<compile_context>
chip_gen: v6e
topology: v6e:2x2x1
jax: 0.10.0
libtpu: 0.0.40
codegen_flags: <defaults>
</compile_context>

<pallas_src>
import functools

import jax
import jax.numpy as jnp
from jax.experimental import pallas as pl
from jax.experimental.pallas import tpu as pltpu


# ---------------------------------------------------------------------------
# Tiling / VMEM helpers
# ---------------------------------------------------------------------------
def _vmem_limit_bytes():
    """Generation-aware scoped-VMEM limit (leave headroom; v7x = 64 MiB)."""
    try:
        cap = int(pltpu.get_tpu_info().vmem_capacity_bytes)
        if cap < (16 << 20):
            cap = 64 << 20
    except Exception:
        cap = 64 << 20                       # conservative (v7x-sized) default
    return min((cap * 3) // 4, 100 * 1024 * 1024)


VMEM_LIMIT = _vmem_limit_bytes()


def _cparams(sem):
    return pltpu.CompilerParams(dimension_semantics=sem,
                                vmem_limit_bytes=VMEM_LIMIT)


def _pick_tile(dim, cap=512):
    for t in (512, 256, 128):
        if t <= cap and dim % t == 0:
            return t
    return dim


def _pick_row_tile(m, cap=512):
    """Row tile; prefer >=2 tiles so a 'parallel' axis can use both v7x TCs."""
    t = _pick_tile(m, cap)
    if t == m and t > 128:
        t = _pick_tile(m, t // 2)
    return t


def _pick_elem_tile(m, cap=2048):
    """Large node tile for the mem-bound BN+ReLU pass."""
    for t in (2048, 1024, 512, 256, 128):
        if t <= cap and m % t == 0:
            return t
    return m


# ---------------------------------------------------------------------------
# Kernels
# ---------------------------------------------------------------------------
def matmul_kernel(a_ref, b_ref, o_ref, acc_ref):
    """Tiled C = A @ B (bf16 inputs, f32 accumulate, cast on writeback)."""
    k = pl.program_id(2)

    @pl.when(k == 0)
    def _():
        acc_ref[...] = jnp.zeros_like(acc_ref)

    acc_ref[...] += jnp.dot(a_ref[...], b_ref[...],
                            preferred_element_type=jnp.float32)

    @pl.when(k == pl.num_programs(2) - 1)
    def _():
        o_ref[...] = acc_ref[...].astype(o_ref.dtype)


def make_adjconv_kernel(has_w, final):
    """Adjacency-conv kernel factory.

    acc = A @ B over the node contraction (grid axis 1).  At the last k:
        h = (bf16(acc) @ W  if has_w else acc) + bias
    then either
        final=True : o = log_softmax(h, -1)  (f32, padded cols hold -1e30 bias)
        final=False: o = bf16(h), plus per-row-tile partial sum / sum-of-
                     squares outputs for the fused BatchNorm statistics.
    """
    def kernel(*refs):
        if has_w:
            a_ref, b_ref, w_ref, bias_ref, *rest = refs
        else:
            a_ref, b_ref, bias_ref, *rest = refs
            w_ref = None
        if final:
            o_ref, acc_ref = rest
        else:
            o_ref, sum_ref, sq_ref, acc_ref = rest

        k = pl.program_id(1)

        @pl.when(k == 0)
        def _():
            acc_ref[...] = jnp.zeros_like(acc_ref)

        acc_ref[...] += jnp.dot(a_ref[...], b_ref[...],
                                preferred_element_type=jnp.float32)

        @pl.when(k == pl.num_programs(1) - 1)
        def _():
            if has_w:
                h = jnp.dot(acc_ref[...].astype(jnp.bfloat16), w_ref[...],
                            preferred_element_type=jnp.float32) + bias_ref[...]
            else:
                h = acc_ref[...] + bias_ref[...]
            if final:
                m = jnp.max(h, axis=-1, keepdims=True)
                s = h - m
                lse = jnp.log(jnp.sum(jnp.exp(s), axis=-1, keepdims=True))
                o_ref[...] = (s - lse).astype(o_ref.dtype)
            else:
                o_ref[...] = h.astype(o_ref.dtype)
                sum_ref[...] = jnp.sum(h, axis=0, keepdims=True)[None, :, :]
                sq_ref[...] = jnp.sum(h * h, axis=0, keepdims=True)[None, :, :]

    return kernel


def scale_shift_relu_kernel(h_ref, scale_ref, shift_ref, o_ref):
    """Folded BatchNorm (precomputed scale/shift) + ReLU; bf16 in/out."""
    y = h_ref[...].astype(jnp.float32) * scale_ref[...] + shift_ref[...]
    o_ref[...] = jnp.maximum(y, 0.0).astype(o_ref.dtype)


# ---------------------------------------------------------------------------
# pallas_call wrappers
# ---------------------------------------------------------------------------
def matmul(a, b, out_dtype=jnp.bfloat16):
    M, K = a.shape
    _, N = b.shape
    tm, tn, tk = _pick_row_tile(M), _pick_tile(N), _pick_tile(K)
    return pl.pallas_call(
        matmul_kernel,
        out_shape=jax.ShapeDtypeStruct((M, N), out_dtype),
        grid=(M // tm, N // tn, K // tk),
        in_specs=[pl.BlockSpec((tm, tk), lambda i, j, k: (i, k)),
                  pl.BlockSpec((tk, tn), lambda i, j, k: (k, j))],
        out_specs=pl.BlockSpec((tm, tn), lambda i, j, k: (i, j)),
        scratch_shapes=[pltpu.VMEM((tm, tn), jnp.float32)],
        compiler_params=_cparams(("parallel", "parallel", "arbitrary")),
    )(a, b)


def adjconv_hidden(adj, x, w, bias):
    """(bf16 h, partial sum, partial sumsq) for h = (adj @ x) @ w + bias."""
    M, K = adj.shape
    fin, fout = w.shape
    tm, tk = _pick_row_tile(M), _pick_tile(K)
    nrt = M // tm
    return pl.pallas_call(
        make_adjconv_kernel(has_w=True, final=False),
        out_shape=(jax.ShapeDtypeStruct((M, fout), jnp.bfloat16),
                   jax.ShapeDtypeStruct((nrt, 1, fout), jnp.float32),
                   jax.ShapeDtypeStruct((nrt, 1, fout), jnp.float32)),
        grid=(nrt, K // tk),
        in_specs=[pl.BlockSpec((tm, tk), lambda i, k: (i, k)),
                  pl.BlockSpec((tk, fin), lambda i, k: (k, 0)),
                  pl.BlockSpec((fin, fout), lambda i, k: (0, 0)),
                  pl.BlockSpec((1, fout), lambda i, k: (0, 0))],
        out_specs=(pl.BlockSpec((tm, fout), lambda i, k: (i, 0)),
                   pl.BlockSpec((1, 1, fout), lambda i, k: (i, 0, 0)),
                   pl.BlockSpec((1, 1, fout), lambda i, k: (i, 0, 0))),
        scratch_shapes=[pltpu.VMEM((tm, fin), jnp.float32)],
        compiler_params=_cparams(("parallel", "arbitrary")),
    )(adj, x, w, bias)


def adjconv_hidden_nw(adj, t, bias):
    """(bf16 h, partial sum, partial sumsq) for h = adj @ t + bias."""
    M, K = adj.shape
    fout = t.shape[1]
    tm, tk = _pick_row_tile(M), _pick_tile(K)
    nrt = M // tm
    return pl.pallas_call(
        make_adjconv_kernel(has_w=False, final=False),
        out_shape=(jax.ShapeDtypeStruct((M, fout), jnp.bfloat16),
                   jax.ShapeDtypeStruct((nrt, 1, fout), jnp.float32),
                   jax.ShapeDtypeStruct((nrt, 1, fout), jnp.float32)),
        grid=(nrt, K // tk),
        in_specs=[pl.BlockSpec((tm, tk), lambda i, k: (i, k)),
                  pl.BlockSpec((tk, fout), lambda i, k: (k, 0)),
                  pl.BlockSpec((1, fout), lambda i, k: (0, 0))],
        out_specs=(pl.BlockSpec((tm, fout), lambda i, k: (i, 0)),
                   pl.BlockSpec((1, 1, fout), lambda i, k: (i, 0, 0)),
                   pl.BlockSpec((1, 1, fout), lambda i, k: (i, 0, 0))),
        scratch_shapes=[pltpu.VMEM((tm, fout), jnp.float32)],
        compiler_params=_cparams(("parallel", "arbitrary")),
    )(adj, t, bias)


def adjconv_final(adj, x, w, bias):
    """log_softmax((adj @ x) @ w + bias, -1); bias must be f32 (-1e30 pads)."""
    assert bias.dtype == jnp.float32
    M, K = adj.shape
    fin, fout = w.shape
    tm, tk = _pick_row_tile(M), _pick_tile(K)
    return pl.pallas_call(
        make_adjconv_kernel(has_w=True, final=True),
        out_shape=jax.ShapeDtypeStruct((M, fout), jnp.float32),
        grid=(M // tm, K // tk),
        in_specs=[pl.BlockSpec((tm, tk), lambda i, k: (i, k)),
                  pl.BlockSpec((tk, fin), lambda i, k: (k, 0)),
                  pl.BlockSpec((fin, fout), lambda i, k: (0, 0)),
                  pl.BlockSpec((1, fout), lambda i, k: (0, 0))],
        out_specs=pl.BlockSpec((tm, fout), lambda i, k: (i, 0)),
        scratch_shapes=[pltpu.VMEM((tm, fin), jnp.float32)],
        compiler_params=_cparams(("parallel", "arbitrary")),
    )(adj, x, w, bias)


def adjconv_final_nw(adj, t, bias):
    """log_softmax(adj @ t + bias, -1); bias must be f32 (-1e30 pads)."""
    assert bias.dtype == jnp.float32
    M, K = adj.shape
    fout = t.shape[1]
    tm, tk = _pick_row_tile(M), _pick_tile(K)
    return pl.pallas_call(
        make_adjconv_kernel(has_w=False, final=True),
        out_shape=jax.ShapeDtypeStruct((M, fout), jnp.float32),
        grid=(M // tm, K // tk),
        in_specs=[pl.BlockSpec((tm, tk), lambda i, k: (i, k)),
                  pl.BlockSpec((tk, fout), lambda i, k: (k, 0)),
                  pl.BlockSpec((1, fout), lambda i, k: (0, 0))],
        out_specs=pl.BlockSpec((tm, fout), lambda i, k: (i, 0)),
        scratch_shapes=[pltpu.VMEM((tm, fout), jnp.float32)],
        compiler_params=_cparams(("parallel", "arbitrary")),
    )(adj, t, bias)


def scale_shift_relu(h, scale, shift):
    M, F = h.shape
    tm = _pick_elem_tile(M)
    return pl.pallas_call(
        scale_shift_relu_kernel,
        out_shape=jax.ShapeDtypeStruct((M, F), jnp.bfloat16),
        grid=(M // tm,),
        in_specs=[pl.BlockSpec((tm, F), lambda i: (i, 0)),
                  pl.BlockSpec((1, F), lambda i: (0, 0)),
                  pl.BlockSpec((1, F), lambda i: (0, 0))],
        out_specs=pl.BlockSpec((tm, F), lambda i: (i, 0)),
        compiler_params=_cparams(("parallel",)),
    )(h, scale, shift)


# ---------------------------------------------------------------------------
# Padding helpers + forward glue
# ---------------------------------------------------------------------------
def _pad_cols(x, value=0.0):
    pad = (-x.shape[1]) % 128
    if pad == 0:
        return x
    return jnp.pad(x, ((0, 0), (0, pad)), constant_values=value)


def _pad_mat(w):
    p0 = (-w.shape[0]) % 128
    p1 = (-w.shape[1]) % 128
    if p0 == 0 and p1 == 0:
        return w
    return jnp.pad(w, ((0, p0), (0, p1)))


def _pad_vec(v, value=0.0):
    # Kept in f32 on purpose: the -1e30 padded-logit bias overflows in bf16.
    v = v.astype(jnp.float32)
    pad = (-v.shape[0]) % 128
    if pad:
        v = jnp.pad(v, (0, pad), constant_values=value)
    return v


def _bn_scale_shift(psum, psq, gamma_pad, beta_pad, n):
    """Reduce the tiny per-row-tile partials; fold BN into scale/shift."""
    total = jnp.sum(psum, axis=(0, 1))
    totsq = jnp.sum(psq, axis=(0, 1))
    mean = total / n
    var = jnp.maximum(totsq / n - mean * mean, 0.0)   # clamp one-pass variance
    scale = gamma_pad * jax.lax.rsqrt(var + 1e-5)
    shift = beta_pad - mean * scale
    return scale[None, :], shift[None, :]


@functools.partial(jax.jit, static_argnames=("out_channels",))
def gcn_forward(x, adj, params, out_channels):
    n = x.shape[0]
    assert n % 128 == 0, "demo wrapper requires node count multiple of 128"

    adj_b = adj.astype(jnp.bfloat16)
    h = _pad_cols(x).astype(jnp.bfloat16)

    *hidden, (w_f, b_f) = params
    for (w, b, gamma, beta) in hidden:
        w_p = _pad_mat(w).astype(jnp.bfloat16)
        b_p = _pad_vec(b)[None, :]
        g_p = _pad_vec(gamma, value=1.0)
        be_p = _pad_vec(beta)
        fin_pad, fout_pad = w_p.shape

        if fin_pad <= fout_pad:
            # Fused ((A @ h) @ W + b) with BN partial stats in the epilogue.
            hc, psum, psq = adjconv_hidden(adj_b, h, w_p, b_p)
        else:
            t = matmul(h, w_p)                          # bf16 (N, fout_pad)
            hc, psum, psq = adjconv_hidden_nw(adj_b, t, b_p)

        scale, shift = _bn_scale_shift(psum, psq, g_p, be_p, n)
        h = scale_shift_relu(hc, scale, shift)
        # TODO(synk): dropout omitted (eval-mode identity).

    w_p = _pad_mat(w_f).astype(jnp.bfloat16)
    b_p = _pad_vec(b_f, value=-1e30)[None, :]           # kill padded logit cols
    fin_pad, fout_pad = w_p.shape
    if fin_pad <= fout_pad:
        logp = adjconv_final(adj_b, h, w_p, b_p)
    else:
        t = matmul(h, w_p)
        logp = adjconv_final_nw(adj_b, t, b_p)
    return logp[:, :out_channels]


# ---------------------------------------------------------------------------
# Pure-JAX reference (mirrors the kernel's bf16 quantization points)
# ---------------------------------------------------------------------------
def ref_gcn_forward(x, adj, params, out_channels):
    def bdot(a, b):
        return jnp.dot(a.astype(jnp.bfloat16), b.astype(jnp.bfloat16),
                       preferred_element_type=jnp.float32)

    n = x.shape[0]
    h = x.astype(jnp.float32)
    *hidden, (w_f, b_f) = params

    def conv(h, w, b):
        fin_pad = -(-w.shape[0] // 128) * 128
        fout_pad = -(-w.shape[1] // 128) * 128
        if fin_pad <= fout_pad:
            p = bdot(adj, h).astype(jnp.bfloat16)
            return bdot(p, w) + b
        t = bdot(h, w).astype(jnp.bfloat16)
        return bdot(adj, t) + b

    for (w, b, gamma, beta) in hidden:
        hc = conv(h, w, b)
        mean = jnp.mean(hc, axis=0)
        var = jnp.maximum(jnp.mean(hc * hc, axis=0) - mean * mean, 0.0)
        scale = gamma * jax.lax.rsqrt(var + 1e-5)
        shift = beta - mean * scale
        hq = hc.astype(jnp.bfloat16).astype(jnp.float32)   # bf16 activation store
        h = jnp.maximum(hq * scale + shift, 0.0).astype(jnp.bfloat16)
        h = h.astype(jnp.float32)

    hc = conv(h, w_f, b_f)
    return jax.nn.log_softmax(hc, axis=-1)


# ---------------------------------------------------------------------------
# Deterministic parameter init + demo
# ---------------------------------------------------------------------------
def init_params(key, in_channels, hidden_channels, out_channels, num_layers):
    params = []
    dims = [in_channels] + [hidden_channels] * (num_layers - 1) + [out_channels]
    for layer in range(num_layers):
        f_in, f_out = dims[layer], dims[layer + 1]
        key, kw, kb = jax.random.split(key, 3)
        limit = (6.0 / (f_in + f_out)) ** 0.5
        w = jax.random.uniform(kw, (f_in, f_out), jnp.float32, -limit, limit)
        b = 0.1 * jax.random.normal(kb, (f_out,), jnp.float32)
        if layer < num_layers - 1:
            gamma = jnp.ones((f_out,), jnp.float32)
            beta = jnp.zeros((f_out,), jnp.float32)
            params.append((w, b, gamma, beta))
        else:
            params.append((w, b))
    return params


if __name__ == "__main__":
    N = 512               # number of graph nodes (multiple of 128)
    IN_CH = 200           # pads to 256 -> exercises the A @ (X W) association
    HIDDEN_CH = 64        # pads to 128
    OUT_CH = 40           # pads to 128 (ogbn-arxiv has 40 classes)
    NUM_LAYERS = 3

    key = jax.random.PRNGKey(0)
    kx, kadj, kparams = jax.random.split(key, 3)

    x = jax.random.normal(kx, (N, IN_CH), jnp.float32)

    # Dense symmetric-normalized adjacency (synthetic, deterministic).
    a = (jax.random.uniform(kadj, (N, N)) < 0.05).astype(jnp.float32)
    a = jnp.minimum(a + a.T + jnp.eye(N, dtype=jnp.float32), 1.0)
    deg = jnp.sum(a, axis=1, keepdims=True)
    d_inv_sqrt = 1.0 / jnp.sqrt(deg)
    adj = a * d_inv_sqrt * d_inv_sqrt.T                   # D^-1/2 A D^-1/2

    params = init_params(kparams, IN_CH, HIDDEN_CH, OUT_CH, NUM_LAYERS)

    out = gcn_forward(x, adj, params, out_channels=OUT_CH)
    out = jax.block_until_ready(out)

    assert out.shape == (N, OUT_CH)
    # log_softmax rows should exponentiate-sum to ~1.
    row_sums = jnp.exp(out).sum(axis=-1)
    assert bool(jnp.all(jnp.abs(row_sums - 1.0) < 1e-3))

    # Compare against a pure-JAX reference mirroring the bf16 cast points.
    ref = ref_gcn_forward(x, adj, params, OUT_CH)
    max_err = float(jnp.max(jnp.abs(out - ref)))
    assert max_err < 3e-2, f"max_err={max_err}"

    print("KERNEL_OK")
</pallas_src>

<mosaic_0001>
module attributes {stable_mosaic.version = 11 : i64} {
  func.func @matmul_kernel(%arg0: i32, %arg1: i32, %arg2: i32, %arg3: memref<256x256xbf16, #tpu.memory_space<vmem>>, %arg4: memref<256x128xbf16, #tpu.memory_space<vmem>>, %arg5: memref<256x128xbf16, #tpu.memory_space<vmem>>, %arg6: memref<256x128xf32, #tpu.memory_space<vmem>>) attributes {dimension_semantics = [#tpu.dimension_semantics<parallel>, #tpu.dimension_semantics<parallel>, #tpu.dimension_semantics<arbitrary>], iteration_bounds = array<i64: 2, 1, 1>, scalar_prefetch = 0 : i64, scratch_operands = 1 : i64, tpu.core_type = #tpu.core_type<tc>, window_params = [{transform_indices = @transform_0, window_bounds = array<i64: 256, 256>}, {transform_indices = @transform_1, window_bounds = array<i64: 256, 128>}, {transform_indices = @transform_2, window_bounds = array<i64: 256, 128>}]} {
    %c0_i32 = arith.constant 0 : i32
    %0 = arith.cmpi eq, %arg2, %c0_i32 : i32
    %1 = arith.extui %0 : i1 to i32
    %c0_i32_0 = arith.constant 0 : i32
    %2 = arith.cmpi ne, %1, %c0_i32_0 : i32
    scf.if %2 {
      %cst_10 = arith.constant 0.000000e+00 : f32
      %12 = vector.broadcast %cst_10 : f32 to vector<256x128xf32>
      %c0_11 = arith.constant 0 : index
      %c0_12 = arith.constant 0 : index
      %13 = vector.load %arg6[%c0_11, %c0_12] : memref<256x128xf32, #tpu.memory_space<vmem>>, vector<256x128xf32>
      tpu.vector_store %arg6[%c0_11, %c0_12], %12 {strides = array<i32>} : memref<256x128xf32, #tpu.memory_space<vmem>>, vector<256x128xf32>,
    } else {
    }
    %c0 = arith.constant 0 : index
    %c0_1 = arith.constant 0 : index
    %3 = vector.load %arg6[%c0, %c0_1] : memref<256x128xf32, #tpu.memory_space<vmem>>, vector<256x128xf32>
    %c0_2 = arith.constant 0 : index
    %c0_3 = arith.constant 0 : index
    %4 = vector.load %arg3[%c0_2, %c0_3] : memref<256x256xbf16, #tpu.memory_space<vmem>>, vector<256x256xbf16>
    %c0_4 = arith.constant 0 : index
    %c0_5 = arith.constant 0 : index
    %5 = vector.load %arg4[%c0_4, %c0_5] : memref<256x128xbf16, #tpu.memory_space<vmem>>, vector<256x128xbf16>
    %cst = arith.constant dense<0.000000e+00> : vector<256x128xf32>
    %6 = tpu.matmul %4, %5, %cst {dimension_numbers = #tpu.dot_dimension_numbers<[1], [0], [0], [1], [0, 0, 1, 1], [], []>} : vector<256x256xbf16>, vector<256x128xbf16>, vector<256x128xf32> -> vector<256x128xf32>
    %7 = arith.addf %3, %6 : vector<256x128xf32>
    %c0_6 = arith.constant 0 : index
    %c0_7 = arith.constant 0 : index
    %8 = vector.load %arg6[%c0_6, %c0_7] : memref<256x128xf32, #tpu.memory_space<vmem>>, vector<256x128xf32>
    tpu.vector_store %arg6[%c0_6, %c0_7], %7 {strides = array<i32>} : memref<256x128xf32, #tpu.memory_space<vmem>>, vector<256x128xf32>,
    %c0_i32_8 = arith.constant 0 : i32
    %9 = arith.cmpi eq, %arg2, %c0_i32_8 : i32
    %10 = arith.extui %9 : i1 to i32
    %c0_i32_9 = arith.constant 0 : i32
    %11 = arith.cmpi ne, %10, %c0_i32_9 : i32
    scf.if %11 {
      %c0_10 = arith.constant 0 : index
      %c0_11 = arith.constant 0 : index
      %12 = vector.load %arg6[%c0_10, %c0_11] : memref<256x128xf32, #tpu.memory_space<vmem>>, vector<256x128xf32>
      %13 = arith.truncf %12 : vector<256x128xf32> to vector<256x128xbf16>
      %c0_12 = arith.constant 0 : index
      %c0_13 = arith.constant 0 : index
      %14 = vector.load %arg5[%c0_12, %c0_13] : memref<256x128xbf16, #tpu.memory_space<vmem>>, vector<256x128xbf16>
      tpu.vector_store %arg5[%c0_12, %c0_13], %13 {strides = array<i32>} : memref<256x128xbf16, #tpu.memory_space<vmem>>, vector<256x128xbf16>,
    } else {
    }
    return
  }
  func.func @transform_0(%arg0: i32, %arg1: i32, %arg2: i32) -> (i32, i32) {
    %c0_i32 = arith.constant 0 : i32
    return %arg0, %arg2 : i32, i32
  }
  func.func @transform_1(%arg0: i32, %arg1: i32, %arg2: i32) -> (i32, i32) {
    %c0_i32 = arith.constant 0 : i32
    return %arg2, %arg1 : i32, i32
  }
  func.func @transform_2(%arg0: i32, %arg1: i32, %arg2: i32) -> (i32, i32) {
    %c0_i32 = arith.constant 0 : i32
    return %arg0, %arg1 : i32, i32
  }
}

module attributes {stable_mosaic.version = 11 : i64} {
  func.func @kernel(%arg0: i32, %arg1: i32, %arg2: memref<256x512xbf16, #tpu.memory_space<vmem>>, %arg3: memref<512x128xbf16, #tpu.memory_space<vmem>>, %arg4: memref<1x128xf32, #tpu.memory_space<vmem>>, %arg5: memref<256x128xbf16, #tpu.memory_space<vmem>>, %arg6: memref<1x1x128xf32, #tpu.memory_space<vmem>>, %arg7: memref<1x1x128xf32, #tpu.memory_space<vmem>>, %arg8: memref<256x128xf32, #tpu.memory_space<vmem>>) attributes {dimension_semantics = [#tpu.dimension_semantics<parallel>, #tpu.dimension_semantics<arbitrary>], iteration_bounds = array<i64: 2, 1>, scalar_prefetch = 0 : i64, scratch_operands = 1 : i64, tpu.core_type = #tpu.core_type<tc>, window_params = [{transform_indices = @transform_0, window_bounds = array<i64: 256, 512>}, {transform_indices = @transform_1, window_bounds = array<i64: 512, 128>}, {pipeline_mode = #tpu.pipeline_mode<synchronous>, transform_indices = @transform_2, window_bounds = array<i64: 1, 128>}, {transform_indices = @transform_3, window_bounds = array<i64: 256, 128>}, {transform_indices = @transform_4, window_bounds = array<i64: 1, 1, 128>}, {transform_indices = @transform_5, window_bounds = array<i64: 1, 1, 128>}]} {
    %c0_i32 = arith.constant 0 : i32
    %0 = arith.cmpi eq, %arg1, %c0_i32 : i32
    %1 = arith.extui %0 : i1 to i32
    %c0_i32_0 = arith.constant 0 : i32
    %2 = arith.cmpi ne, %1, %c0_i32_0 : i32
    scf.if %2 {
      %cst_10 = arith.constant 0.000000e+00 : f32
      %12 = vector.broadcast %cst_10 : f32 to vector<256x128xf32>
      %c0_11 = arith.constant 0 : index
      %c0_12 = arith.constant 0 : index
      %13 = vector.load %arg8[%c0_11, %c0_12] : memref<256x128xf32, #tpu.memory_space<vmem>>, vector<256x128xf32>
      tpu.vector_store %arg8[%c0_11, %c0_12], %12 {strides = array<i32>} : memref<256x128xf32, #tpu.memory_space<vmem>>, vector<256x128xf32>,
    } else {
    }
    %c0 = arith.constant 0 : index
    %c0_1 = arith.constant 0 : index
    %3 = vector.load %arg8[%c0, %c0_1] : memref<256x128xf32, #tpu.memory_space<vmem>>, vector<256x128xf32>
    %c0_2 = arith.constant 0 : index
    %c0_3 = arith.constant 0 : index
    %4 = vector.load %arg2[%c0_2, %c0_3] : memref<256x512xbf16, #tpu.memory_space<vmem>>, vector<256x512xbf16>
    %c0_4 = arith.constant 0 : index
    %c0_5 = arith.constant 0 : index
    %5 = vector.load %arg3[%c0_4, %c0_5] : memref<512x128xbf16, #tpu.memory_space<vmem>>, vector<512x128xbf16>
    %cst = arith.constant dense<0.000000e+00> : vector<256x128xf32>
    %6 = tpu.matmul %4, %5, %cst {dimension_numbers = #tpu.dot_dimension_numbers<[1], [0], [0], [1], [0, 0, 1, 1], [], []>} : vector<256x512xbf16>, vector<512x128xbf16>, vector<256x128xf32> -> vector<256x128xf32>
    %7 = arith.addf %3, %6 : vector<256x128xf32>
    %c0_6 = arith.constant 0 : index
    %c0_7 = arith.constant 0 : index
    %8 = vector.load %arg8[%c0_6, %c0_7] : memref<256x128xf32, #tpu.memory_space<vmem>>, vector<256x128xf32>
    tpu.vector_store %arg8[%c0_6, %c0_7], %7 {strides = array<i32>} : memref<256x128xf32, #tpu.memory_space<vmem>>, vector<256x128xf32>,
    %c0_i32_8 = arith.constant 0 : i32
    %9 = arith.cmpi eq, %arg1, %c0_i32_8 : i32
    %10 = arith.extui %9 : i1 to i32
    %c0_i32_9 = arith.constant 0 : i32
    %11 = arith.cmpi ne, %10, %c0_i32_9 : i32
    scf.if %11 {
      %c0_10 = arith.constant 0 : index
      %c0_11 = arith.constant 0 : index
      %12 = vector.load %arg8[%c0_10, %c0_11] : memref<256x128xf32, #tpu.memory_space<vmem>>, vector<256x128xf32>
      %c0_12 = arith.constant 0 : index
      %c0_13 = arith.constant 0 : index
      %13 = vector.load %arg4[%c0_12, %c0_13] : memref<1x128xf32, #tpu.memory_space<vmem>>, vector<1x128xf32>
      %14 = vector.broadcast %13 : vector<1x128xf32> to vector<256x128xf32>
      %15 = arith.addf %12, %14 : vector<256x128xf32>
      %16 = arith.truncf %15 : vector<256x128xf32> to vector<256x128xbf16>
      %c0_14 = arith.constant 0 : index
      %c0_15 = arith.constant 0 : index
      %17 = vector.load %arg5[%c0_14, %c0_15] : memref<256x128xbf16, #tpu.memory_space<vmem>>, vector<256x128xbf16>
      tpu.vector_store %arg5[%c0_14, %c0_15], %16 {strides = array<i32>} : memref<256x128xbf16, #tpu.memory_space<vmem>>, vector<256x128xbf16>,
      %cst_16 = arith.constant dense<0.000000e+00> : vector<128xf32>
      %18 = vector.multi_reduction <add>, %15, %cst_16 [0] : vector<256x128xf32> to vector<128xf32>
      %19 = vector.shape_cast %18 : vector<128xf32> to vector<1x128xf32>
      %20 = vector.shape_cast %19 : vector<1x128xf32> to vector<1x1x128xf32>
      %c0_17 = arith.constant 0 : index
      %c0_18 = arith.constant 0 : index
      %c0_19 = arith.constant 0 : index
      %21 = vector.load %arg6[%c0_17, %c0_18, %c0_19] : memref<1x1x128xf32, #tpu.memory_space<vmem>>, vector<1x1x128xf32>
      tpu.vector_store %arg6[%c0_17, %c0_18, %c0_19], %20 {strides = array<i32>} : memref<1x1x128xf32, #tpu.memory_space<vmem>>, vector<1x1x128xf32>,
      %22 = arith.mulf %15, %15 : vector<256x128xf32>
      %cst_20 = arith.constant dense<0.000000e+00> : vector<128xf32>
      %23 = vector.multi_reduction <add>, %22, %cst_20 [0] : vector<256x128xf32> to vector<128xf32>
      %24 = vector.shape_cast %23 : vector<128xf32> to vector<1x128xf32>
      %25 = vector.shape_cast %24 : vector<1x128xf32> to vector<1x1x128xf32>
      %c0_21 = arith.constant 0 : index
      %c0_22 = arith.constant 0 : index
      %c0_23 = arith.constant 0 : index
      %26 = vector.load %arg7[%c0_21, %c0_22, %c0_23] : memref<1x1x128xf32, #tpu.memory_space<vmem>>, vector<1x1x128xf32>
      tpu.vector_store %arg7[%c0_21, %c0_22, %c0_23], %25 {strides = array<i32>} : memref<1x1x128xf32, #tpu.memory_space<vmem>>, vector<1x1x128xf32>,
    } else {
    }
    return
  }
  func.func @transform_0(%arg0: i32, %arg1: i32) -> (i32, i32) {
    %c0_i32 = arith.constant 0 : i32
    return %arg0, %arg1 : i32, i32
  }
  func.func @transform_1(%arg0: i32, %arg1: i32) -> (i32, i32) {
    %c0_i32 = arith.constant 0 : i32
    %c0_i32_0 = arith.constant 0 : i32
    return %arg1, %c0_i32 : i32, i32
  }
  func.func @transform_2(%arg0: i32, %arg1: i32) -> (i32, i32) {
    %c0_i32 = arith.constant 0 : i32
    %c0_i32_0 = arith.constant 0 : i32
    %c0_i32_1 = arith.constant 0 : i32
    return %c0_i32, %c0_i32_0 : i32, i32
  }
  func.func @transform_3(%arg0: i32, %arg1: i32) -> (i32, i32) {
    %c0_i32 = arith.constant 0 : i32
    %c0_i32_0 = arith.constant 0 : i32
    return %arg0, %c0_i32 : i32, i32
  }
  func.func @transform_4(%arg0: i32, %arg1: i32) -> (i32, i32, i32) {
    %c0_i32 = arith.constant 0 : i32
    %c0_i32_0 = arith.constant 0 : i32
    %c0_i32_1 = arith.constant 0 : i32
    return %arg0, %c0_i32, %c0_i32_0 : i32, i32, i32
  }
  func.func @transform_5(%arg0: i32, %arg1: i32) -> (i32, i32, i32) {
    %c0_i32 = arith.constant 0 : i32
    %c0_i32_0 = arith.constant 0 : i32
    %c0_i32_1 = arith.constant 0 : i32
    return %arg0, %c0_i32, %c0_i32_0 : i32, i32, i32
  }
}

module attributes {stable_mosaic.version = 11 : i64} {
  func.func @scale_shift_relu_kernel(%arg0: i32, %arg1: memref<512x128xbf16, #tpu.memory_space<vmem>>, %arg2: memref<1x128xf32, #tpu.memory_space<vmem>>, %arg3: memref<1x128xf32, #tpu.memory_space<vmem>>, %arg4: memref<512x128xbf16, #tpu.memory_space<vmem>>) attributes {dimension_semantics = [#tpu.dimension_semantics<parallel>], iteration_bounds = array<i64: 1>, scalar_prefetch = 0 : i64, scratch_operands = 0 : i64, tpu.core_type = #tpu.core_type<tc>, window_params = [{transform_indices = @transform_0, window_bounds = array<i64: 512, 128>}, {pipeline_mode = #tpu.pipeline_mode<synchronous>, transform_indices = @transform_1, window_bounds = array<i64: 1, 128>}, {pipeline_mode = #tpu.pipeline_mode<synchronous>, transform_indices = @transform_2, window_bounds = array<i64: 1, 128>}, {transform_indices = @transform_3, window_bounds = array<i64: 512, 128>}]} {
    %c0 = arith.constant 0 : index
    %c0_0 = arith.constant 0 : index
    %0 = vector.load %arg1[%c0, %c0_0] : memref<512x128xbf16, #tpu.memory_space<vmem>>, vector<512x128xbf16>
    %1 = arith.extf %0 : vector<512x128xbf16> to vector<512x128xf32>
    %c0_1 = arith.constant 0 : index
    %c0_2 = arith.constant 0 : index
    %2 = vector.load %arg2[%c0_1, %c0_2] : memref<1x128xf32, #tpu.memory_space<vmem>>, vector<1x128xf32>
    %3 = vector.broadcast %2 : vector<1x128xf32> to vector<512x128xf32>
    %4 = arith.mulf %1, %3 : vector<512x128xf32>
    %c0_3 = arith.constant 0 : index
    %c0_4 = arith.constant 0 : index
    %5 = vector.load %arg3[%c0_3, %c0_4] : memref<1x128xf32, #tpu.memory_space<vmem>>, vector<1x128xf32>
    %6 = vector.broadcast %5 : vector<1x128xf32> to vector<512x128xf32>
    %7 = arith.addf %4, %6 : vector<512x128xf32>
    %cst = arith.constant 0.000000e+00 : f32
    %8 = vector.broadcast %cst : f32 to vector<512x128xf32>
    %9 = arith.maximumf %7, %8 : vector<512x128xf32>
    %10 = arith.truncf %9 : vector<512x128xf32> to vector<512x128xbf16>
    %c0_5 = arith.constant 0 : index
    %c0_6 = arith.constant 0 : index
    %11 = vector.load %arg4[%c0_5, %c0_6] : memref<512x128xbf16, #tpu.memory_space<vmem>>, vector<512x128xbf16>
    tpu.vector_store %arg4[%c0_5, %c0_6], %10 {strides = array<i32>} : memref<512x128xbf16, #tpu.memory_space<vmem>>, vector<512x128xbf16>,
    return
  }
  func.func @transform_0(%arg0: i32) -> (i32, i32) {
    %c0_i32 = arith.constant 0 : i32
    %c0_i32_0 = arith.constant 0 : i32
    return %arg0, %c0_i32 : i32, i32
  }
  func.func @transform_1(%arg0: i32) -> (i32, i32) {
    %c0_i32 = arith.constant 0 : i32
    %c0_i32_0 = arith.constant 0 : i32
    %c0_i32_1 = arith.constant 0 : i32
    return %c0_i32, %c0_i32_0 : i32, i32
  }
  func.func @transform_2(%arg0: i32) -> (i32, i32) {
    %c0_i32 = arith.constant 0 : i32
    %c0_i32_0 = arith.constant 0 : i32
    %c0_i32_1 = arith.constant 0 : i32
    return %c0_i32, %c0_i32_0 : i32, i32
  }
  func.func @transform_3(%arg0: i32) -> (i32, i32) {
    %c0_i32 = arith.constant 0 : i32
    %c0_i32_0 = arith.constant 0 : i32
    return %arg0, %c0_i32 : i32, i32
  }
}

module attributes {stable_mosaic.version = 11 : i64} {
  func.func @kernel(%arg0: i32, %arg1: i32, %arg2: memref<256x512xbf16, #tpu.memory_space<vmem>>, %arg3: memref<512x128xbf16, #tpu.memory_space<vmem>>, %arg4: memref<128x128xbf16, #tpu.memory_space<vmem>>, %arg5: memref<1x128xf32, #tpu.memory_space<vmem>>, %arg6: memref<256x128xbf16, #tpu.memory_space<vmem>>, %arg7: memref<1x1x128xf32, #tpu.memory_space<vmem>>, %arg8: memref<1x1x128xf32, #tpu.memory_space<vmem>>, %arg9: memref<256x128xf32, #tpu.memory_space<vmem>>) attributes {dimension_semantics = [#tpu.dimension_semantics<parallel>, #tpu.dimension_semantics<arbitrary>], iteration_bounds = array<i64: 2, 1>, scalar_prefetch = 0 : i64, scratch_operands = 1 : i64, tpu.core_type = #tpu.core_type<tc>, window_params = [{transform_indices = @transform_0, window_bounds = array<i64: 256, 512>}, {transform_indices = @transform_1, window_bounds = array<i64: 512, 128>}, {pipeline_mode = #tpu.pipeline_mode<synchronous>, transform_indices = @transform_2, window_bounds = array<i64: 128, 128>}, {pipeline_mode = #tpu.pipeline_mode<synchronous>, transform_indices = @transform_3, window_bounds = array<i64: 1, 128>}, {transform_indices = @transform_4, window_bounds = array<i64: 256, 128>}, {transform_indices = @transform_5, window_bounds = array<i64: 1, 1, 128>}, {transform_indices = @transform_6, window_bounds = array<i64: 1, 1, 128>}]} {
    %c0_i32 = arith.constant 0 : i32
    %0 = arith.cmpi eq, %arg1, %c0_i32 : i32
    %1 = arith.extui %0 : i1 to i32
    %c0_i32_0 = arith.constant 0 : i32
    %2 = arith.cmpi ne, %1, %c0_i32_0 : i32
    scf.if %2 {
      %cst_10 = arith.constant 0.000000e+00 : f32
      %12 = vector.broadcast %cst_10 : f32 to vector<256x128xf32>
      %c0_11 = arith.constant 0 : index
      %c0_12 = arith.constant 0 : index
      %13 = vector.load %arg9[%c0_11, %c0_12] : memref<256x128xf32, #tpu.memory_space<vmem>>, vector<256x128xf32>
      tpu.vector_store %arg9[%c0_11, %c0_12], %12 {strides = array<i32>} : memref<256x128xf32, #tpu.memory_space<vmem>>, vector<256x128xf32>,
    } else {
    }
    %c0 = arith.constant 0 : index
    %c0_1 = arith.constant 0 : index
    %3 = vector.load %arg9[%c0, %c0_1] : memref<256x128xf32, #tpu.memory_space<vmem>>, vector<256x128xf32>
    %c0_2 = arith.constant 0 : index
    %c0_3 = arith.constant 0 : index
    %4 = vector.load %arg2[%c0_2, %c0_3] : memref<256x512xbf16, #tpu.memory_space<vmem>>, vector<256x512xbf16>
    %c0_4 = arith.constant 0 : index
    %c0_5 = arith.constant 0 : index
    %5 = vector.load %arg3[%c0_4, %c0_5] : memref<512x128xbf16, #tpu.memory_space<vmem>>, vector<512x128xbf16>
    %cst = arith.constant dense<0.000000e+00> : vector<256x128xf32>
    %6 = tpu.matmul %4, %5, %cst {dimension_numbers = #tpu.dot_dimension_numbers<[1], [0], [0], [1], [0, 0, 1, 1], [], []>} : vector<256x512xbf16>, vector<512x128xbf16>, vector<256x128xf32> -> vector<256x128xf32>
    %7 = arith.addf %3, %6 : vector<256x128xf32>
    %c0_6 = arith.constant 0 : index
    %c0_7 = arith.constant 0 : index
    %8 = vector.load %arg9[%c0_6, %c0_7] : memref<256x128xf32, #tpu.memory_space<vmem>>, vector<256x128xf32>
    tpu.vector_store %arg9[%c0_6, %c0_7], %7 {strides = array<i32>} : memref<256x128xf32, #tpu.memory_space<vmem>>, vector<256x128xf32>,
    %c0_i32_8 = arith.constant 0 : i32
    %9 = arith.cmpi eq, %arg1, %c0_i32_8 : i32
    %10 = arith.extui %9 : i1 to i32
    %c0_i32_9 = arith.constant 0 : i32
    %11 = arith.cmpi ne, %10, %c0_i32_9 : i32
    scf.if %11 {
      %c0_10 = arith.constant 0 : index
      %c0_11 = arith.constant 0 : index
      %12 = vector.load %arg9[%c0_10, %c0_11] : memref<256x128xf32, #tpu.memory_space<vmem>>, vector<256x128xf32>
      %13 = arith.truncf %12 : vector<256x128xf32> to vector<256x128xbf16>
      %c0_12 = arith.constant 0 : index
      %c0_13 = arith.constant 0 : index
      %14 = vector.load %arg4[%c0_12, %c0_13] : memref<128x128xbf16, #tpu.memory_space<vmem>>, vector<128x128xbf16>
      %cst_14 = arith.constant dense<0.000000e+00> : vector<256x128xf32>
      %15 = tpu.matmul %13, %14, %cst_14 {dimension_numbers = #tpu.dot_dimension_numbers<[1], [0], [0], [1], [0, 0, 1, 1], [], []>} : vector<256x128xbf16>, vector<128x128xbf16>, vector<256x128xf32> -> vector<256x128xf32>
      %c0_15 = arith.constant 0 : index
      %c0_16 = arith.constant 0 : index
      %16 = vector.load %arg5[%c0_15, %c0_16] : memref<1x128xf32, #tpu.memory_space<vmem>>, vector<1x128xf32>
      %17 = vector.broadcast %16 : vector<1x128xf32> to vector<256x128xf32>
      %18 = arith.addf %15, %17 : vector<256x128xf32>
      %19 = arith.truncf %18 : vector<256x128xf32> to vector<256x128xbf16>
      %c0_17 = arith.constant 0 : index
      %c0_18 = arith.constant 0 : index
      %20 = vector.load %arg6[%c0_17, %c0_18] : memref<256x128xbf16, #tpu.memory_space<vmem>>, vector<256x128xbf16>
      tpu.vector_store %arg6[%c0_17, %c0_18], %19 {strides = array<i32>} : memref<256x128xbf16, #tpu.memory_space<vmem>>, vector<256x128xbf16>,
      %cst_19 = arith.constant dense<0.000000e+00> : vector<128xf32>
      %21 = vector.multi_reduction <add>, %18, %cst_19 [0] : vector<256x128xf32> to vector<128xf32>
      %22 = vector.shape_cast %21 : vector<128xf32> to vector<1x128xf32>
      %23 = vector.shape_cast %22 : vector<1x128xf32> to vector<1x1x128xf32>
      %c0_20 = arith.constant 0 : index
      %c0_21 = arith.constant 0 : index
      %c0_22 = arith.constant 0 : index
      %24 = vector.load %arg7[%c0_20, %c0_21, %c0_22] : memref<1x1x128xf32, #tpu.memory_space<vmem>>, vector<1x1x128xf32>
      tpu.vector_store %arg7[%c0_20, %c0_21, %c0_22], %23 {strides = array<i32>} : memref<1x1x128xf32, #tpu.memory_space<vmem>>, vector<1x1x128xf32>,
      %25 = arith.mulf %18, %18 : vector<256x128xf32>
      %cst_23 = arith.constant dense<0.000000e+00> : vector<128xf32>
      %26 = vector.multi_reduction <add>, %25, %cst_23 [0] : vector<256x128xf32> to vector<128xf32>
      %27 = vector.shape_cast %26 : vector<128xf32> to vector<1x128xf32>
      %28 = vector.shape_cast %27 : vector<1x128xf32> to vector<1x1x128xf32>
      %c0_24 = arith.constant 0 : index
      %c0_25 = arith.constant 0 : index
      %c0_26 = arith.constant 0 : index
      %29 = vector.load %arg8[%c0_24, %c0_25, %c0_26] : memref<1x1x128xf32, #tpu.memory_space<vmem>>, vector<1x1x128xf32>
      tpu.vector_store %arg8[%c0_24, %c0_25, %c0_26], %28 {strides = array<i32>} : memref<1x1x128xf32, #tpu.memory_space<vmem>>, vector<1x1x128xf32>,
    } else {
    }
    return
  }
  func.func @transform_0(%arg0: i32, %arg1: i32) -> (i32, i32) {
    %c0_i32 = arith.constant 0 : i32
    return %arg0, %arg1 : i32, i32
  }
  func.func @transform_1(%arg0: i32, %arg1: i32) -> (i32, i32) {
    %c0_i32 = arith.constant 0 : i32
    %c0_i32_0 = arith.constant 0 : i32
    return %arg1, %c0_i32 : i32, i32
  }
  func.func @transform_2(%arg0: i32, %arg1: i32) -> (i32, i32) {
    %c0_i32 = arith.constant 0 : i32
    %c0_i32_0 = arith.constant 0 : i32
    %c0_i32_1 = arith.constant 0 : i32
    return %c0_i32, %c0_i32_0 : i32, i32
  }
  func.func @transform_3(%arg0: i32, %arg1: i32) -> (i32, i32) {
    %c0_i32 = arith.constant 0 : i32
    %c0_i32_0 = arith.constant 0 : i32
    %c0_i32_1 = arith.constant 0 : i32
    return %c0_i32, %c0_i32_0 : i32, i32
  }
  func.func @transform_4(%arg0: i32, %arg1: i32) -> (i32, i32) {
    %c0_i32 = arith.constant 0 : i32
    %c0_i32_0 = arith.constant 0 : i32
    return %arg0, %c0_i32 : i32, i32
  }
  func.func @transform_5(%arg0: i32, %arg1: i32) -> (i32, i32, i32) {
    %c0_i32 = arith.constant 0 : i32
    %c0_i32_0 = arith.constant 0 : i32
    %c0_i32_1 = arith.constant 0 : i32
    return %arg0, %c0_i32, %c0_i32_0 : i32, i32, i32
  }
  func.func @transform_6(%arg0: i32, %arg1: i32) -> (i32, i32, i32) {
    %c0_i32 = arith.constant 0 : i32
    %c0_i32_0 = arith.constant 0 : i32
    %c0_i32_1 = arith.constant 0 : i32
    return %arg0, %c0_i32, %c0_i32_0 : i32, i32, i32
  }
}

module attributes {stable_mosaic.version = 11 : i64} {
  func.func @kernel(%arg0: i32, %arg1: i32, %arg2: memref<256x512xbf16, #tpu.memory_space<vmem>>, %arg3: memref<512x128xbf16, #tpu.memory_space<vmem>>, %arg4: memref<128x128xbf16, #tpu.memory_space<vmem>>, %arg5: memref<1x128xf32, #tpu.memory_space<vmem>>, %arg6: memref<256x128xf32, #tpu.memory_space<vmem>>, %arg7: memref<256x128xf32, #tpu.memory_space<vmem>>) attributes {dimension_semantics = [#tpu.dimension_semantics<parallel>, #tpu.dimension_semantics<arbitrary>], iteration_bounds = array<i64: 2, 1>, scalar_prefetch = 0 : i64, scratch_operands = 1 : i64, tpu.core_type = #tpu.core_type<tc>, window_params = [{transform_indices = @transform_0, window_bounds = array<i64: 256, 512>}, {transform_indices = @transform_1, window_bounds = array<i64: 512, 128>}, {pipeline_mode = #tpu.pipeline_mode<synchronous>, transform_indices = @transform_2, window_bounds = array<i64: 128, 128>}, {pipeline_mode = #tpu.pipeline_mode<synchronous>, transform_indices = @transform_3, window_bounds = array<i64: 1, 128>}, {transform_indices = @transform_4, window_bounds = array<i64: 256, 128>}]} {
    %c0_i32 = arith.constant 0 : i32
    %0 = arith.cmpi eq, %arg1, %c0_i32 : i32
    %1 = arith.extui %0 : i1 to i32
    %c0_i32_0 = arith.constant 0 : i32
    %2 = arith.cmpi ne, %1, %c0_i32_0 : i32
    scf.if %2 {
      %cst_10 = arith.constant 0.000000e+00 : f32
      %12 = vector.broadcast %cst_10 : f32 to vector<256x128xf32>
      %c0_11 = arith.constant 0 : index
      %c0_12 = arith.constant 0 : index
      %13 = vector.load %arg7[%c0_11, %c0_12] : memref<256x128xf32, #tpu.memory_space<vmem>>, vector<256x128xf32>
      tpu.vector_store %arg7[%c0_11, %c0_12], %12 {strides = array<i32>} : memref<256x128xf32, #tpu.memory_space<vmem>>, vector<256x128xf32>,
    } else {
    }
    %c0 = arith.constant 0 : index
    %c0_1 = arith.constant 0 : index
    %3 = vector.load %arg7[%c0, %c0_1] : memref<256x128xf32, #tpu.memory_space<vmem>>, vector<256x128xf32>
    %c0_2 = arith.constant 0 : index
    %c0_3 = arith.constant 0 : index
    %4 = vector.load %arg2[%c0_2, %c0_3] : memref<256x512xbf16, #tpu.memory_space<vmem>>, vector<256x512xbf16>
    %c0_4 = arith.constant 0 : index
    %c0_5 = arith.constant 0 : index
    %5 = vector.load %arg3[%c0_4, %c0_5] : memref<512x128xbf16, #tpu.memory_space<vmem>>, vector<512x128xbf16>
    %cst = arith.constant dense<0.000000e+00> : vector<256x128xf32>
    %6 = tpu.matmul %4, %5, %cst {dimension_numbers = #tpu.dot_dimension_numbers<[1], [0], [0], [1], [0, 0, 1, 1], [], []>} : vector<256x512xbf16>, vector<512x128xbf16>, vector<256x128xf32> -> vector<256x128xf32>
    %7 = arith.addf %3, %6 : vector<256x128xf32>
    %c0_6 = arith.constant 0 : index
    %c0_7 = arith.constant 0 : index
    %8 = vector.load %arg7[%c0_6, %c0_7] : memref<256x128xf32, #tpu.memory_space<vmem>>, vector<256x128xf32>
    tpu.vector_store %arg7[%c0_6, %c0_7], %7 {strides = array<i32>} : memref<256x128xf32, #tpu.memory_space<vmem>>, vector<256x128xf32>,
    %c0_i32_8 = arith.constant 0 : i32
    %9 = arith.cmpi eq, %arg1, %c0_i32_8 : i32
    %10 = arith.extui %9 : i1 to i32
    %c0_i32_9 = arith.constant 0 : i32
    %11 = arith.cmpi ne, %10, %c0_i32_9 : i32
    scf.if %11 {
      %c0_10 = arith.constant 0 : index
      %c0_11 = arith.constant 0 : index
      %12 = vector.load %arg7[%c0_10, %c0_11] : memref<256x128xf32, #tpu.memory_space<vmem>>, vector<256x128xf32>
      %13 = arith.truncf %12 : vector<256x128xf32> to vector<256x128xbf16>
      %c0_12 = arith.constant 0 : index
      %c0_13 = arith.constant 0 : index
      %14 = vector.load %arg4[%c0_12, %c0_13] : memref<128x128xbf16, #tpu.memory_space<vmem>>, vector<128x128xbf16>
      %cst_14 = arith.constant dense<0.000000e+00> : vector<256x128xf32>
      %15 = tpu.matmul %13, %14, %cst_14 {dimension_numbers = #tpu.dot_dimension_numbers<[1], [0], [0], [1], [0, 0, 1, 1], [], []>} : vector<256x128xbf16>, vector<128x128xbf16>, vector<256x128xf32> -> vector<256x128xf32>
      %c0_15 = arith.constant 0 : index
      %c0_16 = arith.constant 0 : index
      %16 = vector.load %arg5[%c0_15, %c0_16] : memref<1x128xf32, #tpu.memory_space<vmem>>, vector<1x128xf32>
      %17 = vector.broadcast %16 : vector<1x128xf32> to vector<256x128xf32>
      %18 = arith.addf %15, %17 : vector<256x128xf32>
      %cst_17 = arith.constant dense<0xFF800000> : vector<256xf32>
      %19 = vector.multi_reduction <maximumf>, %18, %cst_17 [1] : vector<256x128xf32> to vector<256xf32>
      %20 = vector.shape_cast %19 : vector<256xf32> to vector<256x1xf32>
      %21 = vector.broadcast %20 : vector<256x1xf32> to vector<256x128xf32>
      %22 = arith.subf %18, %21 : vector<256x128xf32>
      %23 = math.exp %22 : vector<256x128xf32>
      %cst_18 = arith.constant dense<0.000000e+00> : vector<256xf32>
      %24 = vector.multi_reduction <add>, %23, %cst_18 [1] : vector<256x128xf32> to vector<256xf32>
      %25 = vector.shape_cast %24 : vector<256xf32> to vector<256x1xf32>
      %26 = math.log %25 : vector<256x1xf32>
      %27 = vector.broadcast %26 : vector<256x1xf32> to vector<256x128xf32>
      %28 = arith.subf %22, %27 : vector<256x128xf32>
      %c0_19 = arith.constant 0 : index
      %c0_20 = arith.constant 0 : index
      %29 = vector.load %arg6[%c0_19, %c0_20] : memref<256x128xf32, #tpu.memory_space<vmem>>, vector<256x128xf32>
      tpu.vector_store %arg6[%c0_19, %c0_20], %28 {strides = array<i32>} : memref<256x128xf32, #tpu.memory_space<vmem>>, vector<256x128xf32>,
    } else {
    }
    return
  }
  func.func @transform_0(%arg0: i32, %arg1: i32) -> (i32, i32) {
    %c0_i32 = arith.constant 0 : i32
    return %arg0, %arg1 : i32, i32
  }
  func.func @transform_1(%arg0: i32, %arg1: i32) -> (i32, i32) {
    %c0_i32 = arith.constant 0 : i32
    %c0_i32_0 = arith.constant 0 : i32
    return %arg1, %c0_i32 : i32, i32
  }
  func.func @transform_2(%arg0: i32, %arg1: i32) -> (i32, i32) {
    %c0_i32 = arith.constant 0 : i32
    %c0_i32_0 = arith.constant 0 : i32
    %c0_i32_1 = arith.constant 0 : i32
    return %c0_i32, %c0_i32_0 : i32, i32
  }
  func.func @transform_3(%arg0: i32, %arg1: i32) -> (i32, i32) {
    %c0_i32 = arith.constant 0 : i32
    %c0_i32_0 = arith.constant 0 : i32
    %c0_i32_1 = arith.constant 0 : i32
    return %c0_i32, %c0_i32_0 : i32, i32
  }
  func.func @transform_4(%arg0: i32, %arg1: i32) -> (i32, i32) {
    %c0_i32 = arith.constant 0 : i32
    %c0_i32_0 = arith.constant 0 : i32
    return %arg0, %c0_i32 : i32, i32
  }
}

</mosaic_0001>

<llo_original>
// kernel: gcn_forward.8
$region0: #{gcn_forward.8}
  #allocation0 [shape = 'u32[]', space=smem, size = 0x4, offset = 0x4, fixed_abs, tag = 'smem constant byte address 0x4 - core index']
  #allocation1 [shape = 'u32[144,128]{1,0:T(1,128)}', space=vmem, size = 0x12000, scoped, tag = 'internal scratch']
  %s0 = inlined_call_operand.vmem [shape: bf16[512,128], index: 0, kind: input, shape index: {}]
  %s1 = inlined_call_operand.vmem [shape: f32[1,128], index: 1, kind: input, shape index: {}]
  %s2 = inlined_call_operand.vmem [shape: f32[1,128], index: 2, kind: input, shape index: {}]
  %s3 = inlined_call_operand.vmem [shape: bf16[512,128], index: 3, kind: output, shape index: {}]
  %s4 = sld [smem:[#allocation0]]
  $region22: #{gcn_forward.8} parent=0
    _
  %s6 = ssub.s32 1, %s4
  %s7 = scalar_select 0, %s6, %s4
  // Predicated region
  $region2: #{gcn_forward.8} parent=0 // pred_check
    _
  $region3: #{gcn_forward.8} parent=0 // pred_check_branch
    %9 = sbr.rel (0) target = $region5
  $region4: #{gcn_forward.8} parent=0 // pred_region
    _
  $region5: #{gcn_forward.8} parent=0 // pred_fallthru
    _
  // Predicated region
  $region6: #{gcn_forward.8} parent=0 // pred_check
    _
  $region7: #{gcn_forward.8} parent=0 // pred_check_branch
    %11 = sbr.rel (0) target = $region9
  $region8: #{gcn_forward.8} parent=0 // pred_region
    _
  $region9: #{gcn_forward.8} parent=0 // pred_fallthru
    _
  // Predicated region
  $region10: #{gcn_forward.8} parent=0 // pred_check
    _
  $region11: #{gcn_forward.8} parent=0 // pred_check_branch
    %13 = sbr.rel (0) target = $region13
  $region12: #{gcn_forward.8} parent=0 // pred_region
    _
  $region13: #{gcn_forward.8} parent=0 // pred_fallthru
    _
  %v14 = vld [vmem:[%s0] sm:$0xf]
  %v15 = vld [vmem:[%s0 + $0x4] sm:$0xf]
  %v16 = vld [vmem:[%s0 + $0x8] sm:$0xf]
  %v17 = vld [vmem:[%s0 + $0xc] sm:$0xf]
  %v18 = vld [vmem:[%s0 + $0x10] sm:$0xf]
  %v19 = vld [vmem:[%s0 + $0x14] sm:$0xf]
  %v20 = vld [vmem:[%s0 + $0x18] sm:$0xf]
  %v21 = vld [vmem:[%s0 + $0x1c] sm:$0xf]
  %v22 = vld [vmem:[%s0 + $0x20] sm:$0xf]
  %v23 = vld [vmem:[%s0 + $0x24] sm:$0xf]
  %v24 = vld [vmem:[%s0 + $0x28] sm:$0xf]
  %v25 = vld [vmem:[%s0 + $0x2c] sm:$0xf]
  %v26 = vld [vmem:[%s0 + $0x30] sm:$0xf]
  %v27 = vld [vmem:[%s0 + $0x34] sm:$0xf]
  %v28 = vld [vmem:[%s0 + $0x38] sm:$0xf]
  %v29 = vld [vmem:[%s0 + $0x3c] sm:$0xf]
  %v30 = vld [vmem:[%s0 + $0x40] sm:$0xf]
  %v31 = vld [vmem:[%s0 + $0x44] sm:$0xf]
  %v32 = vld [vmem:[%s0 + $0x48] sm:$0xf]
  %v33 = vld [vmem:[%s0 + $0x4c] sm:$0xf]
  %v34 = vld [vmem:[%s0 + $0x50] sm:$0xf]
  %v35 = vld [vmem:[%s0 + $0x54] sm:$0xf]
  %v36 = vld [vmem:[%s0 + $0x58] sm:$0xf]
  %v37 = vld [vmem:[%s0 + $0x5c] sm:$0xf]
  %v38 = vld [vmem:[%s0 + $0x60] sm:$0xf]
  %v39 = vld [vmem:[%s0 + $0x64] sm:$0xf]
  %v40 = vld [vmem:[%s0 + $0x68] sm:$0xf]
  %v41 = vld [vmem:[%s0 + $0x6c] sm:$0xf]
  %v42 = vld [vmem:[%s0 + $0x70] sm:$0xf]
  %v43 = vld [vmem:[%s0 + $0x74] sm:$0xf]
  %v44 = vld [vmem:[%s0 + $0x78] sm:$0xf]
  %v45 = vld [vmem:[%s0 + $0x7c] sm:$0xf]
  %v46 = vld [vmem:[%s0 + $0x80] sm:$0xf]
  %v47 = vld [vmem:[%s0 + $0x84] sm:$0xf]
  %v48 = vld [vmem:[%s0 + $0x88] sm:$0xf]
  %v49 = vld [vmem:[%s0 + $0x8c] sm:$0xf]
  %v50 = vld [vmem:[%s0 + $0x90] sm:$0xf]
  %v51 = vld [vmem:[%s0 + $0x94] sm:$0xf]
  %v52 = vld [vmem:[%s0 + $0x98] sm:$0xf]
  %v53 = vld [vmem:[%s0 + $0x9c] sm:$0xf]
  %v54 = vld [vmem:[%s0 + $0xa0] sm:$0xf]
  %v55 = vld [vmem:[%s0 + $0xa4] sm:$0xf]
  %v56 = vld [vmem:[%s0 + $0xa8] sm:$0xf]
  %v57 = vld [vmem:[%s0 + $0xac] sm:$0xf]
  %v58 = vld [vmem:[%s0 + $0xb0] sm:$0xf]
  %v59 = vld [vmem:[%s0 + $0xb4] sm:$0xf]
  %v60 = vld [vmem:[%s0 + $0xb8] sm:$0xf]
  %v61 = vld [vmem:[%s0 + $0xbc] sm:$0xf]
  %v62 = vld [vmem:[%s0 + $0xc0] sm:$0xf]
  %v63 = vld [vmem:[%s0 + $0xc4] sm:$0xf]
  %v64 = vld [vmem:[%s0 + $0xc8] sm:$0xf]
  %v65 = vld [vmem:[%s0 + $0xcc] sm:$0xf]
  %v66 = vld [vmem:[%s0 + $0xd0] sm:$0xf]
  %v67 = vld [vmem:[%s0 + $0xd4] sm:$0xf]
  %v68 = vld [vmem:[%s0 + $0xd8] sm:$0xf]
  %v69 = vld [vmem:[%s0 + $0xdc] sm:$0xf]
  %v70 = vld [vmem:[%s0 + $0xe0] sm:$0xf]
  %v71 = vld [vmem:[%s0 + $0xe4] sm:$0xf]
  %v72 = vld [vmem:[%s0 + $0xe8] sm:$0xf]
  %v73 = vld [vmem:[%s0 + $0xec] sm:$0xf]
  %v74 = vld [vmem:[%s0 + $0xf0] sm:$0xf]
  %v75 = vld [vmem:[%s0 + $0xf4] sm:$0xf]
  %v76 = vld [vmem:[%s0 + $0xf8] sm:$0xf]
  %v77 = vld [vmem:[%s0 + $0xfc] sm:$0xf]
  %v78 = vunpack.c.l.bf16 %v14
  %v79 = vunpack.c.l.bf16 %v15
  %v80 = vunpack.c.l.bf16 %v16
  %v81 = vunpack.c.l.bf16 %v17
  %v82 = vunpack.c.l.bf16 %v18
  %v83 = vunpack.c.l.bf16 %v19
  %v84 = vunpack.c.l.bf16 %v20
  %v85 = vunpack.c.l.bf16 %v21
  %v86 = vunpack.c.l.bf16 %v22
  %v87 = vunpack.c.l.bf16 %v23
  %v88 = vunpack.c.l.bf16 %v24
  %v89 = vunpack.c.l.bf16 %v25
  %v90 = vunpack.c.l.bf16 %v26
  %v91 = vunpack.c.l.bf16 %v27
  %v92 = vunpack.c.l.bf16 %v28
  %v93 = vunpack.c.l.bf16 %v29
  %v94 = vunpack.c.l.bf16 %v30
  %v95 = vunpack.c.l.bf16 %v31
  %v96 = vunpack.c.l.bf16 %v32
  %v97 = vunpack.c.l.bf16 %v33
  %v98 = vunpack.c.l.bf16 %v34
  %v99 = vunpack.c.l.bf16 %v35
  %v100 = vunpack.c.l.bf16 %v36
  %v101 = vunpack.c.l.bf16 %v37
  %v102 = vunpack.c.l.bf16 %v38
  %v103 = vunpack.c.l.bf16 %v39
  %v104 = vunpack.c.l.bf16 %v40
  %v105 = vunpack.c.l.bf16 %v41
  %v106 = vunpack.c.l.bf16 %v42
  %v107 = vunpack.c.l.bf16 %v43
  %v108 = vunpack.c.l.bf16 %v44
  %v109 = vunpack.c.l.bf16 %v45
  %v110 = vunpack.c.l.bf16 %v46
  %v111 = vunpack.c.l.bf16 %v47
  %v112 = vunpack.c.l.bf16 %v48
  %v113 = vunpack.c.l.bf16 %v49
  %v114 = vunpack.c.l.bf16 %v50
  %v115 = vunpack.c.l.bf16 %v51
  %v116 = vunpack.c.l.bf16 %v52
  %v117 = vunpack.c.l.bf16 %v53
  %v118 = vunpack.c.l.bf16 %v54
  %v119 = vunpack.c.l.bf16 %v55
  %v120 = vunpack.c.l.bf16 %v56
  %v121 = vunpack.c.l.bf16 %v57
  %v122 = vunpack.c.l.bf16 %v58
  %v123 = vunpack.c.l.bf16 %v59
  %v124 = vunpack.c.l.bf16 %v60
  %v125 = vunpack.c.l.bf16 %v61
  %v126 = vunpack.c.l.bf16 %v62
  %v127 = vunpack.c.l.bf16 %v63
  %v128 = vunpack.c.l.bf16 %v64
  %v129 = vunpack.c.l.bf16 %v65
  %v130 = vunpack.c.l.bf16 %v66
  %v131 = vunpack.c.l.bf16 %v67
  %v132 = vunpack.c.l.bf16 %v68
  %v133 = vunpack.c.l.bf16 %v69
  %v134 = vunpack.c.l.bf16 %v70
  %v135 = vunpack.c.l.bf16 %v71
  %v136 = vunpack.c.l.bf16 %v72
  %v137 = vunpack.c.l.bf16 %v73
  %v138 = vunpack.c.l.bf16 %v74
  %v139 = vunpack.c.l.bf16 %v75
  %v140 = vunpack.c.l.bf16 %v76
  %v141 = vunpack.c.l.bf16 %v77
  %v142 = vld [vmem:[%s1] sm:$0x1]
  %v144 = vlaneseq
  %v145 = vshrl.u32 %v144, 7
  %v146 = vsub.s32 0, %v145
  %v147 = vrot.slane %v142, %v146
  %v149 = vmul.f32 %v78, %v147
  %v150 = vmul.f32 %v79, %v147
  %v151 = vmul.f32 %v80, %v147
  %v152 = vmul.f32 %v81, %v147
  %v153 = vmul.f32 %v82, %v147
  %v154 = vmul.f32 %v83, %v147
  %v155 = vmul.f32 %v84, %v147
  %v156 = vmul.f32 %v85, %v147
  %v157 = vmul.f32 %v86, %v147
  %v158 = vmul.f32 %v87, %v147
  %v159 = vmul.f32 %v88, %v147
  %v160 = vmul.f32 %v89, %v147
  %v161 = vmul.f32 %v90, %v147
  %v162 = vmul.f32 %v91, %v147
  %v163 = vmul.f32 %v92, %v147
  %v164 = vmul.f32 %v93, %v147
  %v165 = vmul.f32 %v94, %v147
  %v166 = vmul.f32 %v95, %v147
  %v167 = vmul.f32 %v96, %v147
  %v168 = vmul.f32 %v97, %v147
  %v169 = vmul.f32 %v98, %v147
  %v170 = vmul.f32 %v99, %v147
  %v171 = vmul.f32 %v100, %v147
  %v172 = vmul.f32 %v101, %v147
  %v173 = vmul.f32 %v102, %v147
  %v174 = vmul.f32 %v103, %v147
  %v175 = vmul.f32 %v104, %v147
  %v176 = vmul.f32 %v105, %v147
  %v177 = vmul.f32 %v106, %v147
  %v178 = vmul.f32 %v107, %v147
  %v179 = vmul.f32 %v108, %v147
  %v180 = vmul.f32 %v109, %v147
  %v181 = vmul.f32 %v110, %v147
  %v182 = vmul.f32 %v111, %v147
  %v183 = vmul.f32 %v112, %v147
  %v184 = vmul.f32 %v113, %v147
  %v185 = vmul.f32 %v114, %v147
  %v186 = vmul.f32 %v115, %v147
  %v187 = vmul.f32 %v116, %v147
  %v188 = vmul.f32 %v117, %v147
  %v189 = vmul.f32 %v118, %v147
  %v190 = vmul.f32 %v119, %v147
  %v191 = vmul.f32 %v120, %v147
  %v192 = vmul.f32 %v121, %v147
  %v193 = vmul.f32 %v122, %v147
  %v194 = vmul.f32 %v123, %v147
  %v195 = vmul.f32 %v124, %v147
  %v196 = vmul.f32 %v125, %v147
  %v197 = vmul.f32 %v126, %v147
  %v198 = vmul.f32 %v127, %v147
  %v199 = vmul.f32 %v128, %v147
  %v200 = vmul.f32 %v129, %v147
  %v201 = vmul.f32 %v130, %v147
  %v202 = vmul.f32 %v131, %v147
  %v203 = vmul.f32 %v132, %v147
  %v204 = vmul.f32 %v133, %v147
  %v205 = vmul.f32 %v134, %v147
  %v206 = vmul.f32 %v135, %v147
  %v207 = vmul.f32 %v136, %v147
  %v208 = vmul.f32 %v137, %v147
  %v209 = vmul.f32 %v138, %v147
  %v210 = vmul.f32 %v139, %v147
  %v211 = vmul.f32 %v140, %v147
  %v212 = vmul.f32 %v141, %v147
  %v213 = vld [vmem:[%s2] sm:$0x1]
  %v215 = vlaneseq
  %v216 = vshrl.u32 %v215, 7
  %v217 = vsub.s32 0, %v216
  %v218 = vrot.slane %v213, %v217
  %v220 = vadd.f32 %v149, %v218
  %v221 = vadd.f32 %v150, %v218
  %v222 = vadd.f32 %v151, %v218
  %v223 = vadd.f32 %v152, %v218
  %v224 = vadd.f32 %v153, %v218
  %v225 = vadd.f32 %v154, %v218
  %v226 = vadd.f32 %v155, %v218
  %v227 = vadd.f32 %v156, %v218
  %v228 = vadd.f32 %v157, %v218
  %v229 = vadd.f32 %v158, %v218
  %v230 = vadd.f32 %v159, %v218
  %v231 = vadd.f32 %v160, %v218
  %v232 = vadd.f32 %v161, %v218
  %v233 = vadd.f32 %v162, %v218
  %v234 = vadd.f32 %v163, %v218
  %v235 = vadd.f32 %v164, %v218
  %v236 = vadd.f32 %v165, %v218
  %v237 = vadd.f32 %v166, %v218
  %v238 = vadd.f32 %v167, %v218
  %v239 = vadd.f32 %v168, %v218
  %v240 = vadd.f32 %v169, %v218
  %v241 = vadd.f32 %v170, %v218
  %v242 = vadd.f32 %v171, %v218
  %v243 = vadd.f32 %v172, %v218
  %v244 = vadd.f32 %v173, %v218
  %v245 = vadd.f32 %v174, %v218
  %v246 = vadd.f32 %v175, %v218
  %v247 = vadd.f32 %v176, %v218
  %v248 = vadd.f32 %v177, %v218
  %v249 = vadd.f32 %v178, %v218
  %v250 = vadd.f32 %v179, %v218
  %v251 = vadd.f32 %v180, %v218
  %v252 = vadd.f32 %v181, %v218
  %v253 = vadd.f32 %v182, %v218
  %v254 = vadd.f32 %v183, %v218
  %v255 = vadd.f32 %v184, %v218
  %v256 = vadd.f32 %v185, %v218
  %v257 = vadd.f32 %v186, %v218
  %v258 = vadd.f32 %v187, %v218
  %v259 = vadd.f32 %v188, %v218
  %v260 = vadd.f32 %v189, %v218
  %v261 = vadd.f32 %v190, %v218
  %v262 = vadd.f32 %v191, %v218
  %v263 = vadd.f32 %v192, %v218
  %v264 = vadd.f32 %v193, %v218
  %v265 = vadd.f32 %v194, %v218
  %v266 = vadd.f32 %v195, %v218
  %v267 = vadd.f32 %v196, %v218
  %v268 = vadd.f32 %v197, %v218
  %v269 = vadd.f32 %v198, %v218
  %v270 = vadd.f32 %v199, %v218
  %v271 = vadd.f32 %v200, %v218
  %v272 = vadd.f32 %v201, %v218
  %v273 = vadd.f32 %v202, %v218
  %v274 = vadd.f32 %v203, %v218
  %v275 = vadd.f32 %v204, %v218
  %v276 = vadd.f32 %v205, %v218
  %v277 = vadd.f32 %v206, %v218
  %v278 = vadd.f32 %v207, %v218
  %v279 = vadd.f32 %v208, %v218
  %v280 = vadd.f32 %v209, %v218
  %v281 = vadd.f32 %v210, %v218
  %v282 = vadd.f32 %v211, %v218
  %v283 = vadd.f32 %v212, %v218
  %v284 = vmax.f32 %v220, 0.0
  %v285 = vmax.f32 %v221, 0.0
  %v286 = vmax.f32 %v222, 0.0
  %v287 = vmax.f32 %v223, 0.0
  %v288 = vmax.f32 %v224, 0.0
  %v289 = vmax.f32 %v225, 0.0
  %v290 = vmax.f32 %v226, 0.0
  %v291 = vmax.f32 %v227, 0.0
  %v292 = vmax.f32 %v228, 0.0
  %v293 = vmax.f32 %v229, 0.0
  %v294 = vmax.f32 %v230, 0.0
  %v295 = vmax.f32 %v231, 0.0
  %v296 = vmax.f32 %v232, 0.0
  %v297 = vmax.f32 %v233, 0.0
  %v298 = vmax.f32 %v234, 0.0
  %v299 = vmax.f32 %v235, 0.0
  %v300 = vmax.f32 %v236, 0.0
  %v301 = vmax.f32 %v237, 0.0
  %v302 = vmax.f32 %v238, 0.0
  %v303 = vmax.f32 %v239, 0.0
  %v304 = vmax.f32 %v240, 0.0
  %v305 = vmax.f32 %v241, 0.0
  %v306 = vmax.f32 %v242, 0.0
  %v307 = vmax.f32 %v243, 0.0
  %v308 = vmax.f32 %v244, 0.0
  %v309 = vmax.f32 %v245, 0.0
  %v310 = vmax.f32 %v246, 0.0
  %v311 = vmax.f32 %v247, 0.0
  %v312 = vmax.f32 %v248, 0.0
  %v313 = vmax.f32 %v249, 0.0
  %v314 = vmax.f32 %v250, 0.0
  %v315 = vmax.f32 %v251, 0.0
  %v316 = vmax.f32 %v252, 0.0
  %v317 = vmax.f32 %v253, 0.0
  %v318 = vmax.f32 %v254, 0.0
  %v319 = vmax.f32 %v255, 0.0
  %v320 = vmax.f32 %v256, 0.0
  %v321 = vmax.f32 %v257, 0.0
  %v322 = vmax.f32 %v258, 0.0
  %v323 = vmax.f32 %v259, 0.0
  %v324 = vmax.f32 %v260, 0.0
  %v325 = vmax.f32 %v261, 0.0
  %v326 = vmax.f32 %v262, 0.0
  %v327 = vmax.f32 %v263, 0.0
  %v328 = vmax.f32 %v264, 0.0
  %v329 = vmax.f32 %v265, 0.0
  %v330 = vmax.f32 %v266, 0.0
  %v331 = vmax.f32 %v267, 0.0
  %v332 = vmax.f32 %v268, 0.0
  %v333 = vmax.f32 %v269, 0.0
  %v334 = vmax.f32 %v270, 0.0
  %v335 = vmax.f32 %v271, 0.0
  %v336 = vmax.f32 %v272, 0.0
  %v337 = vmax.f32 %v273, 0.0
  %v338 = vmax.f32 %v274, 0.0
  %v339 = vmax.f32 %v275, 0.0
  %v340 = vmax.f32 %v276, 0.0
  %v341 = vmax.f32 %v277, 0.0
  %v342 = vmax.f32 %v278, 0.0
  %v343 = vmax.f32 %v279, 0.0
  %v344 = vmax.f32 %v280, 0.0
  %v345 = vmax.f32 %v281, 0.0
  %v346 = vmax.f32 %v282, 0.0
  %v347 = vmax.f32 %v283, 0.0
  %v348 = vpack.c.bf16 %v285, %v284
  %v349 = vpack.c.bf16 %v287, %v286
  %v350 = vpack.c.bf16 %v289, %v288
  %v351 = vpack.c.bf16 %v291, %v290
  %v352 = vpack.c.bf16 %v293, %v292
  %v353 = vpack.c.bf16 %v295, %v294
  %v354 = vpack.c.bf16 %v297, %v296
  %v355 = vpack.c.bf16 %v299, %v298
  %v356 = vpack.c.bf16 %v301, %v300
  %v357 = vpack.c.bf16 %v303, %v302
  %v358 = vpack.c.bf16 %v305, %v304
  %v359 = vpack.c.bf16 %v307, %v306
  %v360 = vpack.c.bf16 %v309, %v308
  %v361 = vpack.c.bf16 %v311, %v310
  %v362 = vpack.c.bf16 %v313, %v312
  %v363 = vpack.c.bf16 %v315, %v314
  %v364 = vpack.c.bf16 %v317, %v316
  %v365 = vpack.c.bf16 %v319, %v318
  %v366 = vpack.c.bf16 %v321, %v320
  %v367 = vpack.c.bf16 %v323, %v322
  %v368 = vpack.c.bf16 %v325, %v324
  %v369 = vpack.c.bf16 %v327, %v326
  %v370 = vpack.c.bf16 %v329, %v328
  %v371 = vpack.c.bf16 %v331, %v330
  %v372 = vpack.c.bf16 %v333, %v332
  %v373 = vpack.c.bf16 %v335, %v334
  %v374 = vpack.c.bf16 %v337, %v336
  %v375 = vpack.c.bf16 %v339, %v338
  %v376 = vpack.c.bf16 %v341, %v340
  %v377 = vpack.c.bf16 %v343, %v342
  %v378 = vpack.c.bf16 %v345, %v344
  %v379 = vpack.c.bf16 %v347, %v346
  %v412 = vunpack.c.l.b16 %v348
  %v413 = vunpack.c.h.b16 %v348
  %v414 = vunpack.c.l.b16 %v349
  %v415 = vunpack.c.h.b16 %v349
  %v416 = vunpack.c.l.b16 %v350
  %v417 = vunpack.c.h.b16 %v350
  %v418 = vunpack.c.l.b16 %v351
  %v419 = vunpack.c.h.b16 %v351
  %v420 = vunpack.c.l.b16 %v352
  %v421 = vunpack.c.h.b16 %v352
  %v422 = vunpack.c.l.b16 %v353
  %v423 = vunpack.c.h.b16 %v353
  %v424 = vunpack.c.l.b16 %v354
  %v425 = vunpack.c.h.b16 %v354
  %v426 = vunpack.c.l.b16 %v355
  %v427 = vunpack.c.h.b16 %v355
  %v428 = vunpack.c.l.b16 %v356
  %v429 = vunpack.c.h.b16 %v356
  %v430 = vunpack.c.l.b16 %v357
  %v431 = vunpack.c.h.b16 %v357
  %v432 = vunpack.c.l.b16 %v358
  %v433 = vunpack.c.h.b16 %v358
  %v434 = vunpack.c.l.b16 %v359
  %v435 = vunpack.c.h.b16 %v359
  %v436 = vunpack.c.l.b16 %v360
  %v437 = vunpack.c.h.b16 %v360
  %v438 = vunpack.c.l.b16 %v361
  %v439 = vunpack.c.h.b16 %v361
  %v440 = vunpack.c.l.b16 %v362
  %v441 = vunpack.c.h.b16 %v362
  %v442 = vunpack.c.l.b16 %v363
  %v443 = vunpack.c.h.b16 %v363
  %v444 = vunpack.c.l.b16 %v364
  %v445 = vunpack.c.h.b16 %v364
  %v446 = vunpack.c.l.b16 %v365
  %v447 = vunpack.c.h.b16 %v365
  %v448 = vunpack.c.l.b16 %v366
  %v449 = vunpack.c.h.b16 %v366
  %v450 = vunpack.c.l.b16 %v367
  %v451 = vunpack.c.h.b16 %v367
  %v452 = vunpack.c.l.b16 %v368
  %v453 = vunpack.c.h.b16 %v368
  %v454 = vunpack.c.l.b16 %v369
  %v455 = vunpack.c.h.b16 %v369
  %v456 = vunpack.c.l.b16 %v370
  %v457 = vunpack.c.h.b16 %v370
  %v458 = vunpack.c.l.b16 %v371
  %v459 = vunpack.c.h.b16 %v371
  %v460 = vunpack.c.l.b16 %v372
  %v461 = vunpack.c.h.b16 %v372
  %v462 = vunpack.c.l.b16 %v373
  %v463 = vunpack.c.h.b16 %v373
  %v464 = vunpack.c.l.b16 %v374
  %v465 = vunpack.c.h.b16 %v374
  %v466 = vunpack.c.l.b16 %v375
  %v467 = vunpack.c.h.b16 %v375
  %v468 = vunpack.c.l.b16 %v376
  %v469 = vunpack.c.h.b16 %v376
  %v470 = vunpack.c.l.b16 %v377
  %v471 = vunpack.c.h.b16 %v377
  %v472 = vunpack.c.l.b16 %v378
  %v473 = vunpack.c.h.b16 %v378
  %v474 = vunpack.c.l.b16 %v379
  %v475 = vunpack.c.h.b16 %v379
  %v476 = vpack.c.b16 %v412, %v412
  %v477 = vpack.c.b16 %v413, %v413
  %v478 = vpack.c.b16 %v414, %v414
  %v479 = vpack.c.b16 %v415, %v415
  %v480 = vpack.c.b16 %v416, %v416
  %v481 = vpack.c.b16 %v417, %v417
  %v482 = vpack.c.b16 %v418, %v418
  %v483 = vpack.c.b16 %v419, %v419
  %v484 = vpack.c.b16 %v420, %v420
  %v485 = vpack.c.b16 %v421, %v421
  %v486 = vpack.c.b16 %v422, %v422
  %v487 = vpack.c.b16 %v423, %v423
  %v488 = vpack.c.b16 %v424, %v424
  %v489 = vpack.c.b16 %v425, %v425
  %v490 = vpack.c.b16 %v426, %v426
  %v491 = vpack.c.b16 %v427, %v427
  %v492 = vpack.c.b16 %v428, %v428
  %v493 = vpack.c.b16 %v429, %v429
  %v494 = vpack.c.b16 %v430, %v430
  %v495 = vpack.c.b16 %v431, %v431
  %v496 = vpack.c.b16 %v432, %v432
  %v497 = vpack.c.b16 %v433, %v433
  %v498 = vpack.c.b16 %v434, %v434
  %v499 = vpack.c.b16 %v435, %v435
  %v500 = vpack.c.b16 %v436, %v436
  %v501 = vpack.c.b16 %v437, %v437
  %v502 = vpack.c.b16 %v438, %v438
  %v503 = vpack.c.b16 %v439, %v439
  %v504 = vpack.c.b16 %v440, %v440
  %v505 = vpack.c.b16 %v441, %v441
  %v506 = vpack.c.b16 %v442, %v442
  %v507 = vpack.c.b16 %v443, %v443
  %v508 = vpack.c.b16 %v444, %v444
  %v509 = vpack.c.b16 %v445, %v445
  %v510 = vpack.c.b16 %v446, %v446
  %v511 = vpack.c.b16 %v447, %v447
  %v512 = vpack.c.b16 %v448, %v448
  %v513 = vpack.c.b16 %v449, %v449
  %v514 = vpack.c.b16 %v450, %v450
  %v515 = vpack.c.b16 %v451, %v451
  %v516 = vpack.c.b16 %v452, %v452
  %v517 = vpack.c.b16 %v453, %v453
  %v518 = vpack.c.b16 %v454, %v454
  %v519 = vpack.c.b16 %v455, %v455
  %v520 = vpack.c.b16 %v456, %v456
  %v521 = vpack.c.b16 %v457, %v457
  %v522 = vpack.c.b16 %v458, %v458
  %v523 = vpack.c.b16 %v459, %v459
  %v524 = vpack.c.b16 %v460, %v460
  %v525 = vpack.c.b16 %v461, %v461
  %v526 = vpack.c.b16 %v462, %v462
  %v527 = vpack.c.b16 %v463, %v463
  %v528 = vpack.c.b16 %v464, %v464
  %v529 = vpack.c.b16 %v465, %v465
  %v530 = vpack.c.b16 %v466, %v466
  %v531 = vpack.c.b16 %v467, %v467
  %v532 = vpack.c.b16 %v468, %v468
  %v533 = vpack.c.b16 %v469, %v469
  %v534 = vpack.c.b16 %v470, %v470
  %v535 = vpack.c.b16 %v471, %v471
  %v536 = vpack.c.b16 %v472, %v472
  %v537 = vpack.c.b16 %v473, %v473
  %v538 = vpack.c.b16 %v474, %v474
  %v539 = vpack.c.b16 %v475, %v475
  %604 = vst [vmem:[%s3] sm:$0xf] %v476
  %605 = vst [vmem:[%s3 + $0x4] sm:$0xf] %v477
  %606 = vst [vmem:[%s3 + $0x8] sm:$0xf] %v478
  %607 = vst [vmem:[%s3 + $0xc] sm:$0xf] %v479
  %608 = vst [vmem:[%s3 + $0x10] sm:$0xf] %v480
  %609 = vst [vmem:[%s3 + $0x14] sm:$0xf] %v481
  %610 = vst [vmem:[%s3 + $0x18] sm:$0xf] %v482
  %611 = vst [vmem:[%s3 + $0x1c] sm:$0xf] %v483
  %612 = vst [vmem:[%s3 + $0x20] sm:$0xf] %v484
  %613 = vst [vmem:[%s3 + $0x24] sm:$0xf] %v485
  %614 = vst [vmem:[%s3 + $0x28] sm:$0xf] %v486
  %615 = vst [vmem:[%s3 + $0x2c] sm:$0xf] %v487
  %616 = vst [vmem:[%s3 + $0x30] sm:$0xf] %v488
  %617 = vst [vmem:[%s3 + $0x34] sm:$0xf] %v489
  %618 = vst [vmem:[%s3 + $0x38] sm:$0xf] %v490
  %619 = vst [vmem:[%s3 + $0x3c] sm:$0xf] %v491
  %620 = vst [vmem:[%s3 + $0x40] sm:$0xf] %v492
  %621 = vst [vmem:[%s3 + $0x44] sm:$0xf] %v493
  %622 = vst [vmem:[%s3 + $0x48] sm:$0xf] %v494
  %623 = vst [vmem:[%s3 + $0x4c] sm:$0xf] %v495
  %624 = vst [vmem:[%s3 + $0x50] sm:$0xf] %v496
  %625 = vst [vmem:[%s3 + $0x54] sm:$0xf] %v497
  %626 = vst [vmem:[%s3 + $0x58] sm:$0xf] %v498
  %627 = vst [vmem:[%s3 + $0x5c] sm:$0xf] %v499
  %628 = vst [vmem:[%s3 + $0x60] sm:$0xf] %v500
  %629 = vst [vmem:[%s3 + $0x64] sm:$0xf] %v501
  %630 = vst [vmem:[%s3 + $0x68] sm:$0xf] %v502
  %631 = vst [vmem:[%s3 + $0x6c] sm:$0xf] %v503
  %632 = vst [vmem:[%s3 + $0x70] sm:$0xf] %v504
  %633 = vst [vmem:[%s3 + $0x74] sm:$0xf] %v505
  %634 = vst [vmem:[%s3 + $0x78] sm:$0xf] %v506
  %635 = vst [vmem:[%s3 + $0x7c] sm:$0xf] %v507
  %636 = vst [vmem:[%s3 + $0x80] sm:$0xf] %v508
  %637 = vst [vmem:[%s3 + $0x84] sm:$0xf] %v509
  %638 = vst [vmem:[%s3 + $0x88] sm:$0xf] %v510
  %639 = vst [vmem:[%s3 + $0x8c] sm:$0xf] %v511
  %640 = vst [vmem:[%s3 + $0x90] sm:$0xf] %v512
  %641 = vst [vmem:[%s3 + $0x94] sm:$0xf] %v513
  %642 = vst [vmem:[%s3 + $0x98] sm:$0xf] %v514
  %643 = vst [vmem:[%s3 + $0x9c] sm:$0xf] %v515
  %644 = vst [vmem:[%s3 + $0xa0] sm:$0xf] %v516
  %645 = vst [vmem:[%s3 + $0xa4] sm:$0xf] %v517
  %646 = vst [vmem:[%s3 + $0xa8] sm:$0xf] %v518
  %647 = vst [vmem:[%s3 + $0xac] sm:$0xf] %v519
  %648 = vst [vmem:[%s3 + $0xb0] sm:$0xf] %v520
  %649 = vst [vmem:[%s3 + $0xb4] sm:$0xf] %v521
  %650 = vst [vmem:[%s3 + $0xb8] sm:$0xf] %v522
  %651 = vst [vmem:[%s3 + $0xbc] sm:$0xf] %v523
  %652 = vst [vmem:[%s3 + $0xc0] sm:$0xf] %v524
  %653 = vst [vmem:[%s3 + $0xc4] sm:$0xf] %v525
  %654 = vst [vmem:[%s3 + $0xc8] sm:$0xf] %v526
  %655 = vst [vmem:[%s3 + $0xcc] sm:$0xf] %v527
  %656 = vst [vmem:[%s3 + $0xd0] sm:$0xf] %v528
  %657 = vst [vmem:[%s3 + $0xd4] sm:$0xf] %v529
  %658 = vst [vmem:[%s3 + $0xd8] sm:$0xf] %v530
  %659 = vst [vmem:[%s3 + $0xdc] sm:$0xf] %v531
  %660 = vst [vmem:[%s3 + $0xe0] sm:$0xf] %v532
  %661 = vst [vmem:[%s3 + $0xe4] sm:$0xf] %v533
  %662 = vst [vmem:[%s3 + $0xe8] sm:$0xf] %v534
  %663 = vst [vmem:[%s3 + $0xec] sm:$0xf] %v535
  %664 = vst [vmem:[%s3 + $0xf0] sm:$0xf] %v536
  %665 = vst [vmem:[%s3 + $0xf4] sm:$0xf] %v537
  %666 = vst [vmem:[%s3 + $0xf8] sm:$0xf] %v538
  %667 = vst [vmem:[%s3 + $0xfc] sm:$0xf] %v539
  // Predicated region
  $region14: #{gcn_forward.8} parent=0 // pred_check
    _
  $region15: #{gcn_forward.8} parent=0 // pred_check_branch
    %669 = sbr.rel (0) target = $region17
  $region16: #{gcn_forward.8} parent=0 // pred_region
    _
  $region17: #{gcn_forward.8} parent=0 // pred_fallthru
    _
  // Predicated region
  $region18: #{gcn_forward.8} parent=0 // pred_check
    _
  $region19: #{gcn_forward.8} parent=0 // pred_check_branch
    %671 = sbr.rel (0) target = $region21
  $region20: #{gcn_forward.8} parent=0 // pred_region
    _
  $region21: #{gcn_forward.8} parent=0 // pred_fallthru
    _

// kernel: gcn_forward.6
$region0: #{gcn_forward.6}
  #allocation0 [shape = 'u32[]', space=smem, size = 0x4, offset = 0x4, fixed_abs, tag = 'smem constant byte address 0x4 - core index']
  #allocation1 [shape = 'u32[144,128]{1,0:T(1,128)}', space=vmem, size = 0x12000, scoped, tag = 'internal scratch']
  #allocation2 [shape = 'f32[256,128]{1,0:T(8,128)}', space=vmem, size = 0x20000, scoped, tag = 'scratch operand']
  %s0 = inlined_call_operand.vmem [shape: bf16[512,256], index: 0, kind: input, shape index: {}]
  %s1 = inlined_call_operand.vmem [shape: bf16[256,128], index: 1, kind: input, shape index: {}]
  %s2 = inlined_call_operand.vmem [shape: bf16[512,128], index: 2, kind: output, shape index: {}]
  %s3 = sld [smem:[#allocation0]]
  $region49: #{gcn_forward.6} parent=0
    _
  %s5 = ssub.s32 1, %s3
  %s6 = scalar_select 0, %s5, %s3
  loop: start=0, step=1, limit=4
  $region2: #{gcn_forward.6} parent=0 // loop_pre_header
    _
  $region3: #{gcn_forward.6} parent=0 // loop_header
    %s8 = sphi 0, %s12
    %p9 = scmp.ge.s32.totalorder %s8, 4
    %s15 = sphi 0, %s34
    %s16 = sphi 0, %s30
    %s17 = sphi 0, %s26
    %s18 = sphi 0, %s15
    %s19 = sphi 0, %s16
    %s20 = sphi 0, %s17
    %s21 = sphi 0, %s18
    %s22 = sphi 0, %s19
    %s23 = sphi 0, %s20
    %s39 = sphi 0, %s41
    %s42 = sphi 0, %s39
    %s43 = sphi 0, %s42
    %s59 = sphi 0, %s43
    %s67 = sphi 0, %s69
    %s70 = sphi 0, %s67
    %s71 = sphi 0, %s70
    %s87 = sphi 0, %s71
    %s95 = sphi 0, %s97
    %s98 = sphi 0, %s95
    %s99 = sphi 0, %s98
    %s115 = sphi 0, %s99
  $region4: #{gcn_forward.6} parent=0 // loop_header_branch
    %11 = sbr.rel (%p9) target = $region8
  $region5: #{gcn_forward.6} parent=0 // loop_body
    %s13 = ssub.s32 %s8, 1
    %s14 = ssub.s32 %s8, 2
    %s24 = sadd.s32 1, %s17
    %p25 = scmp.ge.s32.totalorder %s24, 1
    %s26 = scalar_select %p25, 0, %s24
    %s27 = sadd.s32 1, %s16
    %s28 = scalar_select %p25, %s27, %s16
    %p29 = scmp.ge.s32.totalorder %s28, 1
    %s30 = scalar_select %p29, 0, %s28
    %s31 = sadd.s32 1, %s15
    %s32 = scalar_select %p29, %s31, %s15
    %p33 = scmp.ge.s32.totalorder %s32, 2
    %s34 = scalar_select %p33, 0, %s32
    %s35 = ssub.s32 %s15, %s34
    %s36 = ssub.s32 %s17, %s26
    %s37 = sor.u32 %s35, %s36
    %p38 = scmp.eq.s32.totalorder %s37, 0
    %s40 = sadd.s32 %s39, 1
    %s41 = scalar_select %p38, %s39, %s40
    %p44 = pneg %p38
    %p45 = scmp.eq.s32.totalorder %s8, 1
    %p46 = por %p44, %p45
    %p47 = scmp.ne.s32.totalorder %s39, %s42
    %p48 = scmp.eq.s32.totalorder %s8, 0
    %p49 = por %p47, %p48
    %p50 = scmp.ne.s32.totalorder %s39, %s42
    %p51 = scmp.eq.s32.totalorder %s13, 1
    %p52 = por %p50, %p51
    %p53 = scmp.ne.s32.totalorder %s42, %s43
    %p54 = scmp.eq.s32.totalorder %s13, 0
    %p55 = por %p53, %p54
    %p56 = scmp.ne.s32.totalorder %s42, %s43
    %p57 = scmp.eq.s32.totalorder %s14, 1
    %p58 = por %p56, %p57
    %p60 = scmp.ne.s32.totalorder %s43, %s59
    %p61 = scmp.eq.s32.totalorder %s14, 0
    %p62 = por %p60, %p61
    %s63 = ssub.s32 %s17, %s26
    %s64 = ssub.s32 %s16, %s30
    %s65 = sor.u32 %s63, %s64
    %p66 = scmp.eq.s32.totalorder %s65, 0
    %s68 = sadd.s32 %s67, 1
    %s69 = scalar_select %p66, %s67, %s68
    %p72 = pneg %p66
    %p73 = scmp.eq.s32.totalorder %s8, 1
    %p74 = por %p72, %p73
    %p75 = scmp.ne.s32.totalorder %s67, %s70
    %p76 = scmp.eq.s32.totalorder %s8, 0
    %p77 = por %p75, %p76
    %p78 = scmp.ne.s32.totalorder %s67, %s70
    %p79 = scmp.eq.s32.totalorder %s13, 1
    %p80 = por %p78, %p79
    %p81 = scmp.ne.s32.totalorder %s70, %s71
    %p82 = scmp.eq.s32.totalorder %s13, 0
    %p83 = por %p81, %p82
    %p84 = scmp.ne.s32.totalorder %s70, %s71
    %p85 = scmp.eq.s32.totalorder %s14, 1
    %p86 = por %p84, %p85
    %p88 = scmp.ne.s32.totalorder %s71, %s87
    %p89 = scmp.eq.s32.totalorder %s14, 0
    %p90 = por %p88, %p89
    %s91 = ssub.s32 %s15, %s34
    %s92 = ssub.s32 %s16, %s30
    %s93 = sor.u32 %s91, %s92
    %p94 = scmp.eq.s32.totalorder %s93, 0
    %s96 = sadd.s32 %s95, 1
    %s97 = scalar_select %p94, %s95, %s96
    %p100 = pneg %p94
    %p101 = scmp.eq.s32.totalorder %s8, 1
    %p102 = por %p100, %p101
    %p103 = scmp.ne.s32.totalorder %s95, %s98
    %p104 = scmp.eq.s32.totalorder %s8, 0
    %p105 = por %p103, %p104
    %p106 = scmp.ne.s32.totalorder %s95, %s98
    %p107 = scmp.eq.s32.totalorder %s13, 1
    %p108 = por %p106, %p107
    %p109 = scmp.ne.s32.totalorder %s98, %s99
    %p110 = scmp.eq.s32.totalorder %s13, 0
    %p111 = por %p109, %p110
    %p112 = scmp.ne.s32.totalorder %s98, %s99
    %p113 = scmp.eq.s32.totalorder %s14, 1
    %p114 = por %p112, %p113
    %p116 = scmp.ne.s32.totalorder %s99, %s115
    %p117 = scmp.eq.s32.totalorder %s14, 0
    %p118 = por %p116, %p117
    %p119 = scmp.le.s32.totalorder 1, %s8
    %p120 = scmp.lt.s32.totalorder %s8, 3
    %p121 = pnand %p119, %p120
    %p122 = pneg %p121
    // Predicated region
    $region9: #{gcn_forward.6} parent=5 // pred_check
      _
    $region10: #{gcn_forward.6} parent=5 // pred_check_branch
      %124 = sbr.rel (%p121) target = $region12
    $region11: #{gcn_forward.6} parent=5 // pred_region
      %s125 = ssub.s32 %s8, 1
      // Predicated region
      $region13: #{gcn_forward.6} parent=11 // pred_check
        %p126 = pneg %p83
      $region14: #{gcn_forward.6} parent=11 // pred_check_branch
        %128 = sbr.rel (%p126) target = $region16
      $region15: #{gcn_forward.6} parent=11 // pred_region
        %s129 = smul.u32 32, %s20
        %p130 = scmp.lt.s32.totalorder %s129, 31
        %s131 = scalar_select %p130, %s129, 31
        %p132 = scmp.lt.s32.totalorder %s19, 0
        %s133 = scalar_select %p132, %s19, 0
        %s134 = sadd.s32 %s133, %s131
        %s135 = smul.addr %s134, 4
        %s136 = scalar_lea.vmem %s1, %s135
        %s137 = smul.u32 32, %s20
      $region16: #{gcn_forward.6} parent=11 // pred_fallthru
        _
    $region12: #{gcn_forward.6} parent=5 // pred_fallthru
      _
    %p138 = scmp.lt.s32.totalorder %s8, 2
    // Predicated region
    $region17: #{gcn_forward.6} parent=5 // pred_check
      %p139 = pneg %p138
    $region18: #{gcn_forward.6} parent=5 // pred_check_branch
      %141 = sbr.rel (%p139) target = $region20
    $region19: #{gcn_forward.6} parent=5 // pred_region
      // Predicated region
      $region21: #{gcn_forward.6} parent=19 // pred_check
        %p142 = pneg %p49
      $region22: #{gcn_forward.6} parent=19 // pred_check_branch
        %144 = sbr.rel (%p142) target = $region24
      $region23: #{gcn_forward.6} parent=19 // pred_region
        %s145 = smul.u32 32, %s15
        %s146 = smul.u32 2, %s17
        %p147 = scmp.lt.s32.totalorder %s145, 63
        %s148 = scalar_select %p147, %s145, 63
        %p149 = scmp.lt.s32.totalorder %s146, 1
        %s150 = scalar_select %p149, %s146, 1
        %s151 = smul.addr %s148, 2
        %s152 = sadd.s32 %s150, %s151
        %s153 = smul.addr %s152, 4
        %s154 = scalar_lea.vmem %s0, %s153
        %s155 = smul.u32 32, %s15
        %s156 = smul.u32 2, %s17
      $region24: #{gcn_forward.6} parent=19 // pred_fallthru
        _
    $region20: #{gcn_forward.6} parent=5 // pred_fallthru
      _
    %p157 = scmp.le.s32.totalorder 1, %s8
    %p158 = scmp.lt.s32.totalorder %s8, 3
    %p159 = pnand %p157, %p158
    %p160 = pneg %p159
    // Predicated region
    $region25: #{gcn_forward.6} parent=5 // pred_check
      _
    $region26: #{gcn_forward.6} parent=5 // pred_check_branch
      %162 = sbr.rel (%p159) target = $region28
    $region27: #{gcn_forward.6} parent=5 // pred_region
      %s163 = ssub.s32 %s8, 1
      %s164 = smul.u32 32, %s18
      %s165 = smul.u32 2, %s20
      %p166 = scmp.lt.s32.totalorder %s164, 63
      %s167 = scalar_select %p166, %s164, 63
      %p168 = scmp.lt.s32.totalorder %s165, 1
      %s169 = scalar_select %p168, %s165, 1
      %s170 = smul.addr %s167, 2
      %s171 = sadd.s32 %s169, %s170
      %s172 = smul.addr %s171, 4
      %s173 = scalar_lea.vmem %s0, %s172
      %p174 = pneg %p55
      %p175 = pneg %p52
      %s176 = smul.u32 32, %s20
      %p177 = scmp.lt.s32.totalorder %s176, 31
      %s178 = scalar_select %p177, %s176, 31
      %p179 = scmp.lt.s32.totalorder %s19, 0
      %s180 = scalar_select %p179, %s19, 0
      %s181 = sadd.s32 %s180, %s178
      %s182 = smul.addr %s181, 4
      %s183 = scalar_lea.vmem %s1, %s182
      %p184 = pneg %p83
      %p185 = pneg %p80
      %p186 = pneg %p111
      %p187 = pneg %p108
      %s188 = smul.u32 32, %s18
      %p189 = scmp.lt.s32.totalorder %s188, 63
      %s190 = scalar_select %p189, %s188, 63
      %p191 = scmp.lt.s32.totalorder %s19, 0
      %s192 = scalar_select %p191, %s19, 0
      %s193 = sadd.s32 %s192, %s190
      %s194 = smul.addr %s193, 4
      %s195 = scalar_lea.vmem %s2, %s194
      %s196 = smul.u32 32, %s18
      %s197 = smul.u32 2, %s20
      %p198 = scmp.lt.s32.totalorder %s196, 63
      %s199 = scalar_select %p198, %s196, 63
      %p200 = scmp.lt.s32.totalorder %s197, 1
      %s201 = scalar_select %p200, %s197, 1
      %s202 = smul.addr %s199, 2
      %s203 = sadd.s32 %s201, %s202
      %s204 = smul.addr %s203, 4
      %s205 = scalar_lea.vmem %s0, %s204
      %s206 = smul.u32 32, %s18
      %s207 = smul.u32 2, %s20
      %s208 = smul.u32 32, %s20
      %p209 = scmp.lt.s32.totalorder %s208, 31
      %s210 = scalar_select %p209, %s208, 31
      %p211 = scmp.lt.s32.totalorder %s19, 0
      %s212 = scalar_select %p211, %s19, 0
      %s213 = sadd.s32 %s212, %s210
      %s214 = smul.addr %s213, 4
      %s215 = scalar_lea.vmem %s1, %s214
      %s216 = smul.u32 32, %s20
      %s217 = smul.u32 32, %s18
      %p218 = scmp.lt.s32.totalorder %s217, 63
      %s219 = scalar_select %p218, %s217, 63
      %p220 = scmp.lt.s32.totalorder %s19, 0
      %s221 = scalar_select %p220, %s19, 0
      %s222 = sadd.s32 %s221, %s219
      %s223 = smul.addr %s222, 4
      %s224 = scalar_lea.vmem %s2, %s223
      %s225 = smul.u32 32, %s18
      %p227 = scmp.eq.s32.totalorder %s20, 0
      // Predicated region
      $region29: #{gcn_forward.6} parent=27 // pred_check
        %p228 = pneg %p227
      $region30: #{gcn_forward.6} parent=27 // pred_check_branch
        %230 = sbr.rel (%p228) target = $region32
      $region31: #{gcn_forward.6} parent=27 // pred_region
        %231 = vst [vmem:[#allocation2] sm:$0xff] 0.0
        %232 = vst [vmem:[#allocation2 + $0x8] sm:$0xff] 0.0
        %233 = vst [vmem:[#allocation2 + $0x10] sm:$0xff] 0.0
        %234 = vst [vmem:[#allocation2 + $0x18] sm:$0xff] 0.0
        %235 = vst [vmem:[#allocation2 + $0x20] sm:$0xff] 0.0
        %236 = vst [vmem:[#allocation2 + $0x28] sm:$0xff] 0.0
        %237 = vst [vmem:[#allocation2 + $0x30] sm:$0xff] 0.0
        %238 = vst [vmem:[#allocation2 + $0x38] sm:$0xff] 0.0
        %239 = vst [vmem:[#allocation2 + $0x40] sm:$0xff] 0.0
        %240 = vst [vmem:[#allocation2 + $0x48] sm:$0xff] 0.0
        %241 = vst [vmem:[#allocation2 + $0x50] sm:$0xff] 0.0
        %242 = vst [vmem:[#allocation2 + $0x58] sm:$0xff] 0.0
        %243 = vst [vmem:[#allocation2 + $0x60] sm:$0xff] 0.0
        %244 = vst [vmem:[#allocation2 + $0x68] sm:$0xff] 0.0
        %245 = vst [vmem:[#allocation2 + $0x70] sm:$0xff] 0.0
        %246 = vst [vmem:[#allocation2 + $0x78] sm:$0xff] 0.0
        %247 = vst [vmem:[#allocation2 + $0x80] sm:$0xff] 0.0
        %248 = vst [vmem:[#allocation2 + $0x88] sm:$0xff] 0.0
        %249 = vst [vmem:[#allocation2 + $0x90] sm:$0xff] 0.0
        %250 = vst [vmem:[#allocation2 + $0x98] sm:$0xff] 0.0
        %251 = vst [vmem:[#allocation2 + $0xa0] sm:$0xff] 0.0
        %252 = vst [vmem:[#allocation2 + $0xa8] sm:$0xff] 0.0
        %253 = vst [vmem:[#allocation2 + $0xb0] sm:$0xff] 0.0
        %254 = vst [vmem:[#allocation2 + $0xb8] sm:$0xff] 0.0
        %255 = vst [vmem:[#allocation2 + $0xc0] sm:$0xff] 0.0
        %256 = vst [vmem:[#allocation2 + $0xc8] sm:$0xff] 0.0
        %257 = vst [vmem:[#allocation2 + $0xd0] sm:$0xff] 0.0
        %258 = vst [vmem:[#allocation2 + $0xd8] sm:$0xff] 0.0
        %259 = vst [vmem:[#allocation2 + $0xe0] sm:$0xff] 0.0
        %260 = vst [vmem:[#allocation2 + $0xe8] sm:$0xff] 0.0
        %261 = vst [vmem:[#allocation2 + $0xf0] sm:$0xff] 0.0
        %262 = vst [vmem:[#allocation2 + $0xf8] sm:$0xff] 0.0
      $region32: #{gcn_forward.6} parent=27 // pred_fallthru
        _
      %v263 = vld [vmem:[#allocation2] sm:$0xff]
      %v264 = vld [vmem:[#allocation2 + $0x8] sm:$0xff]
      %v265 = vld [vmem:[#allocation2 + $0x10] sm:$0xff]
      %v266 = vld [vmem:[#allocation2 + $0x18] sm:$0xff]
      %v267 = vld [vmem:[#allocation2 + $0x20] sm:$0xff]
      %v268 = vld [vmem:[#allocation2 + $0x28] sm:$0xff]
      %v269 = vld [vmem:[#allocation2 + $0x30] sm:$0xff]
      %v270 = vld [vmem:[#allocation2 + $0x38] sm:$0xff]
      %v271 = vld [vmem:[#allocation2 + $0x40] sm:$0xff]
      %v272 = vld [vmem:[#allocation2 + $0x48] sm:$0xff]
      %v273 = vld [vmem:[#allocation2 + $0x50] sm:$0xff]
      %v274 = vld [vmem:[#allocation2 + $0x58] sm:$0xff]
      %v275 = vld [vmem:[#allocation2 + $0x60] sm:$0xff]
      %v276 = vld [vmem:[#allocation2 + $0x68] sm:$0xff]
      %v277 = vld [vmem:[#allocation2 + $0x70] sm:$0xff]
      %v278 = vld [vmem:[#allocation2 + $0x78] sm:$0xff]
      %v279 = vld [vmem:[#allocation2 + $0x80] sm:$0xff]
      %v280 = vld [vmem:[#allocation2 + $0x88] sm:$0xff]
      %v281 = vld [vmem:[#allocation2 + $0x90] sm:$0xff]
      %v282 = vld [vmem:[#allocation2 + $0x98] sm:$0xff]
      %v283 = vld [vmem:[#allocation2 + $0xa0] sm:$0xff]
      %v284 = vld [vmem:[#allocation2 + $0xa8] sm:$0xff]
      %v285 = vld [vmem:[#allocation2 + $0xb0] sm:$0xff]
      %v286 = vld [vmem:[#allocation2 + $0xb8] sm:$0xff]
      %v287 = vld [vmem:[#allocation2 + $0xc0] sm:$0xff]
      %v288 = vld [vmem:[#allocation2 + $0xc8] sm:$0xff]
      %v289 = vld [vmem:[#allocation2 + $0xd0] sm:$0xff]
      %v290 = vld [vmem:[#allocation2 + $0xd8] sm:$0xff]
      %v291 = vld [vmem:[#allocation2 + $0xe0] sm:$0xff]
      %v292 = vld [vmem:[#allocation2 + $0xe8] sm:$0xff]
      %v293 = vld [vmem:[#allocation2 + $0xf0] sm:$0xff]
      %v294 = vld [vmem:[#allocation2 + $0xf8] sm:$0xff]
      %v295 = vld [vmem:[%s205] sm:$0xff]
      %v296 = vld [vmem:[%s205 + $0x8] sm:$0xff]
      %v297 = vld [vmem:[%s205 + $0x10] sm:$0xff]
      %v298 = vld [vmem:[%s205 + $0x18] sm:$0xff]
      %v299 = vld [vmem:[%s205 + $0x20] sm:$0xff]
      %v300 = vld [vmem:[%s205 + $0x28] sm:$0xff]
      %v301 = vld [vmem:[%s205 + $0x30] sm:$0xff]
      %v302 = vld [vmem:[%s205 + $0x38] sm:$0xff]
      %v303 = vld [vmem:[%s205 + $0x40] sm:$0xff]
      %v304 = vld [vmem:[%s205 + $0x48] sm:$0xff]
      %v305 = vld [vmem:[%s205 + $0x50] sm:$0xff]
      %v306 = vld [vmem:[%s205 + $0x58] sm:$0xff]
      %v307 = vld [vmem:[%s205 + $0x60] sm:$0xff]
      %v308 = vld [vmem:[%s205 + $0x68] sm:$0xff]
      %v309 = vld [vmem:[%s205 + $0x70] sm:$0xff]
      %v310 = vld [vmem:[%s205 + $0x78] sm:$0xff]
      %v311 = vld [vmem:[%s205 + $0x80] sm:$0xff]
      %v312 = vld [vmem:[%s205 + $0x88] sm:$0xff]
      %v313 = vld [vmem:[%s205 + $0x90] sm:$0xff]
      %v314 = vld [vmem:[%s205 + $0x98] sm:$0xff]
      %v315 = vld [vmem:[%s205 + $0xa0] sm:$0xff]
      %v316 = vld [vmem:[%s205 + $0xa8] sm:$0xff]
      %v317 = vld [vmem:[%s205 + $0xb0] sm:$0xff]
      %v318 = vld [vmem:[%s205 + $0xb8] sm:$0xff]
      %v319 = vld [vmem:[%s205 + $0xc0] sm:$0xff]
      %v320 = vld [vmem:[%s205 + $0xc8] sm:$0xff]
      %v321 = vld [vmem:[%s205 + $0xd0] sm:$0xff]
      %v322 = vld [vmem:[%s205 + $0xd8] sm:$0xff]
      %v323 = vld [vmem:[%s205 + $0xe0] sm:$0xff]
      %v324 = vld [vmem:[%s205 + $0xe8] sm:$0xff]
      %v325 = vld [vmem:[%s205 + $0xf0] sm:$0xff]
      %v326 = vld [vmem:[%s205 + $0xf8] sm:$0xff]
      %v327 = vld [vmem:[%s215] sm:$0xf]
      %v328 = vld [vmem:[%s215 + $0x4] sm:$0xf]
      %v329 = vld [vmem:[%s215 + $0x8] sm:$0xf]
      %v330 = vld [vmem:[%s215 + $0xc] sm:$0xf]
      %v331 = vld [vmem:[%s215 + $0x10] sm:$0xf]
      %v332 = vld [vmem:[%s215 + $0x14] sm:$0xf]
      %v333 = vld [vmem:[%s215 + $0x18] sm:$0xf]
      %v334 = vld [vmem:[%s215 + $0x1c] sm:$0xf]
      %v335 = vld [vmem:[%s215 + $0x20] sm:$0xf]
      %v336 = vld [vmem:[%s215 + $0x24] sm:$0xf]
      %v337 = vld [vmem:[%s215 + $0x28] sm:$0xf]
      %v338 = vld [vmem:[%s215 + $0x2c] sm:$0xf]
      %v339 = vld [vmem:[%s215 + $0x30] sm:$0xf]
      %v340 = vld [vmem:[%s215 + $0x34] sm:$0xf]
      %v341 = vld [vmem:[%s215 + $0x38] sm:$0xf]
      %v342 = vld [vmem:[%s215 + $0x3c] sm:$0xf]
      %v343 = vld [vmem:[%s215 + $0x40] sm:$0xf]
      %v344 = vld [vmem:[%s215 + $0x44] sm:$0xf]
      %v345 = vld [vmem:[%s215 + $0x48] sm:$0xf]
      %v346 = vld [vmem:[%s215 + $0x4c] sm:$0xf]
      %v347 = vld [vmem:[%s215 + $0x50] sm:$0xf]
      %v348 = vld [vmem:[%s215 + $0x54] sm:$0xf]
      %v349 = vld [vmem:[%s215 + $0x58] sm:$0xf]
      %v350 = vld [vmem:[%s215 + $0x5c] sm:$0xf]
      %v351 = vld [vmem:[%s215 + $0x60] sm:$0xf]
      %v352 = vld [vmem:[%s215 + $0x64] sm:$0xf]
      %v353 = vld [vmem:[%s215 + $0x68] sm:$0xf]
      %v354 = vld [vmem:[%s215 + $0x6c] sm:$0xf]
      %v355 = vld [vmem:[%s215 + $0x70] sm:$0xf]
      %v356 = vld [vmem:[%s215 + $0x74] sm:$0xf]
      %v357 = vld [vmem:[%s215 + $0x78] sm:$0xf]
      %v358 = vld [vmem:[%s215 + $0x7c] sm:$0xf]
      %v391 = vunpack.c.l.b16 %v295
      %v392 = vunpack.c.h.b16 %v295
      %v393 = vunpack.c.l.b16 %v296
      %v394 = vunpack.c.h.b16 %v296
      %v395 = vunpack.c.l.b16 %v297
      %v396 = vunpack.c.h.b16 %v297
      %v397 = vunpack.c.l.b16 %v298
      %v398 = vunpack.c.h.b16 %v298
      %v399 = vunpack.c.l.b16 %v299
      %v400 = vunpack.c.h.b16 %v299
      %v401 = vunpack.c.l.b16 %v300
      %v402 = vunpack.c.h.b16 %v300
      %v403 = vunpack.c.l.b16 %v301
      %v404 = vunpack.c.h.b16 %v301
      %v405 = vunpack.c.l.b16 %v302
      %v406 = vunpack.c.h.b16 %v302
      %v407 = vunpack.c.l.b16 %v303
      %v408 = vunpack.c.h.b16 %v303
      %v409 = vunpack.c.l.b16 %v304
      %v410 = vunpack.c.h.b16 %v304
      %v411 = vunpack.c.l.b16 %v305
      %v412 = vunpack.c.h.b16 %v305
      %v413 = vunpack.c.l.b16 %v306
      %v414 = vunpack.c.h.b16 %v306
      %v415 = vunpack.c.l.b16 %v307
      %v416 = vunpack.c.h.b16 %v307
      %v417 = vunpack.c.l.b16 %v308
      %v418 = vunpack.c.h.b16 %v308
      %v419 = vunpack.c.l.b16 %v309
      %v420 = vunpack.c.h.b16 %v309
      %v421 = vunpack.c.l.b16 %v310
      %v422 = vunpack.c.h.b16 %v310
      %v423 = vunpack.c.l.b16 %v311
      %v424 = vunpack.c.h.b16 %v311
      %v425 = vunpack.c.l.b16 %v312
      %v426 = vunpack.c.h.b16 %v312
      %v427 = vunpack.c.l.b16 %v313
      %v428 = vunpack.c.h.b16 %v313
      %v429 = vunpack.c.l.b16 %v314
      %v430 = vunpack.c.h.b16 %v314
      %v431 = vunpack.c.l.b16 %v315
      %v432 = vunpack.c.h.b16 %v315
      %v433 = vunpack.c.l.b16 %v316
      %v434 = vunpack.c.h.b16 %v316
      %v435 = vunpack.c.l.b16 %v317
      %v436 = vunpack.c.h.b16 %v317
      %v437 = vunpack.c.l.b16 %v318
      %v438 = vunpack.c.h.b16 %v318
      %v439 = vunpack.c.l.b16 %v319
      %v440 = vunpack.c.h.b16 %v319
      %v441 = vunpack.c.l.b16 %v320
      %v442 = vunpack.c.h.b16 %v320
      %v443 = vunpack.c.l.b16 %v321
      %v444 = vunpack.c.h.b16 %v321
      %v445 = vunpack.c.l.b16 %v322
      %v446 = vunpack.c.h.b16 %v322
      %v447 = vunpack.c.l.b16 %v323
      %v448 = vunpack.c.h.b16 %v323
      %v449 = vunpack.c.l.b16 %v324
      %v450 = vunpack.c.h.b16 %v324
      %v451 = vunpack.c.l.b16 %v325
      %v452 = vunpack.c.h.b16 %v325
      %v453 = vunpack.c.l.b16 %v326
      %v454 = vunpack.c.h.b16 %v326
      %v455 = vpack.c.b16 %v393, %v391
      %v456 = vpack.c.b16 %v394, %v392
      %v457 = vpack.c.b16 %v397, %v395
      %v458 = vpack.c.b16 %v398, %v396
      %v459 = vpack.c.b16 %v401, %v399
      %v460 = vpack.c.b16 %v402, %v400
      %v461 = vpack.c.b16 %v405, %v403
      %v462 = vpack.c.b16 %v406, %v404
      %v463 = vpack.c.b16 %v409, %v407
      %v464 = vpack.c.b16 %v410, %v408
      %v465 = vpack.c.b16 %v413, %v411
      %v466 = vpack.c.b16 %v414, %v412
      %v467 = vpack.c.b16 %v417, %v415
      %v468 = vpack.c.b16 %v418, %v416
      %v469 = vpack.c.b16 %v421, %v419
      %v470 = vpack.c.b16 %v422, %v420
      %v471 = vpack.c.b16 %v425, %v423
      %v472 = vpack.c.b16 %v426, %v424
      %v473 = vpack.c.b16 %v429, %v427
      %v474 = vpack.c.b16 %v430, %v428
      %v475 = vpack.c.b16 %v433, %v431
      %v476 = vpack.c.b16 %v434, %v432
      %v477 = vpack.c.b16 %v437, %v435
      %v478 = vpack.c.b16 %v438, %v436
      %v479 = vpack.c.b16 %v441, %v439
      %v480 = vpack.c.b16 %v442, %v440
      %v481 = vpack.c.b16 %v445, %v443
      %v482 = vpack.c.b16 %v446, %v444
      %v483 = vpack.c.b16 %v449, %v447
      %v484 = vpack.c.b16 %v450, %v448
      %v485 = vpack.c.b16 %v453, %v451
      %v486 = vpack.c.b16 %v454, %v452
      %v551 = vunpack.c.l.b16 %v327
      %v552 = vunpack.c.l.b16 %v328
      %v553 = vunpack.c.l.b16 %v329
      %v554 = vunpack.c.l.b16 %v330
      %v555 = vunpack.c.l.b16 %v331
      %v556 = vunpack.c.l.b16 %v332
      %v557 = vunpack.c.l.b16 %v333
      %v558 = vunpack.c.l.b16 %v334
      %v559 = vunpack.c.l.b16 %v335
      %v560 = vunpack.c.l.b16 %v336
      %v561 = vunpack.c.l.b16 %v337
      %v562 = vunpack.c.l.b16 %v338
      %v563 = vunpack.c.l.b16 %v339
      %v564 = vunpack.c.l.b16 %v340
      %v565 = vunpack.c.l.b16 %v341
      %v566 = vunpack.c.l.b16 %v342
      %v567 = vunpack.c.l.b16 %v343
      %v568 = vunpack.c.l.b16 %v344
      %v569 = vunpack.c.l.b16 %v345
      %v570 = vunpack.c.l.b16 %v346
      %v571 = vunpack.c.l.b16 %v347
      %v572 = vunpack.c.l.b16 %v348
      %v573 = vunpack.c.l.b16 %v349
      %v574 = vunpack.c.l.b16 %v350
      %v575 = vunpack.c.l.b16 %v351
      %v576 = vunpack.c.l.b16 %v352
      %v577 = vunpack.c.l.b16 %v353
      %v578 = vunpack.c.l.b16 %v354
      %v579 = vunpack.c.l.b16 %v355
      %v580 = vunpack.c.l.b16 %v356
      %v581 = vunpack.c.l.b16 %v357
      %v582 = vunpack.c.l.b16 %v358
      %v583 = vpack.c.b16 %v552, %v551
      %v584 = vpack.c.b16 %v554, %v553
      %v585 = vpack.c.b16 %v556, %v555
      %v586 = vpack.c.b16 %v558, %v557
      %v587 = vpack.c.b16 %v560, %v559
      %v588 = vpack.c.b16 %v562, %v561
      %v589 = vpack.c.b16 %v564, %v563
      %v590 = vpack.c.b16 %v566, %v565
      %v591 = vpack.c.b16 %v568, %v567
      %v592 = vpack.c.b16 %v570, %v569
      %v593 = vpack.c.b16 %v572, %v571
      %v594 = vpack.c.b16 %v574, %v573
      %v595 = vpack.c.b16 %v576, %v575
      %v596 = vpack.c.b16 %v578, %v577
      %v597 = vpack.c.b16 %v580, %v579
      %v598 = vpack.c.b16 %v582, %v581
      %615 = vmatprep.subr.bf16.mxu0 0
      %616 = vmatpush1.bf16.msra.mxu0 %v590
      %617 = vmatprep.subr.bf16.mxu0 0
      %618 = vmatpush1.bf16.msra.mxu0 %v589
      %619 = vmatprep.subr.bf16.mxu0 0
      %620 = vmatpush1.bf16.msra.mxu0 %v588
      %621 = vmatprep.subr.bf16.mxu0 0
      %622 = vmatpush1.bf16.msra.mxu0 %v587
      %623 = vmatprep.subr.bf16.mxu0 0
      %624 = vmatpush1.bf16.msra.mxu0 %v586
      %625 = vmatprep.subr.bf16.mxu0 0
      %626 = vmatpush1.bf16.msra.mxu0 %v585
      %627 = vmatprep.subr.bf16.mxu0 0
      %628 = vmatpush1.bf16.msra.mxu0 %v584
      %629 = vmatprep.subr.bf16.mxu0 0
      %630 = vmatpush1.bf16.msra.mxu0 %v583
      %631 = vmatprep.subr.bf16.mxu0 0
      %632 = vmatpush2.bf16.msra.mxu0 %v598
      %633 = vmatprep.subr.bf16.mxu0 0
      %634 = vmatpush2.bf16.msra.mxu0 %v597
      %635 = vmatprep.subr.bf16.mxu0 0
      %636 = vmatpush2.bf16.msra.mxu0 %v596
      %637 = vmatprep.subr.bf16.mxu0 0
      %638 = vmatpush2.bf16.msra.mxu0 %v595
      %639 = vmatprep.subr.bf16.mxu0 0
      %640 = vmatpush2.bf16.msra.mxu0 %v594
      %641 = vmatprep.subr.bf16.mxu0 0
      %642 = vmatpush2.bf16.msra.mxu0 %v593
      %643 = vmatprep.subr.bf16.mxu0 0
      %644 = vmatpush2.bf16.msra.mxu0 %v592
      %645 = vmatprep.subr.bf16.mxu0 0
      %646 = vmatpush2.bf16.msra.mxu0 %v591
      %647 = vmatprep.mubr.bf16.mxu0 %v456
      %648 = vmatmul.mubr.bf16.gmra.mxu0 %v455
      %v649 = vpop.f32.mrf.mxu0
      %v650 = vadd.f32 0.0, %v649
      %v651 = vpop.f32.mrf.mxu0
      %v652 = vpop.f32.mrf.mxu0
      %v653 = vadd.f32 0.0, %v652
      %v654 = vpop.f32.mrf.mxu0
      %655 = vmatprep.mubr.bf16.mxu0 %v458
      %656 = vmatmul.mubr.bf16.gmra.mxu0 %v457
      %v657 = vpop.f32.mrf.mxu0
      %v658 = vadd.f32 0.0, %v657
      %v659 = vpop.f32.mrf.mxu0
      %v660 = vpop.f32.mrf.mxu0
      %v661 = vadd.f32 0.0, %v660
      %v662 = vpop.f32.mrf.mxu0
      %663 = vmatprep.mubr.bf16.mxu0 %v460
      %664 = vmatmul.mubr.bf16.gmra.mxu0 %v459
      %v665 = vpop.f32.mrf.mxu0
      %v666 = vadd.f32 0.0, %v665
      %v667 = vpop.f32.mrf.mxu0
      %v668 = vpop.f32.mrf.mxu0
      %v669 = vadd.f32 0.0, %v668
      %v670 = vpop.f32.mrf.mxu0
      %671 = vmatprep.mubr.bf16.mxu0 %v462
      %672 = vmatmul.mubr.bf16.gmra.mxu0 %v461
      %v673 = vpop.f32.mrf.mxu0
      %v674 = vadd.f32 0.0, %v673
      %v675 = vpop.f32.mrf.mxu0
      %v676 = vpop.f32.mrf.mxu0
      %v677 = vadd.f32 0.0, %v676
      %v678 = vpop.f32.mrf.mxu0
      %679 = vmatprep.mubr.bf16.mxu0 %v464
      %680 = vmatmul.mubr.bf16.gmra.mxu0 %v463
      %v681 = vpop.f32.mrf.mxu0
      %v682 = vadd.f32 0.0, %v681
      %v683 = vpop.f32.mrf.mxu0
      %v684 = vpop.f32.mrf.mxu0
      %v685 = vadd.f32 0.0, %v684
      %v686 = vpop.f32.mrf.mxu0
      %687 = vmatprep.mubr.bf16.mxu0 %v466
      %688 = vmatmul.mubr.bf16.gmra.mxu0 %v465
      %v689 = vpop.f32.mrf.mxu0
      %v690 = vadd.f32 0.0, %v689
      %v691 = vpop.f32.mrf.mxu0
      %v692 = vpop.f32.mrf.mxu0
      %v693 = vadd.f32 0.0, %v692
      %v694 = vpop.f32.mrf.mxu0
      %695 = vmatprep.mubr.bf16.mxu0 %v468
      %696 = vmatmul.mubr.bf16.gmra.mxu0 %v467
      %v697 = vpop.f32.mrf.mxu0
      %v698 = vadd.f32 0.0, %v697
      %v699 = vpop.f32.mrf.mxu0
      %v700 = vpop.f32.mrf.mxu0
      %v701 = vadd.f32 0.0, %v700
      %v702 = vpop.f32.mrf.mxu0
      %703 = vmatprep.mubr.bf16.mxu0 %v470
      %704 = vmatmul.mubr.bf16.gmra.mxu0 %v469
      %v705 = vpop.f32.mrf.mxu0
      %v706 = vadd.f32 0.0, %v705
      %v707 = vpop.f32.mrf.mxu0
      %v708 = vpop.f32.mrf.mxu0
      %v709 = vadd.f32 0.0, %v708
      %v710 = vpop.f32.mrf.mxu0
      %711 = vmatprep.mubr.bf16.mxu0 %v472
      %712 = vmatmul.mubr.bf16.gmra.mxu0 %v471
      %v713 = vpop.f32.mrf.mxu0
      %v714 = vadd.f32 0.0, %v713
      %v715 = vpop.f32.mrf.mxu0
      %v716 = vpop.f32.mrf.mxu0
      %v717 = vadd.f32 0.0, %v716
      %v718 = vpop.f32.mrf.mxu0
      %719 = vmatprep.mubr.bf16.mxu0 %v474
      %720 = vmatmul.mubr.bf16.gmra.mxu0 %v473
      %v721 = vpop.f32.mrf.mxu0
      %v722 = vadd.f32 0.0, %v721
      %v723 = vpop.f32.mrf.mxu0
      %v724 = vpop.f32.mrf.mxu0
      %v725 = vadd.f32 0.0, %v724
      %v726 = vpop.f32.mrf.mxu0
      %727 = vmatprep.mubr.bf16.mxu0 %v476
      %728 = vmatmul.mubr.bf16.gmra.mxu0 %v475
      %v729 = vpop.f32.mrf.mxu0
      %v730 = vadd.f32 0.0, %v729
      %v731 = vpop.f32.mrf.mxu0
      %v732 = vpop.f32.mrf.mxu0
      %v733 = vadd.f32 0.0, %v732
      %v734 = vpop.f32.mrf.mxu0
      %735 = vmatprep.mubr.bf16.mxu0 %v478
      %736 = vmatmul.mubr.bf16.gmra.mxu0 %v477
      %v737 = vpop.f32.mrf.mxu0
      %v738 = vadd.f32 0.0, %v737
      %v739 = vpop.f32.mrf.mxu0
      %v740 = vpop.f32.mrf.mxu0
      %v741 = vadd.f32 0.0, %v740
      %v742 = vpop.f32.mrf.mxu0
      %743 = vmatprep.mubr.bf16.mxu0 %v480
      %744 = vmatmul.mubr.bf16.gmra.mxu0 %v479
      %v745 = vpop.f32.mrf.mxu0
      %v746 = vadd.f32 0.0, %v745
      %v747 = vpop.f32.mrf.mxu0
      %v748 = vpop.f32.mrf.mxu0
      %v749 = vadd.f32 0.0, %v748
      %v750 = vpop.f32.mrf.mxu0
      %751 = vmatprep.mubr.bf16.mxu0 %v482
      %752 = vmatmul.mubr.bf16.gmra.mxu0 %v481
      %v753 = vpop.f32.mrf.mxu0
      %v754 = vadd.f32 0.0, %v753
      %v755 = vpop.f32.mrf.mxu0
      %v756 = vpop.f32.mrf.mxu0
      %v757 = vadd.f32 0.0, %v756
      %v758 = vpop.f32.mrf.mxu0
      %759 = vmatprep.mubr.bf16.mxu0 %v484
      %760 = vmatmul.mubr.bf16.gmra.mxu0 %v483
      %v761 = vpop.f32.mrf.mxu0
      %v762 = vadd.f32 0.0, %v761
      %v763 = vpop.f32.mrf.mxu0
      %v764 = vpop.f32.mrf.mxu0
      %v765 = vadd.f32 0.0, %v764
      %v766 = vpop.f32.mrf.mxu0
      %767 = vmatprep.mubr.bf16.mxu0 %v486
      %768 = vmatmul.mubr.bf16.gmra.mxu0 %v485
      %v769 = vpop.f32.mrf.mxu0
      %v770 = vadd.f32 0.0, %v769
      %v771 = vpop.f32.mrf.mxu0
      %v772 = vpop.f32.mrf.mxu0
      %v773 = vadd.f32 0.0, %v772
      %v774 = vpop.f32.mrf.mxu0
      %775 = vdwg.mxu0
      %v776 = vadd.f32 %v263, %v650
      %v777 = vadd.f32 %v264, %v653
      %v778 = vadd.f32 %v265, %v658
      %v779 = vadd.f32 %v266, %v661
      %v780 = vadd.f32 %v267, %v666
      %v781 = vadd.f32 %v268, %v669
      %v782 = vadd.f32 %v269, %v674
      %v783 = vadd.f32 %v270, %v677
      %v784 = vadd.f32 %v271, %v682
      %v785 = vadd.f32 %v272, %v685
      %v786 = vadd.f32 %v273, %v690
      %v787 = vadd.f32 %v274, %v693
      %v788 = vadd.f32 %v275, %v698
      %v789 = vadd.f32 %v276, %v701
      %v790 = vadd.f32 %v277, %v706
      %v791 = vadd.f32 %v278, %v709
      %v792 = vadd.f32 %v279, %v714
      %v793 = vadd.f32 %v280, %v717
      %v794 = vadd.f32 %v281, %v722
      %v795 = vadd.f32 %v282, %v725
      %v796 = vadd.f32 %v283, %v730
      %v797 = vadd.f32 %v284, %v733
      %v798 = vadd.f32 %v285, %v738
      %v799 = vadd.f32 %v286, %v741
      %v800 = vadd.f32 %v287, %v746
      %v801 = vadd.f32 %v288, %v749
      %v802 = vadd.f32 %v289, %v754
      %v803 = vadd.f32 %v290, %v757
      %v804 = vadd.f32 %v291, %v762
      %v805 = vadd.f32 %v292, %v765
      %v806 = vadd.f32 %v293, %v770
      %v807 = vadd.f32 %v294, %v773
      %808 = vst [vmem:[#allocation2] sm:$0xff] %v776
      %809 = vst [vmem:[#allocation2 + $0x8] sm:$0xff] %v777
      %810 = vst [vmem:[#allocation2 + $0x10] sm:$0xff] %v778
      %811 = vst [vmem:[#allocation2 + $0x18] sm:$0xff] %v779
      %812 = vst [vmem:[#allocation2 + $0x20] sm:$0xff] %v780
      %813 = vst [vmem:[#allocation2 + $0x28] sm:$0xff] %v781
      %814 = vst [vmem:[#allocation2 + $0x30] sm:$0xff] %v782
      %815 = vst [vmem:[#allocation2 + $0x38] sm:$0xff] %v783
      %816 = vst [vmem:[#allocation2 + $0x40] sm:$0xff] %v784
      %817 = vst [vmem:[#allocation2 + $0x48] sm:$0xff] %v785
      %818 = vst [vmem:[#allocation2 + $0x50] sm:$0xff] %v786
      %819 = vst [vmem:[#allocation2 + $0x58] sm:$0xff] %v787
      %820 = vst [vmem:[#allocation2 + $0x60] sm:$0xff] %v788
      %821 = vst [vmem:[#allocation2 + $0x68] sm:$0xff] %v789
      %822 = vst [vmem:[#allocation2 + $0x70] sm:$0xff] %v790
      %823 = vst [vmem:[#allocation2 + $0x78] sm:$0xff] %v791
      %824 = vst [vmem:[#allocation2 + $0x80] sm:$0xff] %v792
      %825 = vst [vmem:[#allocation2 + $0x88] sm:$0xff] %v793
      %826 = vst [vmem:[#allocation2 + $0x90] sm:$0xff] %v794
      %827 = vst [vmem:[#allocation2 + $0x98] sm:$0xff] %v795
      %828 = vst [vmem:[#allocation2 + $0xa0] sm:$0xff] %v796
      %829 = vst [vmem:[#allocation2 + $0xa8] sm:$0xff] %v797
      %830 = vst [vmem:[#allocation2 + $0xb0] sm:$0xff] %v798
      %831 = vst [vmem:[#allocation2 + $0xb8] sm:$0xff] %v799
      %832 = vst [vmem:[#allocation2 + $0xc0] sm:$0xff] %v800
      %833 = vst [vmem:[#allocation2 + $0xc8] sm:$0xff] %v801
      %834 = vst [vmem:[#allocation2 + $0xd0] sm:$0xff] %v802
      %835 = vst [vmem:[#allocation2 + $0xd8] sm:$0xff] %v803
      %836 = vst [vmem:[#allocation2 + $0xe0] sm:$0xff] %v804
      %837 = vst [vmem:[#allocation2 + $0xe8] sm:$0xff] %v805
      %838 = vst [vmem:[#allocation2 + $0xf0] sm:$0xff] %v806
      %839 = vst [vmem:[#allocation2 + $0xf8] sm:$0xff] %v807
      // Predicated region
      $region33: #{gcn_forward.6} parent=27 // pred_check
        %p840 = pneg %p227
      $region34: #{gcn_forward.6} parent=27 // pred_check_branch
        %842 = sbr.rel (%p840) target = $region36
      $region35: #{gcn_forward.6} parent=27 // pred_region
        %v843 = vld [vmem:[#allocation2] sm:$0xff]
        %v844 = vld [vmem:[#allocation2 + $0x8] sm:$0xff]
        %v845 = vld [vmem:[#allocation2 + $0x10] sm:$0xff]
        %v846 = vld [vmem:[#allocation2 + $0x18] sm:$0xff]
        %v847 = vld [vmem:[#allocation2 + $0x20] sm:$0xff]
        %v848 = vld [vmem:[#allocation2 + $0x28] sm:$0xff]
        %v849 = vld [vmem:[#allocation2 + $0x30] sm:$0xff]
        %v850 = vld [vmem:[#allocation2 + $0x38] sm:$0xff]
        %v851 = vld [vmem:[#allocation2 + $0x40] sm:$0xff]
        %v852 = vld [vmem:[#allocation2 + $0x48] sm:$0xff]
        %v853 = vld [vmem:[#allocation2 + $0x50] sm:$0xff]
        %v854 = vld [vmem:[#allocation2 + $0x58] sm:$0xff]
        %v855 = vld [vmem:[#allocation2 + $0x60] sm:$0xff]
        %v856 = vld [vmem:[#allocation2 + $0x68] sm:$0xff]
        %v857 = vld [vmem:[#allocation2 + $0x70] sm:$0xff]
        %v858 = vld [vmem:[#allocation2 + $0x78] sm:$0xff]
        %v859 = vld [vmem:[#allocation2 + $0x80] sm:$0xff]
        %v860 = vld [vmem:[#allocation2 + $0x88] sm:$0xff]
        %v861 = vld [vmem:[#allocation2 + $0x90] sm:$0xff]
        %v862 = vld [vmem:[#allocation2 + $0x98] sm:$0xff]
        %v863 = vld [vmem:[#allocation2 + $0xa0] sm:$0xff]
        %v864 = vld [vmem:[#allocation2 + $0xa8] sm:$0xff]
        %v865 = vld [vmem:[#allocation2 + $0xb0] sm:$0xff]
        %v866 = vld [vmem:[#allocation2 + $0xb8] sm:$0xff]
        %v867 = vld [vmem:[#allocation2 + $0xc0] sm:$0xff]
        %v868 = vld [vmem:[#allocation2 + $0xc8] sm:$0xff]
        %v869 = vld [vmem:[#allocation2 + $0xd0] sm:$0xff]
        %v870 = vld [vmem:[#allocation2 + $0xd8] sm:$0xff]
        %v871 = vld [vmem:[#allocation2 + $0xe0] sm:$0xff]
        %v872 = vld [vmem:[#allocation2 + $0xe8] sm:$0xff]
        %v873 = vld [vmem:[#allocation2 + $0xf0] sm:$0xff]
        %v874 = vld [vmem:[#allocation2 + $0xf8] sm:$0xff]
        %v875 = vpack.c.bf16 %v844, %v843
        %v876 = vpack.c.bf16 %v846, %v845
        %v877 = vpack.c.bf16 %v848, %v847
        %v878 = vpack.c.bf16 %v850, %v849
        %v879 = vpack.c.bf16 %v852, %v851
        %v880 = vpack.c.bf16 %v854, %v853
        %v881 = vpack.c.bf16 %v856, %v855
        %v882 = vpack.c.bf16 %v858, %v857
        %v883 = vpack.c.bf16 %v860, %v859
        %v884 = vpack.c.bf16 %v862, %v861
        %v885 = vpack.c.bf16 %v864, %v863
        %v886 = vpack.c.bf16 %v866, %v865
        %v887 = vpack.c.bf16 %v868, %v867
        %v888 = vpack.c.bf16 %v870, %v869
        %v889 = vpack.c.bf16 %v872, %v871
        %v890 = vpack.c.bf16 %v874, %v873
        %v907 = vunpack.c.l.b16 %v875
        %v908 = vunpack.c.h.b16 %v875
        %v909 = vunpack.c.l.b16 %v876
        %v910 = vunpack.c.h.b16 %v876
        %v911 = vunpack.c.l.b16 %v877
        %v912 = vunpack.c.h.b16 %v877
        %v913 = vunpack.c.l.b16 %v878
        %v914 = vunpack.c.h.b16 %v878
        %v915 = vunpack.c.l.b16 %v879
        %v916 = vunpack.c.h.b16 %v879
        %v917 = vunpack.c.l.b16 %v880
        %v918 = vunpack.c.h.b16 %v880
        %v919 = vunpack.c.l.b16 %v881
        %v920 = vunpack.c.h.b16 %v881
        %v921 = vunpack.c.l.b16 %v882
        %v922 = vunpack.c.h.b16 %v882
        %v923 = vunpack.c.l.b16 %v883
        %v924 = vunpack.c.h.b16 %v883
        %v925 = vunpack.c.l.b16 %v884
        %v926 = vunpack.c.h.b16 %v884
        %v927 = vunpack.c.l.b16 %v885
        %v928 = vunpack.c.h.b16 %v885
        %v929 = vunpack.c.l.b16 %v886
        %v930 = vunpack.c.h.b16 %v886
        %v931 = vunpack.c.l.b16 %v887
        %v932 = vunpack.c.h.b16 %v887
        %v933 = vunpack.c.l.b16 %v888
        %v934 = vunpack.c.h.b16 %v888
        %v935 = vunpack.c.l.b16 %v889
        %v936 = vunpack.c.h.b16 %v889
        %v937 = vunpack.c.l.b16 %v890
        %v938 = vunpack.c.h.b16 %v890
        %v939 = vpack.c.b16 %v907, %v907
        %v940 = vpack.c.b16 %v908, %v908
        %v941 = vpack.c.b16 %v909, %v909
        %v942 = vpack.c.b16 %v910, %v910
        %v943 = vpack.c.b16 %v911, %v911
        %v944 = vpack.c.b16 %v912, %v912
        %v945 = vpack.c.b16 %v913, %v913
        %v946 = vpack.c.b16 %v914, %v914
        %v947 = vpack.c.b16 %v915, %v915
        %v948 = vpack.c.b16 %v916, %v916
        %v949 = vpack.c.b16 %v917, %v917
        %v950 = vpack.c.b16 %v918, %v918
        %v951 = vpack.c.b16 %v919, %v919
        %v952 = vpack.c.b16 %v920, %v920
        %v953 = vpack.c.b16 %v921, %v921
        %v954 = vpack.c.b16 %v922, %v922
        %v955 = vpack.c.b16 %v923, %v923
        %v956 = vpack.c.b16 %v924, %v924
        %v957 = vpack.c.b16 %v925, %v925
        %v958 = vpack.c.b16 %v926, %v926
        %v959 = vpack.c.b16 %v927, %v927
        %v960 = vpack.c.b16 %v928, %v928
        %v961 = vpack.c.b16 %v929, %v929
        %v962 = vpack.c.b16 %v930, %v930
        %v963 = vpack.c.b16 %v931, %v931
        %v964 = vpack.c.b16 %v932, %v932
        %v965 = vpack.c.b16 %v933, %v933
        %v966 = vpack.c.b16 %v934, %v934
        %v967 = vpack.c.b16 %v935, %v935
        %v968 = vpack.c.b16 %v936, %v936
        %v969 = vpack.c.b16 %v937, %v937
        %v970 = vpack.c.b16 %v938, %v938
        %1003 = vst [vmem:[%s224] sm:$0xf] %v939
        %1004 = vst [vmem:[%s224 + $0x4] sm:$0xf] %v940
        %1005 = vst [vmem:[%s224 + $0x8] sm:$0xf] %v941
        %1006 = vst [vmem:[%s224 + $0xc] sm:$0xf] %v942
        %1007 = vst [vmem:[%s224 + $0x10] sm:$0xf] %v943
        %1008 = vst [vmem:[%s224 + $0x14] sm:$0xf] %v944
        %1009 = vst [vmem:[%s224 + $0x18] sm:$0xf] %v945
        %1010 = vst [vmem:[%s224 + $0x1c] sm:$0xf] %v946
        %1011 = vst [vmem:[%s224 + $0x20] sm:$0xf] %v947
        %1012 = vst [vmem:[%s224 + $0x24] sm:$0xf] %v948
        %1013 = vst [vmem:[%s224 + $0x28] sm:$0xf] %v949
        %1014 = vst [vmem:[%s224 + $0x2c] sm:$0xf] %v950
        %1015 = vst [vmem:[%s224 + $0x30] sm:$0xf] %v951
        %1016 = vst [vmem:[%s224 + $0x34] sm:$0xf] %v952
        %1017 = vst [vmem:[%s224 + $0x38] sm:$0xf] %v953
        %1018 = vst [vmem:[%s224 + $0x3c] sm:$0xf] %v954
        %1019 = vst [vmem:[%s224 + $0x40] sm:$0xf] %v955
        %1020 = vst [vmem:[%s224 + $0x44] sm:$0xf] %v956
        %1021 = vst [vmem:[%s224 + $0x48] sm:$0xf] %v957
        %1022 = vst [vmem:[%s224 + $0x4c] sm:$0xf] %v958
        %1023 = vst [vmem:[%s224 + $0x50] sm:$0xf] %v959
        %1024 = vst [vmem:[%s224 + $0x54] sm:$0xf] %v960
        %1025 = vst [vmem:[%s224 + $0x58] sm:$0xf] %v961
        %1026 = vst [vmem:[%s224 + $0x5c] sm:$0xf] %v962
        %1027 = vst [vmem:[%s224 + $0x60] sm:$0xf] %v963
        %1028 = vst [vmem:[%s224 + $0x64] sm:$0xf] %v964
        %1029 = vst [vmem:[%s224 + $0x68] sm:$0xf] %v965
        %1030 = vst [vmem:[%s224 + $0x6c] sm:$0xf] %v966
        %1031 = vst [vmem:[%s224 + $0x70] sm:$0xf] %v967
        %1032 = vst [vmem:[%s224 + $0x74] sm:$0xf] %v968
        %1033 = vst [vmem:[%s224 + $0x78] sm:$0xf] %v969
        %1034 = vst [vmem:[%s224 + $0x7c] sm:$0xf] %v970
      $region36: #{gcn_forward.6} parent=27 // pred_fallthru
        _
      %s1035 = smul.u32 32, %s18
      %p1036 = scmp.lt.s32.totalorder %s1035, 63
      %s1037 = scalar_select %p1036, %s1035, 63
      %p1038 = scmp.lt.s32.totalorder %s19, 0
      %s1039 = scalar_select %p1038, %s19, 0
      %s1040 = sadd.s32 %s1039, %s1037
      %s1041 = smul.addr %s1040, 4
      %s1042 = scalar_lea.vmem %s2, %s1041
      // Predicated region
      $region37: #{gcn_forward.6} parent=27 // pred_check
        %p1043 = pneg %p108
      $region38: #{gcn_forward.6} parent=27 // pred_check_branch
        %1045 = sbr.rel (%p1043) target = $region40
      $region39: #{gcn_forward.6} parent=27 // pred_region
        %s1046 = smul.u32 32, %s18
      $region40: #{gcn_forward.6} parent=27 // pred_fallthru
        _
    $region28: #{gcn_forward.6} parent=5 // pred_fallthru
      _
    %p1047 = scmp.le.s32.totalorder 2, %s8
    // Predicated region
    $region41: #{gcn_forward.6} parent=5 // pred_check
      %p1048 = pneg %p1047
    $region42: #{gcn_forward.6} parent=5 // pred_check_branch
      %1050 = sbr.rel (%p1048) target = $region44
    $region43: #{gcn_forward.6} parent=5 // pred_region
      %s1051 = ssub.s32 %s8, 2
      // Predicated region
      $region45: #{gcn_forward.6} parent=43 // pred_check
        %p1052 = pneg %p114
      $region46: #{gcn_forward.6} parent=43 // pred_check_branch
        %1054 = sbr.rel (%p1052) target = $region48
      $region47: #{gcn_forward.6} parent=43 // pred_region
        %s1055 = smul.u32 32, %s21
        %p1056 = scmp.lt.s32.totalorder %s1055, 63
        %s1057 = scalar_select %p1056, %s1055, 63
        %p1058 = scmp.lt.s32.totalorder %s22, 0
        %s1059 = scalar_select %p1058, %s22, 0
        %s1060 = sadd.s32 %s1059, %s1057
        %s1061 = smul.addr %s1060, 4
        %s1062 = scalar_lea.vmem %s2, %s1061
      $region48: #{gcn_forward.6} parent=43 // pred_fallthru
        _
    $region44: #{gcn_forward.6} parent=5 // pred_fallthru
      _
  $region6: #{gcn_forward.6} parent=0 // loop_footer
    %s12 = sadd.s32 1, %s8
  $region7: #{gcn_forward.6} parent=0 // loop_footer_branch
    %7 = sbr.rel target = $region3
  $region8: #{gcn_forward.6} parent=0 // loop_exit
    _

// kernel: gcn_forward.7
$region0: #{gcn_forward.7}
  #allocation0 [shape = 'u32[]', space=smem, size = 0x4, offset = 0x4, fixed_abs, tag = 'smem constant byte address 0x4 - core index']
  #allocation1 [shape = 'u32[144,128]{1,0:T(1,128)}', space=vmem, size = 0x12000, scoped, tag = 'internal scratch']
  #allocation2 [shape = 'f32[256,128]{1,0:T(8,128)}', space=vmem, size = 0x20000, scoped, tag = 'scratch operand']
  %s0 = inlined_call_operand.vmem [shape: bf16[512,512], index: 0, kind: input, shape index: {}]
  %s1 = inlined_call_operand.vmem [shape: bf16[512,128], index: 1, kind: input, shape index: {}]
  %s2 = inlined_call_operand.vmem [shape: f32[1,128], index: 2, kind: input, shape index: {}]
  %s3 = inlined_call_operand.vmem [shape: bf16[512,128], index: 3, kind: output, shape index: {0}]
  %s4 = inlined_call_operand.vmem [shape: f32[2,1,128], index: 4, kind: output, shape index: {1}]
  %s5 = inlined_call_operand.vmem [shape: f32[2,1,128], index: 5, kind: output, shape index: {2}]
  %6 = xla_tuple %s3, %s4, %s5
  %s7 = sld [smem:[#allocation0]]
  $region69: #{gcn_forward.7} parent=0
    _
  %s9 = ssub.s32 1, %s7
  %s10 = scalar_select 0, %s9, %s7
  loop: start=0, step=1, limit=4
  $region2: #{gcn_forward.7} parent=0 // loop_pre_header
    _
  $region3: #{gcn_forward.7} parent=0 // loop_header
    %s12 = sphi 0, %s16
    %p13 = scmp.ge.s32.totalorder %s12, 4
    %s19 = sphi 0, %s31
    %s20 = sphi 0, %s27
    %s21 = sphi 0, %s19
    %s22 = sphi 0, %s20
    %s23 = sphi 0, %s21
    %s24 = sphi 0, %s22
    %s36 = sphi 0, %s38
    %s39 = sphi 0, %s36
    %s40 = sphi 0, %s39
    %s56 = sphi 0, %s40
    %s62 = sphi 0, %s64
    %s65 = sphi 0, %s62
    %s66 = sphi 0, %s65
    %s82 = sphi 0, %s66
    %s86 = sphi 0, %s86
    %s88 = sphi 0, %s86
    %s89 = sphi 0, %s88
    %s103 = sphi 0, %s89
    %s109 = sphi 0, %s111
    %s112 = sphi 0, %s109
    %s113 = sphi 0, %s112
    %s129 = sphi 0, %s113
    %s135 = sphi 0, %s137
    %s138 = sphi 0, %s135
    %s139 = sphi 0, %s138
    %s155 = sphi 0, %s139
    %s161 = sphi 0, %s163
    %s164 = sphi 0, %s161
    %s165 = sphi 0, %s164
    %s181 = sphi 0, %s165
  $region4: #{gcn_forward.7} parent=0 // loop_header_branch
    %15 = sbr.rel (%p13) target = $region8
  $region5: #{gcn_forward.7} parent=0 // loop_body
    %s17 = ssub.s32 %s12, 1
    %s18 = ssub.s32 %s12, 2
    %s25 = sadd.s32 1, %s20
    %p26 = scmp.ge.s32.totalorder %s25, 1
    %s27 = scalar_select %p26, 0, %s25
    %s28 = sadd.s32 1, %s19
    %s29 = scalar_select %p26, %s28, %s19
    %p30 = scmp.ge.s32.totalorder %s29, 2
    %s31 = scalar_select %p30, 0, %s29
    %s32 = ssub.s32 %s19, %s31
    %s33 = ssub.s32 %s20, %s27
    %s34 = sor.u32 %s32, %s33
    %p35 = scmp.eq.s32.totalorder %s34, 0
    %s37 = sadd.s32 %s36, 1
    %s38 = scalar_select %p35, %s36, %s37
    %p41 = pneg %p35
    %p42 = scmp.eq.s32.totalorder %s12, 1
    %p43 = por %p41, %p42
    %p44 = scmp.ne.s32.totalorder %s36, %s39
    %p45 = scmp.eq.s32.totalorder %s12, 0
    %p46 = por %p44, %p45
    %p47 = scmp.ne.s32.totalorder %s36, %s39
    %p48 = scmp.eq.s32.totalorder %s17, 1
    %p49 = por %p47, %p48
    %p50 = scmp.ne.s32.totalorder %s39, %s40
    %p51 = scmp.eq.s32.totalorder %s17, 0
    %p52 = por %p50, %p51
    %p53 = scmp.ne.s32.totalorder %s39, %s40
    %p54 = scmp.eq.s32.totalorder %s18, 1
    %p55 = por %p53, %p54
    %p57 = scmp.ne.s32.totalorder %s40, %s56
    %p58 = scmp.eq.s32.totalorder %s18, 0
    %p59 = por %p57, %p58
    %s60 = ssub.s32 %s20, %s27
    %p61 = scmp.eq.s32.totalorder %s60, 0
    %s63 = sadd.s32 %s62, 1
    %s64 = scalar_select %p61, %s62, %s63
    %p67 = pneg %p61
    %p68 = scmp.eq.s32.totalorder %s12, 1
    %p69 = por %p67, %p68
    %p70 = scmp.ne.s32.totalorder %s62, %s65
    %p71 = scmp.eq.s32.totalorder %s12, 0
    %p72 = por %p70, %p71
    %p73 = scmp.ne.s32.totalorder %s62, %s65
    %p74 = scmp.eq.s32.totalorder %s17, 1
    %p75 = por %p73, %p74
    %p76 = scmp.ne.s32.totalorder %s65, %s66
    %p77 = scmp.eq.s32.totalorder %s17, 0
    %p78 = por %p76, %p77
    %p79 = scmp.ne.s32.totalorder %s65, %s66
    %p80 = scmp.eq.s32.totalorder %s18, 1
    %p81 = por %p79, %p80
    %p83 = scmp.ne.s32.totalorder %s66, %s82
    %p84 = scmp.eq.s32.totalorder %s18, 0
    %p85 = por %p83, %p84
    %s87 = sadd.s32 %s86, 1
    %p90 = scmp.eq.s32.totalorder %s12, 1
    %p91 = scmp.ne.s32.totalorder %s86, %s88
    %p92 = scmp.eq.s32.totalorder %s12, 0
    %p93 = por %p91, %p92
    %p94 = scmp.ne.s32.totalorder %s86, %s88
    %p95 = scmp.eq.s32.totalorder %s17, 1
    %p96 = por %p94, %p95
    %p97 = scmp.ne.s32.totalorder %s88, %s89
    %p98 = scmp.eq.s32.totalorder %s17, 0
    %p99 = por %p97, %p98
    %p100 = scmp.ne.s32.totalorder %s88, %s89
    %p101 = scmp.eq.s32.totalorder %s18, 1
    %p102 = por %p100, %p101
    %p104 = scmp.ne.s32.totalorder %s89, %s103
    %p105 = scmp.eq.s32.totalorder %s18, 0
    %p106 = por %p104, %p105
    %s107 = ssub.s32 %s19, %s31
    %p108 = scmp.eq.s32.totalorder %s107, 0
    %s110 = sadd.s32 %s109, 1
    %s111 = scalar_select %p108, %s109, %s110
    %p114 = pneg %p108
    %p115 = scmp.eq.s32.totalorder %s12, 1
    %p116 = por %p114, %p115
    %p117 = scmp.ne.s32.totalorder %s109, %s112
    %p118 = scmp.eq.s32.totalorder %s12, 0
    %p119 = por %p117, %p118
    %p120 = scmp.ne.s32.totalorder %s109, %s112
    %p121 = scmp.eq.s32.totalorder %s17, 1
    %p122 = por %p120, %p121
    %p123 = scmp.ne.s32.totalorder %s112, %s113
    %p124 = scmp.eq.s32.totalorder %s17, 0
    %p125 = por %p123, %p124
    %p126 = scmp.ne.s32.totalorder %s112, %s113
    %p127 = scmp.eq.s32.totalorder %s18, 1
    %p128 = por %p126, %p127
    %p130 = scmp.ne.s32.totalorder %s113, %s129
    %p131 = scmp.eq.s32.totalorder %s18, 0
    %p132 = por %p130, %p131
    %s133 = ssub.s32 %s19, %s31
    %p134 = scmp.eq.s32.totalorder %s133, 0
    %s136 = sadd.s32 %s135, 1
    %s137 = scalar_select %p134, %s135, %s136
    %p140 = pneg %p134
    %p141 = scmp.eq.s32.totalorder %s12, 1
    %p142 = por %p140, %p141
    %p143 = scmp.ne.s32.totalorder %s135, %s138
    %p144 = scmp.eq.s32.totalorder %s12, 0
    %p145 = por %p143, %p144
    %p146 = scmp.ne.s32.totalorder %s135, %s138
    %p147 = scmp.eq.s32.totalorder %s17, 1
    %p148 = por %p146, %p147
    %p149 = scmp.ne.s32.totalorder %s138, %s139
    %p150 = scmp.eq.s32.totalorder %s17, 0
    %p151 = por %p149, %p150
    %p152 = scmp.ne.s32.totalorder %s138, %s139
    %p153 = scmp.eq.s32.totalorder %s18, 1
    %p154 = por %p152, %p153
    %p156 = scmp.ne.s32.totalorder %s139, %s155
    %p157 = scmp.eq.s32.totalorder %s18, 0
    %p158 = por %p156, %p157
    %s159 = ssub.s32 %s19, %s31
    %p160 = scmp.eq.s32.totalorder %s159, 0
    %s162 = sadd.s32 %s161, 1
    %s163 = scalar_select %p160, %s161, %s162
    %p166 = pneg %p160
    %p167 = scmp.eq.s32.totalorder %s12, 1
    %p168 = por %p166, %p167
    %p169 = scmp.ne.s32.totalorder %s161, %s164
    %p170 = scmp.eq.s32.totalorder %s12, 0
    %p171 = por %p169, %p170
    %p172 = scmp.ne.s32.totalorder %s161, %s164
    %p173 = scmp.eq.s32.totalorder %s17, 1
    %p174 = por %p172, %p173
    %p175 = scmp.ne.s32.totalorder %s164, %s165
    %p176 = scmp.eq.s32.totalorder %s17, 0
    %p177 = por %p175, %p176
    %p178 = scmp.ne.s32.totalorder %s164, %s165
    %p179 = scmp.eq.s32.totalorder %s18, 1
    %p180 = por %p178, %p179
    %p182 = scmp.ne.s32.totalorder %s165, %s181
    %p183 = scmp.eq.s32.totalorder %s18, 0
    %p184 = por %p182, %p183
    %p185 = scmp.le.s32.totalorder 1, %s12
    %p186 = scmp.lt.s32.totalorder %s12, 3
    %p187 = pnand %p185, %p186
    %p188 = pneg %p187
    // Predicated region
    $region9: #{gcn_forward.7} parent=5 // pred_check
      _
    $region10: #{gcn_forward.7} parent=5 // pred_check_branch
      %190 = sbr.rel (%p187) target = $region12
    $region11: #{gcn_forward.7} parent=5 // pred_region
      %s191 = ssub.s32 %s12, 1
      // Predicated region
      $region13: #{gcn_forward.7} parent=11 // pred_check
        %p192 = pneg %p78
      $region14: #{gcn_forward.7} parent=11 // pred_check_branch
        %194 = sbr.rel (%p192) target = $region16
      $region15: #{gcn_forward.7} parent=11 // pred_region
        %s195 = smul.u32 64, %s22
        %p196 = scmp.lt.s32.totalorder %s195, 63
        %s197 = scalar_select %p196, %s195, 63
        %s198 = smul.addr %s197, 4
        %s199 = scalar_lea.vmem %s1, %s198
        %s200 = smul.u32 64, %s22
      $region16: #{gcn_forward.7} parent=11 // pred_fallthru
        _
      // Predicated region
      $region17: #{gcn_forward.7} parent=11 // pred_check
        %p201 = pneg %p99
      $region18: #{gcn_forward.7} parent=11 // pred_check_branch
        %203 = sbr.rel (%p201) target = $region20
      $region19: #{gcn_forward.7} parent=11 // pred_region
        _
      $region20: #{gcn_forward.7} parent=11 // pred_fallthru
        _
    $region12: #{gcn_forward.7} parent=5 // pred_fallthru
      _
    %p204 = scmp.lt.s32.totalorder %s12, 2
    // Predicated region
    $region21: #{gcn_forward.7} parent=5 // pred_check
      %p205 = pneg %p204
    $region22: #{gcn_forward.7} parent=5 // pred_check_branch
      %207 = sbr.rel (%p205) target = $region24
    $region23: #{gcn_forward.7} parent=5 // pred_region
      // Predicated region
      $region25: #{gcn_forward.7} parent=23 // pred_check
        %p208 = pneg %p46
      $region26: #{gcn_forward.7} parent=23 // pred_check_branch
        %210 = sbr.rel (%p208) target = $region28
      $region27: #{gcn_forward.7} parent=23 // pred_region
        %s211 = smul.u32 32, %s19
        %s212 = smul.u32 4, %s20
        %p213 = scmp.lt.s32.totalorder %s211, 63
        %s214 = scalar_select %p213, %s211, 63
        %p215 = scmp.lt.s32.totalorder %s212, 3
        %s216 = scalar_select %p215, %s212, 3
        %s217 = smul.addr %s214, 4
        %s218 = sadd.s32 %s216, %s217
        %s219 = smul.addr %s218, 4
        %s220 = scalar_lea.vmem %s0, %s219
        %s221 = smul.u32 32, %s19
        %s222 = smul.u32 4, %s20
      $region28: #{gcn_forward.7} parent=23 // pred_fallthru
        _
    $region24: #{gcn_forward.7} parent=5 // pred_fallthru
      _
    %p223 = scmp.le.s32.totalorder 1, %s12
    %p224 = scmp.lt.s32.totalorder %s12, 3
    %p225 = pnand %p223, %p224
    %p226 = pneg %p225
    // Predicated region
    $region29: #{gcn_forward.7} parent=5 // pred_check
      _
    $region30: #{gcn_forward.7} parent=5 // pred_check_branch
      %228 = sbr.rel (%p225) target = $region32
    $region31: #{gcn_forward.7} parent=5 // pred_region
      %s229 = ssub.s32 %s12, 1
      %s230 = smul.u32 32, %s21
      %s231 = smul.u32 4, %s22
      %p232 = scmp.lt.s32.totalorder %s230, 63
      %s233 = scalar_select %p232, %s230, 63
      %p234 = scmp.lt.s32.totalorder %s231, 3
      %s235 = scalar_select %p234, %s231, 3
      %s236 = smul.addr %s233, 4
      %s237 = sadd.s32 %s235, %s236
      %s238 = smul.addr %s237, 4
      %s239 = scalar_lea.vmem %s0, %s238
      %p240 = pneg %p52
      %p241 = pneg %p49
      %s242 = smul.u32 64, %s22
      %p243 = scmp.lt.s32.totalorder %s242, 63
      %s244 = scalar_select %p243, %s242, 63
      %s245 = smul.addr %s244, 4
      %s246 = scalar_lea.vmem %s1, %s245
      %p247 = pneg %p78
      %p248 = pneg %p75
      %p249 = pneg %p99
      %p250 = pneg %p96
      %p251 = pneg %p125
      %p252 = pneg %p122
      %s253 = smul.u32 32, %s21
      %p254 = scmp.lt.s32.totalorder %s253, 63
      %s255 = scalar_select %p254, %s253, 63
      %s256 = smul.addr %s255, 4
      %s257 = scalar_lea.vmem %s3, %s256
      %p258 = pneg %p151
      %p259 = pneg %p148
      %p260 = scmp.lt.s32.totalorder %s21, 1
      %s261 = scalar_select %p260, %s21, 1
      %s262 = scalar_lea.vmem %s4, %s261
      %p263 = pneg %p177
      %p264 = pneg %p174
      %p265 = scmp.lt.s32.totalorder %s21, 1
      %s266 = scalar_select %p265, %s21, 1
      %s267 = scalar_lea.vmem %s5, %s266
      %s268 = smul.u32 32, %s21
      %s269 = smul.u32 4, %s22
      %p270 = scmp.lt.s32.totalorder %s268, 63
      %s271 = scalar_select %p270, %s268, 63
      %p272 = scmp.lt.s32.totalorder %s269, 3
      %s273 = scalar_select %p272, %s269, 3
      %s274 = smul.addr %s271, 4
      %s275 = sadd.s32 %s273, %s274
      %s276 = smul.addr %s275, 4
      %s277 = scalar_lea.vmem %s0, %s276
      %s278 = smul.u32 32, %s21
      %s279 = smul.u32 4, %s22
      %s280 = smul.u32 64, %s22
      %p281 = scmp.lt.s32.totalorder %s280, 63
      %s282 = scalar_select %p281, %s280, 63
      %s283 = smul.addr %s282, 4
      %s284 = scalar_lea.vmem %s1, %s283
      %s285 = smul.u32 64, %s22
      %s286 = smul.u32 32, %s21
      %p287 = scmp.lt.s32.totalorder %s286, 63
      %s288 = scalar_select %p287, %s286, 63
      %s289 = smul.addr %s288, 4
      %s290 = scalar_lea.vmem %s3, %s289
      %s291 = smul.u32 32, %s21
      %p292 = scmp.lt.s32.totalorder %s21, 1
      %s293 = scalar_select %p292, %s21, 1
      %s294 = scalar_lea.vmem %s4, %s293
      %p295 = scmp.lt.s32.totalorder %s21, 1
      %s296 = scalar_select %p295, %s21, 1
      %s297 = scalar_lea.vmem %s5, %s296
      %p299 = scmp.eq.s32.totalorder %s22, 0
      // Predicated region
      $region33: #{gcn_forward.7} parent=31 // pred_check
        %p300 = pneg %p299
      $region34: #{gcn_forward.7} parent=31 // pred_check_branch
        %302 = sbr.rel (%p300) target = $region36
      $region35: #{gcn_forward.7} parent=31 // pred_region
        %303 = vst [vmem:[#allocation2] sm:$0xff] 0.0
        %304 = vst [vmem:[#allocation2 + $0x8] sm:$0xff] 0.0
        %305 = vst [vmem:[#allocation2 + $0x10] sm:$0xff] 0.0
        %306 = vst [vmem:[#allocation2 + $0x18] sm:$0xff] 0.0
        %307 = vst [vmem:[#allocation2 + $0x20] sm:$0xff] 0.0
        %308 = vst [vmem:[#allocation2 + $0x28] sm:$0xff] 0.0
        %309 = vst [vmem:[#allocation2 + $0x30] sm:$0xff] 0.0
        %310 = vst [vmem:[#allocation2 + $0x38] sm:$0xff] 0.0
        %311 = vst [vmem:[#allocation2 + $0x40] sm:$0xff] 0.0
        %312 = vst [vmem:[#allocation2 + $0x48] sm:$0xff] 0.0
        %313 = vst [vmem:[#allocation2 + $0x50] sm:$0xff] 0.0
        %314 = vst [vmem:[#allocation2 + $0x58] sm:$0xff] 0.0
        %315 = vst [vmem:[#allocation2 + $0x60] sm:$0xff] 0.0
        %316 = vst [vmem:[#allocation2 + $0x68] sm:$0xff] 0.0
        %317 = vst [vmem:[#allocation2 + $0x70] sm:$0xff] 0.0
        %318 = vst [vmem:[#allocation2 + $0x78] sm:$0xff] 0.0
        %319 = vst [vmem:[#allocation2 + $0x80] sm:$0xff] 0.0
        %320 = vst [vmem:[#allocation2 + $0x88] sm:$0xff] 0.0
        %321 = vst [vmem:[#allocation2 + $0x90] sm:$0xff] 0.0
        %322 = vst [vmem:[#allocation2 + $0x98] sm:$0xff] 0.0
        %323 = vst [vmem:[#allocation2 + $0xa0] sm:$0xff] 0.0
        %324 = vst [vmem:[#allocation2 + $0xa8] sm:$0xff] 0.0
        %325 = vst [vmem:[#allocation2 + $0xb0] sm:$0xff] 0.0
        %326 = vst [vmem:[#allocation2 + $0xb8] sm:$0xff] 0.0
        %327 = vst [vmem:[#allocation2 + $0xc0] sm:$0xff] 0.0
        %328 = vst [vmem:[#allocation2 + $0xc8] sm:$0xff] 0.0
        %329 = vst [vmem:[#allocation2 + $0xd0] sm:$0xff] 0.0
        %330 = vst [vmem:[#allocation2 + $0xd8] sm:$0xff] 0.0
        %331 = vst [vmem:[#allocation2 + $0xe0] sm:$0xff] 0.0
        %332 = vst [vmem:[#allocation2 + $0xe8] sm:$0xff] 0.0
        %333 = vst [vmem:[#allocation2 + $0xf0] sm:$0xff] 0.0
        %334 = vst [vmem:[#allocation2 + $0xf8] sm:$0xff] 0.0
      $region36: #{gcn_forward.7} parent=31 // pred_fallthru
        _
      %v335 = vld [vmem:[#allocation2] sm:$0xff]
      %v336 = vld [vmem:[#allocation2 + $0x8] sm:$0xff]
      %v337 = vld [vmem:[#allocation2 + $0x10] sm:$0xff]
      %v338 = vld [vmem:[#allocation2 + $0x18] sm:$0xff]
      %v339 = vld [vmem:[#allocation2 + $0x20] sm:$0xff]
      %v340 = vld [vmem:[#allocation2 + $0x28] sm:$0xff]
      %v341 = vld [vmem:[#allocation2 + $0x30] sm:$0xff]
      %v342 = vld [vmem:[#allocation2 + $0x38] sm:$0xff]
      %v343 = vld [vmem:[#allocation2 + $0x40] sm:$0xff]
      %v344 = vld [vmem:[#allocation2 + $0x48] sm:$0xff]
      %v345 = vld [vmem:[#allocation2 + $0x50] sm:$0xff]
      %v346 = vld [vmem:[#allocation2 + $0x58] sm:$0xff]
      %v347 = vld [vmem:[#allocation2 + $0x60] sm:$0xff]
      %v348 = vld [vmem:[#allocation2 + $0x68] sm:$0xff]
      %v349 = vld [vmem:[#allocation2 + $0x70] sm:$0xff]
      %v350 = vld [vmem:[#allocation2 + $0x78] sm:$0xff]
      %v351 = vld [vmem:[#allocation2 + $0x80] sm:$0xff]
      %v352 = vld [vmem:[#allocation2 + $0x88] sm:$0xff]
      %v353 = vld [vmem:[#allocation2 + $0x90] sm:$0xff]
      %v354 = vld [vmem:[#allocation2 + $0x98] sm:$0xff]
      %v355 = vld [vmem:[#allocation2 + $0xa0] sm:$0xff]
      %v356 = vld [vmem:[#allocation2 + $0xa8] sm:$0xff]
      %v357 = vld [vmem:[#allocation2 + $0xb0] sm:$0xff]
      %v358 = vld [vmem:[#allocation2 + $0xb8] sm:$0xff]
      %v359 = vld [vmem:[#allocation2 + $0xc0] sm:$0xff]
      %v360 = vld [vmem:[#allocation2 + $0xc8] sm:$0xff]
      %v361 = vld [vmem:[#allocation2 + $0xd0] sm:$0xff]
      %v362 = vld [vmem:[#allocation2 + $0xd8] sm:$0xff]
      %v363 = vld [vmem:[#allocation2 + $0xe0] sm:$0xff]
      %v364 = vld [vmem:[#allocation2 + $0xe8] sm:$0xff]
      %v365 = vld [vmem:[#allocation2 + $0xf0] sm:$0xff]
      %v366 = vld [vmem:[#allocation2 + $0xf8] sm:$0xff]
      %v367 = vld [vmem:[%s277] sm:$0xff]
      %v368 = vld [vmem:[%s277 + $0x8] sm:$0xff]
      %v369 = vld [vmem:[%s277 + $0x10] sm:$0xff]
      %v370 = vld [vmem:[%s277 + $0x18] sm:$0xff]
      %v371 = vld [vmem:[%s277 + $0x20] sm:$0xff]
      %v372 = vld [vmem:[%s277 + $0x28] sm:$0xff]
      %v373 = vld [vmem:[%s277 + $0x30] sm:$0xff]
      %v374 = vld [vmem:[%s277 + $0x38] sm:$0xff]
      %v375 = vld [vmem:[%s277 + $0x40] sm:$0xff]
      %v376 = vld [vmem:[%s277 + $0x48] sm:$0xff]
      %v377 = vld [vmem:[%s277 + $0x50] sm:$0xff]
      %v378 = vld [vmem:[%s277 + $0x58] sm:$0xff]
      %v379 = vld [vmem:[%s277 + $0x60] sm:$0xff]
      %v380 = vld [vmem:[%s277 + $0x68] sm:$0xff]
      %v381 = vld [vmem:[%s277 + $0x70] sm:$0xff]
      %v382 = vld [vmem:[%s277 + $0x78] sm:$0xff]
      %v383 = vld [vmem:[%s277 + $0x80] sm:$0xff]
      %v384 = vld [vmem:[%s277 + $0x88] sm:$0xff]
      %v385 = vld [vmem:[%s277 + $0x90] sm:$0xff]
      %v386 = vld [vmem:[%s277 + $0x98] sm:$0xff]
      %v387 = vld [vmem:[%s277 + $0xa0] sm:$0xff]
      %v388 = vld [vmem:[%s277 + $0xa8] sm:$0xff]
      %v389 = vld [vmem:[%s277 + $0xb0] sm:$0xff]
      %v390 = vld [vmem:[%s277 + $0xb8] sm:$0xff]
      %v391 = vld [vmem:[%s277 + $0xc0] sm:$0xff]
      %v392 = vld [vmem:[%s277 + $0xc8] sm:$0xff]
      %v393 = vld [vmem:[%s277 + $0xd0] sm:$0xff]
      %v394 = vld [vmem:[%s277 + $0xd8] sm:$0xff]
      %v395 = vld [vmem:[%s277 + $0xe0] sm:$0xff]
      %v396 = vld [vmem:[%s277 + $0xe8] sm:$0xff]
      %v397 = vld [vmem:[%s277 + $0xf0] sm:$0xff]
      %v398 = vld [vmem:[%s277 + $0xf8] sm:$0xff]
      %v399 = vld [vmem:[%s277 + $0x100] sm:$0xff]
      %v400 = vld [vmem:[%s277 + $0x108] sm:$0xff]
      %v401 = vld [vmem:[%s277 + $0x110] sm:$0xff]
      %v402 = vld [vmem:[%s277 + $0x118] sm:$0xff]
      %v403 = vld [vmem:[%s277 + $0x120] sm:$0xff]
      %v404 = vld [vmem:[%s277 + $0x128] sm:$0xff]
      %v405 = vld [vmem:[%s277 + $0x130] sm:$0xff]
      %v406 = vld [vmem:[%s277 + $0x138] sm:$0xff]
      %v407 = vld [vmem:[%s277 + $0x140] sm:$0xff]
      %v408 = vld [vmem:[%s277 + $0x148] sm:$0xff]
      %v409 = vld [vmem:[%s277 + $0x150] sm:$0xff]
      %v410 = vld [vmem:[%s277 + $0x158] sm:$0xff]
      %v411 = vld [vmem:[%s277 + $0x160] sm:$0xff]
      %v412 = vld [vmem:[%s277 + $0x168] sm:$0xff]
      %v413 = vld [vmem:[%s277 + $0x170] sm:$0xff]
      %v414 = vld [vmem:[%s277 + $0x178] sm:$0xff]
      %v415 = vld [vmem:[%s277 + $0x180] sm:$0xff]
      %v416 = vld [vmem:[%s277 + $0x188] sm:$0xff]
      %v417 = vld [vmem:[%s277 + $0x190] sm:$0xff]
      %v418 = vld [vmem:[%s277 + $0x198] sm:$0xff]
      %v419 = vld [vmem:[%s277 + $0x1a0] sm:$0xff]
      %v420 = vld [vmem:[%s277 + $0x1a8] sm:$0xff]
      %v421 = vld [vmem:[%s277 + $0x1b0] sm:$0xff]
      %v422 = vld [vmem:[%s277 + $0x1b8] sm:$0xff]
      %v423 = vld [vmem:[%s277 + $0x1c0] sm:$0xff]
      %v424 = vld [vmem:[%s277 + $0x1c8] sm:$0xff]
      %v425 = vld [vmem:[%s277 + $0x1d0] sm:$0xff]
      %v426 = vld [vmem:[%s277 + $0x1d8] sm:$0xff]
      %v427 = vld [vmem:[%s277 + $0x1e0] sm:$0xff]
      %v428 = vld [vmem:[%s277 + $0x1e8] sm:$0xff]
      %v429 = vld [vmem:[%s277 + $0x1f0] sm:$0xff]
      %v430 = vld [vmem:[%s277 + $0x1f8] sm:$0xff]
      %v431 = vld [vmem:[%s284] sm:$0xf]
      %v432 = vld [vmem:[%s284 + $0x4] sm:$0xf]
      %v433 = vld [vmem:[%s284 + $0x8] sm:$0xf]
      %v434 = vld [vmem:[%s284 + $0xc] sm:$0xf]
      %v435 = vld [vmem:[%s284 + $0x10] sm:$0xf]
      %v436 = vld [vmem:[%s284 + $0x14] sm:$0xf]
      %v437 = vld [vmem:[%s284 + $0x18] sm:$0xf]
      %v438 = vld [vmem:[%s284 + $0x1c] sm:$0xf]
      %v439 = vld [vmem:[%s284 + $0x20] sm:$0xf]
      %v440 = vld [vmem:[%s284 + $0x24] sm:$0xf]
      %v441 = vld [vmem:[%s284 + $0x28] sm:$0xf]
      %v442 = vld [vmem:[%s284 + $0x2c] sm:$0xf]
      %v443 = vld [vmem:[%s284 + $0x30] sm:$0xf]
      %v444 = vld [vmem:[%s284 + $0x34] sm:$0xf]
      %v445 = vld [vmem:[%s284 + $0x38] sm:$0xf]
      %v446 = vld [vmem:[%s284 + $0x3c] sm:$0xf]
      %v447 = vld [vmem:[%s284 + $0x40] sm:$0xf]
      %v448 = vld [vmem:[%s284 + $0x44] sm:$0xf]
      %v449 = vld [vmem:[%s284 + $0x48] sm:$0xf]
      %v450 = vld [vmem:[%s284 + $0x4c] sm:$0xf]
      %v451 = vld [vmem:[%s284 + $0x50] sm:$0xf]
      %v452 = vld [vmem:[%s284 + $0x54] sm:$0xf]
      %v453 = vld [vmem:[%s284 + $0x58] sm:$0xf]
      %v454 = vld [vmem:[%s284 + $0x5c] sm:$0xf]
      %v455 = vld [vmem:[%s284 + $0x60] sm:$0xf]
      %v456 = vld [vmem:[%s284 + $0x64] sm:$0xf]
      %v457 = vld [vmem:[%s284 + $0x68] sm:$0xf]
      %v458 = vld [vmem:[%s284 + $0x6c] sm:$0xf]
      %v459 = vld [vmem:[%s284 + $0x70] sm:$0xf]
      %v460 = vld [vmem:[%s284 + $0x74] sm:$0xf]
      %v461 = vld [vmem:[%s284 + $0x78] sm:$0xf]
      %v462 = vld [vmem:[%s284 + $0x7c] sm:$0xf]
      %v463 = vld [vmem:[%s284 + $0x80] sm:$0xf]
      %v464 = vld [vmem:[%s284 + $0x84] sm:$0xf]
      %v465 = vld [vmem:[%s284 + $0x88] sm:$0xf]
      %v466 = vld [vmem:[%s284 + $0x8c] sm:$0xf]
      %v467 = vld [vmem:[%s284 + $0x90] sm:$0xf]
      %v468 = vld [vmem:[%s284 + $0x94] sm:$0xf]
      %v469 = vld [vmem:[%s284 + $0x98] sm:$0xf]
      %v470 = vld [vmem:[%s284 + $0x9c] sm:$0xf]
      %v471 = vld [vmem:[%s284 + $0xa0] sm:$0xf]
      %v472 = vld [vmem:[%s284 + $0xa4] sm:$0xf]
      %v473 = vld [vmem:[%s284 + $0xa8] sm:$0xf]
      %v474 = vld [vmem:[%s284 + $0xac] sm:$0xf]
      %v475 = vld [vmem:[%s284 + $0xb0] sm:$0xf]
      %v476 = vld [vmem:[%s284 + $0xb4] sm:$0xf]
      %v477 = vld [vmem:[%s284 + $0xb8] sm:$0xf]
      %v478 = vld [vmem:[%s284 + $0xbc] sm:$0xf]
      %v479 = vld [vmem:[%s284 + $0xc0] sm:$0xf]
      %v480 = vld [vmem:[%s284 + $0xc4] sm:$0xf]
      %v481 = vld [vmem:[%s284 + $0xc8] sm:$0xf]
      %v482 = vld [vmem:[%s284 + $0xcc] sm:$0xf]
      %v483 = vld [vmem:[%s284 + $0xd0] sm:$0xf]
      %v484 = vld [vmem:[%s284 + $0xd4] sm:$0xf]
      %v485 = vld [vmem:[%s284 + $0xd8] sm:$0xf]
      %v486 = vld [vmem:[%s284 + $0xdc] sm:$0xf]
      %v487 = vld [vmem:[%s284 + $0xe0] sm:$0xf]
      %v488 = vld [vmem:[%s284 + $0xe4] sm:$0xf]
      %v489 = vld [vmem:[%s284 + $0xe8] sm:$0xf]
      %v490 = vld [vmem:[%s284 + $0xec] sm:$0xf]
      %v491 = vld [vmem:[%s284 + $0xf0] sm:$0xf]
      %v492 = vld [vmem:[%s284 + $0xf4] sm:$0xf]
      %v493 = vld [vmem:[%s284 + $0xf8] sm:$0xf]
      %v494 = vld [vmem:[%s284 + $0xfc] sm:$0xf]
      %v559 = vunpack.c.l.b16 %v367
      %v560 = vunpack.c.h.b16 %v367
      %v561 = vunpack.c.l.b16 %v368
      %v562 = vunpack.c.h.b16 %v368
      %v563 = vunpack.c.l.b16 %v369
      %v564 = vunpack.c.h.b16 %v369
      %v565 = vunpack.c.l.b16 %v370
      %v566 = vunpack.c.h.b16 %v370
      %v567 = vunpack.c.l.b16 %v371
      %v568 = vunpack.c.h.b16 %v371
      %v569 = vunpack.c.l.b16 %v372
      %v570 = vunpack.c.h.b16 %v372
      %v571 = vunpack.c.l.b16 %v373
      %v572 = vunpack.c.h.b16 %v373
      %v573 = vunpack.c.l.b16 %v374
      %v574 = vunpack.c.h.b16 %v374
      %v575 = vunpack.c.l.b16 %v375
      %v576 = vunpack.c.h.b16 %v375
      %v577 = vunpack.c.l.b16 %v376
      %v578 = vunpack.c.h.b16 %v376
      %v579 = vunpack.c.l.b16 %v377
      %v580 = vunpack.c.h.b16 %v377
      %v581 = vunpack.c.l.b16 %v378
      %v582 = vunpack.c.h.b16 %v378
      %v583 = vunpack.c.l.b16 %v379
      %v584 = vunpack.c.h.b16 %v379
      %v585 = vunpack.c.l.b16 %v380
      %v586 = vunpack.c.h.b16 %v380
      %v587 = vunpack.c.l.b16 %v381
      %v588 = vunpack.c.h.b16 %v381
      %v589 = vunpack.c.l.b16 %v382
      %v590 = vunpack.c.h.b16 %v382
      %v591 = vunpack.c.l.b16 %v383
      %v592 = vunpack.c.h.b16 %v383
      %v593 = vunpack.c.l.b16 %v384
      %v594 = vunpack.c.h.b16 %v384
      %v595 = vunpack.c.l.b16 %v385
      %v596 = vunpack.c.h.b16 %v385
      %v597 = vunpack.c.l.b16 %v386
      %v598 = vunpack.c.h.b16 %v386
      %v599 = vunpack.c.l.b16 %v387
      %v600 = vunpack.c.h.b16 %v387
      %v601 = vunpack.c.l.b16 %v388
      %v602 = vunpack.c.h.b16 %v388
      %v603 = vunpack.c.l.b16 %v389
      %v604 = vunpack.c.h.b16 %v389
      %v605 = vunpack.c.l.b16 %v390
      %v606 = vunpack.c.h.b16 %v390
      %v607 = vunpack.c.l.b16 %v391
      %v608 = vunpack.c.h.b16 %v391
      %v609 = vunpack.c.l.b16 %v392
      %v610 = vunpack.c.h.b16 %v392
      %v611 = vunpack.c.l.b16 %v393
      %v612 = vunpack.c.h.b16 %v393
      %v613 = vunpack.c.l.b16 %v394
      %v614 = vunpack.c.h.b16 %v394
      %v615 = vunpack.c.l.b16 %v395
      %v616 = vunpack.c.h.b16 %v395
      %v617 = vunpack.c.l.b16 %v396
      %v618 = vunpack.c.h.b16 %v396
      %v619 = vunpack.c.l.b16 %v397
      %v620 = vunpack.c.h.b16 %v397
      %v621 = vunpack.c.l.b16 %v398
      %v622 = vunpack.c.h.b16 %v398
      %v623 = vunpack.c.l.b16 %v399
      %v624 = vunpack.c.h.b16 %v399
      %v625 = vunpack.c.l.b16 %v400
      %v626 = vunpack.c.h.b16 %v400
      %v627 = vunpack.c.l.b16 %v401
      %v628 = vunpack.c.h.b16 %v401
      %v629 = vunpack.c.l.b16 %v402
      %v630 = vunpack.c.h.b16 %v402
      %v631 = vunpack.c.l.b16 %v403
      %v632 = vunpack.c.h.b16 %v403
      %v633 = vunpack.c.l.b16 %v404
      %v634 = vunpack.c.h.b16 %v404
      %v635 = vunpack.c.l.b16 %v405
      %v636 = vunpack.c.h.b16 %v405
      %v637 = vunpack.c.l.b16 %v406
      %v638 = vunpack.c.h.b16 %v406
      %v639 = vunpack.c.l.b16 %v407
      %v640 = vunpack.c.h.b16 %v407
      %v641 = vunpack.c.l.b16 %v408
      %v642 = vunpack.c.h.b16 %v408
      %v643 = vunpack.c.l.b16 %v409
      %v644 = vunpack.c.h.b16 %v409
      %v645 = vunpack.c.l.b16 %v410
      %v646 = vunpack.c.h.b16 %v410
      %v647 = vunpack.c.l.b16 %v411
      %v648 = vunpack.c.h.b16 %v411
      %v649 = vunpack.c.l.b16 %v412
      %v650 = vunpack.c.h.b16 %v412
      %v651 = vunpack.c.l.b16 %v413
      %v652 = vunpack.c.h.b16 %v413
      %v653 = vunpack.c.l.b16 %v414
      %v654 = vunpack.c.h.b16 %v414
      %v655 = vunpack.c.l.b16 %v415
      %v656 = vunpack.c.h.b16 %v415
      %v657 = vunpack.c.l.b16 %v416
      %v658 = vunpack.c.h.b16 %v416
      %v659 = vunpack.c.l.b16 %v417
      %v660 = vunpack.c.h.b16 %v417
      %v661 = vunpack.c.l.b16 %v418
      %v662 = vunpack.c.h.b16 %v418
      %v663 = vunpack.c.l.b16 %v419
      %v664 = vunpack.c.h.b16 %v419
      %v665 = vunpack.c.l.b16 %v420
      %v666 = vunpack.c.h.b16 %v420
      %v667 = vunpack.c.l.b16 %v421
      %v668 = vunpack.c.h.b16 %v421
      %v669 = vunpack.c.l.b16 %v422
      %v670 = vunpack.c.h.b16 %v422
      %v671 = vunpack.c.l.b16 %v423
      %v672 = vunpack.c.h.b16 %v423
      %v673 = vunpack.c.l.b16 %v424
      %v674 = vunpack.c.h.b16 %v424
      %v675 = vunpack.c.l.b16 %v425
      %v676 = vunpack.c.h.b16 %v425
      %v677 = vunpack.c.l.b16 %v426
      %v678 = vunpack.c.h.b16 %v426
      %v679 = vunpack.c.l.b16 %v427
      %v680 = vunpack.c.h.b16 %v427
      %v681 = vunpack.c.l.b16 %v428
      %v682 = vunpack.c.h.b16 %v428
      %v683 = vunpack.c.l.b16 %v429
      %v684 = vunpack.c.h.b16 %v429
      %v685 = vunpack.c.l.b16 %v430
      %v686 = vunpack.c.h.b16 %v430
      %v687 = vpack.c.b16 %v563, %v559
      %v688 = vpack.c.b16 %v564, %v560
      %v689 = vpack.c.b16 %v565, %v561
      %v690 = vpack.c.b16 %v566, %v562
      %v691 = vpack.c.b16 %v571, %v567
      %v692 = vpack.c.b16 %v572, %v568
      %v693 = vpack.c.b16 %v573, %v569
      %v694 = vpack.c.b16 %v574, %v570
      %v695 = vpack.c.b16 %v579, %v575
      %v696 = vpack.c.b16 %v580, %v576
      %v697 = vpack.c.b16 %v581, %v577
      %v698 = vpack.c.b16 %v582, %v578
      %v699 = vpack.c.b16 %v587, %v583
      %v700 = vpack.c.b16 %v588, %v584
      %v701 = vpack.c.b16 %v589, %v585
      %v702 = vpack.c.b16 %v590, %v586
      %v703 = vpack.c.b16 %v595, %v591
      %v704 = vpack.c.b16 %v596, %v592
      %v705 = vpack.c.b16 %v597, %v593
      %v706 = vpack.c.b16 %v598, %v594
      %v707 = vpack.c.b16 %v603, %v599
      %v708 = vpack.c.b16 %v604, %v600
      %v709 = vpack.c.b16 %v605, %v601
      %v710 = vpack.c.b16 %v606, %v602
      %v711 = vpack.c.b16 %v611, %v607
      %v712 = vpack.c.b16 %v612, %v608
      %v713 = vpack.c.b16 %v613, %v609
      %v714 = vpack.c.b16 %v614, %v610
      %v715 = vpack.c.b16 %v619, %v615
      %v716 = vpack.c.b16 %v620, %v616
      %v717 = vpack.c.b16 %v621, %v617
      %v718 = vpack.c.b16 %v622, %v618
      %v719 = vpack.c.b16 %v627, %v623
      %v720 = vpack.c.b16 %v628, %v624
      %v721 = vpack.c.b16 %v629, %v625
      %v722 = vpack.c.b16 %v630, %v626
      %v723 = vpack.c.b16 %v635, %v631
      %v724 = vpack.c.b16 %v636, %v632
      %v725 = vpack.c.b16 %v637, %v633
      %v726 = vpack.c.b16 %v638, %v634
      %v727 = vpack.c.b16 %v643, %v639
      %v728 = vpack.c.b16 %v644, %v640
      %v729 = vpack.c.b16 %v645, %v641
      %v730 = vpack.c.b16 %v646, %v642
      %v731 = vpack.c.b16 %v651, %v647
      %v732 = vpack.c.b16 %v652, %v648
      %v733 = vpack.c.b16 %v653, %v649
      %v734 = vpack.c.b16 %v654, %v650
      %v735 = vpack.c.b16 %v659, %v655
      %v736 = vpack.c.b16 %v660, %v656
      %v737 = vpack.c.b16 %v661, %v657
      %v738 = vpack.c.b16 %v662, %v658
      %v739 = vpack.c.b16 %v667, %v663
      %v740 = vpack.c.b16 %v668, %v664
      %v741 = vpack.c.b16 %v669, %v665
      %v742 = vpack.c.b16 %v670, %v666
      %v743 = vpack.c.b16 %v675, %v671
      %v744 = vpack.c.b16 %v676, %v672
      %v745 = vpack.c.b16 %v677, %v673
      %v746 = vpack.c.b16 %v678, %v674
      %v747 = vpack.c.b16 %v683, %v679
      %v748 = vpack.c.b16 %v684, %v680
      %v749 = vpack.c.b16 %v685, %v681
      %v750 = vpack.c.b16 %v686, %v682
      %v879 = vunpack.c.l.b16 %v431
      %v880 = vunpack.c.l.b16 %v432
      %v881 = vunpack.c.l.b16 %v433
      %v882 = vunpack.c.l.b16 %v434
      %v883 = vunpack.c.l.b16 %v435
      %v884 = vunpack.c.l.b16 %v436
      %v885 = vunpack.c.l.b16 %v437
      %v886 = vunpack.c.l.b16 %v438
      %v887 = vunpack.c.l.b16 %v439
      %v888 = vunpack.c.l.b16 %v440
      %v889 = vunpack.c.l.b16 %v441
      %v890 = vunpack.c.l.b16 %v442
      %v891 = vunpack.c.l.b16 %v443
      %v892 = vunpack.c.l.b16 %v444
      %v893 = vunpack.c.l.b16 %v445
      %v894 = vunpack.c.l.b16 %v446
      %v895 = vunpack.c.l.b16 %v447
      %v896 = vunpack.c.l.b16 %v448
      %v897 = vunpack.c.l.b16 %v449
      %v898 = vunpack.c.l.b16 %v450
      %v899 = vunpack.c.l.b16 %v451
      %v900 = vunpack.c.l.b16 %v452
      %v901 = vunpack.c.l.b16 %v453
      %v902 = vunpack.c.l.b16 %v454
      %v903 = vunpack.c.l.b16 %v455
      %v904 = vunpack.c.l.b16 %v456
      %v905 = vunpack.c.l.b16 %v457
      %v906 = vunpack.c.l.b16 %v458
      %v907 = vunpack.c.l.b16 %v459
      %v908 = vunpack.c.l.b16 %v460
      %v909 = vunpack.c.l.b16 %v461
      %v910 = vunpack.c.l.b16 %v462
      %v911 = vunpack.c.l.b16 %v463
      %v912 = vunpack.c.l.b16 %v464
      %v913 = vunpack.c.l.b16 %v465
      %v914 = vunpack.c.l.b16 %v466
      %v915 = vunpack.c.l.b16 %v467
      %v916 = vunpack.c.l.b16 %v468
      %v917 = vunpack.c.l.b16 %v469
      %v918 = vunpack.c.l.b16 %v470
      %v919 = vunpack.c.l.b16 %v471
      %v920 = vunpack.c.l.b16 %v472
      %v921 = vunpack.c.l.b16 %v473
      %v922 = vunpack.c.l.b16 %v474
      %v923 = vunpack.c.l.b16 %v475
      %v924 = vunpack.c.l.b16 %v476
      %v925 = vunpack.c.l.b16 %v477
      %v926 = vunpack.c.l.b16 %v478
      %v927 = vunpack.c.l.b16 %v479
      %v928 = vunpack.c.l.b16 %v480
      %v929 = vunpack.c.l.b16 %v481
      %v930 = vunpack.c.l.b16 %v482
      %v931 = vunpack.c.l.b16 %v483
      %v932 = vunpack.c.l.b16 %v484
      %v933 = vunpack.c.l.b16 %v485
      %v934 = vunpack.c.l.b16 %v486
      %v935 = vunpack.c.l.b16 %v487
      %v936 = vunpack.c.l.b16 %v488
      %v937 = vunpack.c.l.b16 %v489
      %v938 = vunpack.c.l.b16 %v490
      %v939 = vunpack.c.l.b16 %v491
      %v940 = vunpack.c.l.b16 %v492
      %v941 = vunpack.c.l.b16 %v493
      %v942 = vunpack.c.l.b16 %v494
      %v943 = vpack.c.b16 %v880, %v879
      %v944 = vpack.c.b16 %v882, %v881
      %v945 = vpack.c.b16 %v884, %v883
      %v946 = vpack.c.b16 %v886, %v885
      %v947 = vpack.c.b16 %v888, %v887
      %v948 = vpack.c.b16 %v890, %v889
      %v949 = vpack.c.b16 %v892, %v891
      %v950 = vpack.c.b16 %v894, %v893
      %v951 = vpack.c.b16 %v896, %v895
      %v952 = vpack.c.b16 %v898, %v897
      %v953 = vpack.c.b16 %v900, %v899
      %v954 = vpack.c.b16 %v902, %v901
      %v955 = vpack.c.b16 %v904, %v903
      %v956 = vpack.c.b16 %v906, %v905
      %v957 = vpack.c.b16 %v908, %v907
      %v958 = vpack.c.b16 %v910, %v909
      %v959 = vpack.c.b16 %v912, %v911
      %v960 = vpack.c.b16 %v914, %v913
      %v961 = vpack.c.b16 %v916, %v915
      %v962 = vpack.c.b16 %v918, %v917
      %v963 = vpack.c.b16 %v920, %v919
      %v964 = vpack.c.b16 %v922, %v921
      %v965 = vpack.c.b16 %v924, %v923
      %v966 = vpack.c.b16 %v926, %v925
      %v967 = vpack.c.b16 %v928, %v927
      %v968 = vpack.c.b16 %v930, %v929
      %v969 = vpack.c.b16 %v932, %v931
      %v970 = vpack.c.b16 %v934, %v933
      %v971 = vpack.c.b16 %v936, %v935
      %v972 = vpack.c.b16 %v938, %v937
      %v973 = vpack.c.b16 %v940, %v939
      %v974 = vpack.c.b16 %v942, %v941
      %1007 = vmatprep.subr.bf16.mxu0 0
      %1008 = vmatpush1.bf16.msra.mxu0 %v950
      %1009 = vmatprep.subr.bf16.mxu0 0
      %1010 = vmatpush1.bf16.msra.mxu0 %v949
      %1011 = vmatprep.subr.bf16.mxu0 0
      %1012 = vmatpush1.bf16.msra.mxu0 %v948
      %1013 = vmatprep.subr.bf16.mxu0 0
      %1014 = vmatpush1.bf16.msra.mxu0 %v947
      %1015 = vmatprep.subr.bf16.mxu0 0
      %1016 = vmatpush1.bf16.msra.mxu0 %v946
      %1017 = vmatprep.subr.bf16.mxu0 0
      %1018 = vmatpush1.bf16.msra.mxu0 %v945
      %1019 = vmatprep.subr.bf16.mxu0 0
      %1020 = vmatpush1.bf16.msra.mxu0 %v944
      %1021 = vmatprep.subr.bf16.mxu0 0
      %1022 = vmatpush1.bf16.msra.mxu0 %v943
      %1023 = vmatprep.subr.bf16.mxu0 0
      %1024 = vmatpush2.bf16.msra.mxu0 %v958
      %1025 = vmatprep.subr.bf16.mxu0 0
      %1026 = vmatpush2.bf16.msra.mxu0 %v957
      %1027 = vmatprep.subr.bf16.mxu0 0
      %1028 = vmatpush2.bf16.msra.mxu0 %v956
      %1029 = vmatprep.subr.bf16.mxu0 0
      %1030 = vmatpush2.bf16.msra.mxu0 %v955
      %1031 = vmatprep.subr.bf16.mxu0 0
      %1032 = vmatpush2.bf16.msra.mxu0 %v954
      %1033 = vmatprep.subr.bf16.mxu0 0
      %1034 = vmatpush2.bf16.msra.mxu0 %v953
      %1035 = vmatprep.subr.bf16.mxu0 0
      %1036 = vmatpush2.bf16.msra.mxu0 %v952
      %1037 = vmatprep.subr.bf16.mxu0 0
      %1038 = vmatpush2.bf16.msra.mxu0 %v951
      %1039 = vmatprep.mubr.bf16.mxu0 %v688
      %1040 = vmatmul.mubr.bf16.gmra.mxu0 %v687
      %v1041 = vpop.f32.mrf.mxu0
      %v1042 = vadd.f32 0.0, %v1041
      %v1043 = vpop.f32.mrf.mxu0
      %v1044 = vpop.f32.mrf.mxu0
      %v1045 = vadd.f32 0.0, %v1044
      %v1046 = vpop.f32.mrf.mxu0
      %1047 = vmatprep.mubr.bf16.mxu0 %v692
      %1048 = vmatmul.mubr.bf16.gmra.mxu0 %v691
      %v1049 = vpop.f32.mrf.mxu0
      %v1050 = vadd.f32 0.0, %v1049
      %v1051 = vpop.f32.mrf.mxu0
      %v1052 = vpop.f32.mrf.mxu0
      %v1053 = vadd.f32 0.0, %v1052
      %v1054 = vpop.f32.mrf.mxu0
      %1055 = vmatprep.mubr.bf16.mxu0 %v696
      %1056 = vmatmul.mubr.bf16.gmra.mxu0 %v695
      %v1057 = vpop.f32.mrf.mxu0
      %v1058 = vadd.f32 0.0, %v1057
      %v1059 = vpop.f32.mrf.mxu0
      %v1060 = vpop.f32.mrf.mxu0
      %v1061 = vadd.f32 0.0, %v1060
      %v1062 = vpop.f32.mrf.mxu0
      %1063 = vmatprep.mubr.bf16.mxu0 %v700
      %1064 = vmatmul.mubr.bf16.gmra.mxu0 %v699
      %v1065 = vpop.f32.mrf.mxu0
      %v1066 = vadd.f32 0.0, %v1065
      %v1067 = vpop.f32.mrf.mxu0
      %v1068 = vpop.f32.mrf.mxu0
      %v1069 = vadd.f32 0.0, %v1068
      %v1070 = vpop.f32.mrf.mxu0
      %1071 = vmatprep.mubr.bf16.mxu0 %v704
      %1072 = vmatmul.mubr.bf16.gmra.mxu0 %v703
      %v1073 = vpop.f32.mrf.mxu0
      %v1074 = vadd.f32 0.0, %v1073
      %v1075 = vpop.f32.mrf.mxu0
      %v1076 = vpop.f32.mrf.mxu0
      %v1077 = vadd.f32 0.0, %v1076
      %v1078 = vpop.f32.mrf.mxu0
      %1079 = vmatprep.mubr.bf16.mxu0 %v708
      %1080 = vmatmul.mubr.bf16.gmra.mxu0 %v707
      %v1081 = vpop.f32.mrf.mxu0
      %v1082 = vadd.f32 0.0, %v1081
      %v1083 = vpop.f32.mrf.mxu0
      %v1084 = vpop.f32.mrf.mxu0
      %v1085 = vadd.f32 0.0, %v1084
      %v1086 = vpop.f32.mrf.mxu0
      %1087 = vmatprep.mubr.bf16.mxu0 %v712
      %1088 = vmatmul.mubr.bf16.gmra.mxu0 %v711
      %v1089 = vpop.f32.mrf.mxu0
      %v1090 = vadd.f32 0.0, %v1089
      %v1091 = vpop.f32.mrf.mxu0
      %v1092 = vpop.f32.mrf.mxu0
      %v1093 = vadd.f32 0.0, %v1092
      %v1094 = vpop.f32.mrf.mxu0
      %1095 = vmatprep.mubr.bf16.mxu0 %v716
      %1096 = vmatmul.mubr.bf16.gmra.mxu0 %v715
      %v1097 = vpop.f32.mrf.mxu0
      %v1098 = vadd.f32 0.0, %v1097
      %v1099 = vpop.f32.mrf.mxu0
      %v1100 = vpop.f32.mrf.mxu0
      %v1101 = vadd.f32 0.0, %v1100
      %v1102 = vpop.f32.mrf.mxu0
      %1103 = vmatprep.mubr.bf16.mxu0 %v720
      %1104 = vmatmul.mubr.bf16.gmra.mxu0 %v719
      %v1105 = vpop.f32.mrf.mxu0
      %v1106 = vadd.f32 0.0, %v1105
      %v1107 = vpop.f32.mrf.mxu0
      %v1108 = vpop.f32.mrf.mxu0
      %v1109 = vadd.f32 0.0, %v1108
      %v1110 = vpop.f32.mrf.mxu0
      %1111 = vmatprep.mubr.bf16.mxu0 %v724
      %1112 = vmatmul.mubr.bf16.gmra.mxu0 %v723
      %v1113 = vpop.f32.mrf.mxu0
      %v1114 = vadd.f32 0.0, %v1113
      %v1115 = vpop.f32.mrf.mxu0
      %v1116 = vpop.f32.mrf.mxu0
      %v1117 = vadd.f32 0.0, %v1116
      %v1118 = vpop.f32.mrf.mxu0
      %1119 = vmatprep.mubr.bf16.mxu0 %v728
      %1120 = vmatmul.mubr.bf16.gmra.mxu0 %v727
      %v1121 = vpop.f32.mrf.mxu0
      %v1122 = vadd.f32 0.0, %v1121
      %v1123 = vpop.f32.mrf.mxu0
      %v1124 = vpop.f32.mrf.mxu0
      %v1125 = vadd.f32 0.0, %v1124
      %v1126 = vpop.f32.mrf.mxu0
      %1127 = vmatprep.mubr.bf16.mxu0 %v732
      %1128 = vmatmul.mubr.bf16.gmra.mxu0 %v731
      %v1129 = vpop.f32.mrf.mxu0
      %v1130 = vadd.f32 0.0, %v1129
      %v1131 = vpop.f32.mrf.mxu0
      %v1132 = vpop.f32.mrf.mxu0
      %v1133 = vadd.f32 0.0, %v1132
      %v1134 = vpop.f32.mrf.mxu0
      %1135 = vmatprep.mubr.bf16.mxu0 %v736
      %1136 = vmatmul.mubr.bf16.gmra.mxu0 %v735
      %v1137 = vpop.f32.mrf.mxu0
      %v1138 = vadd.f32 0.0, %v1137
      %v1139 = vpop.f32.mrf.mxu0
      %v1140 = vpop.f32.mrf.mxu0
      %v1141 = vadd.f32 0.0, %v1140
      %v1142 = vpop.f32.mrf.mxu0
      %1143 = vmatprep.mubr.bf16.mxu0 %v740
      %1144 = vmatmul.mubr.bf16.gmra.mxu0 %v739
      %v1145 = vpop.f32.mrf.mxu0
      %v1146 = vadd.f32 0.0, %v1145
      %v1147 = vpop.f32.mrf.mxu0
      %v1148 = vpop.f32.mrf.mxu0
      %v1149 = vadd.f32 0.0, %v1148
      %v1150 = vpop.f32.mrf.mxu0
      %1151 = vmatprep.mubr.bf16.mxu0 %v744
      %1152 = vmatmul.mubr.bf16.gmra.mxu0 %v743
      %v1153 = vpop.f32.mrf.mxu0
      %v1154 = vadd.f32 0.0, %v1153
      %v1155 = vpop.f32.mrf.mxu0
      %v1156 = vpop.f32.mrf.mxu0
      %v1157 = vadd.f32 0.0, %v1156
      %v1158 = vpop.f32.mrf.mxu0
      %1159 = vmatprep.mubr.bf16.mxu0 %v748
      %1160 = vmatmul.mubr.bf16.gmra.mxu0 %v747
      %v1161 = vpop.f32.mrf.mxu0
      %v1162 = vadd.f32 0.0, %v1161
      %v1163 = vpop.f32.mrf.mxu0
      %v1164 = vpop.f32.mrf.mxu0
      %v1165 = vadd.f32 0.0, %v1164
      %v1166 = vpop.f32.mrf.mxu0
      %1167 = vdwg.mxu0
      %1168 = vmatprep.subr.bf16.mxu0 0
      %1169 = vmatpush1.bf16.msra.mxu0 %v966
      %1170 = vmatprep.subr.bf16.mxu0 0
      %1171 = vmatpush1.bf16.msra.mxu0 %v965
      %1172 = vmatprep.subr.bf16.mxu0 0
      %1173 = vmatpush1.bf16.msra.mxu0 %v964
      %1174 = vmatprep.subr.bf16.mxu0 0
      %1175 = vmatpush1.bf16.msra.mxu0 %v963
      %1176 = vmatprep.subr.bf16.mxu0 0
      %1177 = vmatpush1.bf16.msra.mxu0 %v962
      %1178 = vmatprep.subr.bf16.mxu0 0
      %1179 = vmatpush1.bf16.msra.mxu0 %v961
      %1180 = vmatprep.subr.bf16.mxu0 0
      %1181 = vmatpush1.bf16.msra.mxu0 %v960
      %1182 = vmatprep.subr.bf16.mxu0 0
      %1183 = vmatpush1.bf16.msra.mxu0 %v959
      %1184 = vmatprep.subr.bf16.mxu0 0
      %1185 = vmatpush2.bf16.msra.mxu0 %v974
      %1186 = vmatprep.subr.bf16.mxu0 0
      %1187 = vmatpush2.bf16.msra.mxu0 %v973
      %1188 = vmatprep.subr.bf16.mxu0 0
      %1189 = vmatpush2.bf16.msra.mxu0 %v972
      %1190 = vmatprep.subr.bf16.mxu0 0
      %1191 = vmatpush2.bf16.msra.mxu0 %v971
      %1192 = vmatprep.subr.bf16.mxu0 0
      %1193 = vmatpush2.bf16.msra.mxu0 %v970
      %1194 = vmatprep.subr.bf16.mxu0 0
      %1195 = vmatpush2.bf16.msra.mxu0 %v969
      %1196 = vmatprep.subr.bf16.mxu0 0
      %1197 = vmatpush2.bf16.msra.mxu0 %v968
      %1198 = vmatprep.subr.bf16.mxu0 0
      %1199 = vmatpush2.bf16.msra.mxu0 %v967
      %1200 = vmatprep.mubr.bf16.mxu0 %v690
      %1201 = vmatmul.mubr.bf16.gmra.mxu0 %v689
      %v1202 = vpop.f32.mrf.mxu0
      %v1203 = vadd.f32 %v1042, %v1202
      %v1204 = vpop.f32.mrf.mxu0
      %v1205 = vpop.f32.mrf.mxu0
      %v1206 = vadd.f32 %v1045, %v1205
      %v1207 = vpop.f32.mrf.mxu0
      %1208 = vmatprep.mubr.bf16.mxu0 %v694
      %1209 = vmatmul.mubr.bf16.gmra.mxu0 %v693
      %v1210 = vpop.f32.mrf.mxu0
      %v1211 = vadd.f32 %v1050, %v1210
      %v1212 = vpop.f32.mrf.mxu0
      %v1213 = vpop.f32.mrf.mxu0
      %v1214 = vadd.f32 %v1053, %v1213
      %v1215 = vpop.f32.mrf.mxu0
      %1216 = vmatprep.mubr.bf16.mxu0 %v698
      %1217 = vmatmul.mubr.bf16.gmra.mxu0 %v697
      %v1218 = vpop.f32.mrf.mxu0
      %v1219 = vadd.f32 %v1058, %v1218
      %v1220 = vpop.f32.mrf.mxu0
      %v1221 = vpop.f32.mrf.mxu0
      %v1222 = vadd.f32 %v1061, %v1221
      %v1223 = vpop.f32.mrf.mxu0
      %1224 = vmatprep.mubr.bf16.mxu0 %v702
      %1225 = vmatmul.mubr.bf16.gmra.mxu0 %v701
      %v1226 = vpop.f32.mrf.mxu0
      %v1227 = vadd.f32 %v1066, %v1226
      %v1228 = vpop.f32.mrf.mxu0
      %v1229 = vpop.f32.mrf.mxu0
      %v1230 = vadd.f32 %v1069, %v1229
      %v1231 = vpop.f32.mrf.mxu0
      %1232 = vmatprep.mubr.bf16.mxu0 %v706
      %1233 = vmatmul.mubr.bf16.gmra.mxu0 %v705
      %v1234 = vpop.f32.mrf.mxu0
      %v1235 = vadd.f32 %v1074, %v1234
      %v1236 = vpop.f32.mrf.mxu0
      %v1237 = vpop.f32.mrf.mxu0
      %v1238 = vadd.f32 %v1077, %v1237
      %v1239 = vpop.f32.mrf.mxu0
      %1240 = vmatprep.mubr.bf16.mxu0 %v710
      %1241 = vmatmul.mubr.bf16.gmra.mxu0 %v709
      %v1242 = vpop.f32.mrf.mxu0
      %v1243 = vadd.f32 %v1082, %v1242
      %v1244 = vpop.f32.mrf.mxu0
      %v1245 = vpop.f32.mrf.mxu0
      %v1246 = vadd.f32 %v1085, %v1245
      %v1247 = vpop.f32.mrf.mxu0
      %1248 = vmatprep.mubr.bf16.mxu0 %v714
      %1249 = vmatmul.mubr.bf16.gmra.mxu0 %v713
      %v1250 = vpop.f32.mrf.mxu0
      %v1251 = vadd.f32 %v1090, %v1250
      %v1252 = vpop.f32.mrf.mxu0
      %v1253 = vpop.f32.mrf.mxu0
      %v1254 = vadd.f32 %v1093, %v1253
      %v1255 = vpop.f32.mrf.mxu0
      %1256 = vmatprep.mubr.bf16.mxu0 %v718
      %1257 = vmatmul.mubr.bf16.gmra.mxu0 %v717
      %v1258 = vpop.f32.mrf.mxu0
      %v1259 = vadd.f32 %v1098, %v1258
      %v1260 = vpop.f32.mrf.mxu0
      %v1261 = vpop.f32.mrf.mxu0
      %v1262 = vadd.f32 %v1101, %v1261
      %v1263 = vpop.f32.mrf.mxu0
      %1264 = vmatprep.mubr.bf16.mxu0 %v722
      %1265 = vmatmul.mubr.bf16.gmra.mxu0 %v721
      %v1266 = vpop.f32.mrf.mxu0
      %v1267 = vadd.f32 %v1106, %v1266
      %v1268 = vpop.f32.mrf.mxu0
      %v1269 = vpop.f32.mrf.mxu0
      %v1270 = vadd.f32 %v1109, %v1269
      %v1271 = vpop.f32.mrf.mxu0
      %1272 = vmatprep.mubr.bf16.mxu0 %v726
      %1273 = vmatmul.mubr.bf16.gmra.mxu0 %v725
      %v1274 = vpop.f32.mrf.mxu0
      %v1275 = vadd.f32 %v1114, %v1274
      %v1276 = vpop.f32.mrf.mxu0
      %v1277 = vpop.f32.mrf.mxu0
      %v1278 = vadd.f32 %v1117, %v1277
      %v1279 = vpop.f32.mrf.mxu0
      %1280 = vmatprep.mubr.bf16.mxu0 %v730
      %1281 = vmatmul.mubr.bf16.gmra.mxu0 %v729
      %v1282 = vpop.f32.mrf.mxu0
      %v1283 = vadd.f32 %v1122, %v1282
      %v1284 = vpop.f32.mrf.mxu0
      %v1285 = vpop.f32.mrf.mxu0
      %v1286 = vadd.f32 %v1125, %v1285
      %v1287 = vpop.f32.mrf.mxu0
      %1288 = vmatprep.mubr.bf16.mxu0 %v734
      %1289 = vmatmul.mubr.bf16.gmra.mxu0 %v733
      %v1290 = vpop.f32.mrf.mxu0
      %v1291 = vadd.f32 %v1130, %v1290
      %v1292 = vpop.f32.mrf.mxu0
      %v1293 = vpop.f32.mrf.mxu0
      %v1294 = vadd.f32 %v1133, %v1293
      %v1295 = vpop.f32.mrf.mxu0
      %1296 = vmatprep.mubr.bf16.mxu0 %v738
      %1297 = vmatmul.mubr.bf16.gmra.mxu0 %v737
      %v1298 = vpop.f32.mrf.mxu0
      %v1299 = vadd.f32 %v1138, %v1298
      %v1300 = vpop.f32.mrf.mxu0
      %v1301 = vpop.f32.mrf.mxu0
      %v1302 = vadd.f32 %v1141, %v1301
      %v1303 = vpop.f32.mrf.mxu0
      %1304 = vmatprep.mubr.bf16.mxu0 %v742
      %1305 = vmatmul.mubr.bf16.gmra.mxu0 %v741
      %v1306 = vpop.f32.mrf.mxu0
      %v1307 = vadd.f32 %v1146, %v1306
      %v1308 = vpop.f32.mrf.mxu0
      %v1309 = vpop.f32.mrf.mxu0
      %v1310 = vadd.f32 %v1149, %v1309
      %v1311 = vpop.f32.mrf.mxu0
      %1312 = vmatprep.mubr.bf16.mxu0 %v746
      %1313 = vmatmul.mubr.bf16.gmra.mxu0 %v745
      %v1314 = vpop.f32.mrf.mxu0
      %v1315 = vadd.f32 %v1154, %v1314
      %v1316 = vpop.f32.mrf.mxu0
      %v1317 = vpop.f32.mrf.mxu0
      %v1318 = vadd.f32 %v1157, %v1317
      %v1319 = vpop.f32.mrf.mxu0
      %1320 = vmatprep.mubr.bf16.mxu0 %v750
      %1321 = vmatmul.mubr.bf16.gmra.mxu0 %v749
      %v1322 = vpop.f32.mrf.mxu0
      %v1323 = vadd.f32 %v1162, %v1322
      %v1324 = vpop.f32.mrf.mxu0
      %v1325 = vpop.f32.mrf.mxu0
      %v1326 = vadd.f32 %v1165, %v1325
      %v1327 = vpop.f32.mrf.mxu0
      %1328 = vdwg.mxu0
      %v1329 = vadd.f32 %v335, %v1203
      %v1330 = vadd.f32 %v336, %v1206
      %v1331 = vadd.f32 %v337, %v1211
      %v1332 = vadd.f32 %v338, %v1214
      %v1333 = vadd.f32 %v339, %v1219
      %v1334 = vadd.f32 %v340, %v1222
      %v1335 = vadd.f32 %v341, %v1227
      %v1336 = vadd.f32 %v342, %v1230
      %v1337 = vadd.f32 %v343, %v1235
      %v1338 = vadd.f32 %v344, %v1238
      %v1339 = vadd.f32 %v345, %v1243
      %v1340 = vadd.f32 %v346, %v1246
      %v1341 = vadd.f32 %v347, %v1251
      %v1342 = vadd.f32 %v348, %v1254
      %v1343 = vadd.f32 %v349, %v1259
      %v1344 = vadd.f32 %v350, %v1262
      %v1345 = vadd.f32 %v351, %v1267
      %v1346 = vadd.f32 %v352, %v1270
      %v1347 = vadd.f32 %v353, %v1275
      %v1348 = vadd.f32 %v354, %v1278
      %v1349 = vadd.f32 %v355, %v1283
      %v1350 = vadd.f32 %v356, %v1286
      %v1351 = vadd.f32 %v357, %v1291
      %v1352 = vadd.f32 %v358, %v1294
      %v1353 = vadd.f32 %v359, %v1299
      %v1354 = vadd.f32 %v360, %v1302
      %v1355 = vadd.f32 %v361, %v1307
      %v1356 = vadd.f32 %v362, %v1310
      %v1357 = vadd.f32 %v363, %v1315
      %v1358 = vadd.f32 %v364, %v1318
      %v1359 = vadd.f32 %v365, %v1323
      %v1360 = vadd.f32 %v366, %v1326
      %1361 = vst [vmem:[#allocation2] sm:$0xff] %v1329
      %1362 = vst [vmem:[#allocation2 + $0x8] sm:$0xff] %v1330
      %1363 = vst [vmem:[#allocation2 + $0x10] sm:$0xff] %v1331
      %1364 = vst [vmem:[#allocation2 + $0x18] sm:$0xff] %v1332
      %1365 = vst [vmem:[#allocation2 + $0x20] sm:$0xff] %v1333
      %1366 = vst [vmem:[#allocation2 + $0x28] sm:$0xff] %v1334
      %1367 = vst [vmem:[#allocation2 + $0x30] sm:$0xff] %v1335
      %1368 = vst [vmem:[#allocation2 + $0x38] sm:$0xff] %v1336
      %1369 = vst [vmem:[#allocation2 + $0x40] sm:$0xff] %v1337
      %1370 = vst [vmem:[#allocation2 + $0x48] sm:$0xff] %v1338
      %1371 = vst [vmem:[#allocation2 + $0x50] sm:$0xff] %v1339
      %1372 = vst [vmem:[#allocation2 + $0x58] sm:$0xff] %v1340
      %1373 = vst [vmem:[#allocation2 + $0x60] sm:$0xff] %v1341
      %1374 = vst [vmem:[#allocation2 + $0x68] sm:$0xff] %v1342
      %1375 = vst [vmem:[#allocation2 + $0x70] sm:$0xff] %v1343
      %1376 = vst [vmem:[#allocation2 + $0x78] sm:$0xff] %v1344
      %1377 = vst [vmem:[#allocation2 + $0x80] sm:$0xff] %v1345
      %1378 = vst [vmem:[#allocation2 + $0x88] sm:$0xff] %v1346
      %1379 = vst [vmem:[#allocation2 + $0x90] sm:$0xff] %v1347
      %1380 = vst [vmem:[#allocation2 + $0x98] sm:$0xff] %v1348
      %1381 = vst [vmem:[#allocation2 + $0xa0] sm:$0xff] %v1349
      %1382 = vst [vmem:[#allocation2 + $0xa8] sm:$0xff] %v1350
      %1383 = vst [vmem:[#allocation2 + $0xb0] sm:$0xff] %v1351
      %1384 = vst [vmem:[#allocation2 + $0xb8] sm:$0xff] %v1352
      %1385 = vst [vmem:[#allocation2 + $0xc0] sm:$0xff] %v1353
      %1386 = vst [vmem:[#allocation2 + $0xc8] sm:$0xff] %v1354
      %1387 = vst [vmem:[#allocation2 + $0xd0] sm:$0xff] %v1355
      %1388 = vst [vmem:[#allocation2 + $0xd8] sm:$0xff] %v1356
      %1389 = vst [vmem:[#allocation2 + $0xe0] sm:$0xff] %v1357
      %1390 = vst [vmem:[#allocation2 + $0xe8] sm:$0xff] %v1358
      %1391 = vst [vmem:[#allocation2 + $0xf0] sm:$0xff] %v1359
      %1392 = vst [vmem:[#allocation2 + $0xf8] sm:$0xff] %v1360
      // Predicated region
      $region37: #{gcn_forward.7} parent=31 // pred_check
        %p1393 = pneg %p299
      $region38: #{gcn_forward.7} parent=31 // pred_check_branch
        %1395 = sbr.rel (%p1393) target = $region40
      $region39: #{gcn_forward.7} parent=31 // pred_region
        %v1396 = vld [vmem:[#allocation2] sm:$0xff]
        %v1397 = vld [vmem:[#allocation2 + $0x8] sm:$0xff]
        %v1398 = vld [vmem:[#allocation2 + $0x10] sm:$0xff]
        %v1399 = vld [vmem:[#allocation2 + $0x18] sm:$0xff]
        %v1400 = vld [vmem:[#allocation2 + $0x20] sm:$0xff]
        %v1401 = vld [vmem:[#allocation2 + $0x28] sm:$0xff]
        %v1402 = vld [vmem:[#allocation2 + $0x30] sm:$0xff]
        %v1403 = vld [vmem:[#allocation2 + $0x38] sm:$0xff]
        %v1404 = vld [vmem:[#allocation2 + $0x40] sm:$0xff]
        %v1405 = vld [vmem:[#allocation2 + $0x48] sm:$0xff]
        %v1406 = vld [vmem:[#allocation2 + $0x50] sm:$0xff]
        %v1407 = vld [vmem:[#allocation2 + $0x58] sm:$0xff]
        %v1408 = vld [vmem:[#allocation2 + $0x60] sm:$0xff]
        %v1409 = vld [vmem:[#allocation2 + $0x68] sm:$0xff]
        %v1410 = vld [vmem:[#allocation2 + $0x70] sm:$0xff]
        %v1411 = vld [vmem:[#allocation2 + $0x78] sm:$0xff]
        %v1412 = vld [vmem:[#allocation2 + $0x80] sm:$0xff]
        %v1413 = vld [vmem:[#allocation2 + $0x88] sm:$0xff]
        %v1414 = vld [vmem:[#allocation2 + $0x90] sm:$0xff]
        %v1415 = vld [vmem:[#allocation2 + $0x98] sm:$0xff]
        %v1416 = vld [vmem:[#allocation2 + $0xa0] sm:$0xff]
        %v1417 = vld [vmem:[#allocation2 + $0xa8] sm:$0xff]
        %v1418 = vld [vmem:[#allocation2 + $0xb0] sm:$0xff]
        %v1419 = vld [vmem:[#allocation2 + $0xb8] sm:$0xff]
        %v1420 = vld [vmem:[#allocation2 + $0xc0] sm:$0xff]
        %v1421 = vld [vmem:[#allocation2 + $0xc8] sm:$0xff]
        %v1422 = vld [vmem:[#allocation2 + $0xd0] sm:$0xff]
        %v1423 = vld [vmem:[#allocation2 + $0xd8] sm:$0xff]
        %v1424 = vld [vmem:[#allocation2 + $0xe0] sm:$0xff]
        %v1425 = vld [vmem:[#allocation2 + $0xe8] sm:$0xff]
        %v1426 = vld [vmem:[#allocation2 + $0xf0] sm:$0xff]
        %v1427 = vld [vmem:[#allocation2 + $0xf8] sm:$0xff]
        %v1428 = vld [vmem:[%s2] sm:$0x1]
        %v1430 = vlaneseq
        %v1431 = vshrl.u32 %v1430, 7
        %v1432 = vsub.s32 0, %v1431
        %v1433 = vrot.slane %v1428, %v1432
        %v1435 = vadd.f32 %v1396, %v1433
        %v1436 = vadd.f32 %v1397, %v1433
        %v1437 = vadd.f32 %v1398, %v1433
        %v1438 = vadd.f32 %v1399, %v1433
        %v1439 = vadd.f32 %v1400, %v1433
        %v1440 = vadd.f32 %v1401, %v1433
        %v1441 = vadd.f32 %v1402, %v1433
        %v1442 = vadd.f32 %v1403, %v1433
        %v1443 = vadd.f32 %v1404, %v1433
        %v1444 = vadd.f32 %v1405, %v1433
        %v1445 = vadd.f32 %v1406, %v1433
        %v1446 = vadd.f32 %v1407, %v1433
        %v1447 = vadd.f32 %v1408, %v1433
        %v1448 = vadd.f32 %v1409, %v1433
        %v1449 = vadd.f32 %v1410, %v1433
        %v1450 = vadd.f32 %v1411, %v1433
        %v1451 = vadd.f32 %v1412, %v1433
        %v1452 = vadd.f32 %v1413, %v1433
        %v1453 = vadd.f32 %v1414, %v1433
        %v1454 = vadd.f32 %v1415, %v1433
        %v1455 = vadd.f32 %v1416, %v1433
        %v1456 = vadd.f32 %v1417, %v1433
        %v1457 = vadd.f32 %v1418, %v1433
        %v1458 = vadd.f32 %v1419, %v1433
        %v1459 = vadd.f32 %v1420, %v1433
        %v1460 = vadd.f32 %v1421, %v1433
        %v1461 = vadd.f32 %v1422, %v1433
        %v1462 = vadd.f32 %v1423, %v1433
        %v1463 = vadd.f32 %v1424, %v1433
        %v1464 = vadd.f32 %v1425, %v1433
        %v1465 = vadd.f32 %v1426, %v1433
        %v1466 = vadd.f32 %v1427, %v1433
        %v1467 = vpack.c.bf16 %v1436, %v1435
        %v1468 = vpack.c.bf16 %v1438, %v1437
        %v1469 = vpack.c.bf16 %v1440, %v1439
        %v1470 = vpack.c.bf16 %v1442, %v1441
        %v1471 = vpack.c.bf16 %v1444, %v1443
        %v1472 = vpack.c.bf16 %v1446, %v1445
        %v1473 = vpack.c.bf16 %v1448, %v1447
        %v1474 = vpack.c.bf16 %v1450, %v1449
        %v1475 = vpack.c.bf16 %v1452, %v1451
        %v1476 = vpack.c.bf16 %v1454, %v1453
        %v1477 = vpack.c.bf16 %v1456, %v1455
        %v1478 = vpack.c.bf16 %v1458, %v1457
        %v1479 = vpack.c.bf16 %v1460, %v1459
        %v1480 = vpack.c.bf16 %v1462, %v1461
        %v1481 = vpack.c.bf16 %v1464, %v1463
        %v1482 = vpack.c.bf16 %v1466, %v1465
        %v1499 = vunpack.c.l.b16 %v1467
        %v1500 = vunpack.c.h.b16 %v1467
        %v1501 = vunpack.c.l.b16 %v1468
        %v1502 = vunpack.c.h.b16 %v1468
        %v1503 = vunpack.c.l.b16 %v1469
        %v1504 = vunpack.c.h.b16 %v1469
        %v1505 = vunpack.c.l.b16 %v1470
        %v1506 = vunpack.c.h.b16 %v1470
        %v1507 = vunpack.c.l.b16 %v1471
        %v1508 = vunpack.c.h.b16 %v1471
        %v1509 = vunpack.c.l.b16 %v1472
        %v1510 = vunpack.c.h.b16 %v1472
        %v1511 = vunpack.c.l.b16 %v1473
        %v1512 = vunpack.c.h.b16 %v1473
        %v1513 = vunpack.c.l.b16 %v1474
        %v1514 = vunpack.c.h.b16 %v1474
        %v1515 = vunpack.c.l.b16 %v1475
        %v1516 = vunpack.c.h.b16 %v1475
        %v1517 = vunpack.c.l.b16 %v1476
        %v1518 = vunpack.c.h.b16 %v1476
        %v1519 = vunpack.c.l.b16 %v1477
        %v1520 = vunpack.c.h.b16 %v1477
        %v1521 = vunpack.c.l.b16 %v1478
        %v1522 = vunpack.c.h.b16 %v1478
        %v1523 = vunpack.c.l.b16 %v1479
        %v1524 = vunpack.c.h.b16 %v1479
        %v1525 = vunpack.c.l.b16 %v1480
        %v1526 = vunpack.c.h.b16 %v1480
        %v1527 = vunpack.c.l.b16 %v1481
        %v1528 = vunpack.c.h.b16 %v1481
        %v1529 = vunpack.c.l.b16 %v1482
        %v1530 = vunpack.c.h.b16 %v1482
        %v1531 = vpack.c.b16 %v1499, %v1499
        %v1532 = vpack.c.b16 %v1500, %v1500
        %v1533 = vpack.c.b16 %v1501, %v1501
        %v1534 = vpack.c.b16 %v1502, %v1502
        %v1535 = vpack.c.b16 %v1503, %v1503
        %v1536 = vpack.c.b16 %v1504, %v1504
        %v1537 = vpack.c.b16 %v1505, %v1505
        %v1538 = vpack.c.b16 %v1506, %v1506
        %v1539 = vpack.c.b16 %v1507, %v1507
        %v1540 = vpack.c.b16 %v1508, %v1508
        %v1541 = vpack.c.b16 %v1509, %v1509
        %v1542 = vpack.c.b16 %v1510, %v1510
        %v1543 = vpack.c.b16 %v1511, %v1511
        %v1544 = vpack.c.b16 %v1512, %v1512
        %v1545 = vpack.c.b16 %v1513, %v1513
        %v1546 = vpack.c.b16 %v1514, %v1514
        %v1547 = vpack.c.b16 %v1515, %v1515
        %v1548 = vpack.c.b16 %v1516, %v1516
        %v1549 = vpack.c.b16 %v1517, %v1517
        %v1550 = vpack.c.b16 %v1518, %v1518
        %v1551 = vpack.c.b16 %v1519, %v1519
        %v1552 = vpack.c.b16 %v1520, %v1520
        %v1553 = vpack.c.b16 %v1521, %v1521
        %v1554 = vpack.c.b16 %v1522, %v1522
        %v1555 = vpack.c.b16 %v1523, %v1523
        %v1556 = vpack.c.b16 %v1524, %v1524
        %v1557 = vpack.c.b16 %v1525, %v1525
        %v1558 = vpack.c.b16 %v1526, %v1526
        %v1559 = vpack.c.b16 %v1527, %v1527
        %v1560 = vpack.c.b16 %v1528, %v1528
        %v1561 = vpack.c.b16 %v1529, %v1529
        %v1562 = vpack.c.b16 %v1530, %v1530
        %1595 = vst [vmem:[%s290] sm:$0xf] %v1531
        %1596 = vst [vmem:[%s290 + $0x4] sm:$0xf] %v1532
        %1597 = vst [vmem:[%s290 + $0x8] sm:$0xf] %v1533
        %1598 = vst [vmem:[%s290 + $0xc] sm:$0xf] %v1534
        %1599 = vst [vmem:[%s290 + $0x10] sm:$0xf] %v1535
        %1600 = vst [vmem:[%s290 + $0x14] sm:$0xf] %v1536
        %1601 = vst [vmem:[%s290 + $0x18] sm:$0xf] %v1537
        %1602 = vst [vmem:[%s290 + $0x1c] sm:$0xf] %v1538
        %1603 = vst [vmem:[%s290 + $0x20] sm:$0xf] %v1539
        %1604 = vst [vmem:[%s290 + $0x24] sm:$0xf] %v1540
        %1605 = vst [vmem:[%s290 + $0x28] sm:$0xf] %v1541
        %1606 = vst [vmem:[%s290 + $0x2c] sm:$0xf] %v1542
        %1607 = vst [vmem:[%s290 + $0x30] sm:$0xf] %v1543
        %1608 = vst [vmem:[%s290 + $0x34] sm:$0xf] %v1544
        %1609 = vst [vmem:[%s290 + $0x38] sm:$0xf] %v1545
        %1610 = vst [vmem:[%s290 + $0x3c] sm:$0xf] %v1546
        %1611 = vst [vmem:[%s290 + $0x40] sm:$0xf] %v1547
        %1612 = vst [vmem:[%s290 + $0x44] sm:$0xf] %v1548
        %1613 = vst [vmem:[%s290 + $0x48] sm:$0xf] %v1549
        %1614 = vst [vmem:[%s290 + $0x4c] sm:$0xf] %v1550
        %1615 = vst [vmem:[%s290 + $0x50] sm:$0xf] %v1551
        %1616 = vst [vmem:[%s290 + $0x54] sm:$0xf] %v1552
        %1617 = vst [vmem:[%s290 + $0x58] sm:$0xf] %v1553
        %1618 = vst [vmem:[%s290 + $0x5c] sm:$0xf] %v1554
        %1619 = vst [vmem:[%s290 + $0x60] sm:$0xf] %v1555
        %1620 = vst [vmem:[%s290 + $0x64] sm:$0xf] %v1556
        %1621 = vst [vmem:[%s290 + $0x68] sm:$0xf] %v1557
        %1622 = vst [vmem:[%s290 + $0x6c] sm:$0xf] %v1558
        %1623 = vst [vmem:[%s290 + $0x70] sm:$0xf] %v1559
        %1624 = vst [vmem:[%s290 + $0x74] sm:$0xf] %v1560
        %1625 = vst [vmem:[%s290 + $0x78] sm:$0xf] %v1561
        %1626 = vst [vmem:[%s290 + $0x7c] sm:$0xf] %v1562
        %v1627 = vadd.f32 %v1435, %v1436
        %v1628 = vadd.f32 %v1627, %v1437
        %v1629 = vadd.f32 %v1628, %v1438
        %v1630 = vadd.f32 %v1629, %v1439
        %v1631 = vadd.f32 %v1630, %v1440
        %v1632 = vadd.f32 %v1631, %v1441
        %v1633 = vadd.f32 %v1632, %v1442
        %v1634 = vadd.f32 %v1633, %v1443
        %v1635 = vadd.f32 %v1634, %v1444
        %v1636 = vadd.f32 %v1635, %v1445
        %v1637 = vadd.f32 %v1636, %v1446
        %v1638 = vadd.f32 %v1637, %v1447
        %v1639 = vadd.f32 %v1638, %v1448
        %v1640 = vadd.f32 %v1639, %v1449
        %v1641 = vadd.f32 %v1640, %v1450
        %v1642 = vadd.f32 %v1641, %v1451
        %v1643 = vadd.f32 %v1642, %v1452
        %v1644 = vadd.f32 %v1643, %v1453
        %v1645 = vadd.f32 %v1644, %v1454
        %v1646 = vadd.f32 %v1645, %v1455
        %v1647 = vadd.f32 %v1646, %v1456
        %v1648 = vadd.f32 %v1647, %v1457
        %v1649 = vadd.f32 %v1648, %v1458
        %v1650 = vadd.f32 %v1649, %v1459
        %v1651 = vadd.f32 %v1650, %v1460
        %v1652 = vadd.f32 %v1651, %v1461
        %v1653 = vadd.f32 %v1652, %v1462
        %v1654 = vadd.f32 %v1653, %v1463
        %v1655 = vadd.f32 %v1654, %v1464
        %v1656 = vadd.f32 %v1655, %v1465
        %v1657 = vadd.f32 %v1656, %v1466
        %v1658 = vrot.slane %v1657, 4
        %v1659 = vadd.f32 %v1657, %v1658
        %v1660 = vrot.slane %v1659, 2
        %v1661 = vadd.f32 %v1659, %v1660
        %v1662 = vrot.slane %v1661, 1
        %v1663 = vadd.f32 %v1661, %v1662
        %1664 = vst [vmem:[%s294] sm:$0x1] %v1663
        %v1665 = vmul.f32 %v1435, %v1435
        %v1666 = vmul.f32 %v1436, %v1436
        %v1667 = vmul.f32 %v1437, %v1437
        %v1668 = vmul.f32 %v1438, %v1438
        %v1669 = vmul.f32 %v1439, %v1439
        %v1670 = vmul.f32 %v1440, %v1440
        %v1671 = vmul.f32 %v1441, %v1441
        %v1672 = vmul.f32 %v1442, %v1442
        %v1673 = vmul.f32 %v1443, %v1443
        %v1674 = vmul.f32 %v1444, %v1444
        %v1675 = vmul.f32 %v1445, %v1445
        %v1676 = vmul.f32 %v1446, %v1446
        %v1677 = vmul.f32 %v1447, %v1447
        %v1678 = vmul.f32 %v1448, %v1448
        %v1679 = vmul.f32 %v1449, %v1449
        %v1680 = vmul.f32 %v1450, %v1450
        %v1681 = vmul.f32 %v1451, %v1451
        %v1682 = vmul.f32 %v1452, %v1452
        %v1683 = vmul.f32 %v1453, %v1453
        %v1684 = vmul.f32 %v1454, %v1454
        %v1685 = vmul.f32 %v1455, %v1455
        %v1686 = vmul.f32 %v1456, %v1456
        %v1687 = vmul.f32 %v1457, %v1457
        %v1688 = vmul.f32 %v1458, %v1458
        %v1689 = vmul.f32 %v1459, %v1459
        %v1690 = vmul.f32 %v1460, %v1460
        %v1691 = vmul.f32 %v1461, %v1461
        %v1692 = vmul.f32 %v1462, %v1462
        %v1693 = vmul.f32 %v1463, %v1463
        %v1694 = vmul.f32 %v1464, %v1464
        %v1695 = vmul.f32 %v1465, %v1465
        %v1696 = vmul.f32 %v1466, %v1466
        %v1697 = vadd.f32 %v1665, %v1666
        %v1698 = vadd.f32 %v1697, %v1667
        %v1699 = vadd.f32 %v1698, %v1668
        %v1700 = vadd.f32 %v1699, %v1669
        %v1701 = vadd.f32 %v1700, %v1670
        %v1702 = vadd.f32 %v1701, %v1671
        %v1703 = vadd.f32 %v1702, %v1672
        %v1704 = vadd.f32 %v1703, %v1673
        %v1705 = vadd.f32 %v1704, %v1674
        %v1706 = vadd.f32 %v1705, %v1675
        %v1707 = vadd.f32 %v1706, %v1676
        %v1708 = vadd.f32 %v1707, %v1677
        %v1709 = vadd.f32 %v1708, %v1678
        %v1710 = vadd.f32 %v1709, %v1679
        %v1711 = vadd.f32 %v1710, %v1680
        %v1712 = vadd.f32 %v1711, %v1681
        %v1713 = vadd.f32 %v1712, %v1682
        %v1714 = vadd.f32 %v1713, %v1683
        %v1715 = vadd.f32 %v1714, %v1684
        %v1716 = vadd.f32 %v1715, %v1685
        %v1717 = vadd.f32 %v1716, %v1686
        %v1718 = vadd.f32 %v1717, %v1687
        %v1719 = vadd.f32 %v1718, %v1688
        %v1720 = vadd.f32 %v1719, %v1689
        %v1721 = vadd.f32 %v1720, %v1690
        %v1722 = vadd.f32 %v1721, %v1691
        %v1723 = vadd.f32 %v1722, %v1692
        %v1724 = vadd.f32 %v1723, %v1693
        %v1725 = vadd.f32 %v1724, %v1694
        %v1726 = vadd.f32 %v1725, %v1695
        %v1727 = vadd.f32 %v1726, %v1696
        %v1728 = vrot.slane %v1727, 4
        %v1729 = vadd.f32 %v1727, %v1728
        %v1730 = vrot.slane %v1729, 2
        %v1731 = vadd.f32 %v1729, %v1730
        %v1732 = vrot.slane %v1731, 1
        %v1733 = vadd.f32 %v1731, %v1732
        %1734 = vst [vmem:[%s297] sm:$0x1] %v1733
      $region40: #{gcn_forward.7} parent=31 // pred_fallthru
        _
      %s1735 = smul.u32 32, %s21
      %p1736 = scmp.lt.s32.totalorder %s1735, 63
      %s1737 = scalar_select %p1736, %s1735, 63
      %s1738 = smul.addr %s1737, 4
      %s1739 = scalar_lea.vmem %s3, %s1738
      %p1740 = scmp.lt.s32.totalorder %s21, 1
      %s1741 = scalar_select %p1740, %s21, 1
      %s1742 = scalar_lea.vmem %s4, %s1741
      %p1743 = scmp.lt.s32.totalorder %s21, 1
      %s1744 = scalar_select %p1743, %s21, 1
      %s1745 = scalar_lea.vmem %s5, %s1744
      // Predicated region
      $region41: #{gcn_forward.7} parent=31 // pred_check
        %p1746 = pneg %p122
      $region42: #{gcn_forward.7} parent=31 // pred_check_branch
        %1748 = sbr.rel (%p1746) target = $region44
      $region43: #{gcn_forward.7} parent=31 // pred_region
        %s1749 = smul.u32 32, %s21
      $region44: #{gcn_forward.7} parent=31 // pred_fallthru
        _
      // Predicated region
      $region45: #{gcn_forward.7} parent=31 // pred_check
        %p1750 = pneg %p148
      $region46: #{gcn_forward.7} parent=31 // pred_check_branch
        %1752 = sbr.rel (%p1750) target = $region48
      $region47: #{gcn_forward.7} parent=31 // pred_region
        _
      $region48: #{gcn_forward.7} parent=31 // pred_fallthru
        _
      // Predicated region
      $region49: #{gcn_forward.7} parent=31 // pred_check
        %p1753 = pneg %p174
      $region50: #{gcn_forward.7} parent=31 // pred_check_branch
        %1755 = sbr.rel (%p1753) target = $region52
      $region51: #{gcn_forward.7} parent=31 // pred_region
        _
      $region52: #{gcn_forward.7} parent=31 // pred_fallthru
        _
    $region32: #{gcn_forward.7} parent=5 // pred_fallthru
      _
    %p1756 = scmp.le.s32.totalorder 2, %s12
    // Predicated region
    $region53: #{gcn_forward.7} parent=5 // pred_check
      %p1757 = pneg %p1756
    $region54: #{gcn_forward.7} parent=5 // pred_check_branch
      %1759 = sbr.rel (%p1757) target = $region56
    $region55: #{gcn_forward.7} parent=5 // pred_region
      %s1760 = ssub.s32 %s12, 2
      // Predicated region
      $region57: #{gcn_forward.7} parent=55 // pred_check
        %p1761 = pneg %p128
      $region58: #{gcn_forward.7} parent=55 // pred_check_branch
        %1763 = sbr.rel (%p1761) target = $region60
      $region59: #{gcn_forward.7} parent=55 // pred_region
        %s1764 = smul.u32 32, %s23
        %p1765 = scmp.lt.s32.totalorder %s1764, 63
        %s1766 = scalar_select %p1765, %s1764, 63
        %s1767 = smul.addr %s1766, 4
        %s1768 = scalar_lea.vmem %s3, %s1767
      $region60: #{gcn_forward.7} parent=55 // pred_fallthru
        _
      // Predicated region
      $region61: #{gcn_forward.7} parent=55 // pred_check
        %p1769 = pneg %p154
      $region62: #{gcn_forward.7} parent=55 // pred_check_branch
        %1771 = sbr.rel (%p1769) target = $region64
      $region63: #{gcn_forward.7} parent=55 // pred_region
        %p1772 = scmp.lt.s32.totalorder %s23, 1
        %s1773 = scalar_select %p1772, %s23, 1
        %s1774 = scalar_lea.vmem %s4, %s1773
      $region64: #{gcn_forward.7} parent=55 // pred_fallthru
        _
      // Predicated region
      $region65: #{gcn_forward.7} parent=55 // pred_check
        %p1775 = pneg %p180
      $region66: #{gcn_forward.7} parent=55 // pred_check_branch
        %1777 = sbr.rel (%p1775) target = $region68
      $region67: #{gcn_forward.7} parent=55 // pred_region
        %p1778 = scmp.lt.s32.totalorder %s23, 1
        %s1779 = scalar_select %p1778, %s23, 1
        %s1780 = scalar_lea.vmem %s5, %s1779
      $region68: #{gcn_forward.7} parent=55 // pred_fallthru
        _
    $region56: #{gcn_forward.7} parent=5 // pred_fallthru
      _
  $region6: #{gcn_forward.7} parent=0 // loop_footer
    %s16 = sadd.s32 1, %s12
  $region7: #{gcn_forward.7} parent=0 // loop_footer_branch
    %11 = sbr.rel target = $region3
  $region8: #{gcn_forward.7} parent=0 // loop_exit
    _

// kernel: gcn_forward.9
$region0: #{gcn_forward.9}
  #allocation0 [shape = 'u32[]', space=smem, size = 0x4, offset = 0x4, fixed_abs, tag = 'smem constant byte address 0x4 - core index']
  #allocation1 [shape = 'u32[144,128]{1,0:T(1,128)}', space=vmem, size = 0x12000, scoped, tag = 'internal scratch']
  #allocation2 [shape = 'f32[256,128]{1,0:T(8,128)}', space=vmem, size = 0x20000, scoped, tag = 'scratch operand']
  %s0 = inlined_call_operand.vmem [shape: bf16[512,512], index: 0, kind: input, shape index: {}]
  %s1 = inlined_call_operand.vmem [shape: bf16[512,128], index: 1, kind: input, shape index: {}]
  %s2 = inlined_call_operand.vmem [shape: bf16[128,128], index: 2, kind: input, shape index: {}]
  %s3 = inlined_call_operand.vmem [shape: f32[1,128], index: 3, kind: input, shape index: {}]
  %s4 = inlined_call_operand.vmem [shape: bf16[512,128], index: 4, kind: output, shape index: {0}]
  %s5 = inlined_call_operand.vmem [shape: f32[2,1,128], index: 5, kind: output, shape index: {1}]
  %s6 = inlined_call_operand.vmem [shape: f32[2,1,128], index: 6, kind: output, shape index: {2}]
  %7 = xla_tuple %s4, %s5, %s6
  %s8 = sld [smem:[#allocation0]]
  $region73: #{gcn_forward.9} parent=0
    _
  %s10 = ssub.s32 1, %s8
  %s11 = scalar_select 0, %s10, %s8
  loop: start=0, step=1, limit=4
  $region2: #{gcn_forward.9} parent=0 // loop_pre_header
    _
  $region3: #{gcn_forward.9} parent=0 // loop_header
    %s13 = sphi 0, %s17
    %p14 = scmp.ge.s32.totalorder %s13, 4
    %s20 = sphi 0, %s32
    %s21 = sphi 0, %s28
    %s22 = sphi 0, %s20
    %s23 = sphi 0, %s21
    %s24 = sphi 0, %s22
    %s25 = sphi 0, %s23
    %s37 = sphi 0, %s39
    %s40 = sphi 0, %s37
    %s41 = sphi 0, %s40
    %s57 = sphi 0, %s41
    %s63 = sphi 0, %s65
    %s66 = sphi 0, %s63
    %s67 = sphi 0, %s66
    %s83 = sphi 0, %s67
    %s87 = sphi 0, %s87
    %s89 = sphi 0, %s87
    %s90 = sphi 0, %s89
    %s104 = sphi 0, %s90
    %s108 = sphi 0, %s108
    %s110 = sphi 0, %s108
    %s111 = sphi 0, %s110
    %s125 = sphi 0, %s111
    %s131 = sphi 0, %s133
    %s134 = sphi 0, %s131
    %s135 = sphi 0, %s134
    %s151 = sphi 0, %s135
    %s157 = sphi 0, %s159
    %s160 = sphi 0, %s157
    %s161 = sphi 0, %s160
    %s177 = sphi 0, %s161
    %s183 = sphi 0, %s185
    %s186 = sphi 0, %s183
    %s187 = sphi 0, %s186
    %s203 = sphi 0, %s187
  $region4: #{gcn_forward.9} parent=0 // loop_header_branch
    %16 = sbr.rel (%p14) target = $region8
  $region5: #{gcn_forward.9} parent=0 // loop_body
    %s18 = ssub.s32 %s13, 1
    %s19 = ssub.s32 %s13, 2
    %s26 = sadd.s32 1, %s21
    %p27 = scmp.ge.s32.totalorder %s26, 1
    %s28 = scalar_select %p27, 0, %s26
    %s29 = sadd.s32 1, %s20
    %s30 = scalar_select %p27, %s29, %s20
    %p31 = scmp.ge.s32.totalorder %s30, 2
    %s32 = scalar_select %p31, 0, %s30
    %s33 = ssub.s32 %s20, %s32
    %s34 = ssub.s32 %s21, %s28
    %s35 = sor.u32 %s33, %s34
    %p36 = scmp.eq.s32.totalorder %s35, 0
    %s38 = sadd.s32 %s37, 1
    %s39 = scalar_select %p36, %s37, %s38
    %p42 = pneg %p36
    %p43 = scmp.eq.s32.totalorder %s13, 1
    %p44 = por %p42, %p43
    %p45 = scmp.ne.s32.totalorder %s37, %s40
    %p46 = scmp.eq.s32.totalorder %s13, 0
    %p47 = por %p45, %p46
    %p48 = scmp.ne.s32.totalorder %s37, %s40
    %p49 = scmp.eq.s32.totalorder %s18, 1
    %p50 = por %p48, %p49
    %p51 = scmp.ne.s32.totalorder %s40, %s41
    %p52 = scmp.eq.s32.totalorder %s18, 0
    %p53 = por %p51, %p52
    %p54 = scmp.ne.s32.totalorder %s40, %s41
    %p55 = scmp.eq.s32.totalorder %s19, 1
    %p56 = por %p54, %p55
    %p58 = scmp.ne.s32.totalorder %s41, %s57
    %p59 = scmp.eq.s32.totalorder %s19, 0
    %p60 = por %p58, %p59
    %s61 = ssub.s32 %s21, %s28
    %p62 = scmp.eq.s32.totalorder %s61, 0
    %s64 = sadd.s32 %s63, 1
    %s65 = scalar_select %p62, %s63, %s64
    %p68 = pneg %p62
    %p69 = scmp.eq.s32.totalorder %s13, 1
    %p70 = por %p68, %p69
    %p71 = scmp.ne.s32.totalorder %s63, %s66
    %p72 = scmp.eq.s32.totalorder %s13, 0
    %p73 = por %p71, %p72
    %p74 = scmp.ne.s32.totalorder %s63, %s66
    %p75 = scmp.eq.s32.totalorder %s18, 1
    %p76 = por %p74, %p75
    %p77 = scmp.ne.s32.totalorder %s66, %s67
    %p78 = scmp.eq.s32.totalorder %s18, 0
    %p79 = por %p77, %p78
    %p80 = scmp.ne.s32.totalorder %s66, %s67
    %p81 = scmp.eq.s32.totalorder %s19, 1
    %p82 = por %p80, %p81
    %p84 = scmp.ne.s32.totalorder %s67, %s83
    %p85 = scmp.eq.s32.totalorder %s19, 0
    %p86 = por %p84, %p85
    %s88 = sadd.s32 %s87, 1
    %p91 = scmp.eq.s32.totalorder %s13, 1
    %p92 = scmp.ne.s32.totalorder %s87, %s89
    %p93 = scmp.eq.s32.totalorder %s13, 0
    %p94 = por %p92, %p93
    %p95 = scmp.ne.s32.totalorder %s87, %s89
    %p96 = scmp.eq.s32.totalorder %s18, 1
    %p97 = por %p95, %p96
    %p98 = scmp.ne.s32.totalorder %s89, %s90
    %p99 = scmp.eq.s32.totalorder %s18, 0
    %p100 = por %p98, %p99
    %p101 = scmp.ne.s32.totalorder %s89, %s90
    %p102 = scmp.eq.s32.totalorder %s19, 1
    %p103 = por %p101, %p102
    %p105 = scmp.ne.s32.totalorder %s90, %s104
    %p106 = scmp.eq.s32.totalorder %s19, 0
    %p107 = por %p105, %p106
    %s109 = sadd.s32 %s108, 1
    %p112 = scmp.eq.s32.totalorder %s13, 1
    %p113 = scmp.ne.s32.totalorder %s108, %s110
    %p114 = scmp.eq.s32.totalorder %s13, 0
    %p115 = por %p113, %p114
    %p116 = scmp.ne.s32.totalorder %s108, %s110
    %p117 = scmp.eq.s32.totalorder %s18, 1
    %p118 = por %p116, %p117
    %p119 = scmp.ne.s32.totalorder %s110, %s111
    %p120 = scmp.eq.s32.totalorder %s18, 0
    %p121 = por %p119, %p120
    %p122 = scmp.ne.s32.totalorder %s110, %s111
    %p123 = scmp.eq.s32.totalorder %s19, 1
    %p124 = por %p122, %p123
    %p126 = scmp.ne.s32.totalorder %s111, %s125
    %p127 = scmp.eq.s32.totalorder %s19, 0
    %p128 = por %p126, %p127
    %s129 = ssub.s32 %s20, %s32
    %p130 = scmp.eq.s32.totalorder %s129, 0
    %s132 = sadd.s32 %s131, 1
    %s133 = scalar_select %p130, %s131, %s132
    %p136 = pneg %p130
    %p137 = scmp.eq.s32.totalorder %s13, 1
    %p138 = por %p136, %p137
    %p139 = scmp.ne.s32.totalorder %s131, %s134
    %p140 = scmp.eq.s32.totalorder %s13, 0
    %p141 = por %p139, %p140
    %p142 = scmp.ne.s32.totalorder %s131, %s134
    %p143 = scmp.eq.s32.totalorder %s18, 1
    %p144 = por %p142, %p143
    %p145 = scmp.ne.s32.totalorder %s134, %s135
    %p146 = scmp.eq.s32.totalorder %s18, 0
    %p147 = por %p145, %p146
    %p148 = scmp.ne.s32.totalorder %s134, %s135
    %p149 = scmp.eq.s32.totalorder %s19, 1
    %p150 = por %p148, %p149
    %p152 = scmp.ne.s32.totalorder %s135, %s151
    %p153 = scmp.eq.s32.totalorder %s19, 0
    %p154 = por %p152, %p153
    %s155 = ssub.s32 %s20, %s32
    %p156 = scmp.eq.s32.totalorder %s155, 0
    %s158 = sadd.s32 %s157, 1
    %s159 = scalar_select %p156, %s157, %s158
    %p162 = pneg %p156
    %p163 = scmp.eq.s32.totalorder %s13, 1
    %p164 = por %p162, %p163
    %p165 = scmp.ne.s32.totalorder %s157, %s160
    %p166 = scmp.eq.s32.totalorder %s13, 0
    %p167 = por %p165, %p166
    %p168 = scmp.ne.s32.totalorder %s157, %s160
    %p169 = scmp.eq.s32.totalorder %s18, 1
    %p170 = por %p168, %p169
    %p171 = scmp.ne.s32.totalorder %s160, %s161
    %p172 = scmp.eq.s32.totalorder %s18, 0
    %p173 = por %p171, %p172
    %p174 = scmp.ne.s32.totalorder %s160, %s161
    %p175 = scmp.eq.s32.totalorder %s19, 1
    %p176 = por %p174, %p175
    %p178 = scmp.ne.s32.totalorder %s161, %s177
    %p179 = scmp.eq.s32.totalorder %s19, 0
    %p180 = por %p178, %p179
    %s181 = ssub.s32 %s20, %s32
    %p182 = scmp.eq.s32.totalorder %s181, 0
    %s184 = sadd.s32 %s183, 1
    %s185 = scalar_select %p182, %s183, %s184
    %p188 = pneg %p182
    %p189 = scmp.eq.s32.totalorder %s13, 1
    %p190 = por %p188, %p189
    %p191 = scmp.ne.s32.totalorder %s183, %s186
    %p192 = scmp.eq.s32.totalorder %s13, 0
    %p193 = por %p191, %p192
    %p194 = scmp.ne.s32.totalorder %s183, %s186
    %p195 = scmp.eq.s32.totalorder %s18, 1
    %p196 = por %p194, %p195
    %p197 = scmp.ne.s32.totalorder %s186, %s187
    %p198 = scmp.eq.s32.totalorder %s18, 0
    %p199 = por %p197, %p198
    %p200 = scmp.ne.s32.totalorder %s186, %s187
    %p201 = scmp.eq.s32.totalorder %s19, 1
    %p202 = por %p200, %p201
    %p204 = scmp.ne.s32.totalorder %s187, %s203
    %p205 = scmp.eq.s32.totalorder %s19, 0
    %p206 = por %p204, %p205
    %p207 = scmp.le.s32.totalorder 1, %s13
    %p208 = scmp.lt.s32.totalorder %s13, 3
    %p209 = pnand %p207, %p208
    %p210 = pneg %p209
    // Predicated region
    $region9: #{gcn_forward.9} parent=5 // pred_check
      _
    $region10: #{gcn_forward.9} parent=5 // pred_check_branch
      %212 = sbr.rel (%p209) target = $region12
    $region11: #{gcn_forward.9} parent=5 // pred_region
      %s213 = ssub.s32 %s13, 1
      // Predicated region
      $region13: #{gcn_forward.9} parent=11 // pred_check
        %p214 = pneg %p79
      $region14: #{gcn_forward.9} parent=11 // pred_check_branch
        %216 = sbr.rel (%p214) target = $region16
      $region15: #{gcn_forward.9} parent=11 // pred_region
        %s217 = smul.u32 64, %s23
        %p218 = scmp.lt.s32.totalorder %s217, 63
        %s219 = scalar_select %p218, %s217, 63
        %s220 = smul.addr %s219, 4
        %s221 = scalar_lea.vmem %s1, %s220
        %s222 = smul.u32 64, %s23
      $region16: #{gcn_forward.9} parent=11 // pred_fallthru
        _
      // Predicated region
      $region17: #{gcn_forward.9} parent=11 // pred_check
        %p223 = pneg %p100
      $region18: #{gcn_forward.9} parent=11 // pred_check_branch
        %225 = sbr.rel (%p223) target = $region20
      $region19: #{gcn_forward.9} parent=11 // pred_region
        _
      $region20: #{gcn_forward.9} parent=11 // pred_fallthru
        _
      // Predicated region
      $region21: #{gcn_forward.9} parent=11 // pred_check
        %p226 = pneg %p121
      $region22: #{gcn_forward.9} parent=11 // pred_check_branch
        %228 = sbr.rel (%p226) target = $region24
      $region23: #{gcn_forward.9} parent=11 // pred_region
        _
      $region24: #{gcn_forward.9} parent=11 // pred_fallthru
        _
    $region12: #{gcn_forward.9} parent=5 // pred_fallthru
      _
    %p229 = scmp.lt.s32.totalorder %s13, 2
    // Predicated region
    $region25: #{gcn_forward.9} parent=5 // pred_check
      %p230 = pneg %p229
    $region26: #{gcn_forward.9} parent=5 // pred_check_branch
      %232 = sbr.rel (%p230) target = $region28
    $region27: #{gcn_forward.9} parent=5 // pred_region
      // Predicated region
      $region29: #{gcn_forward.9} parent=27 // pred_check
        %p233 = pneg %p47
      $region30: #{gcn_forward.9} parent=27 // pred_check_branch
        %235 = sbr.rel (%p233) target = $region32
      $region31: #{gcn_forward.9} parent=27 // pred_region
        %s236 = smul.u32 32, %s20
        %s237 = smul.u32 4, %s21
        %p238 = scmp.lt.s32.totalorder %s236, 63
        %s239 = scalar_select %p238, %s236, 63
        %p240 = scmp.lt.s32.totalorder %s237, 3
        %s241 = scalar_select %p240, %s237, 3
        %s242 = smul.addr %s239, 4
        %s243 = sadd.s32 %s241, %s242
        %s244 = smul.addr %s243, 4
        %s245 = scalar_lea.vmem %s0, %s244
        %s246 = smul.u32 32, %s20
        %s247 = smul.u32 4, %s21
      $region32: #{gcn_forward.9} parent=27 // pred_fallthru
        _
    $region28: #{gcn_forward.9} parent=5 // pred_fallthru
      _
    %p248 = scmp.le.s32.totalorder 1, %s13
    %p249 = scmp.lt.s32.totalorder %s13, 3
    %p250 = pnand %p248, %p249
    %p251 = pneg %p250
    // Predicated region
    $region33: #{gcn_forward.9} parent=5 // pred_check
      _
    $region34: #{gcn_forward.9} parent=5 // pred_check_branch
      %253 = sbr.rel (%p250) target = $region36
    $region35: #{gcn_forward.9} parent=5 // pred_region
      %s254 = ssub.s32 %s13, 1
      %s255 = smul.u32 32, %s22
      %s256 = smul.u32 4, %s23
      %p257 = scmp.lt.s32.totalorder %s255, 63
      %s258 = scalar_select %p257, %s255, 63
      %p259 = scmp.lt.s32.totalorder %s256, 3
      %s260 = scalar_select %p259, %s256, 3
      %s261 = smul.addr %s258, 4
      %s262 = sadd.s32 %s260, %s261
      %s263 = smul.addr %s262, 4
      %s264 = scalar_lea.vmem %s0, %s263
      %p265 = pneg %p53
      %p266 = pneg %p50
      %s267 = smul.u32 64, %s23
      %p268 = scmp.lt.s32.totalorder %s267, 63
      %s269 = scalar_select %p268, %s267, 63
      %s270 = smul.addr %s269, 4
      %s271 = scalar_lea.vmem %s1, %s270
      %p272 = pneg %p79
      %p273 = pneg %p76
      %p274 = pneg %p100
      %p275 = pneg %p97
      %p276 = pneg %p121
      %p277 = pneg %p118
      %p278 = pneg %p147
      %p279 = pneg %p144
      %s280 = smul.u32 32, %s22
      %p281 = scmp.lt.s32.totalorder %s280, 63
      %s282 = scalar_select %p281, %s280, 63
      %s283 = smul.addr %s282, 4
      %s284 = scalar_lea.vmem %s4, %s283
      %p285 = pneg %p173
      %p286 = pneg %p170
      %p287 = scmp.lt.s32.totalorder %s22, 1
      %s288 = scalar_select %p287, %s22, 1
      %s289 = scalar_lea.vmem %s5, %s288
      %p290 = pneg %p199
      %p291 = pneg %p196
      %p292 = scmp.lt.s32.totalorder %s22, 1
      %s293 = scalar_select %p292, %s22, 1
      %s294 = scalar_lea.vmem %s6, %s293
      %s295 = smul.u32 32, %s22
      %s296 = smul.u32 4, %s23
      %p297 = scmp.lt.s32.totalorder %s295, 63
      %s298 = scalar_select %p297, %s295, 63
      %p299 = scmp.lt.s32.totalorder %s296, 3
      %s300 = scalar_select %p299, %s296, 3
      %s301 = smul.addr %s298, 4
      %s302 = sadd.s32 %s300, %s301
      %s303 = smul.addr %s302, 4
      %s304 = scalar_lea.vmem %s0, %s303
      %s305 = smul.u32 32, %s22
      %s306 = smul.u32 4, %s23
      %s307 = smul.u32 64, %s23
      %p308 = scmp.lt.s32.totalorder %s307, 63
      %s309 = scalar_select %p308, %s307, 63
      %s310 = smul.addr %s309, 4
      %s311 = scalar_lea.vmem %s1, %s310
      %s312 = smul.u32 64, %s23
      %s313 = smul.u32 32, %s22
      %p314 = scmp.lt.s32.totalorder %s313, 63
      %s315 = scalar_select %p314, %s313, 63
      %s316 = smul.addr %s315, 4
      %s317 = scalar_lea.vmem %s4, %s316
      %s318 = smul.u32 32, %s22
      %p319 = scmp.lt.s32.totalorder %s22, 1
      %s320 = scalar_select %p319, %s22, 1
      %s321 = scalar_lea.vmem %s5, %s320
      %p322 = scmp.lt.s32.totalorder %s22, 1
      %s323 = scalar_select %p322, %s22, 1
      %s324 = scalar_lea.vmem %s6, %s323
      %p326 = scmp.eq.s32.totalorder %s23, 0
      // Predicated region
      $region37: #{gcn_forward.9} parent=35 // pred_check
        %p327 = pneg %p326
      $region38: #{gcn_forward.9} parent=35 // pred_check_branch
        %329 = sbr.rel (%p327) target = $region40
      $region39: #{gcn_forward.9} parent=35 // pred_region
        %330 = vst [vmem:[#allocation2] sm:$0xff] 0.0
        %331 = vst [vmem:[#allocation2 + $0x8] sm:$0xff] 0.0
        %332 = vst [vmem:[#allocation2 + $0x10] sm:$0xff] 0.0
        %333 = vst [vmem:[#allocation2 + $0x18] sm:$0xff] 0.0
        %334 = vst [vmem:[#allocation2 + $0x20] sm:$0xff] 0.0
        %335 = vst [vmem:[#allocation2 + $0x28] sm:$0xff] 0.0
        %336 = vst [vmem:[#allocation2 + $0x30] sm:$0xff] 0.0
        %337 = vst [vmem:[#allocation2 + $0x38] sm:$0xff] 0.0
        %338 = vst [vmem:[#allocation2 + $0x40] sm:$0xff] 0.0
        %339 = vst [vmem:[#allocation2 + $0x48] sm:$0xff] 0.0
        %340 = vst [vmem:[#allocation2 + $0x50] sm:$0xff] 0.0
        %341 = vst [vmem:[#allocation2 + $0x58] sm:$0xff] 0.0
        %342 = vst [vmem:[#allocation2 + $0x60] sm:$0xff] 0.0
        %343 = vst [vmem:[#allocation2 + $0x68] sm:$0xff] 0.0
        %344 = vst [vmem:[#allocation2 + $0x70] sm:$0xff] 0.0
        %345 = vst [vmem:[#allocation2 + $0x78] sm:$0xff] 0.0
        %346 = vst [vmem:[#allocation2 + $0x80] sm:$0xff] 0.0
        %347 = vst [vmem:[#allocation2 + $0x88] sm:$0xff] 0.0
        %348 = vst [vmem:[#allocation2 + $0x90] sm:$0xff] 0.0
        %349 = vst [vmem:[#allocation2 + $0x98] sm:$0xff] 0.0
        %350 = vst [vmem:[#allocation2 + $0xa0] sm:$0xff] 0.0
        %351 = vst [vmem:[#allocation2 + $0xa8] sm:$0xff] 0.0
        %352 = vst [vmem:[#allocation2 + $0xb0] sm:$0xff] 0.0
        %353 = vst [vmem:[#allocation2 + $0xb8] sm:$0xff] 0.0
        %354 = vst [vmem:[#allocation2 + $0xc0] sm:$0xff] 0.0
        %355 = vst [vmem:[#allocation2 + $0xc8] sm:$0xff] 0.0
        %356 = vst [vmem:[#allocation2 + $0xd0] sm:$0xff] 0.0
        %357 = vst [vmem:[#allocation2 + $0xd8] sm:$0xff] 0.0
        %358 = vst [vmem:[#allocation2 + $0xe0] sm:$0xff] 0.0
        %359 = vst [vmem:[#allocation2 + $0xe8] sm:$0xff] 0.0
        %360 = vst [vmem:[#allocation2 + $0xf0] sm:$0xff] 0.0
        %361 = vst [vmem:[#allocation2 + $0xf8] sm:$0xff] 0.0
      $region40: #{gcn_forward.9} parent=35 // pred_fallthru
        _
      %v362 = vld [vmem:[#allocation2] sm:$0xff]
      %v363 = vld [vmem:[#allocation2 + $0x8] sm:$0xff]
      %v364 = vld [vmem:[#allocation2 + $0x10] sm:$0xff]
      %v365 = vld [vmem:[#allocation2 + $0x18] sm:$0xff]
      %v366 = vld [vmem:[#allocation2 + $0x20] sm:$0xff]
      %v367 = vld [vmem:[#allocation2 + $0x28] sm:$0xff]
      %v368 = vld [vmem:[#allocation2 + $0x30] sm:$0xff]
      %v369 = vld [vmem:[#allocation2 + $0x38] sm:$0xff]
      %v370 = vld [vmem:[#allocation2 + $0x40] sm:$0xff]
      %v371 = vld [vmem:[#allocation2 + $0x48] sm:$0xff]
      %v372 = vld [vmem:[#allocation2 + $0x50] sm:$0xff]
      %v373 = vld [vmem:[#allocation2 + $0x58] sm:$0xff]
      %v374 = vld [vmem:[#allocation2 + $0x60] sm:$0xff]
      %v375 = vld [vmem:[#allocation2 + $0x68] sm:$0xff]
      %v376 = vld [vmem:[#allocation2 + $0x70] sm:$0xff]
      %v377 = vld [vmem:[#allocation2 + $0x78] sm:$0xff]
      %v378 = vld [vmem:[#allocation2 + $0x80] sm:$0xff]
      %v379 = vld [vmem:[#allocation2 + $0x88] sm:$0xff]
      %v380 = vld [vmem:[#allocation2 + $0x90] sm:$0xff]
      %v381 = vld [vmem:[#allocation2 + $0x98] sm:$0xff]
      %v382 = vld [vmem:[#allocation2 + $0xa0] sm:$0xff]
      %v383 = vld [vmem:[#allocation2 + $0xa8] sm:$0xff]
      %v384 = vld [vmem:[#allocation2 + $0xb0] sm:$0xff]
      %v385 = vld [vmem:[#allocation2 + $0xb8] sm:$0xff]
      %v386 = vld [vmem:[#allocation2 + $0xc0] sm:$0xff]
      %v387 = vld [vmem:[#allocation2 + $0xc8] sm:$0xff]
      %v388 = vld [vmem:[#allocation2 + $0xd0] sm:$0xff]
      %v389 = vld [vmem:[#allocation2 + $0xd8] sm:$0xff]
      %v390 = vld [vmem:[#allocation2 + $0xe0] sm:$0xff]
      %v391 = vld [vmem:[#allocation2 + $0xe8] sm:$0xff]
      %v392 = vld [vmem:[#allocation2 + $0xf0] sm:$0xff]
      %v393 = vld [vmem:[#allocation2 + $0xf8] sm:$0xff]
      %v394 = vld [vmem:[%s304] sm:$0xff]
      %v395 = vld [vmem:[%s304 + $0x8] sm:$0xff]
      %v396 = vld [vmem:[%s304 + $0x10] sm:$0xff]
      %v397 = vld [vmem:[%s304 + $0x18] sm:$0xff]
      %v398 = vld [vmem:[%s304 + $0x20] sm:$0xff]
      %v399 = vld [vmem:[%s304 + $0x28] sm:$0xff]
      %v400 = vld [vmem:[%s304 + $0x30] sm:$0xff]
      %v401 = vld [vmem:[%s304 + $0x38] sm:$0xff]
      %v402 = vld [vmem:[%s304 + $0x40] sm:$0xff]
      %v403 = vld [vmem:[%s304 + $0x48] sm:$0xff]
      %v404 = vld [vmem:[%s304 + $0x50] sm:$0xff]
      %v405 = vld [vmem:[%s304 + $0x58] sm:$0xff]
      %v406 = vld [vmem:[%s304 + $0x60] sm:$0xff]
      %v407 = vld [vmem:[%s304 + $0x68] sm:$0xff]
      %v408 = vld [vmem:[%s304 + $0x70] sm:$0xff]
      %v409 = vld [vmem:[%s304 + $0x78] sm:$0xff]
      %v410 = vld [vmem:[%s304 + $0x80] sm:$0xff]
      %v411 = vld [vmem:[%s304 + $0x88] sm:$0xff]
      %v412 = vld [vmem:[%s304 + $0x90] sm:$0xff]
      %v413 = vld [vmem:[%s304 + $0x98] sm:$0xff]
      %v414 = vld [vmem:[%s304 + $0xa0] sm:$0xff]
      %v415 = vld [vmem:[%s304 + $0xa8] sm:$0xff]
      %v416 = vld [vmem:[%s304 + $0xb0] sm:$0xff]
      %v417 = vld [vmem:[%s304 + $0xb8] sm:$0xff]
      %v418 = vld [vmem:[%s304 + $0xc0] sm:$0xff]
      %v419 = vld [vmem:[%s304 + $0xc8] sm:$0xff]
      %v420 = vld [vmem:[%s304 + $0xd0] sm:$0xff]
      %v421 = vld [vmem:[%s304 + $0xd8] sm:$0xff]
      %v422 = vld [vmem:[%s304 + $0xe0] sm:$0xff]
      %v423 = vld [vmem:[%s304 + $0xe8] sm:$0xff]
      %v424 = vld [vmem:[%s304 + $0xf0] sm:$0xff]
      %v425 = vld [vmem:[%s304 + $0xf8] sm:$0xff]
      %v426 = vld [vmem:[%s304 + $0x100] sm:$0xff]
      %v427 = vld [vmem:[%s304 + $0x108] sm:$0xff]
      %v428 = vld [vmem:[%s304 + $0x110] sm:$0xff]
      %v429 = vld [vmem:[%s304 + $0x118] sm:$0xff]
      %v430 = vld [vmem:[%s304 + $0x120] sm:$0xff]
      %v431 = vld [vmem:[%s304 + $0x128] sm:$0xff]
      %v432 = vld [vmem:[%s304 + $0x130] sm:$0xff]
      %v433 = vld [vmem:[%s304 + $0x138] sm:$0xff]
      %v434 = vld [vmem:[%s304 + $0x140] sm:$0xff]
      %v435 = vld [vmem:[%s304 + $0x148] sm:$0xff]
      %v436 = vld [vmem:[%s304 + $0x150] sm:$0xff]
      %v437 = vld [vmem:[%s304 + $0x158] sm:$0xff]
      %v438 = vld [vmem:[%s304 + $0x160] sm:$0xff]
      %v439 = vld [vmem:[%s304 + $0x168] sm:$0xff]
      %v440 = vld [vmem:[%s304 + $0x170] sm:$0xff]
      %v441 = vld [vmem:[%s304 + $0x178] sm:$0xff]
      %v442 = vld [vmem:[%s304 + $0x180] sm:$0xff]
      %v443 = vld [vmem:[%s304 + $0x188] sm:$0xff]
      %v444 = vld [vmem:[%s304 + $0x190] sm:$0xff]
      %v445 = vld [vmem:[%s304 + $0x198] sm:$0xff]
      %v446 = vld [vmem:[%s304 + $0x1a0] sm:$0xff]
      %v447 = vld [vmem:[%s304 + $0x1a8] sm:$0xff]
      %v448 = vld [vmem:[%s304 + $0x1b0] sm:$0xff]
      %v449 = vld [vmem:[%s304 + $0x1b8] sm:$0xff]
      %v450 = vld [vmem:[%s304 + $0x1c0] sm:$0xff]
      %v451 = vld [vmem:[%s304 + $0x1c8] sm:$0xff]
      %v452 = vld [vmem:[%s304 + $0x1d0] sm:$0xff]
      %v453 = vld [vmem:[%s304 + $0x1d8] sm:$0xff]
      %v454 = vld [vmem:[%s304 + $0x1e0] sm:$0xff]
      %v455 = vld [vmem:[%s304 + $0x1e8] sm:$0xff]
      %v456 = vld [vmem:[%s304 + $0x1f0] sm:$0xff]
      %v457 = vld [vmem:[%s304 + $0x1f8] sm:$0xff]
      %v458 = vld [vmem:[%s311] sm:$0xf]
      %v459 = vld [vmem:[%s311 + $0x4] sm:$0xf]
      %v460 = vld [vmem:[%s311 + $0x8] sm:$0xf]
      %v461 = vld [vmem:[%s311 + $0xc] sm:$0xf]
      %v462 = vld [vmem:[%s311 + $0x10] sm:$0xf]
      %v463 = vld [vmem:[%s311 + $0x14] sm:$0xf]
      %v464 = vld [vmem:[%s311 + $0x18] sm:$0xf]
      %v465 = vld [vmem:[%s311 + $0x1c] sm:$0xf]
      %v466 = vld [vmem:[%s311 + $0x20] sm:$0xf]
      %v467 = vld [vmem:[%s311 + $0x24] sm:$0xf]
      %v468 = vld [vmem:[%s311 + $0x28] sm:$0xf]
      %v469 = vld [vmem:[%s311 + $0x2c] sm:$0xf]
      %v470 = vld [vmem:[%s311 + $0x30] sm:$0xf]
      %v471 = vld [vmem:[%s311 + $0x34] sm:$0xf]
      %v472 = vld [vmem:[%s311 + $0x38] sm:$0xf]
      %v473 = vld [vmem:[%s311 + $0x3c] sm:$0xf]
      %v474 = vld [vmem:[%s311 + $0x40] sm:$0xf]
      %v475 = vld [vmem:[%s311 + $0x44] sm:$0xf]
      %v476 = vld [vmem:[%s311 + $0x48] sm:$0xf]
      %v477 = vld [vmem:[%s311 + $0x4c] sm:$0xf]
      %v478 = vld [vmem:[%s311 + $0x50] sm:$0xf]
      %v479 = vld [vmem:[%s311 + $0x54] sm:$0xf]
      %v480 = vld [vmem:[%s311 + $0x58] sm:$0xf]
      %v481 = vld [vmem:[%s311 + $0x5c] sm:$0xf]
      %v482 = vld [vmem:[%s311 + $0x60] sm:$0xf]
      %v483 = vld [vmem:[%s311 + $0x64] sm:$0xf]
      %v484 = vld [vmem:[%s311 + $0x68] sm:$0xf]
      %v485 = vld [vmem:[%s311 + $0x6c] sm:$0xf]
      %v486 = vld [vmem:[%s311 + $0x70] sm:$0xf]
      %v487 = vld [vmem:[%s311 + $0x74] sm:$0xf]
      %v488 = vld [vmem:[%s311 + $0x78] sm:$0xf]
      %v489 = vld [vmem:[%s311 + $0x7c] sm:$0xf]
      %v490 = vld [vmem:[%s311 + $0x80] sm:$0xf]
      %v491 = vld [vmem:[%s311 + $0x84] sm:$0xf]
      %v492 = vld [vmem:[%s311 + $0x88] sm:$0xf]
      %v493 = vld [vmem:[%s311 + $0x8c] sm:$0xf]
      %v494 = vld [vmem:[%s311 + $0x90] sm:$0xf]
      %v495 = vld [vmem:[%s311 + $0x94] sm:$0xf]
      %v496 = vld [vmem:[%s311 + $0x98] sm:$0xf]
      %v497 = vld [vmem:[%s311 + $0x9c] sm:$0xf]
      %v498 = vld [vmem:[%s311 + $0xa0] sm:$0xf]
      %v499 = vld [vmem:[%s311 + $0xa4] sm:$0xf]
      %v500 = vld [vmem:[%s311 + $0xa8] sm:$0xf]
      %v501 = vld [vmem:[%s311 + $0xac] sm:$0xf]
      %v502 = vld [vmem:[%s311 + $0xb0] sm:$0xf]
      %v503 = vld [vmem:[%s311 + $0xb4] sm:$0xf]
      %v504 = vld [vmem:[%s311 + $0xb8] sm:$0xf]
      %v505 = vld [vmem:[%s311 + $0xbc] sm:$0xf]
      %v506 = vld [vmem:[%s311 + $0xc0] sm:$0xf]
      %v507 = vld [vmem:[%s311 + $0xc4] sm:$0xf]
      %v508 = vld [vmem:[%s311 + $0xc8] sm:$0xf]
      %v509 = vld [vmem:[%s311 + $0xcc] sm:$0xf]
      %v510 = vld [vmem:[%s311 + $0xd0] sm:$0xf]
      %v511 = vld [vmem:[%s311 + $0xd4] sm:$0xf]
      %v512 = vld [vmem:[%s311 + $0xd8] sm:$0xf]
      %v513 = vld [vmem:[%s311 + $0xdc] sm:$0xf]
      %v514 = vld [vmem:[%s311 + $0xe0] sm:$0xf]
      %v515 = vld [vmem:[%s311 + $0xe4] sm:$0xf]
      %v516 = vld [vmem:[%s311 + $0xe8] sm:$0xf]
      %v517 = vld [vmem:[%s311 + $0xec] sm:$0xf]
      %v518 = vld [vmem:[%s311 + $0xf0] sm:$0xf]
      %v519 = vld [vmem:[%s311 + $0xf4] sm:$0xf]
      %v520 = vld [vmem:[%s311 + $0xf8] sm:$0xf]
      %v521 = vld [vmem:[%s311 + $0xfc] sm:$0xf]
      %v586 = vunpack.c.l.b16 %v394
      %v587 = vunpack.c.h.b16 %v394
      %v588 = vunpack.c.l.b16 %v395
      %v589 = vunpack.c.h.b16 %v395
      %v590 = vunpack.c.l.b16 %v396
      %v591 = vunpack.c.h.b16 %v396
      %v592 = vunpack.c.l.b16 %v397
      %v593 = vunpack.c.h.b16 %v397
      %v594 = vunpack.c.l.b16 %v398
      %v595 = vunpack.c.h.b16 %v398
      %v596 = vunpack.c.l.b16 %v399
      %v597 = vunpack.c.h.b16 %v399
      %v598 = vunpack.c.l.b16 %v400
      %v599 = vunpack.c.h.b16 %v400
      %v600 = vunpack.c.l.b16 %v401
      %v601 = vunpack.c.h.b16 %v401
      %v602 = vunpack.c.l.b16 %v402
      %v603 = vunpack.c.h.b16 %v402
      %v604 = vunpack.c.l.b16 %v403
      %v605 = vunpack.c.h.b16 %v403
      %v606 = vunpack.c.l.b16 %v404
      %v607 = vunpack.c.h.b16 %v404
      %v608 = vunpack.c.l.b16 %v405
      %v609 = vunpack.c.h.b16 %v405
      %v610 = vunpack.c.l.b16 %v406
      %v611 = vunpack.c.h.b16 %v406
      %v612 = vunpack.c.l.b16 %v407
      %v613 = vunpack.c.h.b16 %v407
      %v614 = vunpack.c.l.b16 %v408
      %v615 = vunpack.c.h.b16 %v408
      %v616 = vunpack.c.l.b16 %v409
      %v617 = vunpack.c.h.b16 %v409
      %v618 = vunpack.c.l.b16 %v410
      %v619 = vunpack.c.h.b16 %v410
      %v620 = vunpack.c.l.b16 %v411
      %v621 = vunpack.c.h.b16 %v411
      %v622 = vunpack.c.l.b16 %v412
      %v623 = vunpack.c.h.b16 %v412
      %v624 = vunpack.c.l.b16 %v413
      %v625 = vunpack.c.h.b16 %v413
      %v626 = vunpack.c.l.b16 %v414
      %v627 = vunpack.c.h.b16 %v414
      %v628 = vunpack.c.l.b16 %v415
      %v629 = vunpack.c.h.b16 %v415
      %v630 = vunpack.c.l.b16 %v416
      %v631 = vunpack.c.h.b16 %v416
      %v632 = vunpack.c.l.b16 %v417
      %v633 = vunpack.c.h.b16 %v417
      %v634 = vunpack.c.l.b16 %v418
      %v635 = vunpack.c.h.b16 %v418
      %v636 = vunpack.c.l.b16 %v419
      %v637 = vunpack.c.h.b16 %v419
      %v638 = vunpack.c.l.b16 %v420
      %v639 = vunpack.c.h.b16 %v420
      %v640 = vunpack.c.l.b16 %v421
      %v641 = vunpack.c.h.b16 %v421
      %v642 = vunpack.c.l.b16 %v422
      %v643 = vunpack.c.h.b16 %v422
      %v644 = vunpack.c.l.b16 %v423
      %v645 = vunpack.c.h.b16 %v423
      %v646 = vunpack.c.l.b16 %v424
      %v647 = vunpack.c.h.b16 %v424
      %v648 = vunpack.c.l.b16 %v425
      %v649 = vunpack.c.h.b16 %v425
      %v650 = vunpack.c.l.b16 %v426
      %v651 = vunpack.c.h.b16 %v426
      %v652 = vunpack.c.l.b16 %v427
      %v653 = vunpack.c.h.b16 %v427
      %v654 = vunpack.c.l.b16 %v428
      %v655 = vunpack.c.h.b16 %v428
      %v656 = vunpack.c.l.b16 %v429
      %v657 = vunpack.c.h.b16 %v429
      %v658 = vunpack.c.l.b16 %v430
      %v659 = vunpack.c.h.b16 %v430
      %v660 = vunpack.c.l.b16 %v431
      %v661 = vunpack.c.h.b16 %v431
      %v662 = vunpack.c.l.b16 %v432
      %v663 = vunpack.c.h.b16 %v432
      %v664 = vunpack.c.l.b16 %v433
      %v665 = vunpack.c.h.b16 %v433
      %v666 = vunpack.c.l.b16 %v434
      %v667 = vunpack.c.h.b16 %v434
      %v668 = vunpack.c.l.b16 %v435
      %v669 = vunpack.c.h.b16 %v435
      %v670 = vunpack.c.l.b16 %v436
      %v671 = vunpack.c.h.b16 %v436
      %v672 = vunpack.c.l.b16 %v437
      %v673 = vunpack.c.h.b16 %v437
      %v674 = vunpack.c.l.b16 %v438
      %v675 = vunpack.c.h.b16 %v438
      %v676 = vunpack.c.l.b16 %v439
      %v677 = vunpack.c.h.b16 %v439
      %v678 = vunpack.c.l.b16 %v440
      %v679 = vunpack.c.h.b16 %v440
      %v680 = vunpack.c.l.b16 %v441
      %v681 = vunpack.c.h.b16 %v441
      %v682 = vunpack.c.l.b16 %v442
      %v683 = vunpack.c.h.b16 %v442
      %v684 = vunpack.c.l.b16 %v443
      %v685 = vunpack.c.h.b16 %v443
      %v686 = vunpack.c.l.b16 %v444
      %v687 = vunpack.c.h.b16 %v444
      %v688 = vunpack.c.l.b16 %v445
      %v689 = vunpack.c.h.b16 %v445
      %v690 = vunpack.c.l.b16 %v446
      %v691 = vunpack.c.h.b16 %v446
      %v692 = vunpack.c.l.b16 %v447
      %v693 = vunpack.c.h.b16 %v447
      %v694 = vunpack.c.l.b16 %v448
      %v695 = vunpack.c.h.b16 %v448
      %v696 = vunpack.c.l.b16 %v449
      %v697 = vunpack.c.h.b16 %v449
      %v698 = vunpack.c.l.b16 %v450
      %v699 = vunpack.c.h.b16 %v450
      %v700 = vunpack.c.l.b16 %v451
      %v701 = vunpack.c.h.b16 %v451
      %v702 = vunpack.c.l.b16 %v452
      %v703 = vunpack.c.h.b16 %v452
      %v704 = vunpack.c.l.b16 %v453
      %v705 = vunpack.c.h.b16 %v453
      %v706 = vunpack.c.l.b16 %v454
      %v707 = vunpack.c.h.b16 %v454
      %v708 = vunpack.c.l.b16 %v455
      %v709 = vunpack.c.h.b16 %v455
      %v710 = vunpack.c.l.b16 %v456
      %v711 = vunpack.c.h.b16 %v456
      %v712 = vunpack.c.l.b16 %v457
      %v713 = vunpack.c.h.b16 %v457
      %v714 = vpack.c.b16 %v590, %v586
      %v715 = vpack.c.b16 %v591, %v587
      %v716 = vpack.c.b16 %v592, %v588
      %v717 = vpack.c.b16 %v593, %v589
      %v718 = vpack.c.b16 %v598, %v594
      %v719 = vpack.c.b16 %v599, %v595
      %v720 = vpack.c.b16 %v600, %v596
      %v721 = vpack.c.b16 %v601, %v597
      %v722 = vpack.c.b16 %v606, %v602
      %v723 = vpack.c.b16 %v607, %v603
      %v724 = vpack.c.b16 %v608, %v604
      %v725 = vpack.c.b16 %v609, %v605
      %v726 = vpack.c.b16 %v614, %v610
      %v727 = vpack.c.b16 %v615, %v611
      %v728 = vpack.c.b16 %v616, %v612
      %v729 = vpack.c.b16 %v617, %v613
      %v730 = vpack.c.b16 %v622, %v618
      %v731 = vpack.c.b16 %v623, %v619
      %v732 = vpack.c.b16 %v624, %v620
      %v733 = vpack.c.b16 %v625, %v621
      %v734 = vpack.c.b16 %v630, %v626
      %v735 = vpack.c.b16 %v631, %v627
      %v736 = vpack.c.b16 %v632, %v628
      %v737 = vpack.c.b16 %v633, %v629
      %v738 = vpack.c.b16 %v638, %v634
      %v739 = vpack.c.b16 %v639, %v635
      %v740 = vpack.c.b16 %v640, %v636
      %v741 = vpack.c.b16 %v641, %v637
      %v742 = vpack.c.b16 %v646, %v642
      %v743 = vpack.c.b16 %v647, %v643
      %v744 = vpack.c.b16 %v648, %v644
      %v745 = vpack.c.b16 %v649, %v645
      %v746 = vpack.c.b16 %v654, %v650
      %v747 = vpack.c.b16 %v655, %v651
      %v748 = vpack.c.b16 %v656, %v652
      %v749 = vpack.c.b16 %v657, %v653
      %v750 = vpack.c.b16 %v662, %v658
      %v751 = vpack.c.b16 %v663, %v659
      %v752 = vpack.c.b16 %v664, %v660
      %v753 = vpack.c.b16 %v665, %v661
      %v754 = vpack.c.b16 %v670, %v666
      %v755 = vpack.c.b16 %v671, %v667
      %v756 = vpack.c.b16 %v672, %v668
      %v757 = vpack.c.b16 %v673, %v669
      %v758 = vpack.c.b16 %v678, %v674
      %v759 = vpack.c.b16 %v679, %v675
      %v760 = vpack.c.b16 %v680, %v676
      %v761 = vpack.c.b16 %v681, %v677
      %v762 = vpack.c.b16 %v686, %v682
      %v763 = vpack.c.b16 %v687, %v683
      %v764 = vpack.c.b16 %v688, %v684
      %v765 = vpack.c.b16 %v689, %v685
      %v766 = vpack.c.b16 %v694, %v690
      %v767 = vpack.c.b16 %v695, %v691
      %v768 = vpack.c.b16 %v696, %v692
      %v769 = vpack.c.b16 %v697, %v693
      %v770 = vpack.c.b16 %v702, %v698
      %v771 = vpack.c.b16 %v703, %v699
      %v772 = vpack.c.b16 %v704, %v700
      %v773 = vpack.c.b16 %v705, %v701
      %v774 = vpack.c.b16 %v710, %v706
      %v775 = vpack.c.b16 %v711, %v707
      %v776 = vpack.c.b16 %v712, %v708
      %v777 = vpack.c.b16 %v713, %v709
      %v906 = vunpack.c.l.b16 %v458
      %v907 = vunpack.c.l.b16 %v459
      %v908 = vunpack.c.l.b16 %v460
      %v909 = vunpack.c.l.b16 %v461
      %v910 = vunpack.c.l.b16 %v462
      %v911 = vunpack.c.l.b16 %v463
      %v912 = vunpack.c.l.b16 %v464
      %v913 = vunpack.c.l.b16 %v465
      %v914 = vunpack.c.l.b16 %v466
      %v915 = vunpack.c.l.b16 %v467
      %v916 = vunpack.c.l.b16 %v468
      %v917 = vunpack.c.l.b16 %v469
      %v918 = vunpack.c.l.b16 %v470
      %v919 = vunpack.c.l.b16 %v471
      %v920 = vunpack.c.l.b16 %v472
      %v921 = vunpack.c.l.b16 %v473
      %v922 = vunpack.c.l.b16 %v474
      %v923 = vunpack.c.l.b16 %v475
      %v924 = vunpack.c.l.b16 %v476
      %v925 = vunpack.c.l.b16 %v477
      %v926 = vunpack.c.l.b16 %v478
      %v927 = vunpack.c.l.b16 %v479
      %v928 = vunpack.c.l.b16 %v480
      %v929 = vunpack.c.l.b16 %v481
      %v930 = vunpack.c.l.b16 %v482
      %v931 = vunpack.c.l.b16 %v483
      %v932 = vunpack.c.l.b16 %v484
      %v933 = vunpack.c.l.b16 %v485
      %v934 = vunpack.c.l.b16 %v486
      %v935 = vunpack.c.l.b16 %v487
      %v936 = vunpack.c.l.b16 %v488
      %v937 = vunpack.c.l.b16 %v489
      %v938 = vunpack.c.l.b16 %v490
      %v939 = vunpack.c.l.b16 %v491
      %v940 = vunpack.c.l.b16 %v492
      %v941 = vunpack.c.l.b16 %v493
      %v942 = vunpack.c.l.b16 %v494
      %v943 = vunpack.c.l.b16 %v495
      %v944 = vunpack.c.l.b16 %v496
      %v945 = vunpack.c.l.b16 %v497
      %v946 = vunpack.c.l.b16 %v498
      %v947 = vunpack.c.l.b16 %v499
      %v948 = vunpack.c.l.b16 %v500
      %v949 = vunpack.c.l.b16 %v501
      %v950 = vunpack.c.l.b16 %v502
      %v951 = vunpack.c.l.b16 %v503
      %v952 = vunpack.c.l.b16 %v504
      %v953 = vunpack.c.l.b16 %v505
      %v954 = vunpack.c.l.b16 %v506
      %v955 = vunpack.c.l.b16 %v507
      %v956 = vunpack.c.l.b16 %v508
      %v957 = vunpack.c.l.b16 %v509
      %v958 = vunpack.c.l.b16 %v510
      %v959 = vunpack.c.l.b16 %v511
      %v960 = vunpack.c.l.b16 %v512
      %v961 = vunpack.c.l.b16 %v513
      %v962 = vunpack.c.l.b16 %v514
      %v963 = vunpack.c.l.b16 %v515
      %v964 = vunpack.c.l.b16 %v516
      %v965 = vunpack.c.l.b16 %v517
      %v966 = vunpack.c.l.b16 %v518
      %v967 = vunpack.c.l.b16 %v519
      %v968 = vunpack.c.l.b16 %v520
      %v969 = vunpack.c.l.b16 %v521
      %v970 = vpack.c.b16 %v907, %v906
      %v971 = vpack.c.b16 %v909, %v908
      %v972 = vpack.c.b16 %v911, %v910
      %v973 = vpack.c.b16 %v913, %v912
      %v974 = vpack.c.b16 %v915, %v914
      %v975 = vpack.c.b16 %v917, %v916
      %v976 = vpack.c.b16 %v919, %v918
      %v977 = vpack.c.b16 %v921, %v920
      %v978 = vpack.c.b16 %v923, %v922
      %v979 = vpack.c.b16 %v925, %v924
      %v980 = vpack.c.b16 %v927, %v926
      %v981 = vpack.c.b16 %v929, %v928
      %v982 = vpack.c.b16 %v931, %v930
      %v983 = vpack.c.b16 %v933, %v932
      %v984 = vpack.c.b16 %v935, %v934
      %v985 = vpack.c.b16 %v937, %v936
      %v986 = vpack.c.b16 %v939, %v938
      %v987 = vpack.c.b16 %v941, %v940
      %v988 = vpack.c.b16 %v943, %v942
      %v989 = vpack.c.b16 %v945, %v944
      %v990 = vpack.c.b16 %v947, %v946
      %v991 = vpack.c.b16 %v949, %v948
      %v992 = vpack.c.b16 %v951, %v950
      %v993 = vpack.c.b16 %v953, %v952
      %v994 = vpack.c.b16 %v955, %v954
      %v995 = vpack.c.b16 %v957, %v956
      %v996 = vpack.c.b16 %v959, %v958
      %v997 = vpack.c.b16 %v961, %v960
      %v998 = vpack.c.b16 %v963, %v962
      %v999 = vpack.c.b16 %v965, %v964
      %v1000 = vpack.c.b16 %v967, %v966
      %v1001 = vpack.c.b16 %v969, %v968
      %1034 = vmatprep.subr.bf16.mxu0 0
      %1035 = vmatpush1.bf16.msra.mxu0 %v977
      %1036 = vmatprep.subr.bf16.mxu0 0
      %1037 = vmatpush1.bf16.msra.mxu0 %v976
      %1038 = vmatprep.subr.bf16.mxu0 0
      %1039 = vmatpush1.bf16.msra.mxu0 %v975
      %1040 = vmatprep.subr.bf16.mxu0 0
      %1041 = vmatpush1.bf16.msra.mxu0 %v974
      %1042 = vmatprep.subr.bf16.mxu0 0
      %1043 = vmatpush1.bf16.msra.mxu0 %v973
      %1044 = vmatprep.subr.bf16.mxu0 0
      %1045 = vmatpush1.bf16.msra.mxu0 %v972
      %1046 = vmatprep.subr.bf16.mxu0 0
      %1047 = vmatpush1.bf16.msra.mxu0 %v971
      %1048 = vmatprep.subr.bf16.mxu0 0
      %1049 = vmatpush1.bf16.msra.mxu0 %v970
      %1050 = vmatprep.subr.bf16.mxu0 0
      %1051 = vmatpush2.bf16.msra.mxu0 %v985
      %1052 = vmatprep.subr.bf16.mxu0 0
      %1053 = vmatpush2.bf16.msra.mxu0 %v984
      %1054 = vmatprep.subr.bf16.mxu0 0
      %1055 = vmatpush2.bf16.msra.mxu0 %v983
      %1056 = vmatprep.subr.bf16.mxu0 0
      %1057 = vmatpush2.bf16.msra.mxu0 %v982
      %1058 = vmatprep.subr.bf16.mxu0 0
      %1059 = vmatpush2.bf16.msra.mxu0 %v981
      %1060 = vmatprep.subr.bf16.mxu0 0
      %1061 = vmatpush2.bf16.msra.mxu0 %v980
      %1062 = vmatprep.subr.bf16.mxu0 0
      %1063 = vmatpush2.bf16.msra.mxu0 %v979
      %1064 = vmatprep.subr.bf16.mxu0 0
      %1065 = vmatpush2.bf16.msra.mxu0 %v978
      %1066 = vmatprep.mubr.bf16.mxu0 %v715
      %1067 = vmatmul.mubr.bf16.gmra.mxu0 %v714
      %v1068 = vpop.f32.mrf.mxu0
      %v1069 = vadd.f32 0.0, %v1068
      %v1070 = vpop.f32.mrf.mxu0
      %v1071 = vpop.f32.mrf.mxu0
      %v1072 = vadd.f32 0.0, %v1071
      %v1073 = vpop.f32.mrf.mxu0
      %1074 = vmatprep.mubr.bf16.mxu0 %v719
      %1075 = vmatmul.mubr.bf16.gmra.mxu0 %v718
      %v1076 = vpop.f32.mrf.mxu0
      %v1077 = vadd.f32 0.0, %v1076
      %v1078 = vpop.f32.mrf.mxu0
      %v1079 = vpop.f32.mrf.mxu0
      %v1080 = vadd.f32 0.0, %v1079
      %v1081 = vpop.f32.mrf.mxu0
      %1082 = vmatprep.mubr.bf16.mxu0 %v723
      %1083 = vmatmul.mubr.bf16.gmra.mxu0 %v722
      %v1084 = vpop.f32.mrf.mxu0
      %v1085 = vadd.f32 0.0, %v1084
      %v1086 = vpop.f32.mrf.mxu0
      %v1087 = vpop.f32.mrf.mxu0
      %v1088 = vadd.f32 0.0, %v1087
      %v1089 = vpop.f32.mrf.mxu0
      %1090 = vmatprep.mubr.bf16.mxu0 %v727
      %1091 = vmatmul.mubr.bf16.gmra.mxu0 %v726
      %v1092 = vpop.f32.mrf.mxu0
      %v1093 = vadd.f32 0.0, %v1092
      %v1094 = vpop.f32.mrf.mxu0
      %v1095 = vpop.f32.mrf.mxu0
      %v1096 = vadd.f32 0.0, %v1095
      %v1097 = vpop.f32.mrf.mxu0
      %1098 = vmatprep.mubr.bf16.mxu0 %v731
      %1099 = vmatmul.mubr.bf16.gmra.mxu0 %v730
      %v1100 = vpop.f32.mrf.mxu0
      %v1101 = vadd.f32 0.0, %v1100
      %v1102 = vpop.f32.mrf.mxu0
      %v1103 = vpop.f32.mrf.mxu0
      %v1104 = vadd.f32 0.0, %v1103
      %v1105 = vpop.f32.mrf.mxu0
      %1106 = vmatprep.mubr.bf16.mxu0 %v735
      %1107 = vmatmul.mubr.bf16.gmra.mxu0 %v734
      %v1108 = vpop.f32.mrf.mxu0
      %v1109 = vadd.f32 0.0, %v1108
      %v1110 = vpop.f32.mrf.mxu0
      %v1111 = vpop.f32.mrf.mxu0
      %v1112 = vadd.f32 0.0, %v1111
      %v1113 = vpop.f32.mrf.mxu0
      %1114 = vmatprep.mubr.bf16.mxu0 %v739
      %1115 = vmatmul.mubr.bf16.gmra.mxu0 %v738
      %v1116 = vpop.f32.mrf.mxu0
      %v1117 = vadd.f32 0.0, %v1116
      %v1118 = vpop.f32.mrf.mxu0
      %v1119 = vpop.f32.mrf.mxu0
      %v1120 = vadd.f32 0.0, %v1119
      %v1121 = vpop.f32.mrf.mxu0
      %1122 = vmatprep.mubr.bf16.mxu0 %v743
      %1123 = vmatmul.mubr.bf16.gmra.mxu0 %v742
      %v1124 = vpop.f32.mrf.mxu0
      %v1125 = vadd.f32 0.0, %v1124
      %v1126 = vpop.f32.mrf.mxu0
      %v1127 = vpop.f32.mrf.mxu0
      %v1128 = vadd.f32 0.0, %v1127
      %v1129 = vpop.f32.mrf.mxu0
      %1130 = vmatprep.mubr.bf16.mxu0 %v747
      %1131 = vmatmul.mubr.bf16.gmra.mxu0 %v746
      %v1132 = vpop.f32.mrf.mxu0
      %v1133 = vadd.f32 0.0, %v1132
      %v1134 = vpop.f32.mrf.mxu0
      %v1135 = vpop.f32.mrf.mxu0
      %v1136 = vadd.f32 0.0, %v1135
      %v1137 = vpop.f32.mrf.mxu0
      %1138 = vmatprep.mubr.bf16.mxu0 %v751
      %1139 = vmatmul.mubr.bf16.gmra.mxu0 %v750
      %v1140 = vpop.f32.mrf.mxu0
      %v1141 = vadd.f32 0.0, %v1140
      %v1142 = vpop.f32.mrf.mxu0
      %v1143 = vpop.f32.mrf.mxu0
      %v1144 = vadd.f32 0.0, %v1143
      %v1145 = vpop.f32.mrf.mxu0
      %1146 = vmatprep.mubr.bf16.mxu0 %v755
      %1147 = vmatmul.mubr.bf16.gmra.mxu0 %v754
      %v1148 = vpop.f32.mrf.mxu0
      %v1149 = vadd.f32 0.0, %v1148
      %v1150 = vpop.f32.mrf.mxu0
      %v1151 = vpop.f32.mrf.mxu0
      %v1152 = vadd.f32 0.0, %v1151
      %v1153 = vpop.f32.mrf.mxu0
      %1154 = vmatprep.mubr.bf16.mxu0 %v759
      %1155 = vmatmul.mubr.bf16.gmra.mxu0 %v758
      %v1156 = vpop.f32.mrf.mxu0
      %v1157 = vadd.f32 0.0, %v1156
      %v1158 = vpop.f32.mrf.mxu0
      %v1159 = vpop.f32.mrf.mxu0
      %v1160 = vadd.f32 0.0, %v1159
      %v1161 = vpop.f32.mrf.mxu0
      %1162 = vmatprep.mubr.bf16.mxu0 %v763
      %1163 = vmatmul.mubr.bf16.gmra.mxu0 %v762
      %v1164 = vpop.f32.mrf.mxu0
      %v1165 = vadd.f32 0.0, %v1164
      %v1166 = vpop.f32.mrf.mxu0
      %v1167 = vpop.f32.mrf.mxu0
      %v1168 = vadd.f32 0.0, %v1167
      %v1169 = vpop.f32.mrf.mxu0
      %1170 = vmatprep.mubr.bf16.mxu0 %v767
      %1171 = vmatmul.mubr.bf16.gmra.mxu0 %v766
      %v1172 = vpop.f32.mrf.mxu0
      %v1173 = vadd.f32 0.0, %v1172
      %v1174 = vpop.f32.mrf.mxu0
      %v1175 = vpop.f32.mrf.mxu0
      %v1176 = vadd.f32 0.0, %v1175
      %v1177 = vpop.f32.mrf.mxu0
      %1178 = vmatprep.mubr.bf16.mxu0 %v771
      %1179 = vmatmul.mubr.bf16.gmra.mxu0 %v770
      %v1180 = vpop.f32.mrf.mxu0
      %v1181 = vadd.f32 0.0, %v1180
      %v1182 = vpop.f32.mrf.mxu0
      %v1183 = vpop.f32.mrf.mxu0
      %v1184 = vadd.f32 0.0, %v1183
      %v1185 = vpop.f32.mrf.mxu0
      %1186 = vmatprep.mubr.bf16.mxu0 %v775
      %1187 = vmatmul.mubr.bf16.gmra.mxu0 %v774
      %v1188 = vpop.f32.mrf.mxu0
      %v1189 = vadd.f32 0.0, %v1188
      %v1190 = vpop.f32.mrf.mxu0
      %v1191 = vpop.f32.mrf.mxu0
      %v1192 = vadd.f32 0.0, %v1191
      %v1193 = vpop.f32.mrf.mxu0
      %1194 = vdwg.mxu0
      %1195 = vmatprep.subr.bf16.mxu0 0
      %1196 = vmatpush1.bf16.msra.mxu0 %v993
      %1197 = vmatprep.subr.bf16.mxu0 0
      %1198 = vmatpush1.bf16.msra.mxu0 %v992
      %1199 = vmatprep.subr.bf16.mxu0 0
      %1200 = vmatpush1.bf16.msra.mxu0 %v991
      %1201 = vmatprep.subr.bf16.mxu0 0
      %1202 = vmatpush1.bf16.msra.mxu0 %v990
      %1203 = vmatprep.subr.bf16.mxu0 0
      %1204 = vmatpush1.bf16.msra.mxu0 %v989
      %1205 = vmatprep.subr.bf16.mxu0 0
      %1206 = vmatpush1.bf16.msra.mxu0 %v988
      %1207 = vmatprep.subr.bf16.mxu0 0
      %1208 = vmatpush1.bf16.msra.mxu0 %v987
      %1209 = vmatprep.subr.bf16.mxu0 0
      %1210 = vmatpush1.bf16.msra.mxu0 %v986
      %1211 = vmatprep.subr.bf16.mxu0 0
      %1212 = vmatpush2.bf16.msra.mxu0 %v1001
      %1213 = vmatprep.subr.bf16.mxu0 0
      %1214 = vmatpush2.bf16.msra.mxu0 %v1000
      %1215 = vmatprep.subr.bf16.mxu0 0
      %1216 = vmatpush2.bf16.msra.mxu0 %v999
      %1217 = vmatprep.subr.bf16.mxu0 0
      %1218 = vmatpush2.bf16.msra.mxu0 %v998
      %1219 = vmatprep.subr.bf16.mxu0 0
      %1220 = vmatpush2.bf16.msra.mxu0 %v997
      %1221 = vmatprep.subr.bf16.mxu0 0
      %1222 = vmatpush2.bf16.msra.mxu0 %v996
      %1223 = vmatprep.subr.bf16.mxu0 0
      %1224 = vmatpush2.bf16.msra.mxu0 %v995
      %1225 = vmatprep.subr.bf16.mxu0 0
      %1226 = vmatpush2.bf16.msra.mxu0 %v994
      %1227 = vmatprep.mubr.bf16.mxu0 %v717
      %1228 = vmatmul.mubr.bf16.gmra.mxu0 %v716
      %v1229 = vpop.f32.mrf.mxu0
      %v1230 = vadd.f32 %v1069, %v1229
      %v1231 = vpop.f32.mrf.mxu0
      %v1232 = vpop.f32.mrf.mxu0
      %v1233 = vadd.f32 %v1072, %v1232
      %v1234 = vpop.f32.mrf.mxu0
      %1235 = vmatprep.mubr.bf16.mxu0 %v721
      %1236 = vmatmul.mubr.bf16.gmra.mxu0 %v720
      %v1237 = vpop.f32.mrf.mxu0
      %v1238 = vadd.f32 %v1077, %v1237
      %v1239 = vpop.f32.mrf.mxu0
      %v1240 = vpop.f32.mrf.mxu0
      %v1241 = vadd.f32 %v1080, %v1240
      %v1242 = vpop.f32.mrf.mxu0
      %1243 = vmatprep.mubr.bf16.mxu0 %v725
      %1244 = vmatmul.mubr.bf16.gmra.mxu0 %v724
      %v1245 = vpop.f32.mrf.mxu0
      %v1246 = vadd.f32 %v1085, %v1245
      %v1247 = vpop.f32.mrf.mxu0
      %v1248 = vpop.f32.mrf.mxu0
      %v1249 = vadd.f32 %v1088, %v1248
      %v1250 = vpop.f32.mrf.mxu0
      %1251 = vmatprep.mubr.bf16.mxu0 %v729
      %1252 = vmatmul.mubr.bf16.gmra.mxu0 %v728
      %v1253 = vpop.f32.mrf.mxu0
      %v1254 = vadd.f32 %v1093, %v1253
      %v1255 = vpop.f32.mrf.mxu0
      %v1256 = vpop.f32.mrf.mxu0
      %v1257 = vadd.f32 %v1096, %v1256
      %v1258 = vpop.f32.mrf.mxu0
      %1259 = vmatprep.mubr.bf16.mxu0 %v733
      %1260 = vmatmul.mubr.bf16.gmra.mxu0 %v732
      %v1261 = vpop.f32.mrf.mxu0
      %v1262 = vadd.f32 %v1101, %v1261
      %v1263 = vpop.f32.mrf.mxu0
      %v1264 = vpop.f32.mrf.mxu0
      %v1265 = vadd.f32 %v1104, %v1264
      %v1266 = vpop.f32.mrf.mxu0
      %1267 = vmatprep.mubr.bf16.mxu0 %v737
      %1268 = vmatmul.mubr.bf16.gmra.mxu0 %v736
      %v1269 = vpop.f32.mrf.mxu0
      %v1270 = vadd.f32 %v1109, %v1269
      %v1271 = vpop.f32.mrf.mxu0
      %v1272 = vpop.f32.mrf.mxu0
      %v1273 = vadd.f32 %v1112, %v1272
      %v1274 = vpop.f32.mrf.mxu0
      %1275 = vmatprep.mubr.bf16.mxu0 %v741
      %1276 = vmatmul.mubr.bf16.gmra.mxu0 %v740
      %v1277 = vpop.f32.mrf.mxu0
      %v1278 = vadd.f32 %v1117, %v1277
      %v1279 = vpop.f32.mrf.mxu0
      %v1280 = vpop.f32.mrf.mxu0
      %v1281 = vadd.f32 %v1120, %v1280
      %v1282 = vpop.f32.mrf.mxu0
      %1283 = vmatprep.mubr.bf16.mxu0 %v745
      %1284 = vmatmul.mubr.bf16.gmra.mxu0 %v744
      %v1285 = vpop.f32.mrf.mxu0
      %v1286 = vadd.f32 %v1125, %v1285
      %v1287 = vpop.f32.mrf.mxu0
      %v1288 = vpop.f32.mrf.mxu0
      %v1289 = vadd.f32 %v1128, %v1288
      %v1290 = vpop.f32.mrf.mxu0
      %1291 = vmatprep.mubr.bf16.mxu0 %v749
      %1292 = vmatmul.mubr.bf16.gmra.mxu0 %v748
      %v1293 = vpop.f32.mrf.mxu0
      %v1294 = vadd.f32 %v1133, %v1293
      %v1295 = vpop.f32.mrf.mxu0
      %v1296 = vpop.f32.mrf.mxu0
      %v1297 = vadd.f32 %v1136, %v1296
      %v1298 = vpop.f32.mrf.mxu0
      %1299 = vmatprep.mubr.bf16.mxu0 %v753
      %1300 = vmatmul.mubr.bf16.gmra.mxu0 %v752
      %v1301 = vpop.f32.mrf.mxu0
      %v1302 = vadd.f32 %v1141, %v1301
      %v1303 = vpop.f32.mrf.mxu0
      %v1304 = vpop.f32.mrf.mxu0
      %v1305 = vadd.f32 %v1144, %v1304
      %v1306 = vpop.f32.mrf.mxu0
      %1307 = vmatprep.mubr.bf16.mxu0 %v757
      %1308 = vmatmul.mubr.bf16.gmra.mxu0 %v756
      %v1309 = vpop.f32.mrf.mxu0
      %v1310 = vadd.f32 %v1149, %v1309
      %v1311 = vpop.f32.mrf.mxu0
      %v1312 = vpop.f32.mrf.mxu0
      %v1313 = vadd.f32 %v1152, %v1312
      %v1314 = vpop.f32.mrf.mxu0
      %1315 = vmatprep.mubr.bf16.mxu0 %v761
      %1316 = vmatmul.mubr.bf16.gmra.mxu0 %v760
      %v1317 = vpop.f32.mrf.mxu0
      %v1318 = vadd.f32 %v1157, %v1317
      %v1319 = vpop.f32.mrf.mxu0
      %v1320 = vpop.f32.mrf.mxu0
      %v1321 = vadd.f32 %v1160, %v1320
      %v1322 = vpop.f32.mrf.mxu0
      %1323 = vmatprep.mubr.bf16.mxu0 %v765
      %1324 = vmatmul.mubr.bf16.gmra.mxu0 %v764
      %v1325 = vpop.f32.mrf.mxu0
      %v1326 = vadd.f32 %v1165, %v1325
      %v1327 = vpop.f32.mrf.mxu0
      %v1328 = vpop.f32.mrf.mxu0
      %v1329 = vadd.f32 %v1168, %v1328
      %v1330 = vpop.f32.mrf.mxu0
      %1331 = vmatprep.mubr.bf16.mxu0 %v769
      %1332 = vmatmul.mubr.bf16.gmra.mxu0 %v768
      %v1333 = vpop.f32.mrf.mxu0
      %v1334 = vadd.f32 %v1173, %v1333
      %v1335 = vpop.f32.mrf.mxu0
      %v1336 = vpop.f32.mrf.mxu0
      %v1337 = vadd.f32 %v1176, %v1336
      %v1338 = vpop.f32.mrf.mxu0
      %1339 = vmatprep.mubr.bf16.mxu0 %v773
      %1340 = vmatmul.mubr.bf16.gmra.mxu0 %v772
      %v1341 = vpop.f32.mrf.mxu0
      %v1342 = vadd.f32 %v1181, %v1341
      %v1343 = vpop.f32.mrf.mxu0
      %v1344 = vpop.f32.mrf.mxu0
      %v1345 = vadd.f32 %v1184, %v1344
      %v1346 = vpop.f32.mrf.mxu0
      %1347 = vmatprep.mubr.bf16.mxu0 %v777
      %1348 = vmatmul.mubr.bf16.gmra.mxu0 %v776
      %v1349 = vpop.f32.mrf.mxu0
      %v1350 = vadd.f32 %v1189, %v1349
      %v1351 = vpop.f32.mrf.mxu0
      %v1352 = vpop.f32.mrf.mxu0
      %v1353 = vadd.f32 %v1192, %v1352
      %v1354 = vpop.f32.mrf.mxu0
      %1355 = vdwg.mxu0
      %v1356 = vadd.f32 %v362, %v1230
      %v1357 = vadd.f32 %v363, %v1233
      %v1358 = vadd.f32 %v364, %v1238
      %v1359 = vadd.f32 %v365, %v1241
      %v1360 = vadd.f32 %v366, %v1246
      %v1361 = vadd.f32 %v367, %v1249
      %v1362 = vadd.f32 %v368, %v1254
      %v1363 = vadd.f32 %v369, %v1257
      %v1364 = vadd.f32 %v370, %v1262
      %v1365 = vadd.f32 %v371, %v1265
      %v1366 = vadd.f32 %v372, %v1270
      %v1367 = vadd.f32 %v373, %v1273
      %v1368 = vadd.f32 %v374, %v1278
      %v1369 = vadd.f32 %v375, %v1281
      %v1370 = vadd.f32 %v376, %v1286
      %v1371 = vadd.f32 %v377, %v1289
      %v1372 = vadd.f32 %v378, %v1294
      %v1373 = vadd.f32 %v379, %v1297
      %v1374 = vadd.f32 %v380, %v1302
      %v1375 = vadd.f32 %v381, %v1305
      %v1376 = vadd.f32 %v382, %v1310
      %v1377 = vadd.f32 %v383, %v1313
      %v1378 = vadd.f32 %v384, %v1318
      %v1379 = vadd.f32 %v385, %v1321
      %v1380 = vadd.f32 %v386, %v1326
      %v1381 = vadd.f32 %v387, %v1329
      %v1382 = vadd.f32 %v388, %v1334
      %v1383 = vadd.f32 %v389, %v1337
      %v1384 = vadd.f32 %v390, %v1342
      %v1385 = vadd.f32 %v391, %v1345
      %v1386 = vadd.f32 %v392, %v1350
      %v1387 = vadd.f32 %v393, %v1353
      %1388 = vst [vmem:[#allocation2] sm:$0xff] %v1356
      %1389 = vst [vmem:[#allocation2 + $0x8] sm:$0xff] %v1357
      %1390 = vst [vmem:[#allocation2 + $0x10] sm:$0xff] %v1358
      %1391 = vst [vmem:[#allocation2 + $0x18] sm:$0xff] %v1359
      %1392 = vst [vmem:[#allocation2 + $0x20] sm:$0xff] %v1360
      %1393 = vst [vmem:[#allocation2 + $0x28] sm:$0xff] %v1361
      %1394 = vst [vmem:[#allocation2 + $0x30] sm:$0xff] %v1362
      %1395 = vst [vmem:[#allocation2 + $0x38] sm:$0xff] %v1363
      %1396 = vst [vmem:[#allocation2 + $0x40] sm:$0xff] %v1364
      %1397 = vst [vmem:[#allocation2 + $0x48] sm:$0xff] %v1365
      %1398 = vst [vmem:[#allocation2 + $0x50] sm:$0xff] %v1366
      %1399 = vst [vmem:[#allocation2 + $0x58] sm:$0xff] %v1367
      %1400 = vst [vmem:[#allocation2 + $0x60] sm:$0xff] %v1368
      %1401 = vst [vmem:[#allocation2 + $0x68] sm:$0xff] %v1369
      %1402 = vst [vmem:[#allocation2 + $0x70] sm:$0xff] %v1370
      %1403 = vst [vmem:[#allocation2 + $0x78] sm:$0xff] %v1371
      %1404 = vst [vmem:[#allocation2 + $0x80] sm:$0xff] %v1372
      %1405 = vst [vmem:[#allocation2 + $0x88] sm:$0xff] %v1373
      %1406 = vst [vmem:[#allocation2 + $0x90] sm:$0xff] %v1374
      %1407 = vst [vmem:[#allocation2 + $0x98] sm:$0xff] %v1375
      %1408 = vst [vmem:[#allocation2 + $0xa0] sm:$0xff] %v1376
      %1409 = vst [vmem:[#allocation2 + $0xa8] sm:$0xff] %v1377
      %1410 = vst [vmem:[#allocation2 + $0xb0] sm:$0xff] %v1378
      %1411 = vst [vmem:[#allocation2 + $0xb8] sm:$0xff] %v1379
      %1412 = vst [vmem:[#allocation2 + $0xc0] sm:$0xff] %v1380
      %1413 = vst [vmem:[#allocation2 + $0xc8] sm:$0xff] %v1381
      %1414 = vst [vmem:[#allocation2 + $0xd0] sm:$0xff] %v1382
      %1415 = vst [vmem:[#allocation2 + $0xd8] sm:$0xff] %v1383
      %1416 = vst [vmem:[#allocation2 + $0xe0] sm:$0xff] %v1384
      %1417 = vst [vmem:[#allocation2 + $0xe8] sm:$0xff] %v1385
      %1418 = vst [vmem:[#allocation2 + $0xf0] sm:$0xff] %v1386
      %1419 = vst [vmem:[#allocation2 + $0xf8] sm:$0xff] %v1387
      // Predicated region
      $region41: #{gcn_forward.9} parent=35 // pred_check
        %p1420 = pneg %p326
      $region42: #{gcn_forward.9} parent=35 // pred_check_branch
        %1422 = sbr.rel (%p1420) target = $region44
      $region43: #{gcn_forward.9} parent=35 // pred_region
        %v1423 = vld [vmem:[#allocation2] sm:$0xff]
        %v1424 = vld [vmem:[#allocation2 + $0x8] sm:$0xff]
        %v1425 = vld [vmem:[#allocation2 + $0x10] sm:$0xff]
        %v1426 = vld [vmem:[#allocation2 + $0x18] sm:$0xff]
        %v1427 = vld [vmem:[#allocation2 + $0x20] sm:$0xff]
        %v1428 = vld [vmem:[#allocation2 + $0x28] sm:$0xff]
        %v1429 = vld [vmem:[#allocation2 + $0x30] sm:$0xff]
        %v1430 = vld [vmem:[#allocation2 + $0x38] sm:$0xff]
        %v1431 = vld [vmem:[#allocation2 + $0x40] sm:$0xff]
        %v1432 = vld [vmem:[#allocation2 + $0x48] sm:$0xff]
        %v1433 = vld [vmem:[#allocation2 + $0x50] sm:$0xff]
        %v1434 = vld [vmem:[#allocation2 + $0x58] sm:$0xff]
        %v1435 = vld [vmem:[#allocation2 + $0x60] sm:$0xff]
        %v1436 = vld [vmem:[#allocation2 + $0x68] sm:$0xff]
        %v1437 = vld [vmem:[#allocation2 + $0x70] sm:$0xff]
        %v1438 = vld [vmem:[#allocation2 + $0x78] sm:$0xff]
        %v1439 = vld [vmem:[#allocation2 + $0x80] sm:$0xff]
        %v1440 = vld [vmem:[#allocation2 + $0x88] sm:$0xff]
        %v1441 = vld [vmem:[#allocation2 + $0x90] sm:$0xff]
        %v1442 = vld [vmem:[#allocation2 + $0x98] sm:$0xff]
        %v1443 = vld [vmem:[#allocation2 + $0xa0] sm:$0xff]
        %v1444 = vld [vmem:[#allocation2 + $0xa8] sm:$0xff]
        %v1445 = vld [vmem:[#allocation2 + $0xb0] sm:$0xff]
        %v1446 = vld [vmem:[#allocation2 + $0xb8] sm:$0xff]
        %v1447 = vld [vmem:[#allocation2 + $0xc0] sm:$0xff]
        %v1448 = vld [vmem:[#allocation2 + $0xc8] sm:$0xff]
        %v1449 = vld [vmem:[#allocation2 + $0xd0] sm:$0xff]
        %v1450 = vld [vmem:[#allocation2 + $0xd8] sm:$0xff]
        %v1451 = vld [vmem:[#allocation2 + $0xe0] sm:$0xff]
        %v1452 = vld [vmem:[#allocation2 + $0xe8] sm:$0xff]
        %v1453 = vld [vmem:[#allocation2 + $0xf0] sm:$0xff]
        %v1454 = vld [vmem:[#allocation2 + $0xf8] sm:$0xff]
        %v1455 = vpack.c.bf16 %v1424, %v1423
        %v1456 = vpack.c.bf16 %v1426, %v1425
        %v1457 = vpack.c.bf16 %v1428, %v1427
        %v1458 = vpack.c.bf16 %v1430, %v1429
        %v1459 = vpack.c.bf16 %v1432, %v1431
        %v1460 = vpack.c.bf16 %v1434, %v1433
        %v1461 = vpack.c.bf16 %v1436, %v1435
        %v1462 = vpack.c.bf16 %v1438, %v1437
        %v1463 = vpack.c.bf16 %v1440, %v1439
        %v1464 = vpack.c.bf16 %v1442, %v1441
        %v1465 = vpack.c.bf16 %v1444, %v1443
        %v1466 = vpack.c.bf16 %v1446, %v1445
        %v1467 = vpack.c.bf16 %v1448, %v1447
        %v1468 = vpack.c.bf16 %v1450, %v1449
        %v1469 = vpack.c.bf16 %v1452, %v1451
        %v1470 = vpack.c.bf16 %v1454, %v1453
        %v1471 = vld [vmem:[%s2] sm:$0xf]
        %v1472 = vld [vmem:[%s2 + $0x4] sm:$0xf]
        %v1473 = vld [vmem:[%s2 + $0x8] sm:$0xf]
        %v1474 = vld [vmem:[%s2 + $0xc] sm:$0xf]
        %v1475 = vld [vmem:[%s2 + $0x10] sm:$0xf]
        %v1476 = vld [vmem:[%s2 + $0x14] sm:$0xf]
        %v1477 = vld [vmem:[%s2 + $0x18] sm:$0xf]
        %v1478 = vld [vmem:[%s2 + $0x1c] sm:$0xf]
        %v1479 = vld [vmem:[%s2 + $0x20] sm:$0xf]
        %v1480 = vld [vmem:[%s2 + $0x24] sm:$0xf]
        %v1481 = vld [vmem:[%s2 + $0x28] sm:$0xf]
        %v1482 = vld [vmem:[%s2 + $0x2c] sm:$0xf]
        %v1483 = vld [vmem:[%s2 + $0x30] sm:$0xf]
        %v1484 = vld [vmem:[%s2 + $0x34] sm:$0xf]
        %v1485 = vld [vmem:[%s2 + $0x38] sm:$0xf]
        %v1486 = vld [vmem:[%s2 + $0x3c] sm:$0xf]
        %v1487 = vld [vmem:[%s3] sm:$0x1]
        %v1489 = vlaneseq
        %v1490 = vshrl.u32 %v1489, 7
        %v1491 = vsub.s32 0, %v1490
        %v1492 = vrot.slane %v1487, %v1491
        %v1510 = vunpack.c.l.b16 %v1471
        %v1511 = vunpack.c.l.b16 %v1472
        %v1512 = vunpack.c.l.b16 %v1473
        %v1513 = vunpack.c.l.b16 %v1474
        %v1514 = vunpack.c.l.b16 %v1475
        %v1515 = vunpack.c.l.b16 %v1476
        %v1516 = vunpack.c.l.b16 %v1477
        %v1517 = vunpack.c.l.b16 %v1478
        %v1518 = vunpack.c.l.b16 %v1479
        %v1519 = vunpack.c.l.b16 %v1480
        %v1520 = vunpack.c.l.b16 %v1481
        %v1521 = vunpack.c.l.b16 %v1482
        %v1522 = vunpack.c.l.b16 %v1483
        %v1523 = vunpack.c.l.b16 %v1484
        %v1524 = vunpack.c.l.b16 %v1485
        %v1525 = vunpack.c.l.b16 %v1486
        %v1526 = vpack.c.b16 %v1511, %v1510
        %v1527 = vpack.c.b16 %v1513, %v1512
        %v1528 = vpack.c.b16 %v1515, %v1514
        %v1529 = vpack.c.b16 %v1517, %v1516
        %v1530 = vpack.c.b16 %v1519, %v1518
        %v1531 = vpack.c.b16 %v1521, %v1520
        %v1532 = vpack.c.b16 %v1523, %v1522
        %v1533 = vpack.c.b16 %v1525, %v1524
        %1542 = vmatprep.subr.bf16.mxu0 0
        %1543 = vmatpush1.bf16.msra.mxu0 %v1533
        %1544 = vmatprep.subr.bf16.mxu0 0
        %1545 = vmatpush1.bf16.msra.mxu0 %v1532
        %1546 = vmatprep.subr.bf16.mxu0 0
        %1547 = vmatpush1.bf16.msra.mxu0 %v1531
        %1548 = vmatprep.subr.bf16.mxu0 0
        %1549 = vmatpush1.bf16.msra.mxu0 %v1530
        %1550 = vmatprep.subr.bf16.mxu0 0
        %1551 = vmatpush1.bf16.msra.mxu0 %v1529
        %1552 = vmatprep.subr.bf16.mxu0 0
        %1553 = vmatpush1.bf16.msra.mxu0 %v1528
        %1554 = vmatprep.subr.bf16.mxu0 0
        %1555 = vmatpush1.bf16.msra.mxu0 %v1527
        %1556 = vmatprep.subr.bf16.mxu0 0
        %1557 = vmatpush1.bf16.msra.mxu0 %v1526
        %1558 = vmatprep.subr.bf16.mxu0 0
        %1559 = vmatpush2.bf16.msra.mxu0 0
        %1560 = vmatprep.subr.bf16.mxu0 0
        %1561 = vmatpush2.bf16.msra.mxu0 0
        %1562 = vmatprep.subr.bf16.mxu0 0
        %1563 = vmatpush2.bf16.msra.mxu0 0
        %1564 = vmatprep.subr.bf16.mxu0 0
        %1565 = vmatpush2.bf16.msra.mxu0 0
        %1566 = vmatprep.subr.bf16.mxu0 0
        %1567 = vmatpush2.bf16.msra.mxu0 0
        %1568 = vmatprep.subr.bf16.mxu0 0
        %1569 = vmatpush2.bf16.msra.mxu0 0
        %1570 = vmatprep.subr.bf16.mxu0 0
        %1571 = vmatpush2.bf16.msra.mxu0 0
        %1572 = vmatprep.subr.bf16.mxu0 0
        %1573 = vmatpush2.bf16.msra.mxu0 0
        %1574 = vmatprep.mubr.bf16.mxu0 0
        %1575 = vmatmul.mubr.bf16.gmra.mxu0 %v1455
        %v1576 = vpop.f32.mrf.mxu0
        %v1577 = vadd.f32 %v1492, %v1576
        %v1578 = vpop.f32.mrf.mxu0
        %v1579 = vpop.f32.mrf.mxu0
        %v1580 = vadd.f32 %v1492, %v1579
        %v1581 = vpop.f32.mrf.mxu0
        %1582 = vmatprep.mubr.bf16.mxu0 0
        %1583 = vmatmul.mubr.bf16.gmra.mxu0 %v1456
        %v1584 = vpop.f32.mrf.mxu0
        %v1585 = vadd.f32 %v1492, %v1584
        %v1586 = vpop.f32.mrf.mxu0
        %v1587 = vpop.f32.mrf.mxu0
        %v1588 = vadd.f32 %v1492, %v1587
        %v1589 = vpop.f32.mrf.mxu0
        %1590 = vmatprep.mubr.bf16.mxu0 0
        %1591 = vmatmul.mubr.bf16.gmra.mxu0 %v1457
        %v1592 = vpop.f32.mrf.mxu0
        %v1593 = vadd.f32 %v1492, %v1592
        %v1594 = vpop.f32.mrf.mxu0
        %v1595 = vpop.f32.mrf.mxu0
        %v1596 = vadd.f32 %v1492, %v1595
        %v1597 = vpop.f32.mrf.mxu0
        %1598 = vmatprep.mubr.bf16.mxu0 0
        %1599 = vmatmul.mubr.bf16.gmra.mxu0 %v1458
        %v1600 = vpop.f32.mrf.mxu0
        %v1601 = vadd.f32 %v1492, %v1600
        %v1602 = vpop.f32.mrf.mxu0
        %v1603 = vpop.f32.mrf.mxu0
        %v1604 = vadd.f32 %v1492, %v1603
        %v1605 = vpop.f32.mrf.mxu0
        %1606 = vmatprep.mubr.bf16.mxu0 0
        %1607 = vmatmul.mubr.bf16.gmra.mxu0 %v1459
        %v1608 = vpop.f32.mrf.mxu0
        %v1609 = vadd.f32 %v1492, %v1608
        %v1610 = vpop.f32.mrf.mxu0
        %v1611 = vpop.f32.mrf.mxu0
        %v1612 = vadd.f32 %v1492, %v1611
        %v1613 = vpop.f32.mrf.mxu0
        %1614 = vmatprep.mubr.bf16.mxu0 0
        %1615 = vmatmul.mubr.bf16.gmra.mxu0 %v1460
        %v1616 = vpop.f32.mrf.mxu0
        %v1617 = vadd.f32 %v1492, %v1616
        %v1618 = vpop.f32.mrf.mxu0
        %v1619 = vpop.f32.mrf.mxu0
        %v1620 = vadd.f32 %v1492, %v1619
        %v1621 = vpop.f32.mrf.mxu0
        %1622 = vmatprep.mubr.bf16.mxu0 0
        %1623 = vmatmul.mubr.bf16.gmra.mxu0 %v1461
        %v1624 = vpop.f32.mrf.mxu0
        %v1625 = vadd.f32 %v1492, %v1624
        %v1626 = vpop.f32.mrf.mxu0
        %v1627 = vpop.f32.mrf.mxu0
        %v1628 = vadd.f32 %v1492, %v1627
        %v1629 = vpop.f32.mrf.mxu0
        %1630 = vmatprep.mubr.bf16.mxu0 0
        %1631 = vmatmul.mubr.bf16.gmra.mxu0 %v1462
        %v1632 = vpop.f32.mrf.mxu0
        %v1633 = vadd.f32 %v1492, %v1632
        %v1634 = vpop.f32.mrf.mxu0
        %v1635 = vpop.f32.mrf.mxu0
        %v1636 = vadd.f32 %v1492, %v1635
        %v1637 = vpop.f32.mrf.mxu0
        %1638 = vmatprep.mubr.bf16.mxu0 0
        %1639 = vmatmul.mubr.bf16.gmra.mxu0 %v1463
        %v1640 = vpop.f32.mrf.mxu0
        %v1641 = vadd.f32 %v1492, %v1640
        %v1642 = vpop.f32.mrf.mxu0
        %v1643 = vpop.f32.mrf.mxu0
        %v1644 = vadd.f32 %v1492, %v1643
        %v1645 = vpop.f32.mrf.mxu0
        %1646 = vmatprep.mubr.bf16.mxu0 0
        %1647 = vmatmul.mubr.bf16.gmra.mxu0 %v1464
        %v1648 = vpop.f32.mrf.mxu0
        %v1649 = vadd.f32 %v1492, %v1648
        %v1650 = vpop.f32.mrf.mxu0
        %v1651 = vpop.f32.mrf.mxu0
        %v1652 = vadd.f32 %v1492, %v1651
        %v1653 = vpop.f32.mrf.mxu0
        %1654 = vmatprep.mubr.bf16.mxu0 0
        %1655 = vmatmul.mubr.bf16.gmra.mxu0 %v1465
        %v1656 = vpop.f32.mrf.mxu0
        %v1657 = vadd.f32 %v1492, %v1656
        %v1658 = vpop.f32.mrf.mxu0
        %v1659 = vpop.f32.mrf.mxu0
        %v1660 = vadd.f32 %v1492, %v1659
        %v1661 = vpop.f32.mrf.mxu0
        %1662 = vmatprep.mubr.bf16.mxu0 0
        %1663 = vmatmul.mubr.bf16.gmra.mxu0 %v1466
        %v1664 = vpop.f32.mrf.mxu0
        %v1665 = vadd.f32 %v1492, %v1664
        %v1666 = vpop.f32.mrf.mxu0
        %v1667 = vpop.f32.mrf.mxu0
        %v1668 = vadd.f32 %v1492, %v1667
        %v1669 = vpop.f32.mrf.mxu0
        %1670 = vmatprep.mubr.bf16.mxu0 0
        %1671 = vmatmul.mubr.bf16.gmra.mxu0 %v1467
        %v1672 = vpop.f32.mrf.mxu0
        %v1673 = vadd.f32 %v1492, %v1672
        %v1674 = vpop.f32.mrf.mxu0
        %v1675 = vpop.f32.mrf.mxu0
        %v1676 = vadd.f32 %v1492, %v1675
        %v1677 = vpop.f32.mrf.mxu0
        %1678 = vmatprep.mubr.bf16.mxu0 0
        %1679 = vmatmul.mubr.bf16.gmra.mxu0 %v1468
        %v1680 = vpop.f32.mrf.mxu0
        %v1681 = vadd.f32 %v1492, %v1680
        %v1682 = vpop.f32.mrf.mxu0
        %v1683 = vpop.f32.mrf.mxu0
        %v1684 = vadd.f32 %v1492, %v1683
        %v1685 = vpop.f32.mrf.mxu0
        %1686 = vmatprep.mubr.bf16.mxu0 0
        %1687 = vmatmul.mubr.bf16.gmra.mxu0 %v1469
        %v1688 = vpop.f32.mrf.mxu0
        %v1689 = vadd.f32 %v1492, %v1688
        %v1690 = vpop.f32.mrf.mxu0
        %v1691 = vpop.f32.mrf.mxu0
        %v1692 = vadd.f32 %v1492, %v1691
        %v1693 = vpop.f32.mrf.mxu0
        %1694 = vmatprep.mubr.bf16.mxu0 0
        %1695 = vmatmul.mubr.bf16.gmra.mxu0 %v1470
        %v1696 = vpop.f32.mrf.mxu0
        %v1697 = vadd.f32 %v1492, %v1696
        %v1698 = vpop.f32.mrf.mxu0
        %v1699 = vpop.f32.mrf.mxu0
        %v1700 = vadd.f32 %v1492, %v1699
        %v1701 = vpop.f32.mrf.mxu0
        %1702 = vdwg.mxu0
        %v1703 = vpack.c.bf16 %v1580, %v1577
        %v1704 = vpack.c.bf16 %v1588, %v1585
        %v1705 = vpack.c.bf16 %v1596, %v1593
        %v1706 = vpack.c.bf16 %v1604, %v1601
        %v1707 = vpack.c.bf16 %v1612, %v1609
        %v1708 = vpack.c.bf16 %v1620, %v1617
        %v1709 = vpack.c.bf16 %v1628, %v1625
        %v1710 = vpack.c.bf16 %v1636, %v1633
        %v1711 = vpack.c.bf16 %v1644, %v1641
        %v1712 = vpack.c.bf16 %v1652, %v1649
        %v1713 = vpack.c.bf16 %v1660, %v1657
        %v1714 = vpack.c.bf16 %v1668, %v1665
        %v1715 = vpack.c.bf16 %v1676, %v1673
        %v1716 = vpack.c.bf16 %v1684, %v1681
        %v1717 = vpack.c.bf16 %v1692, %v1689
        %v1718 = vpack.c.bf16 %v1700, %v1697
        %v1735 = vunpack.c.l.b16 %v1703
        %v1736 = vunpack.c.h.b16 %v1703
        %v1737 = vunpack.c.l.b16 %v1704
        %v1738 = vunpack.c.h.b16 %v1704
        %v1739 = vunpack.c.l.b16 %v1705
        %v1740 = vunpack.c.h.b16 %v1705
        %v1741 = vunpack.c.l.b16 %v1706
        %v1742 = vunpack.c.h.b16 %v1706
        %v1743 = vunpack.c.l.b16 %v1707
        %v1744 = vunpack.c.h.b16 %v1707
        %v1745 = vunpack.c.l.b16 %v1708
        %v1746 = vunpack.c.h.b16 %v1708
        %v1747 = vunpack.c.l.b16 %v1709
        %v1748 = vunpack.c.h.b16 %v1709
        %v1749 = vunpack.c.l.b16 %v1710
        %v1750 = vunpack.c.h.b16 %v1710
        %v1751 = vunpack.c.l.b16 %v1711
        %v1752 = vunpack.c.h.b16 %v1711
        %v1753 = vunpack.c.l.b16 %v1712
        %v1754 = vunpack.c.h.b16 %v1712
        %v1755 = vunpack.c.l.b16 %v1713
        %v1756 = vunpack.c.h.b16 %v1713
        %v1757 = vunpack.c.l.b16 %v1714
        %v1758 = vunpack.c.h.b16 %v1714
        %v1759 = vunpack.c.l.b16 %v1715
        %v1760 = vunpack.c.h.b16 %v1715
        %v1761 = vunpack.c.l.b16 %v1716
        %v1762 = vunpack.c.h.b16 %v1716
        %v1763 = vunpack.c.l.b16 %v1717
        %v1764 = vunpack.c.h.b16 %v1717
        %v1765 = vunpack.c.l.b16 %v1718
        %v1766 = vunpack.c.h.b16 %v1718
        %v1767 = vpack.c.b16 %v1735, %v1735
        %v1768 = vpack.c.b16 %v1736, %v1736
        %v1769 = vpack.c.b16 %v1737, %v1737
        %v1770 = vpack.c.b16 %v1738, %v1738
        %v1771 = vpack.c.b16 %v1739, %v1739
        %v1772 = vpack.c.b16 %v1740, %v1740
        %v1773 = vpack.c.b16 %v1741, %v1741
        %v1774 = vpack.c.b16 %v1742, %v1742
        %v1775 = vpack.c.b16 %v1743, %v1743
        %v1776 = vpack.c.b16 %v1744, %v1744
        %v1777 = vpack.c.b16 %v1745, %v1745
        %v1778 = vpack.c.b16 %v1746, %v1746
        %v1779 = vpack.c.b16 %v1747, %v1747
        %v1780 = vpack.c.b16 %v1748, %v1748
        %v1781 = vpack.c.b16 %v1749, %v1749
        %v1782 = vpack.c.b16 %v1750, %v1750
        %v1783 = vpack.c.b16 %v1751, %v1751
        %v1784 = vpack.c.b16 %v1752, %v1752
        %v1785 = vpack.c.b16 %v1753, %v1753
        %v1786 = vpack.c.b16 %v1754, %v1754
        %v1787 = vpack.c.b16 %v1755, %v1755
        %v1788 = vpack.c.b16 %v1756, %v1756
        %v1789 = vpack.c.b16 %v1757, %v1757
        %v1790 = vpack.c.b16 %v1758, %v1758
        %v1791 = vpack.c.b16 %v1759, %v1759
        %v1792 = vpack.c.b16 %v1760, %v1760
        %v1793 = vpack.c.b16 %v1761, %v1761
        %v1794 = vpack.c.b16 %v1762, %v1762
        %v1795 = vpack.c.b16 %v1763, %v1763
        %v1796 = vpack.c.b16 %v1764, %v1764
        %v1797 = vpack.c.b16 %v1765, %v1765
        %v1798 = vpack.c.b16 %v1766, %v1766
        %1831 = vst [vmem:[%s317] sm:$0xf] %v1767
        %1832 = vst [vmem:[%s317 + $0x4] sm:$0xf] %v1768
        %1833 = vst [vmem:[%s317 + $0x8] sm:$0xf] %v1769
        %1834 = vst [vmem:[%s317 + $0xc] sm:$0xf] %v1770
        %1835 = vst [vmem:[%s317 + $0x10] sm:$0xf] %v1771
        %1836 = vst [vmem:[%s317 + $0x14] sm:$0xf] %v1772
        %1837 = vst [vmem:[%s317 + $0x18] sm:$0xf] %v1773
        %1838 = vst [vmem:[%s317 + $0x1c] sm:$0xf] %v1774
        %1839 = vst [vmem:[%s317 + $0x20] sm:$0xf] %v1775
        %1840 = vst [vmem:[%s317 + $0x24] sm:$0xf] %v1776
        %1841 = vst [vmem:[%s317 + $0x28] sm:$0xf] %v1777
        %1842 = vst [vmem:[%s317 + $0x2c] sm:$0xf] %v1778
        %1843 = vst [vmem:[%s317 + $0x30] sm:$0xf] %v1779
        %1844 = vst [vmem:[%s317 + $0x34] sm:$0xf] %v1780
        %1845 = vst [vmem:[%s317 + $0x38] sm:$0xf] %v1781
        %1846 = vst [vmem:[%s317 + $0x3c] sm:$0xf] %v1782
        %1847 = vst [vmem:[%s317 + $0x40] sm:$0xf] %v1783
        %1848 = vst [vmem:[%s317 + $0x44] sm:$0xf] %v1784
        %1849 = vst [vmem:[%s317 + $0x48] sm:$0xf] %v1785
        %1850 = vst [vmem:[%s317 + $0x4c] sm:$0xf] %v1786
        %1851 = vst [vmem:[%s317 + $0x50] sm:$0xf] %v1787
        %1852 = vst [vmem:[%s317 + $0x54] sm:$0xf] %v1788
        %1853 = vst [vmem:[%s317 + $0x58] sm:$0xf] %v1789
        %1854 = vst [vmem:[%s317 + $0x5c] sm:$0xf] %v1790
        %1855 = vst [vmem:[%s317 + $0x60] sm:$0xf] %v1791
        %1856 = vst [vmem:[%s317 + $0x64] sm:$0xf] %v1792
        %1857 = vst [vmem:[%s317 + $0x68] sm:$0xf] %v1793
        %1858 = vst [vmem:[%s317 + $0x6c] sm:$0xf] %v1794
        %1859 = vst [vmem:[%s317 + $0x70] sm:$0xf] %v1795
        %1860 = vst [vmem:[%s317 + $0x74] sm:$0xf] %v1796
        %1861 = vst [vmem:[%s317 + $0x78] sm:$0xf] %v1797
        %1862 = vst [vmem:[%s317 + $0x7c] sm:$0xf] %v1798
        %v1863 = vadd.f32 %v1577, %v1580
        %v1864 = vadd.f32 %v1863, %v1585
        %v1865 = vadd.f32 %v1864, %v1588
        %v1866 = vadd.f32 %v1865, %v1593
        %v1867 = vadd.f32 %v1866, %v1596
        %v1868 = vadd.f32 %v1867, %v1601
        %v1869 = vadd.f32 %v1868, %v1604
        %v1870 = vadd.f32 %v1869, %v1609
        %v1871 = vadd.f32 %v1870, %v1612
        %v1872 = vadd.f32 %v1871, %v1617
        %v1873 = vadd.f32 %v1872, %v1620
        %v1874 = vadd.f32 %v1873, %v1625
        %v1875 = vadd.f32 %v1874, %v1628
        %v1876 = vadd.f32 %v1875, %v1633
        %v1877 = vadd.f32 %v1876, %v1636
        %v1878 = vadd.f32 %v1877, %v1641
        %v1879 = vadd.f32 %v1878, %v1644
        %v1880 = vadd.f32 %v1879, %v1649
        %v1881 = vadd.f32 %v1880, %v1652
        %v1882 = vadd.f32 %v1881, %v1657
        %v1883 = vadd.f32 %v1882, %v1660
        %v1884 = vadd.f32 %v1883, %v1665
        %v1885 = vadd.f32 %v1884, %v1668
        %v1886 = vadd.f32 %v1885, %v1673
        %v1887 = vadd.f32 %v1886, %v1676
        %v1888 = vadd.f32 %v1887, %v1681
        %v1889 = vadd.f32 %v1888, %v1684
        %v1890 = vadd.f32 %v1889, %v1689
        %v1891 = vadd.f32 %v1890, %v1692
        %v1892 = vadd.f32 %v1891, %v1697
        %v1893 = vadd.f32 %v1892, %v1700
        %v1894 = vrot.slane %v1893, 4
        %v1895 = vadd.f32 %v1893, %v1894
        %v1896 = vrot.slane %v1895, 2
        %v1897 = vadd.f32 %v1895, %v1896
        %v1898 = vrot.slane %v1897, 1
        %v1899 = vadd.f32 %v1897, %v1898
        %1900 = vst [vmem:[%s321] sm:$0x1] %v1899
        %v1901 = vmul.f32 %v1577, %v1577
        %v1902 = vmul.f32 %v1580, %v1580
        %v1903 = vmul.f32 %v1585, %v1585
        %v1904 = vmul.f32 %v1588, %v1588
        %v1905 = vmul.f32 %v1593, %v1593
        %v1906 = vmul.f32 %v1596, %v1596
        %v1907 = vmul.f32 %v1601, %v1601
        %v1908 = vmul.f32 %v1604, %v1604
        %v1909 = vmul.f32 %v1609, %v1609
        %v1910 = vmul.f32 %v1612, %v1612
        %v1911 = vmul.f32 %v1617, %v1617
        %v1912 = vmul.f32 %v1620, %v1620
        %v1913 = vmul.f32 %v1625, %v1625
        %v1914 = vmul.f32 %v1628, %v1628
        %v1915 = vmul.f32 %v1633, %v1633
        %v1916 = vmul.f32 %v1636, %v1636
        %v1917 = vmul.f32 %v1641, %v1641
        %v1918 = vmul.f32 %v1644, %v1644
        %v1919 = vmul.f32 %v1649, %v1649
        %v1920 = vmul.f32 %v1652, %v1652
        %v1921 = vmul.f32 %v1657, %v1657
        %v1922 = vmul.f32 %v1660, %v1660
        %v1923 = vmul.f32 %v1665, %v1665
        %v1924 = vmul.f32 %v1668, %v1668
        %v1925 = vmul.f32 %v1673, %v1673
        %v1926 = vmul.f32 %v1676, %v1676
        %v1927 = vmul.f32 %v1681, %v1681
        %v1928 = vmul.f32 %v1684, %v1684
        %v1929 = vmul.f32 %v1689, %v1689
        %v1930 = vmul.f32 %v1692, %v1692
        %v1931 = vmul.f32 %v1697, %v1697
        %v1932 = vmul.f32 %v1700, %v1700
        %v1933 = vadd.f32 %v1901, %v1902
        %v1934 = vadd.f32 %v1933, %v1903
        %v1935 = vadd.f32 %v1934, %v1904
        %v1936 = vadd.f32 %v1935, %v1905
        %v1937 = vadd.f32 %v1936, %v1906
        %v1938 = vadd.f32 %v1937, %v1907
        %v1939 = vadd.f32 %v1938, %v1908
        %v1940 = vadd.f32 %v1939, %v1909
        %v1941 = vadd.f32 %v1940, %v1910
        %v1942 = vadd.f32 %v1941, %v1911
        %v1943 = vadd.f32 %v1942, %v1912
        %v1944 = vadd.f32 %v1943, %v1913
        %v1945 = vadd.f32 %v1944, %v1914
        %v1946 = vadd.f32 %v1945, %v1915
        %v1947 = vadd.f32 %v1946, %v1916
        %v1948 = vadd.f32 %v1947, %v1917
        %v1949 = vadd.f32 %v1948, %v1918
        %v1950 = vadd.f32 %v1949, %v1919
        %v1951 = vadd.f32 %v1950, %v1920
        %v1952 = vadd.f32 %v1951, %v1921
        %v1953 = vadd.f32 %v1952, %v1922
        %v1954 = vadd.f32 %v1953, %v1923
        %v1955 = vadd.f32 %v1954, %v1924
        %v1956 = vadd.f32 %v1955, %v1925
        %v1957 = vadd.f32 %v1956, %v1926
        %v1958 = vadd.f32 %v1957, %v1927
        %v1959 = vadd.f32 %v1958, %v1928
        %v1960 = vadd.f32 %v1959, %v1929
        %v1961 = vadd.f32 %v1960, %v1930
        %v1962 = vadd.f32 %v1961, %v1931
        %v1963 = vadd.f32 %v1962, %v1932
        %v1964 = vrot.slane %v1963, 4
        %v1965 = vadd.f32 %v1963, %v1964
        %v1966 = vrot.slane %v1965, 2
        %v1967 = vadd.f32 %v1965, %v1966
        %v1968 = vrot.slane %v1967, 1
        %v1969 = vadd.f32 %v1967, %v1968
        %1970 = vst [vmem:[%s324] sm:$0x1] %v1969
      $region44: #{gcn_forward.9} parent=35 // pred_fallthru
        _
      %s1971 = smul.u32 32, %s22
      %p1972 = scmp.lt.s32.totalorder %s1971, 63
      %s1973 = scalar_select %p1972, %s1971, 63
      %s1974 = smul.addr %s1973, 4
      %s1975 = scalar_lea.vmem %s4, %s1974
      %p1976 = scmp.lt.s32.totalorder %s22, 1
      %s1977 = scalar_select %p1976, %s22, 1
      %s1978 = scalar_lea.vmem %s5, %s1977
      %p1979 = scmp.lt.s32.totalorder %s22, 1
      %s1980 = scalar_select %p1979, %s22, 1
      %s1981 = scalar_lea.vmem %s6, %s1980
      // Predicated region
      $region45: #{gcn_forward.9} parent=35 // pred_check
        %p1982 = pneg %p144
      $region46: #{gcn_forward.9} parent=35 // pred_check_branch
        %1984 = sbr.rel (%p1982) target = $region48
      $region47: #{gcn_forward.9} parent=35 // pred_region
        %s1985 = smul.u32 32, %s22
      $region48: #{gcn_forward.9} parent=35 // pred_fallthru
        _
      // Predicated region
      $region49: #{gcn_forward.9} parent=35 // pred_check
        %p1986 = pneg %p170
      $region50: #{gcn_forward.9} parent=35 // pred_check_branch
        %1988 = sbr.rel (%p1986) target = $region52
      $region51: #{gcn_forward.9} parent=35 // pred_region
        _
      $region52: #{gcn_forward.9} parent=35 // pred_fallthru
        _
      // Predicated region
      $region53: #{gcn_forward.9} parent=35 // pred_check
        %p1989 = pneg %p196
      $region54: #{gcn_forward.9} parent=35 // pred_check_branch
        %1991 = sbr.rel (%p1989) target = $region56
      $region55: #{gcn_forward.9} parent=35 // pred_region
        _
      $region56: #{gcn_forward.9} parent=35 // pred_fallthru
        _
    $region36: #{gcn_forward.9} parent=5 // pred_fallthru
      _
    %p1992 = scmp.le.s32.totalorder 2, %s13
    // Predicated region
    $region57: #{gcn_forward.9} parent=5 // pred_check
      %p1993 = pneg %p1992
    $region58: #{gcn_forward.9} parent=5 // pred_check_branch
      %1995 = sbr.rel (%p1993) target = $region60
    $region59: #{gcn_forward.9} parent=5 // pred_region
      %s1996 = ssub.s32 %s13, 2
      // Predicated region
      $region61: #{gcn_forward.9} parent=59 // pred_check
        %p1997 = pneg %p150
      $region62: #{gcn_forward.9} parent=59 // pred_check_branch
        %1999 = sbr.rel (%p1997) target = $region64
      $region63: #{gcn_forward.9} parent=59 // pred_region
        %s2000 = smul.u32 32, %s24
        %p2001 = scmp.lt.s32.totalorder %s2000, 63
        %s2002 = scalar_select %p2001, %s2000, 63
        %s2003 = smul.addr %s2002, 4
        %s2004 = scalar_lea.vmem %s4, %s2003
      $region64: #{gcn_forward.9} parent=59 // pred_fallthru
        _
      // Predicated region
      $region65: #{gcn_forward.9} parent=59 // pred_check
        %p2005 = pneg %p176
      $region66: #{gcn_forward.9} parent=59 // pred_check_branch
        %2007 = sbr.rel (%p2005) target = $region68
      $region67: #{gcn_forward.9} parent=59 // pred_region
        %p2008 = scmp.lt.s32.totalorder %s24, 1
        %s2009 = scalar_select %p2008, %s24, 1
        %s2010 = scalar_lea.vmem %s5, %s2009
      $region68: #{gcn_forward.9} parent=59 // pred_fallthru
        _
      // Predicated region
      $region69: #{gcn_forward.9} parent=59 // pred_check
        %p2011 = pneg %p202
      $region70: #{gcn_forward.9} parent=59 // pred_check_branch
        %2013 = sbr.rel (%p2011) target = $region72
      $region71: #{gcn_forward.9} parent=59 // pred_region
        %p2014 = scmp.lt.s32.totalorder %s24, 1
        %s2015 = scalar_select %p2014, %s24, 1
        %s2016 = scalar_lea.vmem %s6, %s2015
      $region72: #{gcn_forward.9} parent=59 // pred_fallthru
        _
    $region60: #{gcn_forward.9} parent=5 // pred_fallthru
      _
  $region6: #{gcn_forward.9} parent=0 // loop_footer
    %s17 = sadd.s32 1, %s13
  $region7: #{gcn_forward.9} parent=0 // loop_footer_branch
    %12 = sbr.rel target = $region3
  $region8: #{gcn_forward.9} parent=0 // loop_exit
    _

// kernel: gcn_forward.11
$region0: #{gcn_forward.11}
  #allocation0 [shape = 'u32[]', space=smem, size = 0x4, offset = 0x4, fixed_abs, tag = 'smem constant byte address 0x4 - core index']
  #allocation1 [shape = 'u32[144,128]{1,0:T(1,128)}', space=vmem, size = 0x12000, scoped, tag = 'internal scratch']
  #allocation2 [shape = 'f32[256,128]{1,0:T(8,128)}', space=vmem, size = 0x20000, scoped, tag = 'scratch operand']
  %s0 = inlined_call_operand.vmem [shape: bf16[512,512], index: 0, kind: input, shape index: {}]
  %s1 = inlined_call_operand.vmem [shape: bf16[512,128], index: 1, kind: input, shape index: {}]
  %s2 = inlined_call_operand.vmem [shape: bf16[128,128], index: 2, kind: input, shape index: {}]
  %s3 = inlined_call_operand.vmem [shape: f32[1,128], index: 3, kind: input, shape index: {}]
  %s4 = inlined_call_operand.vmem [shape: f32[512,128], index: 4, kind: output, shape index: {}]
  %s5 = sld [smem:[#allocation0]]
  $region57: #{gcn_forward.11} parent=0
    _
  %s7 = ssub.s32 1, %s5
  %s8 = scalar_select 0, %s7, %s5
  loop: start=0, step=1, limit=4
  $region2: #{gcn_forward.11} parent=0 // loop_pre_header
    _
  $region3: #{gcn_forward.11} parent=0 // loop_header
    %s10 = sphi 0, %s14
    %p11 = scmp.ge.s32.totalorder %s10, 4
    %s17 = sphi 0, %s29
    %s18 = sphi 0, %s25
    %s19 = sphi 0, %s17
    %s20 = sphi 0, %s18
    %s21 = sphi 0, %s19
    %s22 = sphi 0, %s20
    %s34 = sphi 0, %s36
    %s37 = sphi 0, %s34
    %s38 = sphi 0, %s37
    %s54 = sphi 0, %s38
    %s60 = sphi 0, %s62
    %s63 = sphi 0, %s60
    %s64 = sphi 0, %s63
    %s80 = sphi 0, %s64
    %s84 = sphi 0, %s84
    %s86 = sphi 0, %s84
    %s87 = sphi 0, %s86
    %s101 = sphi 0, %s87
    %s105 = sphi 0, %s105
    %s107 = sphi 0, %s105
    %s108 = sphi 0, %s107
    %s122 = sphi 0, %s108
    %s128 = sphi 0, %s130
    %s131 = sphi 0, %s128
    %s132 = sphi 0, %s131
    %s148 = sphi 0, %s132
  $region4: #{gcn_forward.11} parent=0 // loop_header_branch
    %13 = sbr.rel (%p11) target = $region8
  $region5: #{gcn_forward.11} parent=0 // loop_body
    %s15 = ssub.s32 %s10, 1
    %s16 = ssub.s32 %s10, 2
    %s23 = sadd.s32 1, %s18
    %p24 = scmp.ge.s32.totalorder %s23, 1
    %s25 = scalar_select %p24, 0, %s23
    %s26 = sadd.s32 1, %s17
    %s27 = scalar_select %p24, %s26, %s17
    %p28 = scmp.ge.s32.totalorder %s27, 2
    %s29 = scalar_select %p28, 0, %s27
    %s30 = ssub.s32 %s17, %s29
    %s31 = ssub.s32 %s18, %s25
    %s32 = sor.u32 %s30, %s31
    %p33 = scmp.eq.s32.totalorder %s32, 0
    %s35 = sadd.s32 %s34, 1
    %s36 = scalar_select %p33, %s34, %s35
    %p39 = pneg %p33
    %p40 = scmp.eq.s32.totalorder %s10, 1
    %p41 = por %p39, %p40
    %p42 = scmp.ne.s32.totalorder %s34, %s37
    %p43 = scmp.eq.s32.totalorder %s10, 0
    %p44 = por %p42, %p43
    %p45 = scmp.ne.s32.totalorder %s34, %s37
    %p46 = scmp.eq.s32.totalorder %s15, 1
    %p47 = por %p45, %p46
    %p48 = scmp.ne.s32.totalorder %s37, %s38
    %p49 = scmp.eq.s32.totalorder %s15, 0
    %p50 = por %p48, %p49
    %p51 = scmp.ne.s32.totalorder %s37, %s38
    %p52 = scmp.eq.s32.totalorder %s16, 1
    %p53 = por %p51, %p52
    %p55 = scmp.ne.s32.totalorder %s38, %s54
    %p56 = scmp.eq.s32.totalorder %s16, 0
    %p57 = por %p55, %p56
    %s58 = ssub.s32 %s18, %s25
    %p59 = scmp.eq.s32.totalorder %s58, 0
    %s61 = sadd.s32 %s60, 1
    %s62 = scalar_select %p59, %s60, %s61
    %p65 = pneg %p59
    %p66 = scmp.eq.s32.totalorder %s10, 1
    %p67 = por %p65, %p66
    %p68 = scmp.ne.s32.totalorder %s60, %s63
    %p69 = scmp.eq.s32.totalorder %s10, 0
    %p70 = por %p68, %p69
    %p71 = scmp.ne.s32.totalorder %s60, %s63
    %p72 = scmp.eq.s32.totalorder %s15, 1
    %p73 = por %p71, %p72
    %p74 = scmp.ne.s32.totalorder %s63, %s64
    %p75 = scmp.eq.s32.totalorder %s15, 0
    %p76 = por %p74, %p75
    %p77 = scmp.ne.s32.totalorder %s63, %s64
    %p78 = scmp.eq.s32.totalorder %s16, 1
    %p79 = por %p77, %p78
    %p81 = scmp.ne.s32.totalorder %s64, %s80
    %p82 = scmp.eq.s32.totalorder %s16, 0
    %p83 = por %p81, %p82
    %s85 = sadd.s32 %s84, 1
    %p88 = scmp.eq.s32.totalorder %s10, 1
    %p89 = scmp.ne.s32.totalorder %s84, %s86
    %p90 = scmp.eq.s32.totalorder %s10, 0
    %p91 = por %p89, %p90
    %p92 = scmp.ne.s32.totalorder %s84, %s86
    %p93 = scmp.eq.s32.totalorder %s15, 1
    %p94 = por %p92, %p93
    %p95 = scmp.ne.s32.totalorder %s86, %s87
    %p96 = scmp.eq.s32.totalorder %s15, 0
    %p97 = por %p95, %p96
    %p98 = scmp.ne.s32.totalorder %s86, %s87
    %p99 = scmp.eq.s32.totalorder %s16, 1
    %p100 = por %p98, %p99
    %p102 = scmp.ne.s32.totalorder %s87, %s101
    %p103 = scmp.eq.s32.totalorder %s16, 0
    %p104 = por %p102, %p103
    %s106 = sadd.s32 %s105, 1
    %p109 = scmp.eq.s32.totalorder %s10, 1
    %p110 = scmp.ne.s32.totalorder %s105, %s107
    %p111 = scmp.eq.s32.totalorder %s10, 0
    %p112 = por %p110, %p111
    %p113 = scmp.ne.s32.totalorder %s105, %s107
    %p114 = scmp.eq.s32.totalorder %s15, 1
    %p115 = por %p113, %p114
    %p116 = scmp.ne.s32.totalorder %s107, %s108
    %p117 = scmp.eq.s32.totalorder %s15, 0
    %p118 = por %p116, %p117
    %p119 = scmp.ne.s32.totalorder %s107, %s108
    %p120 = scmp.eq.s32.totalorder %s16, 1
    %p121 = por %p119, %p120
    %p123 = scmp.ne.s32.totalorder %s108, %s122
    %p124 = scmp.eq.s32.totalorder %s16, 0
    %p125 = por %p123, %p124
    %s126 = ssub.s32 %s17, %s29
    %p127 = scmp.eq.s32.totalorder %s126, 0
    %s129 = sadd.s32 %s128, 1
    %s130 = scalar_select %p127, %s128, %s129
    %p133 = pneg %p127
    %p134 = scmp.eq.s32.totalorder %s10, 1
    %p135 = por %p133, %p134
    %p136 = scmp.ne.s32.totalorder %s128, %s131
    %p137 = scmp.eq.s32.totalorder %s10, 0
    %p138 = por %p136, %p137
    %p139 = scmp.ne.s32.totalorder %s128, %s131
    %p140 = scmp.eq.s32.totalorder %s15, 1
    %p141 = por %p139, %p140
    %p142 = scmp.ne.s32.totalorder %s131, %s132
    %p143 = scmp.eq.s32.totalorder %s15, 0
    %p144 = por %p142, %p143
    %p145 = scmp.ne.s32.totalorder %s131, %s132
    %p146 = scmp.eq.s32.totalorder %s16, 1
    %p147 = por %p145, %p146
    %p149 = scmp.ne.s32.totalorder %s132, %s148
    %p150 = scmp.eq.s32.totalorder %s16, 0
    %p151 = por %p149, %p150
    %p152 = scmp.le.s32.totalorder 1, %s10
    %p153 = scmp.lt.s32.totalorder %s10, 3
    %p154 = pnand %p152, %p153
    %p155 = pneg %p154
    // Predicated region
    $region9: #{gcn_forward.11} parent=5 // pred_check
      _
    $region10: #{gcn_forward.11} parent=5 // pred_check_branch
      %157 = sbr.rel (%p154) target = $region12
    $region11: #{gcn_forward.11} parent=5 // pred_region
      %s158 = ssub.s32 %s10, 1
      // Predicated region
      $region13: #{gcn_forward.11} parent=11 // pred_check
        %p159 = pneg %p76
      $region14: #{gcn_forward.11} parent=11 // pred_check_branch
        %161 = sbr.rel (%p159) target = $region16
      $region15: #{gcn_forward.11} parent=11 // pred_region
        %s162 = smul.u32 64, %s20
        %p163 = scmp.lt.s32.totalorder %s162, 63
        %s164 = scalar_select %p163, %s162, 63
        %s165 = smul.addr %s164, 4
        %s166 = scalar_lea.vmem %s1, %s165
        %s167 = smul.u32 64, %s20
      $region16: #{gcn_forward.11} parent=11 // pred_fallthru
        _
      // Predicated region
      $region17: #{gcn_forward.11} parent=11 // pred_check
        %p168 = pneg %p97
      $region18: #{gcn_forward.11} parent=11 // pred_check_branch
        %170 = sbr.rel (%p168) target = $region20
      $region19: #{gcn_forward.11} parent=11 // pred_region
        _
      $region20: #{gcn_forward.11} parent=11 // pred_fallthru
        _
      // Predicated region
      $region21: #{gcn_forward.11} parent=11 // pred_check
        %p171 = pneg %p118
      $region22: #{gcn_forward.11} parent=11 // pred_check_branch
        %173 = sbr.rel (%p171) target = $region24
      $region23: #{gcn_forward.11} parent=11 // pred_region
        _
      $region24: #{gcn_forward.11} parent=11 // pred_fallthru
        _
    $region12: #{gcn_forward.11} parent=5 // pred_fallthru
      _
    %p174 = scmp.lt.s32.totalorder %s10, 2
    // Predicated region
    $region25: #{gcn_forward.11} parent=5 // pred_check
      %p175 = pneg %p174
    $region26: #{gcn_forward.11} parent=5 // pred_check_branch
      %177 = sbr.rel (%p175) target = $region28
    $region27: #{gcn_forward.11} parent=5 // pred_region
      // Predicated region
      $region29: #{gcn_forward.11} parent=27 // pred_check
        %p178 = pneg %p44
      $region30: #{gcn_forward.11} parent=27 // pred_check_branch
        %180 = sbr.rel (%p178) target = $region32
      $region31: #{gcn_forward.11} parent=27 // pred_region
        %s181 = smul.u32 32, %s17
        %s182 = smul.u32 4, %s18
        %p183 = scmp.lt.s32.totalorder %s181, 63
        %s184 = scalar_select %p183, %s181, 63
        %p185 = scmp.lt.s32.totalorder %s182, 3
        %s186 = scalar_select %p185, %s182, 3
        %s187 = smul.addr %s184, 4
        %s188 = sadd.s32 %s186, %s187
        %s189 = smul.addr %s188, 4
        %s190 = scalar_lea.vmem %s0, %s189
        %s191 = smul.u32 32, %s17
        %s192 = smul.u32 4, %s18
      $region32: #{gcn_forward.11} parent=27 // pred_fallthru
        _
    $region28: #{gcn_forward.11} parent=5 // pred_fallthru
      _
    %p193 = scmp.le.s32.totalorder 1, %s10
    %p194 = scmp.lt.s32.totalorder %s10, 3
    %p195 = pnand %p193, %p194
    %p196 = pneg %p195
    // Predicated region
    $region33: #{gcn_forward.11} parent=5 // pred_check
      _
    $region34: #{gcn_forward.11} parent=5 // pred_check_branch
      %198 = sbr.rel (%p195) target = $region36
    $region35: #{gcn_forward.11} parent=5 // pred_region
      %s199 = ssub.s32 %s10, 1
      %s200 = smul.u32 32, %s19
      %s201 = smul.u32 4, %s20
      %p202 = scmp.lt.s32.totalorder %s200, 63
      %s203 = scalar_select %p202, %s200, 63
      %p204 = scmp.lt.s32.totalorder %s201, 3
      %s205 = scalar_select %p204, %s201, 3
      %s206 = smul.addr %s203, 4
      %s207 = sadd.s32 %s205, %s206
      %s208 = smul.addr %s207, 4
      %s209 = scalar_lea.vmem %s0, %s208
      %p210 = pneg %p50
      %p211 = pneg %p47
      %s212 = smul.u32 64, %s20
      %p213 = scmp.lt.s32.totalorder %s212, 63
      %s214 = scalar_select %p213, %s212, 63
      %s215 = smul.addr %s214, 4
      %s216 = scalar_lea.vmem %s1, %s215
      %p217 = pneg %p76
      %p218 = pneg %p73
      %p219 = pneg %p97
      %p220 = pneg %p94
      %p221 = pneg %p118
      %p222 = pneg %p115
      %p223 = pneg %p144
      %p224 = pneg %p141
      %s225 = smul.u32 32, %s19
      %p226 = scmp.lt.s32.totalorder %s225, 63
      %s227 = scalar_select %p226, %s225, 63
      %s228 = smul.addr %s227, 8
      %s229 = scalar_lea.vmem %s4, %s228
      %s230 = smul.u32 32, %s19
      %s231 = smul.u32 4, %s20
      %p232 = scmp.lt.s32.totalorder %s230, 63
      %s233 = scalar_select %p232, %s230, 63
      %p234 = scmp.lt.s32.totalorder %s231, 3
      %s235 = scalar_select %p234, %s231, 3
      %s236 = smul.addr %s233, 4
      %s237 = sadd.s32 %s235, %s236
      %s238 = smul.addr %s237, 4
      %s239 = scalar_lea.vmem %s0, %s238
      %s240 = smul.u32 32, %s19
      %s241 = smul.u32 4, %s20
      %s242 = smul.u32 64, %s20
      %p243 = scmp.lt.s32.totalorder %s242, 63
      %s244 = scalar_select %p243, %s242, 63
      %s245 = smul.addr %s244, 4
      %s246 = scalar_lea.vmem %s1, %s245
      %s247 = smul.u32 64, %s20
      %s248 = smul.u32 32, %s19
      %p249 = scmp.lt.s32.totalorder %s248, 63
      %s250 = scalar_select %p249, %s248, 63
      %s251 = smul.addr %s250, 8
      %s252 = scalar_lea.vmem %s4, %s251
      %s253 = smul.u32 32, %s19
      %p255 = scmp.eq.s32.totalorder %s20, 0
      // Predicated region
      $region37: #{gcn_forward.11} parent=35 // pred_check
        %p256 = pneg %p255
      $region38: #{gcn_forward.11} parent=35 // pred_check_branch
        %258 = sbr.rel (%p256) target = $region40
      $region39: #{gcn_forward.11} parent=35 // pred_region
        %259 = vst [vmem:[#allocation2] sm:$0xff] 0.0
        %260 = vst [vmem:[#allocation2 + $0x8] sm:$0xff] 0.0
        %261 = vst [vmem:[#allocation2 + $0x10] sm:$0xff] 0.0
        %262 = vst [vmem:[#allocation2 + $0x18] sm:$0xff] 0.0
        %263 = vst [vmem:[#allocation2 + $0x20] sm:$0xff] 0.0
        %264 = vst [vmem:[#allocation2 + $0x28] sm:$0xff] 0.0
        %265 = vst [vmem:[#allocation2 + $0x30] sm:$0xff] 0.0
        %266 = vst [vmem:[#allocation2 + $0x38] sm:$0xff] 0.0
        %267 = vst [vmem:[#allocation2 + $0x40] sm:$0xff] 0.0
        %268 = vst [vmem:[#allocation2 + $0x48] sm:$0xff] 0.0
        %269 = vst [vmem:[#allocation2 + $0x50] sm:$0xff] 0.0
        %270 = vst [vmem:[#allocation2 + $0x58] sm:$0xff] 0.0
        %271 = vst [vmem:[#allocation2 + $0x60] sm:$0xff] 0.0
        %272 = vst [vmem:[#allocation2 + $0x68] sm:$0xff] 0.0
        %273 = vst [vmem:[#allocation2 + $0x70] sm:$0xff] 0.0
        %274 = vst [vmem:[#allocation2 + $0x78] sm:$0xff] 0.0
        %275 = vst [vmem:[#allocation2 + $0x80] sm:$0xff] 0.0
        %276 = vst [vmem:[#allocation2 + $0x88] sm:$0xff] 0.0
        %277 = vst [vmem:[#allocation2 + $0x90] sm:$0xff] 0.0
        %278 = vst [vmem:[#allocation2 + $0x98] sm:$0xff] 0.0
        %279 = vst [vmem:[#allocation2 + $0xa0] sm:$0xff] 0.0
        %280 = vst [vmem:[#allocation2 + $0xa8] sm:$0xff] 0.0
        %281 = vst [vmem:[#allocation2 + $0xb0] sm:$0xff] 0.0
        %282 = vst [vmem:[#allocation2 + $0xb8] sm:$0xff] 0.0
        %283 = vst [vmem:[#allocation2 + $0xc0] sm:$0xff] 0.0
        %284 = vst [vmem:[#allocation2 + $0xc8] sm:$0xff] 0.0
        %285 = vst [vmem:[#allocation2 + $0xd0] sm:$0xff] 0.0
        %286 = vst [vmem:[#allocation2 + $0xd8] sm:$0xff] 0.0
        %287 = vst [vmem:[#allocation2 + $0xe0] sm:$0xff] 0.0
        %288 = vst [vmem:[#allocation2 + $0xe8] sm:$0xff] 0.0
        %289 = vst [vmem:[#allocation2 + $0xf0] sm:$0xff] 0.0
        %290 = vst [vmem:[#allocation2 + $0xf8] sm:$0xff] 0.0
      $region40: #{gcn_forward.11} parent=35 // pred_fallthru
        _
      %v291 = vld [vmem:[#allocation2] sm:$0xff]
      %v292 = vld [vmem:[#allocation2 + $0x8] sm:$0xff]
      %v293 = vld [vmem:[#allocation2 + $0x10] sm:$0xff]
      %v294 = vld [vmem:[#allocation2 + $0x18] sm:$0xff]
      %v295 = vld [vmem:[#allocation2 + $0x20] sm:$0xff]
      %v296 = vld [vmem:[#allocation2 + $0x28] sm:$0xff]
      %v297 = vld [vmem:[#allocation2 + $0x30] sm:$0xff]
      %v298 = vld [vmem:[#allocation2 + $0x38] sm:$0xff]
      %v299 = vld [vmem:[#allocation2 + $0x40] sm:$0xff]
      %v300 = vld [vmem:[#allocation2 + $0x48] sm:$0xff]
      %v301 = vld [vmem:[#allocation2 + $0x50] sm:$0xff]
      %v302 = vld [vmem:[#allocation2 + $0x58] sm:$0xff]
      %v303 = vld [vmem:[#allocation2 + $0x60] sm:$0xff]
      %v304 = vld [vmem:[#allocation2 + $0x68] sm:$0xff]
      %v305 = vld [vmem:[#allocation2 + $0x70] sm:$0xff]
      %v306 = vld [vmem:[#allocation2 + $0x78] sm:$0xff]
      %v307 = vld [vmem:[#allocation2 + $0x80] sm:$0xff]
      %v308 = vld [vmem:[#allocation2 + $0x88] sm:$0xff]
      %v309 = vld [vmem:[#allocation2 + $0x90] sm:$0xff]
      %v310 = vld [vmem:[#allocation2 + $0x98] sm:$0xff]
      %v311 = vld [vmem:[#allocation2 + $0xa0] sm:$0xff]
      %v312 = vld [vmem:[#allocation2 + $0xa8] sm:$0xff]
      %v313 = vld [vmem:[#allocation2 + $0xb0] sm:$0xff]
      %v314 = vld [vmem:[#allocation2 + $0xb8] sm:$0xff]
      %v315 = vld [vmem:[#allocation2 + $0xc0] sm:$0xff]
      %v316 = vld [vmem:[#allocation2 + $0xc8] sm:$0xff]
      %v317 = vld [vmem:[#allocation2 + $0xd0] sm:$0xff]
      %v318 = vld [vmem:[#allocation2 + $0xd8] sm:$0xff]
      %v319 = vld [vmem:[#allocation2 + $0xe0] sm:$0xff]
      %v320 = vld [vmem:[#allocation2 + $0xe8] sm:$0xff]
      %v321 = vld [vmem:[#allocation2 + $0xf0] sm:$0xff]
      %v322 = vld [vmem:[#allocation2 + $0xf8] sm:$0xff]
      %v323 = vld [vmem:[%s239] sm:$0xff]
      %v324 = vld [vmem:[%s239 + $0x8] sm:$0xff]
      %v325 = vld [vmem:[%s239 + $0x10] sm:$0xff]
      %v326 = vld [vmem:[%s239 + $0x18] sm:$0xff]
      %v327 = vld [vmem:[%s239 + $0x20] sm:$0xff]
      %v328 = vld [vmem:[%s239 + $0x28] sm:$0xff]
      %v329 = vld [vmem:[%s239 + $0x30] sm:$0xff]
      %v330 = vld [vmem:[%s239 + $0x38] sm:$0xff]
      %v331 = vld [vmem:[%s239 + $0x40] sm:$0xff]
      %v332 = vld [vmem:[%s239 + $0x48] sm:$0xff]
      %v333 = vld [vmem:[%s239 + $0x50] sm:$0xff]
      %v334 = vld [vmem:[%s239 + $0x58] sm:$0xff]
      %v335 = vld [vmem:[%s239 + $0x60] sm:$0xff]
      %v336 = vld [vmem:[%s239 + $0x68] sm:$0xff]
      %v337 = vld [vmem:[%s239 + $0x70] sm:$0xff]
      %v338 = vld [vmem:[%s239 + $0x78] sm:$0xff]
      %v339 = vld [vmem:[%s239 + $0x80] sm:$0xff]
      %v340 = vld [vmem:[%s239 + $0x88] sm:$0xff]
      %v341 = vld [vmem:[%s239 + $0x90] sm:$0xff]
      %v342 = vld [vmem:[%s239 + $0x98] sm:$0xff]
      %v343 = vld [vmem:[%s239 + $0xa0] sm:$0xff]
      %v344 = vld [vmem:[%s239 + $0xa8] sm:$0xff]
      %v345 = vld [vmem:[%s239 + $0xb0] sm:$0xff]
      %v346 = vld [vmem:[%s239 + $0xb8] sm:$0xff]
      %v347 = vld [vmem:[%s239 + $0xc0] sm:$0xff]
      %v348 = vld [vmem:[%s239 + $0xc8] sm:$0xff]
      %v349 = vld [vmem:[%s239 + $0xd0] sm:$0xff]
      %v350 = vld [vmem:[%s239 + $0xd8] sm:$0xff]
      %v351 = vld [vmem:[%s239 + $0xe0] sm:$0xff]
      %v352 = vld [vmem:[%s239 + $0xe8] sm:$0xff]
      %v353 = vld [vmem:[%s239 + $0xf0] sm:$0xff]
      %v354 = vld [vmem:[%s239 + $0xf8] sm:$0xff]
      %v355 = vld [vmem:[%s239 + $0x100] sm:$0xff]
      %v356 = vld [vmem:[%s239 + $0x108] sm:$0xff]
      %v357 = vld [vmem:[%s239 + $0x110] sm:$0xff]
      %v358 = vld [vmem:[%s239 + $0x118] sm:$0xff]
      %v359 = vld [vmem:[%s239 + $0x120] sm:$0xff]
      %v360 = vld [vmem:[%s239 + $0x128] sm:$0xff]
      %v361 = vld [vmem:[%s239 + $0x130] sm:$0xff]
      %v362 = vld [vmem:[%s239 + $0x138] sm:$0xff]
      %v363 = vld [vmem:[%s239 + $0x140] sm:$0xff]
      %v364 = vld [vmem:[%s239 + $0x148] sm:$0xff]
      %v365 = vld [vmem:[%s239 + $0x150] sm:$0xff]
      %v366 = vld [vmem:[%s239 + $0x158] sm:$0xff]
      %v367 = vld [vmem:[%s239 + $0x160] sm:$0xff]
      %v368 = vld [vmem:[%s239 + $0x168] sm:$0xff]
      %v369 = vld [vmem:[%s239 + $0x170] sm:$0xff]
      %v370 = vld [vmem:[%s239 + $0x178] sm:$0xff]
      %v371 = vld [vmem:[%s239 + $0x180] sm:$0xff]
      %v372 = vld [vmem:[%s239 + $0x188] sm:$0xff]
      %v373 = vld [vmem:[%s239 + $0x190] sm:$0xff]
      %v374 = vld [vmem:[%s239 + $0x198] sm:$0xff]
      %v375 = vld [vmem:[%s239 + $0x1a0] sm:$0xff]
      %v376 = vld [vmem:[%s239 + $0x1a8] sm:$0xff]
      %v377 = vld [vmem:[%s239 + $0x1b0] sm:$0xff]
      %v378 = vld [vmem:[%s239 + $0x1b8] sm:$0xff]
      %v379 = vld [vmem:[%s239 + $0x1c0] sm:$0xff]
      %v380 = vld [vmem:[%s239 + $0x1c8] sm:$0xff]
      %v381 = vld [vmem:[%s239 + $0x1d0] sm:$0xff]
      %v382 = vld [vmem:[%s239 + $0x1d8] sm:$0xff]
      %v383 = vld [vmem:[%s239 + $0x1e0] sm:$0xff]
      %v384 = vld [vmem:[%s239 + $0x1e8] sm:$0xff]
      %v385 = vld [vmem:[%s239 + $0x1f0] sm:$0xff]
      %v386 = vld [vmem:[%s239 + $0x1f8] sm:$0xff]
      %v387 = vld [vmem:[%s246] sm:$0xf]
      %v388 = vld [vmem:[%s246 + $0x4] sm:$0xf]
      %v389 = vld [vmem:[%s246 + $0x8] sm:$0xf]
      %v390 = vld [vmem:[%s246 + $0xc] sm:$0xf]
      %v391 = vld [vmem:[%s246 + $0x10] sm:$0xf]
      %v392 = vld [vmem:[%s246 + $0x14] sm:$0xf]
      %v393 = vld [vmem:[%s246 + $0x18] sm:$0xf]
      %v394 = vld [vmem:[%s246 + $0x1c] sm:$0xf]
      %v395 = vld [vmem:[%s246 + $0x20] sm:$0xf]
      %v396 = vld [vmem:[%s246 + $0x24] sm:$0xf]
      %v397 = vld [vmem:[%s246 + $0x28] sm:$0xf]
      %v398 = vld [vmem:[%s246 + $0x2c] sm:$0xf]
      %v399 = vld [vmem:[%s246 + $0x30] sm:$0xf]
      %v400 = vld [vmem:[%s246 + $0x34] sm:$0xf]
      %v401 = vld [vmem:[%s246 + $0x38] sm:$0xf]
      %v402 = vld [vmem:[%s246 + $0x3c] sm:$0xf]
      %v403 = vld [vmem:[%s246 + $0x40] sm:$0xf]
      %v404 = vld [vmem:[%s246 + $0x44] sm:$0xf]
      %v405 = vld [vmem:[%s246 + $0x48] sm:$0xf]
      %v406 = vld [vmem:[%s246 + $0x4c] sm:$0xf]
      %v407 = vld [vmem:[%s246 + $0x50] sm:$0xf]
      %v408 = vld [vmem:[%s246 + $0x54] sm:$0xf]
      %v409 = vld [vmem:[%s246 + $0x58] sm:$0xf]
      %v410 = vld [vmem:[%s246 + $0x5c] sm:$0xf]
      %v411 = vld [vmem:[%s246 + $0x60] sm:$0xf]
      %v412 = vld [vmem:[%s246 + $0x64] sm:$0xf]
      %v413 = vld [vmem:[%s246 + $0x68] sm:$0xf]
      %v414 = vld [vmem:[%s246 + $0x6c] sm:$0xf]
      %v415 = vld [vmem:[%s246 + $0x70] sm:$0xf]
      %v416 = vld [vmem:[%s246 + $0x74] sm:$0xf]
      %v417 = vld [vmem:[%s246 + $0x78] sm:$0xf]
      %v418 = vld [vmem:[%s246 + $0x7c] sm:$0xf]
      %v419 = vld [vmem:[%s246 + $0x80] sm:$0xf]
      %v420 = vld [vmem:[%s246 + $0x84] sm:$0xf]
      %v421 = vld [vmem:[%s246 + $0x88] sm:$0xf]
      %v422 = vld [vmem:[%s246 + $0x8c] sm:$0xf]
      %v423 = vld [vmem:[%s246 + $0x90] sm:$0xf]
      %v424 = vld [vmem:[%s246 + $0x94] sm:$0xf]
      %v425 = vld [vmem:[%s246 + $0x98] sm:$0xf]
      %v426 = vld [vmem:[%s246 + $0x9c] sm:$0xf]
      %v427 = vld [vmem:[%s246 + $0xa0] sm:$0xf]
      %v428 = vld [vmem:[%s246 + $0xa4] sm:$0xf]
      %v429 = vld [vmem:[%s246 + $0xa8] sm:$0xf]
      %v430 = vld [vmem:[%s246 + $0xac] sm:$0xf]
      %v431 = vld [vmem:[%s246 + $0xb0] sm:$0xf]
      %v432 = vld [vmem:[%s246 + $0xb4] sm:$0xf]
      %v433 = vld [vmem:[%s246 + $0xb8] sm:$0xf]
      %v434 = vld [vmem:[%s246 + $0xbc] sm:$0xf]
      %v435 = vld [vmem:[%s246 + $0xc0] sm:$0xf]
      %v436 = vld [vmem:[%s246 + $0xc4] sm:$0xf]
      %v437 = vld [vmem:[%s246 + $0xc8] sm:$0xf]
      %v438 = vld [vmem:[%s246 + $0xcc] sm:$0xf]
      %v439 = vld [vmem:[%s246 + $0xd0] sm:$0xf]
      %v440 = vld [vmem:[%s246 + $0xd4] sm:$0xf]
      %v441 = vld [vmem:[%s246 + $0xd8] sm:$0xf]
      %v442 = vld [vmem:[%s246 + $0xdc] sm:$0xf]
      %v443 = vld [vmem:[%s246 + $0xe0] sm:$0xf]
      %v444 = vld [vmem:[%s246 + $0xe4] sm:$0xf]
      %v445 = vld [vmem:[%s246 + $0xe8] sm:$0xf]
      %v446 = vld [vmem:[%s246 + $0xec] sm:$0xf]
      %v447 = vld [vmem:[%s246 + $0xf0] sm:$0xf]
      %v448 = vld [vmem:[%s246 + $0xf4] sm:$0xf]
      %v449 = vld [vmem:[%s246 + $0xf8] sm:$0xf]
      %v450 = vld [vmem:[%s246 + $0xfc] sm:$0xf]
      %v515 = vunpack.c.l.b16 %v323
      %v516 = vunpack.c.h.b16 %v323
      %v517 = vunpack.c.l.b16 %v324
      %v518 = vunpack.c.h.b16 %v324
      %v519 = vunpack.c.l.b16 %v325
      %v520 = vunpack.c.h.b16 %v325
      %v521 = vunpack.c.l.b16 %v326
      %v522 = vunpack.c.h.b16 %v326
      %v523 = vunpack.c.l.b16 %v327
      %v524 = vunpack.c.h.b16 %v327
      %v525 = vunpack.c.l.b16 %v328
      %v526 = vunpack.c.h.b16 %v328
      %v527 = vunpack.c.l.b16 %v329
      %v528 = vunpack.c.h.b16 %v329
      %v529 = vunpack.c.l.b16 %v330
      %v530 = vunpack.c.h.b16 %v330
      %v531 = vunpack.c.l.b16 %v331
      %v532 = vunpack.c.h.b16 %v331
      %v533 = vunpack.c.l.b16 %v332
      %v534 = vunpack.c.h.b16 %v332
      %v535 = vunpack.c.l.b16 %v333
      %v536 = vunpack.c.h.b16 %v333
      %v537 = vunpack.c.l.b16 %v334
      %v538 = vunpack.c.h.b16 %v334
      %v539 = vunpack.c.l.b16 %v335
      %v540 = vunpack.c.h.b16 %v335
      %v541 = vunpack.c.l.b16 %v336
      %v542 = vunpack.c.h.b16 %v336
      %v543 = vunpack.c.l.b16 %v337
      %v544 = vunpack.c.h.b16 %v337
      %v545 = vunpack.c.l.b16 %v338
      %v546 = vunpack.c.h.b16 %v338
      %v547 = vunpack.c.l.b16 %v339
      %v548 = vunpack.c.h.b16 %v339
      %v549 = vunpack.c.l.b16 %v340
      %v550 = vunpack.c.h.b16 %v340
      %v551 = vunpack.c.l.b16 %v341
      %v552 = vunpack.c.h.b16 %v341
      %v553 = vunpack.c.l.b16 %v342
      %v554 = vunpack.c.h.b16 %v342
      %v555 = vunpack.c.l.b16 %v343
      %v556 = vunpack.c.h.b16 %v343
      %v557 = vunpack.c.l.b16 %v344
      %v558 = vunpack.c.h.b16 %v344
      %v559 = vunpack.c.l.b16 %v345
      %v560 = vunpack.c.h.b16 %v345
      %v561 = vunpack.c.l.b16 %v346
      %v562 = vunpack.c.h.b16 %v346
      %v563 = vunpack.c.l.b16 %v347
      %v564 = vunpack.c.h.b16 %v347
      %v565 = vunpack.c.l.b16 %v348
      %v566 = vunpack.c.h.b16 %v348
      %v567 = vunpack.c.l.b16 %v349
      %v568 = vunpack.c.h.b16 %v349
      %v569 = vunpack.c.l.b16 %v350
      %v570 = vunpack.c.h.b16 %v350
      %v571 = vunpack.c.l.b16 %v351
      %v572 = vunpack.c.h.b16 %v351
      %v573 = vunpack.c.l.b16 %v352
      %v574 = vunpack.c.h.b16 %v352
      %v575 = vunpack.c.l.b16 %v353
      %v576 = vunpack.c.h.b16 %v353
      %v577 = vunpack.c.l.b16 %v354
      %v578 = vunpack.c.h.b16 %v354
      %v579 = vunpack.c.l.b16 %v355
      %v580 = vunpack.c.h.b16 %v355
      %v581 = vunpack.c.l.b16 %v356
      %v582 = vunpack.c.h.b16 %v356
      %v583 = vunpack.c.l.b16 %v357
      %v584 = vunpack.c.h.b16 %v357
      %v585 = vunpack.c.l.b16 %v358
      %v586 = vunpack.c.h.b16 %v358
      %v587 = vunpack.c.l.b16 %v359
      %v588 = vunpack.c.h.b16 %v359
      %v589 = vunpack.c.l.b16 %v360
      %v590 = vunpack.c.h.b16 %v360
      %v591 = vunpack.c.l.b16 %v361
      %v592 = vunpack.c.h.b16 %v361
      %v593 = vunpack.c.l.b16 %v362
      %v594 = vunpack.c.h.b16 %v362
      %v595 = vunpack.c.l.b16 %v363
      %v596 = vunpack.c.h.b16 %v363
      %v597 = vunpack.c.l.b16 %v364
      %v598 = vunpack.c.h.b16 %v364
      %v599 = vunpack.c.l.b16 %v365
      %v600 = vunpack.c.h.b16 %v365
      %v601 = vunpack.c.l.b16 %v366
      %v602 = vunpack.c.h.b16 %v366
      %v603 = vunpack.c.l.b16 %v367
      %v604 = vunpack.c.h.b16 %v367
      %v605 = vunpack.c.l.b16 %v368
      %v606 = vunpack.c.h.b16 %v368
      %v607 = vunpack.c.l.b16 %v369
      %v608 = vunpack.c.h.b16 %v369
      %v609 = vunpack.c.l.b16 %v370
      %v610 = vunpack.c.h.b16 %v370
      %v611 = vunpack.c.l.b16 %v371
      %v612 = vunpack.c.h.b16 %v371
      %v613 = vunpack.c.l.b16 %v372
      %v614 = vunpack.c.h.b16 %v372
      %v615 = vunpack.c.l.b16 %v373
      %v616 = vunpack.c.h.b16 %v373
      %v617 = vunpack.c.l.b16 %v374
      %v618 = vunpack.c.h.b16 %v374
      %v619 = vunpack.c.l.b16 %v375
      %v620 = vunpack.c.h.b16 %v375
      %v621 = vunpack.c.l.b16 %v376
      %v622 = vunpack.c.h.b16 %v376
      %v623 = vunpack.c.l.b16 %v377
      %v624 = vunpack.c.h.b16 %v377
      %v625 = vunpack.c.l.b16 %v378
      %v626 = vunpack.c.h.b16 %v378
      %v627 = vunpack.c.l.b16 %v379
      %v628 = vunpack.c.h.b16 %v379
      %v629 = vunpack.c.l.b16 %v380
      %v630 = vunpack.c.h.b16 %v380
      %v631 = vunpack.c.l.b16 %v381
      %v632 = vunpack.c.h.b16 %v381
      %v633 = vunpack.c.l.b16 %v382
      %v634 = vunpack.c.h.b16 %v382
      %v635 = vunpack.c.l.b16 %v383
      %v636 = vunpack.c.h.b16 %v383
      %v637 = vunpack.c.l.b16 %v384
      %v638 = vunpack.c.h.b16 %v384
      %v639 = vunpack.c.l.b16 %v385
      %v640 = vunpack.c.h.b16 %v385
      %v641 = vunpack.c.l.b16 %v386
      %v642 = vunpack.c.h.b16 %v386
      %v643 = vpack.c.b16 %v519, %v515
      %v644 = vpack.c.b16 %v520, %v516
      %v645 = vpack.c.b16 %v521, %v517
      %v646 = vpack.c.b16 %v522, %v518
      %v647 = vpack.c.b16 %v527, %v523
      %v648 = vpack.c.b16 %v528, %v524
      %v649 = vpack.c.b16 %v529, %v525
      %v650 = vpack.c.b16 %v530, %v526
      %v651 = vpack.c.b16 %v535, %v531
      %v652 = vpack.c.b16 %v536, %v532
      %v653 = vpack.c.b16 %v537, %v533
      %v654 = vpack.c.b16 %v538, %v534
      %v655 = vpack.c.b16 %v543, %v539
      %v656 = vpack.c.b16 %v544, %v540
      %v657 = vpack.c.b16 %v545, %v541
      %v658 = vpack.c.b16 %v546, %v542
      %v659 = vpack.c.b16 %v551, %v547
      %v660 = vpack.c.b16 %v552, %v548
      %v661 = vpack.c.b16 %v553, %v549
      %v662 = vpack.c.b16 %v554, %v550
      %v663 = vpack.c.b16 %v559, %v555
      %v664 = vpack.c.b16 %v560, %v556
      %v665 = vpack.c.b16 %v561, %v557
      %v666 = vpack.c.b16 %v562, %v558
      %v667 = vpack.c.b16 %v567, %v563
      %v668 = vpack.c.b16 %v568, %v564
      %v669 = vpack.c.b16 %v569, %v565
      %v670 = vpack.c.b16 %v570, %v566
      %v671 = vpack.c.b16 %v575, %v571
      %v672 = vpack.c.b16 %v576, %v572
      %v673 = vpack.c.b16 %v577, %v573
      %v674 = vpack.c.b16 %v578, %v574
      %v675 = vpack.c.b16 %v583, %v579
      %v676 = vpack.c.b16 %v584, %v580
      %v677 = vpack.c.b16 %v585, %v581
      %v678 = vpack.c.b16 %v586, %v582
      %v679 = vpack.c.b16 %v591, %v587
      %v680 = vpack.c.b16 %v592, %v588
      %v681 = vpack.c.b16 %v593, %v589
      %v682 = vpack.c.b16 %v594, %v590
      %v683 = vpack.c.b16 %v599, %v595
      %v684 = vpack.c.b16 %v600, %v596
      %v685 = vpack.c.b16 %v601, %v597
      %v686 = vpack.c.b16 %v602, %v598
      %v687 = vpack.c.b16 %v607, %v603
      %v688 = vpack.c.b16 %v608, %v604
      %v689 = vpack.c.b16 %v609, %v605
      %v690 = vpack.c.b16 %v610, %v606
      %v691 = vpack.c.b16 %v615, %v611
      %v692 = vpack.c.b16 %v616, %v612
      %v693 = vpack.c.b16 %v617, %v613
      %v694 = vpack.c.b16 %v618, %v614
      %v695 = vpack.c.b16 %v623, %v619
      %v696 = vpack.c.b16 %v624, %v620
      %v697 = vpack.c.b16 %v625, %v621
      %v698 = vpack.c.b16 %v626, %v622
      %v699 = vpack.c.b16 %v631, %v627
      %v700 = vpack.c.b16 %v632, %v628
      %v701 = vpack.c.b16 %v633, %v629
      %v702 = vpack.c.b16 %v634, %v630
      %v703 = vpack.c.b16 %v639, %v635
      %v704 = vpack.c.b16 %v640, %v636
      %v705 = vpack.c.b16 %v641, %v637
      %v706 = vpack.c.b16 %v642, %v638
      %v835 = vunpack.c.l.b16 %v387
      %v836 = vunpack.c.l.b16 %v388
      %v837 = vunpack.c.l.b16 %v389
      %v838 = vunpack.c.l.b16 %v390
      %v839 = vunpack.c.l.b16 %v391
      %v840 = vunpack.c.l.b16 %v392
      %v841 = vunpack.c.l.b16 %v393
      %v842 = vunpack.c.l.b16 %v394
      %v843 = vunpack.c.l.b16 %v395
      %v844 = vunpack.c.l.b16 %v396
      %v845 = vunpack.c.l.b16 %v397
      %v846 = vunpack.c.l.b16 %v398
      %v847 = vunpack.c.l.b16 %v399
      %v848 = vunpack.c.l.b16 %v400
      %v849 = vunpack.c.l.b16 %v401
      %v850 = vunpack.c.l.b16 %v402
      %v851 = vunpack.c.l.b16 %v403
      %v852 = vunpack.c.l.b16 %v404
      %v853 = vunpack.c.l.b16 %v405
      %v854 = vunpack.c.l.b16 %v406
      %v855 = vunpack.c.l.b16 %v407
      %v856 = vunpack.c.l.b16 %v408
      %v857 = vunpack.c.l.b16 %v409
      %v858 = vunpack.c.l.b16 %v410
      %v859 = vunpack.c.l.b16 %v411
      %v860 = vunpack.c.l.b16 %v412
      %v861 = vunpack.c.l.b16 %v413
      %v862 = vunpack.c.l.b16 %v414
      %v863 = vunpack.c.l.b16 %v415
      %v864 = vunpack.c.l.b16 %v416
      %v865 = vunpack.c.l.b16 %v417
      %v866 = vunpack.c.l.b16 %v418
      %v867 = vunpack.c.l.b16 %v419
      %v868 = vunpack.c.l.b16 %v420
      %v869 = vunpack.c.l.b16 %v421
      %v870 = vunpack.c.l.b16 %v422
      %v871 = vunpack.c.l.b16 %v423
      %v872 = vunpack.c.l.b16 %v424
      %v873 = vunpack.c.l.b16 %v425
      %v874 = vunpack.c.l.b16 %v426
      %v875 = vunpack.c.l.b16 %v427
      %v876 = vunpack.c.l.b16 %v428
      %v877 = vunpack.c.l.b16 %v429
      %v878 = vunpack.c.l.b16 %v430
      %v879 = vunpack.c.l.b16 %v431
      %v880 = vunpack.c.l.b16 %v432
      %v881 = vunpack.c.l.b16 %v433
      %v882 = vunpack.c.l.b16 %v434
      %v883 = vunpack.c.l.b16 %v435
      %v884 = vunpack.c.l.b16 %v436
      %v885 = vunpack.c.l.b16 %v437
      %v886 = vunpack.c.l.b16 %v438
      %v887 = vunpack.c.l.b16 %v439
      %v888 = vunpack.c.l.b16 %v440
      %v889 = vunpack.c.l.b16 %v441
      %v890 = vunpack.c.l.b16 %v442
      %v891 = vunpack.c.l.b16 %v443
      %v892 = vunpack.c.l.b16 %v444
      %v893 = vunpack.c.l.b16 %v445
      %v894 = vunpack.c.l.b16 %v446
      %v895 = vunpack.c.l.b16 %v447
      %v896 = vunpack.c.l.b16 %v448
      %v897 = vunpack.c.l.b16 %v449
      %v898 = vunpack.c.l.b16 %v450
      %v899 = vpack.c.b16 %v836, %v835
      %v900 = vpack.c.b16 %v838, %v837
      %v901 = vpack.c.b16 %v840, %v839
      %v902 = vpack.c.b16 %v842, %v841
      %v903 = vpack.c.b16 %v844, %v843
      %v904 = vpack.c.b16 %v846, %v845
      %v905 = vpack.c.b16 %v848, %v847
      %v906 = vpack.c.b16 %v850, %v849
      %v907 = vpack.c.b16 %v852, %v851
      %v908 = vpack.c.b16 %v854, %v853
      %v909 = vpack.c.b16 %v856, %v855
      %v910 = vpack.c.b16 %v858, %v857
      %v911 = vpack.c.b16 %v860, %v859
      %v912 = vpack.c.b16 %v862, %v861
      %v913 = vpack.c.b16 %v864, %v863
      %v914 = vpack.c.b16 %v866, %v865
      %v915 = vpack.c.b16 %v868, %v867
      %v916 = vpack.c.b16 %v870, %v869
      %v917 = vpack.c.b16 %v872, %v871
      %v918 = vpack.c.b16 %v874, %v873
      %v919 = vpack.c.b16 %v876, %v875
      %v920 = vpack.c.b16 %v878, %v877
      %v921 = vpack.c.b16 %v880, %v879
      %v922 = vpack.c.b16 %v882, %v881
      %v923 = vpack.c.b16 %v884, %v883
      %v924 = vpack.c.b16 %v886, %v885
      %v925 = vpack.c.b16 %v888, %v887
      %v926 = vpack.c.b16 %v890, %v889
      %v927 = vpack.c.b16 %v892, %v891
      %v928 = vpack.c.b16 %v894, %v893
      %v929 = vpack.c.b16 %v896, %v895
      %v930 = vpack.c.b16 %v898, %v897
      %963 = vmatprep.subr.bf16.mxu0 0
      %964 = vmatpush1.bf16.msra.mxu0 %v906
      %965 = vmatprep.subr.bf16.mxu0 0
      %966 = vmatpush1.bf16.msra.mxu0 %v905
      %967 = vmatprep.subr.bf16.mxu0 0
      %968 = vmatpush1.bf16.msra.mxu0 %v904
      %969 = vmatprep.subr.bf16.mxu0 0
      %970 = vmatpush1.bf16.msra.mxu0 %v903
      %971 = vmatprep.subr.bf16.mxu0 0
      %972 = vmatpush1.bf16.msra.mxu0 %v902
      %973 = vmatprep.subr.bf16.mxu0 0
      %974 = vmatpush1.bf16.msra.mxu0 %v901
      %975 = vmatprep.subr.bf16.mxu0 0
      %976 = vmatpush1.bf16.msra.mxu0 %v900
      %977 = vmatprep.subr.bf16.mxu0 0
      %978 = vmatpush1.bf16.msra.mxu0 %v899
      %979 = vmatprep.subr.bf16.mxu0 0
      %980 = vmatpush2.bf16.msra.mxu0 %v914
      %981 = vmatprep.subr.bf16.mxu0 0
      %982 = vmatpush2.bf16.msra.mxu0 %v913
      %983 = vmatprep.subr.bf16.mxu0 0
      %984 = vmatpush2.bf16.msra.mxu0 %v912
      %985 = vmatprep.subr.bf16.mxu0 0
      %986 = vmatpush2.bf16.msra.mxu0 %v911
      %987 = vmatprep.subr.bf16.mxu0 0
      %988 = vmatpush2.bf16.msra.mxu0 %v910
      %989 = vmatprep.subr.bf16.mxu0 0
      %990 = vmatpush2.bf16.msra.mxu0 %v909
      %991 = vmatprep.subr.bf16.mxu0 0
      %992 = vmatpush2.bf16.msra.mxu0 %v908
      %993 = vmatprep.subr.bf16.mxu0 0
      %994 = vmatpush2.bf16.msra.mxu0 %v907
      %995 = vmatprep.mubr.bf16.mxu0 %v644
      %996 = vmatmul.mubr.bf16.gmra.mxu0 %v643
      %v997 = vpop.f32.mrf.mxu0
      %v998 = vadd.f32 0.0, %v997
      %v999 = vpop.f32.mrf.mxu0
      %v1000 = vpop.f32.mrf.mxu0
      %v1001 = vadd.f32 0.0, %v1000
      %v1002 = vpop.f32.mrf.mxu0
      %1003 = vmatprep.mubr.bf16.mxu0 %v648
      %1004 = vmatmul.mubr.bf16.gmra.mxu0 %v647
      %v1005 = vpop.f32.mrf.mxu0
      %v1006 = vadd.f32 0.0, %v1005
      %v1007 = vpop.f32.mrf.mxu0
      %v1008 = vpop.f32.mrf.mxu0
      %v1009 = vadd.f32 0.0, %v1008
      %v1010 = vpop.f32.mrf.mxu0
      %1011 = vmatprep.mubr.bf16.mxu0 %v652
      %1012 = vmatmul.mubr.bf16.gmra.mxu0 %v651
      %v1013 = vpop.f32.mrf.mxu0
      %v1014 = vadd.f32 0.0, %v1013
      %v1015 = vpop.f32.mrf.mxu0
      %v1016 = vpop.f32.mrf.mxu0
      %v1017 = vadd.f32 0.0, %v1016
      %v1018 = vpop.f32.mrf.mxu0
      %1019 = vmatprep.mubr.bf16.mxu0 %v656
      %1020 = vmatmul.mubr.bf16.gmra.mxu0 %v655
      %v1021 = vpop.f32.mrf.mxu0
      %v1022 = vadd.f32 0.0, %v1021
      %v1023 = vpop.f32.mrf.mxu0
      %v1024 = vpop.f32.mrf.mxu0
      %v1025 = vadd.f32 0.0, %v1024
      %v1026 = vpop.f32.mrf.mxu0
      %1027 = vmatprep.mubr.bf16.mxu0 %v660
      %1028 = vmatmul.mubr.bf16.gmra.mxu0 %v659
      %v1029 = vpop.f32.mrf.mxu0
      %v1030 = vadd.f32 0.0, %v1029
      %v1031 = vpop.f32.mrf.mxu0
      %v1032 = vpop.f32.mrf.mxu0
      %v1033 = vadd.f32 0.0, %v1032
      %v1034 = vpop.f32.mrf.mxu0
      %1035 = vmatprep.mubr.bf16.mxu0 %v664
      %1036 = vmatmul.mubr.bf16.gmra.mxu0 %v663
      %v1037 = vpop.f32.mrf.mxu0
      %v1038 = vadd.f32 0.0, %v1037
      %v1039 = vpop.f32.mrf.mxu0
      %v1040 = vpop.f32.mrf.mxu0
      %v1041 = vadd.f32 0.0, %v1040
      %v1042 = vpop.f32.mrf.mxu0
      %1043 = vmatprep.mubr.bf16.mxu0 %v668
      %1044 = vmatmul.mubr.bf16.gmra.mxu0 %v667
      %v1045 = vpop.f32.mrf.mxu0
      %v1046 = vadd.f32 0.0, %v1045
      %v1047 = vpop.f32.mrf.mxu0
      %v1048 = vpop.f32.mrf.mxu0
      %v1049 = vadd.f32 0.0, %v1048
      %v1050 = vpop.f32.mrf.mxu0
      %1051 = vmatprep.mubr.bf16.mxu0 %v672
      %1052 = vmatmul.mubr.bf16.gmra.mxu0 %v671
      %v1053 = vpop.f32.mrf.mxu0
      %v1054 = vadd.f32 0.0, %v1053
      %v1055 = vpop.f32.mrf.mxu0
      %v1056 = vpop.f32.mrf.mxu0
      %v1057 = vadd.f32 0.0, %v1056
      %v1058 = vpop.f32.mrf.mxu0
      %1059 = vmatprep.mubr.bf16.mxu0 %v676
      %1060 = vmatmul.mubr.bf16.gmra.mxu0 %v675
      %v1061 = vpop.f32.mrf.mxu0
      %v1062 = vadd.f32 0.0, %v1061
      %v1063 = vpop.f32.mrf.mxu0
      %v1064 = vpop.f32.mrf.mxu0
      %v1065 = vadd.f32 0.0, %v1064
      %v1066 = vpop.f32.mrf.mxu0
      %1067 = vmatprep.mubr.bf16.mxu0 %v680
      %1068 = vmatmul.mubr.bf16.gmra.mxu0 %v679
      %v1069 = vpop.f32.mrf.mxu0
      %v1070 = vadd.f32 0.0, %v1069
      %v1071 = vpop.f32.mrf.mxu0
      %v1072 = vpop.f32.mrf.mxu0
      %v1073 = vadd.f32 0.0, %v1072
      %v1074 = vpop.f32.mrf.mxu0
      %1075 = vmatprep.mubr.bf16.mxu0 %v684
      %1076 = vmatmul.mubr.bf16.gmra.mxu0 %v683
      %v1077 = vpop.f32.mrf.mxu0
      %v1078 = vadd.f32 0.0, %v1077
      %v1079 = vpop.f32.mrf.mxu0
      %v1080 = vpop.f32.mrf.mxu0
      %v1081 = vadd.f32 0.0, %v1080
      %v1082 = vpop.f32.mrf.mxu0
      %1083 = vmatprep.mubr.bf16.mxu0 %v688
      %1084 = vmatmul.mubr.bf16.gmra.mxu0 %v687
      %v1085 = vpop.f32.mrf.mxu0
      %v1086 = vadd.f32 0.0, %v1085
      %v1087 = vpop.f32.mrf.mxu0
      %v1088 = vpop.f32.mrf.mxu0
      %v1089 = vadd.f32 0.0, %v1088
      %v1090 = vpop.f32.mrf.mxu0
      %1091 = vmatprep.mubr.bf16.mxu0 %v692
      %1092 = vmatmul.mubr.bf16.gmra.mxu0 %v691
      %v1093 = vpop.f32.mrf.mxu0
      %v1094 = vadd.f32 0.0, %v1093
      %v1095 = vpop.f32.mrf.mxu0
      %v1096 = vpop.f32.mrf.mxu0
      %v1097 = vadd.f32 0.0, %v1096
      %v1098 = vpop.f32.mrf.mxu0
      %1099 = vmatprep.mubr.bf16.mxu0 %v696
      %1100 = vmatmul.mubr.bf16.gmra.mxu0 %v695
      %v1101 = vpop.f32.mrf.mxu0
      %v1102 = vadd.f32 0.0, %v1101
      %v1103 = vpop.f32.mrf.mxu0
      %v1104 = vpop.f32.mrf.mxu0
      %v1105 = vadd.f32 0.0, %v1104
      %v1106 = vpop.f32.mrf.mxu0
      %1107 = vmatprep.mubr.bf16.mxu0 %v700
      %1108 = vmatmul.mubr.bf16.gmra.mxu0 %v699
      %v1109 = vpop.f32.mrf.mxu0
      %v1110 = vadd.f32 0.0, %v1109
      %v1111 = vpop.f32.mrf.mxu0
      %v1112 = vpop.f32.mrf.mxu0
      %v1113 = vadd.f32 0.0, %v1112
      %v1114 = vpop.f32.mrf.mxu0
      %1115 = vmatprep.mubr.bf16.mxu0 %v704
      %1116 = vmatmul.mubr.bf16.gmra.mxu0 %v703
      %v1117 = vpop.f32.mrf.mxu0
      %v1118 = vadd.f32 0.0, %v1117
      %v1119 = vpop.f32.mrf.mxu0
      %v1120 = vpop.f32.mrf.mxu0
      %v1121 = vadd.f32 0.0, %v1120
      %v1122 = vpop.f32.mrf.mxu0
      %1123 = vdwg.mxu0
      %1124 = vmatprep.subr.bf16.mxu0 0
      %1125 = vmatpush1.bf16.msra.mxu0 %v922
      %1126 = vmatprep.subr.bf16.mxu0 0
      %1127 = vmatpush1.bf16.msra.mxu0 %v921
      %1128 = vmatprep.subr.bf16.mxu0 0
      %1129 = vmatpush1.bf16.msra.mxu0 %v920
      %1130 = vmatprep.subr.bf16.mxu0 0
      %1131 = vmatpush1.bf16.msra.mxu0 %v919
      %1132 = vmatprep.subr.bf16.mxu0 0
      %1133 = vmatpush1.bf16.msra.mxu0 %v918
      %1134 = vmatprep.subr.bf16.mxu0 0
      %1135 = vmatpush1.bf16.msra.mxu0 %v917
      %1136 = vmatprep.subr.bf16.mxu0 0
      %1137 = vmatpush1.bf16.msra.mxu0 %v916
      %1138 = vmatprep.subr.bf16.mxu0 0
      %1139 = vmatpush1.bf16.msra.mxu0 %v915
      %1140 = vmatprep.subr.bf16.mxu0 0
      %1141 = vmatpush2.bf16.msra.mxu0 %v930
      %1142 = vmatprep.subr.bf16.mxu0 0
      %1143 = vmatpush2.bf16.msra.mxu0 %v929
      %1144 = vmatprep.subr.bf16.mxu0 0
      %1145 = vmatpush2.bf16.msra.mxu0 %v928
      %1146 = vmatprep.subr.bf16.mxu0 0
      %1147 = vmatpush2.bf16.msra.mxu0 %v927
      %1148 = vmatprep.subr.bf16.mxu0 0
      %1149 = vmatpush2.bf16.msra.mxu0 %v926
      %1150 = vmatprep.subr.bf16.mxu0 0
      %1151 = vmatpush2.bf16.msra.mxu0 %v925
      %1152 = vmatprep.subr.bf16.mxu0 0
      %1153 = vmatpush2.bf16.msra.mxu0 %v924
      %1154 = vmatprep.subr.bf16.mxu0 0
      %1155 = vmatpush2.bf16.msra.mxu0 %v923
      %1156 = vmatprep.mubr.bf16.mxu0 %v646
      %1157 = vmatmul.mubr.bf16.gmra.mxu0 %v645
      %v1158 = vpop.f32.mrf.mxu0
      %v1159 = vadd.f32 %v998, %v1158
      %v1160 = vpop.f32.mrf.mxu0
      %v1161 = vpop.f32.mrf.mxu0
      %v1162 = vadd.f32 %v1001, %v1161
      %v1163 = vpop.f32.mrf.mxu0
      %1164 = vmatprep.mubr.bf16.mxu0 %v650
      %1165 = vmatmul.mubr.bf16.gmra.mxu0 %v649
      %v1166 = vpop.f32.mrf.mxu0
      %v1167 = vadd.f32 %v1006, %v1166
      %v1168 = vpop.f32.mrf.mxu0
      %v1169 = vpop.f32.mrf.mxu0
      %v1170 = vadd.f32 %v1009, %v1169
      %v1171 = vpop.f32.mrf.mxu0
      %1172 = vmatprep.mubr.bf16.mxu0 %v654
      %1173 = vmatmul.mubr.bf16.gmra.mxu0 %v653
      %v1174 = vpop.f32.mrf.mxu0
      %v1175 = vadd.f32 %v1014, %v1174
      %v1176 = vpop.f32.mrf.mxu0
      %v1177 = vpop.f32.mrf.mxu0
      %v1178 = vadd.f32 %v1017, %v1177
      %v1179 = vpop.f32.mrf.mxu0
      %1180 = vmatprep.mubr.bf16.mxu0 %v658
      %1181 = vmatmul.mubr.bf16.gmra.mxu0 %v657
      %v1182 = vpop.f32.mrf.mxu0
      %v1183 = vadd.f32 %v1022, %v1182
      %v1184 = vpop.f32.mrf.mxu0
      %v1185 = vpop.f32.mrf.mxu0
      %v1186 = vadd.f32 %v1025, %v1185
      %v1187 = vpop.f32.mrf.mxu0
      %1188 = vmatprep.mubr.bf16.mxu0 %v662
      %1189 = vmatmul.mubr.bf16.gmra.mxu0 %v661
      %v1190 = vpop.f32.mrf.mxu0
      %v1191 = vadd.f32 %v1030, %v1190
      %v1192 = vpop.f32.mrf.mxu0
      %v1193 = vpop.f32.mrf.mxu0
      %v1194 = vadd.f32 %v1033, %v1193
      %v1195 = vpop.f32.mrf.mxu0
      %1196 = vmatprep.mubr.bf16.mxu0 %v666
      %1197 = vmatmul.mubr.bf16.gmra.mxu0 %v665
      %v1198 = vpop.f32.mrf.mxu0
      %v1199 = vadd.f32 %v1038, %v1198
      %v1200 = vpop.f32.mrf.mxu0
      %v1201 = vpop.f32.mrf.mxu0
      %v1202 = vadd.f32 %v1041, %v1201
      %v1203 = vpop.f32.mrf.mxu0
      %1204 = vmatprep.mubr.bf16.mxu0 %v670
      %1205 = vmatmul.mubr.bf16.gmra.mxu0 %v669
      %v1206 = vpop.f32.mrf.mxu0
      %v1207 = vadd.f32 %v1046, %v1206
      %v1208 = vpop.f32.mrf.mxu0
      %v1209 = vpop.f32.mrf.mxu0
      %v1210 = vadd.f32 %v1049, %v1209
      %v1211 = vpop.f32.mrf.mxu0
      %1212 = vmatprep.mubr.bf16.mxu0 %v674
      %1213 = vmatmul.mubr.bf16.gmra.mxu0 %v673
      %v1214 = vpop.f32.mrf.mxu0
      %v1215 = vadd.f32 %v1054, %v1214
      %v1216 = vpop.f32.mrf.mxu0
      %v1217 = vpop.f32.mrf.mxu0
      %v1218 = vadd.f32 %v1057, %v1217
      %v1219 = vpop.f32.mrf.mxu0
      %1220 = vmatprep.mubr.bf16.mxu0 %v678
      %1221 = vmatmul.mubr.bf16.gmra.mxu0 %v677
      %v1222 = vpop.f32.mrf.mxu0
      %v1223 = vadd.f32 %v1062, %v1222
      %v1224 = vpop.f32.mrf.mxu0
      %v1225 = vpop.f32.mrf.mxu0
      %v1226 = vadd.f32 %v1065, %v1225
      %v1227 = vpop.f32.mrf.mxu0
      %1228 = vmatprep.mubr.bf16.mxu0 %v682
      %1229 = vmatmul.mubr.bf16.gmra.mxu0 %v681
      %v1230 = vpop.f32.mrf.mxu0
      %v1231 = vadd.f32 %v1070, %v1230
      %v1232 = vpop.f32.mrf.mxu0
      %v1233 = vpop.f32.mrf.mxu0
      %v1234 = vadd.f32 %v1073, %v1233
      %v1235 = vpop.f32.mrf.mxu0
      %1236 = vmatprep.mubr.bf16.mxu0 %v686
      %1237 = vmatmul.mubr.bf16.gmra.mxu0 %v685
      %v1238 = vpop.f32.mrf.mxu0
      %v1239 = vadd.f32 %v1078, %v1238
      %v1240 = vpop.f32.mrf.mxu0
      %v1241 = vpop.f32.mrf.mxu0
      %v1242 = vadd.f32 %v1081, %v1241
      %v1243 = vpop.f32.mrf.mxu0
      %1244 = vmatprep.mubr.bf16.mxu0 %v690
      %1245 = vmatmul.mubr.bf16.gmra.mxu0 %v689
      %v1246 = vpop.f32.mrf.mxu0
      %v1247 = vadd.f32 %v1086, %v1246
      %v1248 = vpop.f32.mrf.mxu0
      %v1249 = vpop.f32.mrf.mxu0
      %v1250 = vadd.f32 %v1089, %v1249
      %v1251 = vpop.f32.mrf.mxu0
      %1252 = vmatprep.mubr.bf16.mxu0 %v694
      %1253 = vmatmul.mubr.bf16.gmra.mxu0 %v693
      %v1254 = vpop.f32.mrf.mxu0
      %v1255 = vadd.f32 %v1094, %v1254
      %v1256 = vpop.f32.mrf.mxu0
      %v1257 = vpop.f32.mrf.mxu0
      %v1258 = vadd.f32 %v1097, %v1257
      %v1259 = vpop.f32.mrf.mxu0
      %1260 = vmatprep.mubr.bf16.mxu0 %v698
      %1261 = vmatmul.mubr.bf16.gmra.mxu0 %v697
      %v1262 = vpop.f32.mrf.mxu0
      %v1263 = vadd.f32 %v1102, %v1262
      %v1264 = vpop.f32.mrf.mxu0
      %v1265 = vpop.f32.mrf.mxu0
      %v1266 = vadd.f32 %v1105, %v1265
      %v1267 = vpop.f32.mrf.mxu0
      %1268 = vmatprep.mubr.bf16.mxu0 %v702
      %1269 = vmatmul.mubr.bf16.gmra.mxu0 %v701
      %v1270 = vpop.f32.mrf.mxu0
      %v1271 = vadd.f32 %v1110, %v1270
      %v1272 = vpop.f32.mrf.mxu0
      %v1273 = vpop.f32.mrf.mxu0
      %v1274 = vadd.f32 %v1113, %v1273
      %v1275 = vpop.f32.mrf.mxu0
      %1276 = vmatprep.mubr.bf16.mxu0 %v706
      %1277 = vmatmul.mubr.bf16.gmra.mxu0 %v705
      %v1278 = vpop.f32.mrf.mxu0
      %v1279 = vadd.f32 %v1118, %v1278
      %v1280 = vpop.f32.mrf.mxu0
      %v1281 = vpop.f32.mrf.mxu0
      %v1282 = vadd.f32 %v1121, %v1281
      %v1283 = vpop.f32.mrf.mxu0
      %1284 = vdwg.mxu0
      %v1285 = vadd.f32 %v291, %v1159
      %v1286 = vadd.f32 %v292, %v1162
      %v1287 = vadd.f32 %v293, %v1167
      %v1288 = vadd.f32 %v294, %v1170
      %v1289 = vadd.f32 %v295, %v1175
      %v1290 = vadd.f32 %v296, %v1178
      %v1291 = vadd.f32 %v297, %v1183
      %v1292 = vadd.f32 %v298, %v1186
      %v1293 = vadd.f32 %v299, %v1191
      %v1294 = vadd.f32 %v300, %v1194
      %v1295 = vadd.f32 %v301, %v1199
      %v1296 = vadd.f32 %v302, %v1202
      %v1297 = vadd.f32 %v303, %v1207
      %v1298 = vadd.f32 %v304, %v1210
      %v1299 = vadd.f32 %v305, %v1215
      %v1300 = vadd.f32 %v306, %v1218
      %v1301 = vadd.f32 %v307, %v1223
      %v1302 = vadd.f32 %v308, %v1226
      %v1303 = vadd.f32 %v309, %v1231
      %v1304 = vadd.f32 %v310, %v1234
      %v1305 = vadd.f32 %v311, %v1239
      %v1306 = vadd.f32 %v312, %v1242
      %v1307 = vadd.f32 %v313, %v1247
      %v1308 = vadd.f32 %v314, %v1250
      %v1309 = vadd.f32 %v315, %v1255
      %v1310 = vadd.f32 %v316, %v1258
      %v1311 = vadd.f32 %v317, %v1263
      %v1312 = vadd.f32 %v318, %v1266
      %v1313 = vadd.f32 %v319, %v1271
      %v1314 = vadd.f32 %v320, %v1274
      %v1315 = vadd.f32 %v321, %v1279
      %v1316 = vadd.f32 %v322, %v1282
      %1317 = vst [vmem:[#allocation2] sm:$0xff] %v1285
      %1318 = vst [vmem:[#allocation2 + $0x8] sm:$0xff] %v1286
      %1319 = vst [vmem:[#allocation2 + $0x10] sm:$0xff] %v1287
      %1320 = vst [vmem:[#allocation2 + $0x18] sm:$0xff] %v1288
      %1321 = vst [vmem:[#allocation2 + $0x20] sm:$0xff] %v1289
      %1322 = vst [vmem:[#allocation2 + $0x28] sm:$0xff] %v1290
      %1323 = vst [vmem:[#allocation2 + $0x30] sm:$0xff] %v1291
      %1324 = vst [vmem:[#allocation2 + $0x38] sm:$0xff] %v1292
      %1325 = vst [vmem:[#allocation2 + $0x40] sm:$0xff] %v1293
      %1326 = vst [vmem:[#allocation2 + $0x48] sm:$0xff] %v1294
      %1327 = vst [vmem:[#allocation2 + $0x50] sm:$0xff] %v1295
      %1328 = vst [vmem:[#allocation2 + $0x58] sm:$0xff] %v1296
      %1329 = vst [vmem:[#allocation2 + $0x60] sm:$0xff] %v1297
      %1330 = vst [vmem:[#allocation2 + $0x68] sm:$0xff] %v1298
      %1331 = vst [vmem:[#allocation2 + $0x70] sm:$0xff] %v1299
      %1332 = vst [vmem:[#allocation2 + $0x78] sm:$0xff] %v1300
      %1333 = vst [vmem:[#allocation2 + $0x80] sm:$0xff] %v1301
      %1334 = vst [vmem:[#allocation2 + $0x88] sm:$0xff] %v1302
      %1335 = vst [vmem:[#allocation2 + $0x90] sm:$0xff] %v1303
      %1336 = vst [vmem:[#allocation2 + $0x98] sm:$0xff] %v1304
      %1337 = vst [vmem:[#allocation2 + $0xa0] sm:$0xff] %v1305
      %1338 = vst [vmem:[#allocation2 + $0xa8] sm:$0xff] %v1306
      %1339 = vst [vmem:[#allocation2 + $0xb0] sm:$0xff] %v1307
      %1340 = vst [vmem:[#allocation2 + $0xb8] sm:$0xff] %v1308
      %1341 = vst [vmem:[#allocation2 + $0xc0] sm:$0xff] %v1309
      %1342 = vst [vmem:[#allocation2 + $0xc8] sm:$0xff] %v1310
      %1343 = vst [vmem:[#allocation2 + $0xd0] sm:$0xff] %v1311
      %1344 = vst [vmem:[#allocation2 + $0xd8] sm:$0xff] %v1312
      %1345 = vst [vmem:[#allocation2 + $0xe0] sm:$0xff] %v1313
      %1346 = vst [vmem:[#allocation2 + $0xe8] sm:$0xff] %v1314
      %1347 = vst [vmem:[#allocation2 + $0xf0] sm:$0xff] %v1315
      %1348 = vst [vmem:[#allocation2 + $0xf8] sm:$0xff] %v1316
      // Predicated region
      $region41: #{gcn_forward.11} parent=35 // pred_check
        %p1349 = pneg %p255
      $region42: #{gcn_forward.11} parent=35 // pred_check_branch
        %1351 = sbr.rel (%p1349) target = $region44
      $region43: #{gcn_forward.11} parent=35 // pred_region
        %v1352 = vld [vmem:[#allocation2] sm:$0xff]
        %v1353 = vld [vmem:[#allocation2 + $0x8] sm:$0xff]
        %v1354 = vld [vmem:[#allocation2 + $0x10] sm:$0xff]
        %v1355 = vld [vmem:[#allocation2 + $0x18] sm:$0xff]
        %v1356 = vld [vmem:[#allocation2 + $0x20] sm:$0xff]
        %v1357 = vld [vmem:[#allocation2 + $0x28] sm:$0xff]
        %v1358 = vld [vmem:[#allocation2 + $0x30] sm:$0xff]
        %v1359 = vld [vmem:[#allocation2 + $0x38] sm:$0xff]
        %v1360 = vld [vmem:[#allocation2 + $0x40] sm:$0xff]
        %v1361 = vld [vmem:[#allocation2 + $0x48] sm:$0xff]
        %v1362 = vld [vmem:[#allocation2 + $0x50] sm:$0xff]
        %v1363 = vld [vmem:[#allocation2 + $0x58] sm:$0xff]
        %v1364 = vld [vmem:[#allocation2 + $0x60] sm:$0xff]
        %v1365 = vld [vmem:[#allocation2 + $0x68] sm:$0xff]
        %v1366 = vld [vmem:[#allocation2 + $0x70] sm:$0xff]
        %v1367 = vld [vmem:[#allocation2 + $0x78] sm:$0xff]
        %v1368 = vld [vmem:[#allocation2 + $0x80] sm:$0xff]
        %v1369 = vld [vmem:[#allocation2 + $0x88] sm:$0xff]
        %v1370 = vld [vmem:[#allocation2 + $0x90] sm:$0xff]
        %v1371 = vld [vmem:[#allocation2 + $0x98] sm:$0xff]
        %v1372 = vld [vmem:[#allocation2 + $0xa0] sm:$0xff]
        %v1373 = vld [vmem:[#allocation2 + $0xa8] sm:$0xff]
        %v1374 = vld [vmem:[#allocation2 + $0xb0] sm:$0xff]
        %v1375 = vld [vmem:[#allocation2 + $0xb8] sm:$0xff]
        %v1376 = vld [vmem:[#allocation2 + $0xc0] sm:$0xff]
        %v1377 = vld [vmem:[#allocation2 + $0xc8] sm:$0xff]
        %v1378 = vld [vmem:[#allocation2 + $0xd0] sm:$0xff]
        %v1379 = vld [vmem:[#allocation2 + $0xd8] sm:$0xff]
        %v1380 = vld [vmem:[#allocation2 + $0xe0] sm:$0xff]
        %v1381 = vld [vmem:[#allocation2 + $0xe8] sm:$0xff]
        %v1382 = vld [vmem:[#allocation2 + $0xf0] sm:$0xff]
        %v1383 = vld [vmem:[#allocation2 + $0xf8] sm:$0xff]
        %v1384 = vpack.c.bf16 %v1353, %v1352
        %v1385 = vpack.c.bf16 %v1355, %v1354
        %v1386 = vpack.c.bf16 %v1357, %v1356
        %v1387 = vpack.c.bf16 %v1359, %v1358
        %v1388 = vpack.c.bf16 %v1361, %v1360
        %v1389 = vpack.c.bf16 %v1363, %v1362
        %v1390 = vpack.c.bf16 %v1365, %v1364
        %v1391 = vpack.c.bf16 %v1367, %v1366
        %v1392 = vpack.c.bf16 %v1369, %v1368
        %v1393 = vpack.c.bf16 %v1371, %v1370
        %v1394 = vpack.c.bf16 %v1373, %v1372
        %v1395 = vpack.c.bf16 %v1375, %v1374
        %v1396 = vpack.c.bf16 %v1377, %v1376
        %v1397 = vpack.c.bf16 %v1379, %v1378
        %v1398 = vpack.c.bf16 %v1381, %v1380
        %v1399 = vpack.c.bf16 %v1383, %v1382
        %v1400 = vld [vmem:[%s2] sm:$0xf]
        %v1401 = vld [vmem:[%s2 + $0x4] sm:$0xf]
        %v1402 = vld [vmem:[%s2 + $0x8] sm:$0xf]
        %v1403 = vld [vmem:[%s2 + $0xc] sm:$0xf]
        %v1404 = vld [vmem:[%s2 + $0x10] sm:$0xf]
        %v1405 = vld [vmem:[%s2 + $0x14] sm:$0xf]
        %v1406 = vld [vmem:[%s2 + $0x18] sm:$0xf]
        %v1407 = vld [vmem:[%s2 + $0x1c] sm:$0xf]
        %v1408 = vld [vmem:[%s2 + $0x20] sm:$0xf]
        %v1409 = vld [vmem:[%s2 + $0x24] sm:$0xf]
        %v1410 = vld [vmem:[%s2 + $0x28] sm:$0xf]
        %v1411 = vld [vmem:[%s2 + $0x2c] sm:$0xf]
        %v1412 = vld [vmem:[%s2 + $0x30] sm:$0xf]
        %v1413 = vld [vmem:[%s2 + $0x34] sm:$0xf]
        %v1414 = vld [vmem:[%s2 + $0x38] sm:$0xf]
        %v1415 = vld [vmem:[%s2 + $0x3c] sm:$0xf]
        %v1416 = vld [vmem:[%s3] sm:$0x1]
        %v1418 = vlaneseq
        %v1419 = vshrl.u32 %v1418, 7
        %v1420 = vsub.s32 0, %v1419
        %v1421 = vrot.slane %v1416, %v1420
        %v1439 = vunpack.c.l.b16 %v1400
        %v1440 = vunpack.c.l.b16 %v1401
        %v1441 = vunpack.c.l.b16 %v1402
        %v1442 = vunpack.c.l.b16 %v1403
        %v1443 = vunpack.c.l.b16 %v1404
        %v1444 = vunpack.c.l.b16 %v1405
        %v1445 = vunpack.c.l.b16 %v1406
        %v1446 = vunpack.c.l.b16 %v1407
        %v1447 = vunpack.c.l.b16 %v1408
        %v1448 = vunpack.c.l.b16 %v1409
        %v1449 = vunpack.c.l.b16 %v1410
        %v1450 = vunpack.c.l.b16 %v1411
        %v1451 = vunpack.c.l.b16 %v1412
        %v1452 = vunpack.c.l.b16 %v1413
        %v1453 = vunpack.c.l.b16 %v1414
        %v1454 = vunpack.c.l.b16 %v1415
        %v1455 = vpack.c.b16 %v1440, %v1439
        %v1456 = vpack.c.b16 %v1442, %v1441
        %v1457 = vpack.c.b16 %v1444, %v1443
        %v1458 = vpack.c.b16 %v1446, %v1445
        %v1459 = vpack.c.b16 %v1448, %v1447
        %v1460 = vpack.c.b16 %v1450, %v1449
        %v1461 = vpack.c.b16 %v1452, %v1451
        %v1462 = vpack.c.b16 %v1454, %v1453
        %1471 = vmatprep.subr.bf16.mxu0 0
        %1472 = vmatpush1.bf16.msra.mxu0 %v1462
        %1473 = vmatprep.subr.bf16.mxu0 0
        %1474 = vmatpush1.bf16.msra.mxu0 %v1461
        %1475 = vmatprep.subr.bf16.mxu0 0
        %1476 = vmatpush1.bf16.msra.mxu0 %v1460
        %1477 = vmatprep.subr.bf16.mxu0 0
        %1478 = vmatpush1.bf16.msra.mxu0 %v1459
        %1479 = vmatprep.subr.bf16.mxu0 0
        %1480 = vmatpush1.bf16.msra.mxu0 %v1458
        %1481 = vmatprep.subr.bf16.mxu0 0
        %1482 = vmatpush1.bf16.msra.mxu0 %v1457
        %1483 = vmatprep.subr.bf16.mxu0 0
        %1484 = vmatpush1.bf16.msra.mxu0 %v1456
        %1485 = vmatprep.subr.bf16.mxu0 0
        %1486 = vmatpush1.bf16.msra.mxu0 %v1455
        %1487 = vmatprep.subr.bf16.mxu0 0
        %1488 = vmatpush2.bf16.msra.mxu0 0
        %1489 = vmatprep.subr.bf16.mxu0 0
        %1490 = vmatpush2.bf16.msra.mxu0 0
        %1491 = vmatprep.subr.bf16.mxu0 0
        %1492 = vmatpush2.bf16.msra.mxu0 0
        %1493 = vmatprep.subr.bf16.mxu0 0
        %1494 = vmatpush2.bf16.msra.mxu0 0
        %1495 = vmatprep.subr.bf16.mxu0 0
        %1496 = vmatpush2.bf16.msra.mxu0 0
        %1497 = vmatprep.subr.bf16.mxu0 0
        %1498 = vmatpush2.bf16.msra.mxu0 0
        %1499 = vmatprep.subr.bf16.mxu0 0
        %1500 = vmatpush2.bf16.msra.mxu0 0
        %1501 = vmatprep.subr.bf16.mxu0 0
        %1502 = vmatpush2.bf16.msra.mxu0 0
        %1503 = vmatprep.mubr.bf16.mxu0 0
        %1504 = vmatmul.mubr.bf16.gmra.mxu0 %v1384
        %v1505 = vpop.f32.mrf.mxu0
        %v1506 = vadd.f32 %v1421, %v1505
        %v1507 = vpop.f32.mrf.mxu0
        %v1508 = vpop.f32.mrf.mxu0
        %v1509 = vadd.f32 %v1421, %v1508
        %v1510 = vpop.f32.mrf.mxu0
        %1511 = vmatprep.mubr.bf16.mxu0 0
        %1512 = vmatmul.mubr.bf16.gmra.mxu0 %v1385
        %v1513 = vpop.f32.mrf.mxu0
        %v1514 = vadd.f32 %v1421, %v1513
        %v1515 = vpop.f32.mrf.mxu0
        %v1516 = vpop.f32.mrf.mxu0
        %v1517 = vadd.f32 %v1421, %v1516
        %v1518 = vpop.f32.mrf.mxu0
        %1519 = vmatprep.mubr.bf16.mxu0 0
        %1520 = vmatmul.mubr.bf16.gmra.mxu0 %v1386
        %v1521 = vpop.f32.mrf.mxu0
        %v1522 = vadd.f32 %v1421, %v1521
        %v1523 = vpop.f32.mrf.mxu0
        %v1524 = vpop.f32.mrf.mxu0
        %v1525 = vadd.f32 %v1421, %v1524
        %v1526 = vpop.f32.mrf.mxu0
        %1527 = vmatprep.mubr.bf16.mxu0 0
        %1528 = vmatmul.mubr.bf16.gmra.mxu0 %v1387
        %v1529 = vpop.f32.mrf.mxu0
        %v1530 = vadd.f32 %v1421, %v1529
        %v1531 = vpop.f32.mrf.mxu0
        %v1532 = vpop.f32.mrf.mxu0
        %v1533 = vadd.f32 %v1421, %v1532
        %v1534 = vpop.f32.mrf.mxu0
        %1535 = vmatprep.mubr.bf16.mxu0 0
        %1536 = vmatmul.mubr.bf16.gmra.mxu0 %v1388
        %v1537 = vpop.f32.mrf.mxu0
        %v1538 = vadd.f32 %v1421, %v1537
        %v1539 = vpop.f32.mrf.mxu0
        %v1540 = vpop.f32.mrf.mxu0
        %v1541 = vadd.f32 %v1421, %v1540
        %v1542 = vpop.f32.mrf.mxu0
        %1543 = vmatprep.mubr.bf16.mxu0 0
        %1544 = vmatmul.mubr.bf16.gmra.mxu0 %v1389
        %v1545 = vpop.f32.mrf.mxu0
        %v1546 = vadd.f32 %v1421, %v1545
        %v1547 = vpop.f32.mrf.mxu0
        %v1548 = vpop.f32.mrf.mxu0
        %v1549 = vadd.f32 %v1421, %v1548
        %v1550 = vpop.f32.mrf.mxu0
        %1551 = vmatprep.mubr.bf16.mxu0 0
        %1552 = vmatmul.mubr.bf16.gmra.mxu0 %v1390
        %v1553 = vpop.f32.mrf.mxu0
        %v1554 = vadd.f32 %v1421, %v1553
        %v1555 = vpop.f32.mrf.mxu0
        %v1556 = vpop.f32.mrf.mxu0
        %v1557 = vadd.f32 %v1421, %v1556
        %v1558 = vpop.f32.mrf.mxu0
        %1559 = vmatprep.mubr.bf16.mxu0 0
        %1560 = vmatmul.mubr.bf16.gmra.mxu0 %v1391
        %v1561 = vpop.f32.mrf.mxu0
        %v1562 = vadd.f32 %v1421, %v1561
        %v1563 = vpop.f32.mrf.mxu0
        %v1564 = vpop.f32.mrf.mxu0
        %v1565 = vadd.f32 %v1421, %v1564
        %v1566 = vpop.f32.mrf.mxu0
        %1567 = vmatprep.mubr.bf16.mxu0 0
        %1568 = vmatmul.mubr.bf16.gmra.mxu0 %v1392
        %v1569 = vpop.f32.mrf.mxu0
        %v1570 = vadd.f32 %v1421, %v1569
        %v1571 = vpop.f32.mrf.mxu0
        %v1572 = vpop.f32.mrf.mxu0
        %v1573 = vadd.f32 %v1421, %v1572
        %v1574 = vpop.f32.mrf.mxu0
        %1575 = vmatprep.mubr.bf16.mxu0 0
        %1576 = vmatmul.mubr.bf16.gmra.mxu0 %v1393
        %v1577 = vpop.f32.mrf.mxu0
        %v1578 = vadd.f32 %v1421, %v1577
        %v1579 = vpop.f32.mrf.mxu0
        %v1580 = vpop.f32.mrf.mxu0
        %v1581 = vadd.f32 %v1421, %v1580
        %v1582 = vpop.f32.mrf.mxu0
        %1583 = vmatprep.mubr.bf16.mxu0 0
        %1584 = vmatmul.mubr.bf16.gmra.mxu0 %v1394
        %v1585 = vpop.f32.mrf.mxu0
        %v1586 = vadd.f32 %v1421, %v1585
        %v1587 = vpop.f32.mrf.mxu0
        %v1588 = vpop.f32.mrf.mxu0
        %v1589 = vadd.f32 %v1421, %v1588
        %v1590 = vpop.f32.mrf.mxu0
        %1591 = vmatprep.mubr.bf16.mxu0 0
        %1592 = vmatmul.mubr.bf16.gmra.mxu0 %v1395
        %v1593 = vpop.f32.mrf.mxu0
        %v1594 = vadd.f32 %v1421, %v1593
        %v1595 = vpop.f32.mrf.mxu0
        %v1596 = vpop.f32.mrf.mxu0
        %v1597 = vadd.f32 %v1421, %v1596
        %v1598 = vpop.f32.mrf.mxu0
        %1599 = vmatprep.mubr.bf16.mxu0 0
        %1600 = vmatmul.mubr.bf16.gmra.mxu0 %v1396
        %v1601 = vpop.f32.mrf.mxu0
        %v1602 = vadd.f32 %v1421, %v1601
        %v1603 = vpop.f32.mrf.mxu0
        %v1604 = vpop.f32.mrf.mxu0
        %v1605 = vadd.f32 %v1421, %v1604
        %v1606 = vpop.f32.mrf.mxu0
        %1607 = vmatprep.mubr.bf16.mxu0 0
        %1608 = vmatmul.mubr.bf16.gmra.mxu0 %v1397
        %v1609 = vpop.f32.mrf.mxu0
        %v1610 = vadd.f32 %v1421, %v1609
        %v1611 = vpop.f32.mrf.mxu0
        %v1612 = vpop.f32.mrf.mxu0
        %v1613 = vadd.f32 %v1421, %v1612
        %v1614 = vpop.f32.mrf.mxu0
        %1615 = vmatprep.mubr.bf16.mxu0 0
        %1616 = vmatmul.mubr.bf16.gmra.mxu0 %v1398
        %v1617 = vpop.f32.mrf.mxu0
        %v1618 = vadd.f32 %v1421, %v1617
        %v1619 = vpop.f32.mrf.mxu0
        %v1620 = vpop.f32.mrf.mxu0
        %v1621 = vadd.f32 %v1421, %v1620
        %v1622 = vpop.f32.mrf.mxu0
        %1623 = vmatprep.mubr.bf16.mxu0 0
        %1624 = vmatmul.mubr.bf16.gmra.mxu0 %v1399
        %v1625 = vpop.f32.mrf.mxu0
        %v1626 = vadd.f32 %v1421, %v1625
        %v1627 = vpop.f32.mrf.mxu0
        %v1628 = vpop.f32.mrf.mxu0
        %v1629 = vadd.f32 %v1421, %v1628
        %v1630 = vpop.f32.mrf.mxu0
        %1631 = vdwg.mxu0
        %1632 = vmax.xlane.f32.xlu0 %v1506
        %v1633 = vpop.xlane.xlu0 %1632
        %1634 = vmax.xlane.f32.xlu0 %v1509
        %v1635 = vpop.xlane.xlu0 %1634
        %1636 = vmax.xlane.f32.xlu0 %v1514
        %v1637 = vpop.xlane.xlu0 %1636
        %1638 = vmax.xlane.f32.xlu0 %v1517
        %v1639 = vpop.xlane.xlu0 %1638
        %1640 = vmax.xlane.f32.xlu0 %v1522
        %v1641 = vpop.xlane.xlu0 %1640
        %1642 = vmax.xlane.f32.xlu0 %v1525
        %v1643 = vpop.xlane.xlu0 %1642
        %1644 = vmax.xlane.f32.xlu0 %v1530
        %v1645 = vpop.xlane.xlu0 %1644
        %1646 = vmax.xlane.f32.xlu0 %v1533
        %v1647 = vpop.xlane.xlu0 %1646
        %1648 = vmax.xlane.f32.xlu0 %v1538
        %v1649 = vpop.xlane.xlu0 %1648
        %1650 = vmax.xlane.f32.xlu0 %v1541
        %v1651 = vpop.xlane.xlu0 %1650
        %1652 = vmax.xlane.f32.xlu0 %v1546
        %v1653 = vpop.xlane.xlu0 %1652
        %1654 = vmax.xlane.f32.xlu0 %v1549
        %v1655 = vpop.xlane.xlu0 %1654
        %1656 = vmax.xlane.f32.xlu0 %v1554
        %v1657 = vpop.xlane.xlu0 %1656
        %1658 = vmax.xlane.f32.xlu0 %v1557
        %v1659 = vpop.xlane.xlu0 %1658
        %1660 = vmax.xlane.f32.xlu0 %v1562
        %v1661 = vpop.xlane.xlu0 %1660
        %1662 = vmax.xlane.f32.xlu0 %v1565
        %v1663 = vpop.xlane.xlu0 %1662
        %1664 = vmax.xlane.f32.xlu0 %v1570
        %v1665 = vpop.xlane.xlu0 %1664
        %1666 = vmax.xlane.f32.xlu0 %v1573
        %v1667 = vpop.xlane.xlu0 %1666
        %1668 = vmax.xlane.f32.xlu0 %v1578
        %v1669 = vpop.xlane.xlu0 %1668
        %1670 = vmax.xlane.f32.xlu0 %v1581
        %v1671 = vpop.xlane.xlu0 %1670
        %1672 = vmax.xlane.f32.xlu0 %v1586
        %v1673 = vpop.xlane.xlu0 %1672
        %1674 = vmax.xlane.f32.xlu0 %v1589
        %v1675 = vpop.xlane.xlu0 %1674
        %1676 = vmax.xlane.f32.xlu0 %v1594
        %v1677 = vpop.xlane.xlu0 %1676
        %1678 = vmax.xlane.f32.xlu0 %v1597
        %v1679 = vpop.xlane.xlu0 %1678
        %1680 = vmax.xlane.f32.xlu0 %v1602
        %v1681 = vpop.xlane.xlu0 %1680
        %1682 = vmax.xlane.f32.xlu0 %v1605
        %v1683 = vpop.xlane.xlu0 %1682
        %1684 = vmax.xlane.f32.xlu0 %v1610
        %v1685 = vpop.xlane.xlu0 %1684
        %1686 = vmax.xlane.f32.xlu0 %v1613
        %v1687 = vpop.xlane.xlu0 %1686
        %1688 = vmax.xlane.f32.xlu0 %v1618
        %v1689 = vpop.xlane.xlu0 %1688
        %1690 = vmax.xlane.f32.xlu0 %v1621
        %v1691 = vpop.xlane.xlu0 %1690
        %1692 = vmax.xlane.f32.xlu0 %v1626
        %v1693 = vpop.xlane.xlu0 %1692
        %1694 = vmax.xlane.f32.xlu0 %v1629
        %v1695 = vpop.xlane.xlu0 %1694
        %v1696 = vsub.f32 %v1506, %v1633
        %v1697 = vsub.f32 %v1509, %v1635
        %v1698 = vsub.f32 %v1514, %v1637
        %v1699 = vsub.f32 %v1517, %v1639
        %v1700 = vsub.f32 %v1522, %v1641
        %v1701 = vsub.f32 %v1525, %v1643
        %v1702 = vsub.f32 %v1530, %v1645
        %v1703 = vsub.f32 %v1533, %v1647
        %v1704 = vsub.f32 %v1538, %v1649
        %v1705 = vsub.f32 %v1541, %v1651
        %v1706 = vsub.f32 %v1546, %v1653
        %v1707 = vsub.f32 %v1549, %v1655
        %v1708 = vsub.f32 %v1554, %v1657
        %v1709 = vsub.f32 %v1557, %v1659
        %v1710 = vsub.f32 %v1562, %v1661
        %v1711 = vsub.f32 %v1565, %v1663
        %v1712 = vsub.f32 %v1570, %v1665
        %v1713 = vsub.f32 %v1573, %v1667
        %v1714 = vsub.f32 %v1578, %v1669
        %v1715 = vsub.f32 %v1581, %v1671
        %v1716 = vsub.f32 %v1586, %v1673
        %v1717 = vsub.f32 %v1589, %v1675
        %v1718 = vsub.f32 %v1594, %v1677
        %v1719 = vsub.f32 %v1597, %v1679
        %v1720 = vsub.f32 %v1602, %v1681
        %v1721 = vsub.f32 %v1605, %v1683
        %v1722 = vsub.f32 %v1610, %v1685
        %v1723 = vsub.f32 %v1613, %v1687
        %v1724 = vsub.f32 %v1618, %v1689
        %v1725 = vsub.f32 %v1621, %v1691
        %v1726 = vsub.f32 %v1626, %v1693
        %v1727 = vsub.f32 %v1629, %v1695
        %v1728 = vmul.f32 %v1696, 1.442695
        %v1729 = vpow.pop %v1728
        %v1730 = vmul.f32 %v1697, 1.442695
        %v1731 = vpow.pop %v1730
        %v1732 = vmul.f32 %v1698, 1.442695
        %v1733 = vpow.pop %v1732
        %v1734 = vmul.f32 %v1699, 1.442695
        %v1735 = vpow.pop %v1734
        %v1736 = vmul.f32 %v1700, 1.442695
        %v1737 = vpow.pop %v1736
        %v1738 = vmul.f32 %v1701, 1.442695
        %v1739 = vpow.pop %v1738
        %v1740 = vmul.f32 %v1702, 1.442695
        %v1741 = vpow.pop %v1740
        %v1742 = vmul.f32 %v1703, 1.442695
        %v1743 = vpow.pop %v1742
        %v1744 = vmul.f32 %v1704, 1.442695
        %v1745 = vpow.pop %v1744
        %v1746 = vmul.f32 %v1705, 1.442695
        %v1747 = vpow.pop %v1746
        %v1748 = vmul.f32 %v1706, 1.442695
        %v1749 = vpow.pop %v1748
        %v1750 = vmul.f32 %v1707, 1.442695
        %v1751 = vpow.pop %v1750
        %v1752 = vmul.f32 %v1708, 1.442695
        %v1753 = vpow.pop %v1752
        %v1754 = vmul.f32 %v1709, 1.442695
        %v1755 = vpow.pop %v1754
        %v1756 = vmul.f32 %v1710, 1.442695
        %v1757 = vpow.pop %v1756
        %v1758 = vmul.f32 %v1711, 1.442695
        %v1759 = vpow.pop %v1758
        %v1760 = vmul.f32 %v1712, 1.442695
        %v1761 = vpow.pop %v1760
        %v1762 = vmul.f32 %v1713, 1.442695
        %v1763 = vpow.pop %v1762
        %v1764 = vmul.f32 %v1714, 1.442695
        %v1765 = vpow.pop %v1764
        %v1766 = vmul.f32 %v1715, 1.442695
        %v1767 = vpow.pop %v1766
        %v1768 = vmul.f32 %v1716, 1.442695
        %v1769 = vpow.pop %v1768
        %v1770 = vmul.f32 %v1717, 1.442695
        %v1771 = vpow.pop %v1770
        %v1772 = vmul.f32 %v1718, 1.442695
        %v1773 = vpow.pop %v1772
        %v1774 = vmul.f32 %v1719, 1.442695
        %v1775 = vpow.pop %v1774
        %v1776 = vmul.f32 %v1720, 1.442695
        %v1777 = vpow.pop %v1776
        %v1778 = vmul.f32 %v1721, 1.442695
        %v1779 = vpow.pop %v1778
        %v1780 = vmul.f32 %v1722, 1.442695
        %v1781 = vpow.pop %v1780
        %v1782 = vmul.f32 %v1723, 1.442695
        %v1783 = vpow.pop %v1782
        %v1784 = vmul.f32 %v1724, 1.442695
        %v1785 = vpow.pop %v1784
        %v1786 = vmul.f32 %v1725, 1.442695
        %v1787 = vpow.pop %v1786
        %v1788 = vmul.f32 %v1726, 1.442695
        %v1789 = vpow.pop %v1788
        %v1790 = vmul.f32 %v1727, 1.442695
        %v1791 = vpow.pop %v1790
        %1792 = vadd.xlane.f32.xlu0 %v1729
        %v1793 = vpop.xlane.xlu0 %1792
        %1794 = vadd.xlane.f32.xlu0 %v1731
        %v1795 = vpop.xlane.xlu0 %1794
        %1796 = vadd.xlane.f32.xlu0 %v1733
        %v1797 = vpop.xlane.xlu0 %1796
        %1798 = vadd.xlane.f32.xlu0 %v1735
        %v1799 = vpop.xlane.xlu0 %1798
        %1800 = vadd.xlane.f32.xlu0 %v1737
        %v1801 = vpop.xlane.xlu0 %1800
        %1802 = vadd.xlane.f32.xlu0 %v1739
        %v1803 = vpop.xlane.xlu0 %1802
        %1804 = vadd.xlane.f32.xlu0 %v1741
        %v1805 = vpop.xlane.xlu0 %1804
        %1806 = vadd.xlane.f32.xlu0 %v1743
        %v1807 = vpop.xlane.xlu0 %1806
        %1808 = vadd.xlane.f32.xlu0 %v1745
        %v1809 = vpop.xlane.xlu0 %1808
        %1810 = vadd.xlane.f32.xlu0 %v1747
        %v1811 = vpop.xlane.xlu0 %1810
        %1812 = vadd.xlane.f32.xlu0 %v1749
        %v1813 = vpop.xlane.xlu0 %1812
        %1814 = vadd.xlane.f32.xlu0 %v1751
        %v1815 = vpop.xlane.xlu0 %1814
        %1816 = vadd.xlane.f32.xlu0 %v1753
        %v1817 = vpop.xlane.xlu0 %1816
        %1818 = vadd.xlane.f32.xlu0 %v1755
        %v1819 = vpop.xlane.xlu0 %1818
        %1820 = vadd.xlane.f32.xlu0 %v1757
        %v1821 = vpop.xlane.xlu0 %1820
        %1822 = vadd.xlane.f32.xlu0 %v1759
        %v1823 = vpop.xlane.xlu0 %1822
        %1824 = vadd.xlane.f32.xlu0 %v1761
        %v1825 = vpop.xlane.xlu0 %1824
        %1826 = vadd.xlane.f32.xlu0 %v1763
        %v1827 = vpop.xlane.xlu0 %1826
        %1828 = vadd.xlane.f32.xlu0 %v1765
        %v1829 = vpop.xlane.xlu0 %1828
        %1830 = vadd.xlane.f32.xlu0 %v1767
        %v1831 = vpop.xlane.xlu0 %1830
        %1832 = vadd.xlane.f32.xlu0 %v1769
        %v1833 = vpop.xlane.xlu0 %1832
        %1834 = vadd.xlane.f32.xlu0 %v1771
        %v1835 = vpop.xlane.xlu0 %1834
        %1836 = vadd.xlane.f32.xlu0 %v1773
        %v1837 = vpop.xlane.xlu0 %1836
        %1838 = vadd.xlane.f32.xlu0 %v1775
        %v1839 = vpop.xlane.xlu0 %1838
        %1840 = vadd.xlane.f32.xlu0 %v1777
        %v1841 = vpop.xlane.xlu0 %1840
        %1842 = vadd.xlane.f32.xlu0 %v1779
        %v1843 = vpop.xlane.xlu0 %1842
        %1844 = vadd.xlane.f32.xlu0 %v1781
        %v1845 = vpop.xlane.xlu0 %1844
        %1846 = vadd.xlane.f32.xlu0 %v1783
        %v1847 = vpop.xlane.xlu0 %1846
        %1848 = vadd.xlane.f32.xlu0 %v1785
        %v1849 = vpop.xlane.xlu0 %1848
        %1850 = vadd.xlane.f32.xlu0 %v1787
        %v1851 = vpop.xlane.xlu0 %1850
        %1852 = vadd.xlane.f32.xlu0 %v1789
        %v1853 = vpop.xlane.xlu0 %1852
        %1854 = vadd.xlane.f32.xlu0 %v1791
        %v1855 = vpop.xlane.xlu0 %1854
        %v1856 = vlog2.pop %v1793
        %v1857 = vmul.f32 %v1856, 0.6931472
        %v1858 = vlog2.pop %v1795
        %v1859 = vmul.f32 %v1858, 0.6931472
        %v1860 = vlog2.pop %v1797
        %v1861 = vmul.f32 %v1860, 0.6931472
        %v1862 = vlog2.pop %v1799
        %v1863 = vmul.f32 %v1862, 0.6931472
        %v1864 = vlog2.pop %v1801
        %v1865 = vmul.f32 %v1864, 0.6931472
        %v1866 = vlog2.pop %v1803
        %v1867 = vmul.f32 %v1866, 0.6931472
        %v1868 = vlog2.pop %v1805
        %v1869 = vmul.f32 %v1868, 0.6931472
        %v1870 = vlog2.pop %v1807
        %v1871 = vmul.f32 %v1870, 0.6931472
        %v1872 = vlog2.pop %v1809
        %v1873 = vmul.f32 %v1872, 0.6931472
        %v1874 = vlog2.pop %v1811
        %v1875 = vmul.f32 %v1874, 0.6931472
        %v1876 = vlog2.pop %v1813
        %v1877 = vmul.f32 %v1876, 0.6931472
        %v1878 = vlog2.pop %v1815
        %v1879 = vmul.f32 %v1878, 0.6931472
        %v1880 = vlog2.pop %v1817
        %v1881 = vmul.f32 %v1880, 0.6931472
        %v1882 = vlog2.pop %v1819
        %v1883 = vmul.f32 %v1882, 0.6931472
        %v1884 = vlog2.pop %v1821
        %v1885 = vmul.f32 %v1884, 0.6931472
        %v1886 = vlog2.pop %v1823
        %v1887 = vmul.f32 %v1886, 0.6931472
        %v1888 = vlog2.pop %v1825
        %v1889 = vmul.f32 %v1888, 0.6931472
        %v1890 = vlog2.pop %v1827
        %v1891 = vmul.f32 %v1890, 0.6931472
        %v1892 = vlog2.pop %v1829
        %v1893 = vmul.f32 %v1892, 0.6931472
        %v1894 = vlog2.pop %v1831
        %v1895 = vmul.f32 %v1894, 0.6931472
        %v1896 = vlog2.pop %v1833
        %v1897 = vmul.f32 %v1896, 0.6931472
        %v1898 = vlog2.pop %v1835
        %v1899 = vmul.f32 %v1898, 0.6931472
        %v1900 = vlog2.pop %v1837
        %v1901 = vmul.f32 %v1900, 0.6931472
        %v1902 = vlog2.pop %v1839
        %v1903 = vmul.f32 %v1902, 0.6931472
        %v1904 = vlog2.pop %v1841
        %v1905 = vmul.f32 %v1904, 0.6931472
        %v1906 = vlog2.pop %v1843
        %v1907 = vmul.f32 %v1906, 0.6931472
        %v1908 = vlog2.pop %v1845
        %v1909 = vmul.f32 %v1908, 0.6931472
        %v1910 = vlog2.pop %v1847
        %v1911 = vmul.f32 %v1910, 0.6931472
        %v1912 = vlog2.pop %v1849
        %v1913 = vmul.f32 %v1912, 0.6931472
        %v1914 = vlog2.pop %v1851
        %v1915 = vmul.f32 %v1914, 0.6931472
        %v1916 = vlog2.pop %v1853
        %v1917 = vmul.f32 %v1916, 0.6931472
        %v1918 = vlog2.pop %v1855
        %v1919 = vmul.f32 %v1918, 0.6931472
        %v1920 = vsub.f32 %v1696, %v1857
        %v1921 = vsub.f32 %v1697, %v1859
        %v1922 = vsub.f32 %v1698, %v1861
        %v1923 = vsub.f32 %v1699, %v1863
        %v1924 = vsub.f32 %v1700, %v1865
        %v1925 = vsub.f32 %v1701, %v1867
        %v1926 = vsub.f32 %v1702, %v1869
        %v1927 = vsub.f32 %v1703, %v1871
        %v1928 = vsub.f32 %v1704, %v1873
        %v1929 = vsub.f32 %v1705, %v1875
        %v1930 = vsub.f32 %v1706, %v1877
        %v1931 = vsub.f32 %v1707, %v1879
        %v1932 = vsub.f32 %v1708, %v1881
        %v1933 = vsub.f32 %v1709, %v1883
        %v1934 = vsub.f32 %v1710, %v1885
        %v1935 = vsub.f32 %v1711, %v1887
        %v1936 = vsub.f32 %v1712, %v1889
        %v1937 = vsub.f32 %v1713, %v1891
        %v1938 = vsub.f32 %v1714, %v1893
        %v1939 = vsub.f32 %v1715, %v1895
        %v1940 = vsub.f32 %v1716, %v1897
        %v1941 = vsub.f32 %v1717, %v1899
        %v1942 = vsub.f32 %v1718, %v1901
        %v1943 = vsub.f32 %v1719, %v1903
        %v1944 = vsub.f32 %v1720, %v1905
        %v1945 = vsub.f32 %v1721, %v1907
        %v1946 = vsub.f32 %v1722, %v1909
        %v1947 = vsub.f32 %v1723, %v1911
        %v1948 = vsub.f32 %v1724, %v1913
        %v1949 = vsub.f32 %v1725, %v1915
        %v1950 = vsub.f32 %v1726, %v1917
        %v1951 = vsub.f32 %v1727, %v1919
        %1952 = vst [vmem:[%s252] sm:$0xff] %v1920
        %1953 = vst [vmem:[%s252 + $0x8] sm:$0xff] %v1921
        %1954 = vst [vmem:[%s252 + $0x10] sm:$0xff] %v1922
        %1955 = vst [vmem:[%s252 + $0x18] sm:$0xff] %v1923
        %1956 = vst [vmem:[%s252 + $0x20] sm:$0xff] %v1924
        %1957 = vst [vmem:[%s252 + $0x28] sm:$0xff] %v1925
        %1958 = vst [vmem:[%s252 + $0x30] sm:$0xff] %v1926
        %1959 = vst [vmem:[%s252 + $0x38] sm:$0xff] %v1927
        %1960 = vst [vmem:[%s252 + $0x40] sm:$0xff] %v1928
        %1961 = vst [vmem:[%s252 + $0x48] sm:$0xff] %v1929
        %1962 = vst [vmem:[%s252 + $0x50] sm:$0xff] %v1930
        %1963 = vst [vmem:[%s252 + $0x58] sm:$0xff] %v1931
        %1964 = vst [vmem:[%s252 + $0x60] sm:$0xff] %v1932
        %1965 = vst [vmem:[%s252 + $0x68] sm:$0xff] %v1933
        %1966 = vst [vmem:[%s252 + $0x70] sm:$0xff] %v1934
        %1967 = vst [vmem:[%s252 + $0x78] sm:$0xff] %v1935
        %1968 = vst [vmem:[%s252 + $0x80] sm:$0xff] %v1936
        %1969 = vst [vmem:[%s252 + $0x88] sm:$0xff] %v1937
        %1970 = vst [vmem:[%s252 + $0x90] sm:$0xff] %v1938
        %1971 = vst [vmem:[%s252 + $0x98] sm:$0xff] %v1939
        %1972 = vst [vmem:[%s252 + $0xa0] sm:$0xff] %v1940
        %1973 = vst [vmem:[%s252 + $0xa8] sm:$0xff] %v1941
        %1974 = vst [vmem:[%s252 + $0xb0] sm:$0xff] %v1942
        %1975 = vst [vmem:[%s252 + $0xb8] sm:$0xff] %v1943
        %1976 = vst [vmem:[%s252 + $0xc0] sm:$0xff] %v1944
        %1977 = vst [vmem:[%s252 + $0xc8] sm:$0xff] %v1945
        %1978 = vst [vmem:[%s252 + $0xd0] sm:$0xff] %v1946
        %1979 = vst [vmem:[%s252 + $0xd8] sm:$0xff] %v1947
        %1980 = vst [vmem:[%s252 + $0xe0] sm:$0xff] %v1948
        %1981 = vst [vmem:[%s252 + $0xe8] sm:$0xff] %v1949
        %1982 = vst [vmem:[%s252 + $0xf0] sm:$0xff] %v1950
        %1983 = vst [vmem:[%s252 + $0xf8] sm:$0xff] %v1951
      $region44: #{gcn_forward.11} parent=35 // pred_fallthru
        _
      %s1984 = smul.u32 32, %s19
      %p1985 = scmp.lt.s32.totalorder %s1984, 63
      %s1986 = scalar_select %p1985, %s1984, 63
      %s1987 = smul.addr %s1986, 8
      %s1988 = scalar_lea.vmem %s4, %s1987
      // Predicated region
      $region45: #{gcn_forward.11} parent=35 // pred_check
        %p1989 = pneg %p141
      $region46: #{gcn_forward.11} parent=35 // pred_check_branch
        %1991 = sbr.rel (%p1989) target = $region48
      $region47: #{gcn_forward.11} parent=35 // pred_region
        %s1992 = smul.u32 32, %s19
      $region48: #{gcn_forward.11} parent=35 // pred_fallthru
        _
    $region36: #{gcn_forward.11} parent=5 // pred_fallthru
      _
    %p1993 = scmp.le.s32.totalorder 2, %s10
    // Predicated region
    $region49: #{gcn_forward.11} parent=5 // pred_check
      %p1994 = pneg %p1993
    $region50: #{gcn_forward.11} parent=5 // pred_check_branch
      %1996 = sbr.rel (%p1994) target = $region52
    $region51: #{gcn_forward.11} parent=5 // pred_region
      %s1997 = ssub.s32 %s10, 2
      // Predicated region
      $region53: #{gcn_forward.11} parent=51 // pred_check
        %p1998 = pneg %p147
      $region54: #{gcn_forward.11} parent=51 // pred_check_branch
        %2000 = sbr.rel (%p1998) target = $region56
      $region55: #{gcn_forward.11} parent=51 // pred_region
        %s2001 = smul.u32 32, %s21
        %p2002 = scmp.lt.s32.totalorder %s2001, 63
        %s2003 = scalar_select %p2002, %s2001, 63
        %s2004 = smul.addr %s2003, 8
        %s2005 = scalar_lea.vmem %s4, %s2004
      $region56: #{gcn_forward.11} parent=51 // pred_fallthru
        _
    $region52: #{gcn_forward.11} parent=5 // pred_fallthru
      _
  $region6: #{gcn_forward.11} parent=0 // loop_footer
    %s14 = sadd.s32 1, %s10
  $region7: #{gcn_forward.11} parent=0 // loop_footer_branch
    %9 = sbr.rel target = $region3
  $region8: #{gcn_forward.11} parent=0 // loop_exit
    _

</llo_original>
